<compile_context>
chip_gen: v5e
topology: v5e:2x2
jax: 0.10.0
libtpu: 0.0.40
codegen_flags: <defaults>
</compile_context>

<pallas_src>
import functools

import jax
import jax.numpy as jnp
import numpy as np
from jax import lax
from jax.experimental import pallas as pl
from jax.experimental.pallas import tpu as pltpu


def _nonlocal_kernel(x_ref, wqkv_ref, bqkv_ref, wo_ref, bo_ref, g_ref, beta_ref,
                     o_ref, *, num_heads, eps):
    # x_ref   : (1, C, S)   one image, channels-major, S = H*W on the lane dim
    # wqkv_ref: (C, 3C)     in_proj_weight.T  (q|k|v fused)
    # bqkv_ref: (1, 3C)     in_proj_bias
    # wo_ref  : (C, C)      out_proj.weight.T (rows = attention-output channels)
    # bo_ref  : (1, C)      out_proj.bias
    # g_ref   : (1, C)      LayerNorm gamma
    # beta_ref: (1, C)      LayerNorm beta
    # o_ref   : (1, C, S)
    x_cs = x_ref[0].astype(jnp.float32)                # (C, S) lane-dense load
    c = x_cs.shape[0]
    hd = c // num_heads
    scale = 1.0 / float(hd) ** 0.5

    x_flat = x_cs.T                                    # (S, C) tokens-major (on-chip flip)
    s_len = x_flat.shape[0]

    # Fused q|k|v projection: one MXU matmul instead of three.
    qkv = (jnp.dot(x_flat, wqkv_ref[...], preferred_element_type=jnp.float32)
           + bqkv_ref[...])                            # (S, 3C)

    wo_t = wo_ref[...]
    y = jnp.zeros((s_len, c), jnp.float32)
    for h in range(num_heads):                         # static unroll (num_heads=4)
        q_h = qkv[:, h * hd:(h + 1) * hd]                      # (S, hd)
        k_h = qkv[:, c + h * hd:c + (h + 1) * hd]              # (S, hd)
        v_h = qkv[:, 2 * c + h * hd:2 * c + (h + 1) * hd]      # (S, hd)
        # scores = q @ k^T  (contract the head dim of both operands)
        s = lax.dot_general(q_h, k_h, (((1,), (1,)), ((), ())),
                            preferred_element_type=jnp.float32) * scale  # (S, S)
        s = s - jnp.max(s, axis=-1, keepdims=True)
        e = jnp.exp(s)
        p = e / jnp.sum(e, axis=-1, keepdims=True)
        o_h = jnp.dot(p, v_h, preferred_element_type=jnp.float32)        # (S, hd)
        # Fold this head's slice of out_proj directly into the f32 accumulator.
        y = y + jnp.dot(o_h, wo_t[h * hd:(h + 1) * hd, :],
                        preferred_element_type=jnp.float32)              # (S, C)

    y = y + bo_ref[...] + x_flat                       # out_proj bias + residual

    # LayerNorm over channels (last dim here), eps = 1e-5 like PyTorch.
    mu = jnp.mean(y, axis=-1, keepdims=True)
    d = y - mu
    var = jnp.mean(d * d, axis=-1, keepdims=True)
    out_sc = d * lax.rsqrt(var + eps) * g_ref[...] + beta_ref[...]       # (S, C)

    o_ref[0] = out_sc.T.astype(o_ref.dtype)            # back to (C, S): lane-dense store


def nonlocal_block(x_nchw, in_proj_w, in_proj_b, out_proj_w, out_proj_b,
                   ln_gamma, ln_beta, *, num_heads=4, eps=1e-5):
    """NonLocalBlock forward.

    x_nchw     : (B, C, H, W)
    in_proj_w  : (3C, C)   in_proj_bias : (3C,)     [PyTorch nn.MultiheadAttention]
    out_proj_w : (C, C)    out_proj_b   : (C,)
    ln_gamma   : (C,)      ln_beta      : (C,)      [PyTorch nn.LayerNorm]
    returns (B, C, H, W)
    """
    B, C, H, W = x_nchw.shape
    assert C % num_heads == 0
    S = H * W

    x_cs = x_nchw.reshape(B, C, S)            # free view, no HBM transpose pass
    wqkv_t = jnp.transpose(in_proj_w)         # (C, 3C)
    wo_t = jnp.transpose(out_proj_w)          # (C, C)
    bqkv = in_proj_b.reshape(1, 3 * C)
    bo = out_proj_b.reshape(1, C)
    g = ln_gamma.reshape(1, C)
    bta = ln_beta.reshape(1, C)

    hd = C // num_heads
    flops = B * (2 * S * C * 3 * C                       # fused qkv projection
                 + num_heads * 4 * S * S * hd            # q@k^T and p@v
                 + 2 * S * C * C)                        # out projection
    transcendentals = B * num_heads * S * S              # softmax exp
    bytes_accessed = 4 * (2 * B * C * S + wqkv_t.size + wo_t.size
                          + bqkv.size + bo.size + g.size + bta.size)

    kernel = functools.partial(_nonlocal_kernel, num_heads=num_heads, eps=eps)

    out_cs = pl.pallas_call(
        kernel,
        out_shape=jax.ShapeDtypeStruct((B, C, S), x_nchw.dtype),
        grid_spec=pltpu.PrefetchScalarGridSpec(
            num_scalar_prefetch=0,
            grid=(B,),
            in_specs=[
                pl.BlockSpec((1, C, S), lambda b: (b, 0, 0)),
                pl.BlockSpec((C, 3 * C), lambda b: (0, 0)),
                pl.BlockSpec((1, 3 * C), lambda b: (0, 0)),
                pl.BlockSpec((C, C), lambda b: (0, 0)),
                pl.BlockSpec((1, C), lambda b: (0, 0)),
                pl.BlockSpec((1, C), lambda b: (0, 0)),
                pl.BlockSpec((1, C), lambda b: (0, 0)),
            ],
            out_specs=pl.BlockSpec((1, C, S), lambda b: (b, 0, 0)),
        ),
        compiler_params=pltpu.CompilerParams(
            dimension_semantics=("parallel",)),
        cost_estimate=pl.CostEstimate(flops=flops,
                                      transcendentals=transcendentals,
                                      bytes_accessed=bytes_accessed),
    )(x_cs, wqkv_t, bqkv, wo_t, bo, g, bta)

    return out_cs.reshape(B, C, H, W)


def _ref_nonlocal(x, in_proj_w, in_proj_b, out_proj_w, out_proj_b,
                  ln_gamma, ln_beta, *, num_heads=4, eps=1e-5):
    """Pure-JAX reference with PyTorch MultiheadAttention + LayerNorm semantics."""
    B, C, H, W = x.shape
    S = H * W
    hd = C // num_heads
    xf = jnp.transpose(x.reshape(B, C, S), (0, 2, 1))            # (B, S, C)
    qkv = xf @ in_proj_w.T + in_proj_b                           # (B, S, 3C)
    q, k, v = qkv[..., :C], qkv[..., C:2 * C], qkv[..., 2 * C:]

    def heads(t):
        return jnp.transpose(t.reshape(B, S, num_heads, hd), (0, 2, 1, 3))

    qh, kh, vh = heads(q), heads(k), heads(v)
    scores = jnp.einsum('bhqd,bhkd->bhqk', qh, kh) / np.sqrt(hd)
    p = jax.nn.softmax(scores, axis=-1)
    o = jnp.einsum('bhqk,bhkd->bhqd', p, vh)
    o = jnp.transpose(o, (0, 2, 1, 3)).reshape(B, S, C)
    o = o @ out_proj_w.T + out_proj_b
    y = o + xf
    mu = y.mean(-1, keepdims=True)
    var = ((y - mu) ** 2).mean(-1, keepdims=True)
    yn = (y - mu) / jnp.sqrt(var + eps) * ln_gamma + ln_beta
    return jnp.transpose(yn, (0, 2, 1)).reshape(B, C, H, W)


if __name__ == "__main__":
    key = jax.random.PRNGKey(0)
    B, C, H, W = 2, 32, 16, 16            # dim=32, num_heads=4 -> head_dim=8
    num_heads = 4

    ks = jax.random.split(key, 7)
    x = jax.random.normal(ks[0], (B, C, H, W), jnp.float32)

    bound = 1.0 / np.sqrt(C)
    in_proj_w = jax.random.uniform(ks[1], (3 * C, C), jnp.float32, -bound, bound)
    in_proj_b = jax.random.uniform(ks[2], (3 * C,), jnp.float32, -bound, bound)
    out_proj_w = jax.random.uniform(ks[3], (C, C), jnp.float32, -bound, bound)
    out_proj_b = jax.random.uniform(ks[4], (C,), jnp.float32, -bound, bound)
    ln_gamma = jax.random.uniform(ks[5], (C,), jnp.float32, 0.5, 1.5)
    ln_beta = jax.random.uniform(ks[6], (C,), jnp.float32, -0.5, 0.5)

    y = jax.block_until_ready(
        nonlocal_block(x, in_proj_w, in_proj_b, out_proj_w, out_proj_b,
                       ln_gamma, ln_beta, num_heads=num_heads))
    assert y.shape == (B, C, H, W), y.shape

    y_ref = _ref_nonlocal(x, in_proj_w, in_proj_b, out_proj_w, out_proj_b,
                          ln_gamma, ln_beta, num_heads=num_heads)
    # Default MXU precision rounds f32 matmul operands; kernel and XLA reference
    # use different op orderings, so allow a small tolerance.
    np.testing.assert_allclose(np.asarray(y), np.asarray(y_ref),
                               atol=2e-2, rtol=2e-2)
    print("KERNEL_OK")
</pallas_src>

<mosaic_0001>
module attributes {stable_mosaic.version = 11 : i64} {
  func.func @_nonlocal_kernel(%arg0: i32, %arg1: memref<1x32x256xf32, #tpu.memory_space<vmem>>, %arg2: memref<32x96xf32, #tpu.memory_space<vmem>>, %arg3: memref<1x96xf32, #tpu.memory_space<vmem>>, %arg4: memref<32x32xf32, #tpu.memory_space<vmem>>, %arg5: memref<1x32xf32, #tpu.memory_space<vmem>>, %arg6: memref<1x32xf32, #tpu.memory_space<vmem>>, %arg7: memref<1x32xf32, #tpu.memory_space<vmem>>, %arg8: memref<1x32x256xf32, #tpu.memory_space<vmem>>) attributes {dimension_semantics = [#tpu.dimension_semantics<parallel>], iteration_bounds = array<i64: 2>, scalar_prefetch = 0 : i64, scratch_operands = 0 : i64, tpu.core_type = #tpu.core_type<tc>, window_params = [{transform_indices = @transform_0, window_bounds = array<i64: 1, 32, 256>}, {pipeline_mode = #tpu.pipeline_mode<synchronous>, transform_indices = @transform_1, window_bounds = array<i64: 32, 96>}, {pipeline_mode = #tpu.pipeline_mode<synchronous>, transform_indices = @transform_2, window_bounds = array<i64: 1, 96>}, {pipeline_mode = #tpu.pipeline_mode<synchronous>, transform_indices = @transform_3, window_bounds = array<i64: 32, 32>}, {pipeline_mode = #tpu.pipeline_mode<synchronous>, transform_indices = @transform_4, window_bounds = array<i64: 1, 32>}, {pipeline_mode = #tpu.pipeline_mode<synchronous>, transform_indices = @transform_5, window_bounds = array<i64: 1, 32>}, {pipeline_mode = #tpu.pipeline_mode<synchronous>, transform_indices = @transform_6, window_bounds = array<i64: 1, 32>}, {transform_indices = @transform_7, window_bounds = array<i64: 1, 32, 256>}]} {
    %c0 = arith.constant 0 : index
    %c0_0 = arith.constant 0 : index
    %c0_1 = arith.constant 0 : index
    %0 = vector.load %arg1[%c0, %c0_0, %c0_1] : memref<1x32x256xf32, #tpu.memory_space<vmem>>, vector<1x32x256xf32>
    %1 = vector.shape_cast %0 : vector<1x32x256xf32> to vector<32x256xf32>
    %2 = tpu.transpose %1, [1, 0] : vector<32x256xf32> -> vector<256x32xf32>
    %c0_2 = arith.constant 0 : index
    %c0_3 = arith.constant 0 : index
    %3 = vector.load %arg2[%c0_2, %c0_3] : memref<32x96xf32, #tpu.memory_space<vmem>>, vector<32x96xf32>
    %cst = arith.constant dense<0.000000e+00> : vector<256x96xf32>
    %4 = tpu.matmul %2, %3, %cst {dimension_numbers = #tpu.dot_dimension_numbers<[1], [0], [0], [1], [0, 0, 1, 1], [], []>} : vector<256x32xf32>, vector<32x96xf32>, vector<256x96xf32> -> vector<256x96xf32>
    %c0_4 = arith.constant 0 : index
    %c0_5 = arith.constant 0 : index
    %5 = vector.load %arg3[%c0_4, %c0_5] : memref<1x96xf32, #tpu.memory_space<vmem>>, vector<1x96xf32>
    %6 = vector.broadcast %5 : vector<1x96xf32> to vector<256x96xf32>
    %7 = arith.addf %4, %6 : vector<256x96xf32>
    %c0_6 = arith.constant 0 : index
    %c0_7 = arith.constant 0 : index
    %8 = vector.load %arg4[%c0_6, %c0_7] : memref<32x32xf32, #tpu.memory_space<vmem>>, vector<32x32xf32>
    %cst_8 = arith.constant 0.000000e+00 : f32
    %9 = vector.broadcast %cst_8 : f32 to vector<256x32xf32>
    %10 = vector.extract_strided_slice %7 {offsets = [0, 0], sizes = [256, 8], strides = [1, 1]} : vector<256x96xf32> to vector<256x8xf32>
    %11 = vector.extract_strided_slice %7 {offsets = [0, 32], sizes = [256, 8], strides = [1, 1]} : vector<256x96xf32> to vector<256x8xf32>
    %12 = vector.extract_strided_slice %7 {offsets = [0, 64], sizes = [256, 8], strides = [1, 1]} : vector<256x96xf32> to vector<256x8xf32>
    %cst_9 = arith.constant dense<0.000000e+00> : vector<256x256xf32>
    %13 = tpu.matmul %10, %11, %cst_9 {dimension_numbers = #tpu.dot_dimension_numbers<[1], [1], [0], [0], [0, 0, 1, 0], [], []>} : vector<256x8xf32>, vector<256x8xf32>, vector<256x256xf32> -> vector<256x256xf32>
    %cst_10 = arith.constant 0.353553385 : f32
    %14 = vector.broadcast %cst_10 : f32 to vector<256x256xf32>
    %15 = arith.mulf %13, %14 : vector<256x256xf32>
    %cst_11 = arith.constant dense<0xFF800000> : vector<256xf32>
    %16 = vector.multi_reduction <maximumf>, %15, %cst_11 [1] : vector<256x256xf32> to vector<256xf32>
    %17 = vector.shape_cast %16 : vector<256xf32> to vector<256x1xf32>
    %18 = vector.broadcast %17 : vector<256x1xf32> to vector<256x256xf32>
    %19 = arith.subf %15, %18 : vector<256x256xf32>
    %20 = math.exp %19 : vector<256x256xf32>
    %cst_12 = arith.constant dense<0.000000e+00> : vector<256xf32>
    %21 = vector.multi_reduction <add>, %20, %cst_12 [1] : vector<256x256xf32> to vector<256xf32>
    %22 = vector.shape_cast %21 : vector<256xf32> to vector<256x1xf32>
    %23 = vector.broadcast %22 : vector<256x1xf32> to vector<256x256xf32>
    %24 = arith.divf %20, %23 : vector<256x256xf32>
    %cst_13 = arith.constant dense<0.000000e+00> : vector<256x8xf32>
    %25 = tpu.matmul %24, %12, %cst_13 {dimension_numbers = #tpu.dot_dimension_numbers<[1], [0], [0], [1], [0, 0, 1, 1], [], []>} : vector<256x256xf32>, vector<256x8xf32>, vector<256x8xf32> -> vector<256x8xf32>
    %26 = vector.extract_strided_slice %8 {offsets = [0, 0], sizes = [8, 32], strides = [1, 1]} : vector<32x32xf32> to vector<8x32xf32>
    %cst_14 = arith.constant dense<0.000000e+00> : vector<256x32xf32>
    %27 = tpu.matmul %25, %26, %cst_14 {dimension_numbers = #tpu.dot_dimension_numbers<[1], [0], [0], [1], [0, 0, 1, 1], [], []>} : vector<256x8xf32>, vector<8x32xf32>, vector<256x32xf32> -> vector<256x32xf32>
    %28 = arith.addf %9, %27 : vector<256x32xf32>
    %29 = vector.extract_strided_slice %7 {offsets = [0, 8], sizes = [256, 8], strides = [1, 1]} : vector<256x96xf32> to vector<256x8xf32>
    %30 = vector.extract_strided_slice %7 {offsets = [0, 40], sizes = [256, 8], strides = [1, 1]} : vector<256x96xf32> to vector<256x8xf32>
    %31 = vector.extract_strided_slice %7 {offsets = [0, 72], sizes = [256, 8], strides = [1, 1]} : vector<256x96xf32> to vector<256x8xf32>
    %cst_15 = arith.constant dense<0.000000e+00> : vector<256x256xf32>
    %32 = tpu.matmul %29, %30, %cst_15 {dimension_numbers = #tpu.dot_dimension_numbers<[1], [1], [0], [0], [0, 0, 1, 0], [], []>} : vector<256x8xf32>, vector<256x8xf32>, vector<256x256xf32> -> vector<256x256xf32>
    %cst_16 = arith.constant 0.353553385 : f32
    %33 = vector.broadcast %cst_16 : f32 to vector<256x256xf32>
    %34 = arith.mulf %32, %33 : vector<256x256xf32>
    %cst_17 = arith.constant dense<0xFF800000> : vector<256xf32>
    %35 = vector.multi_reduction <maximumf>, %34, %cst_17 [1] : vector<256x256xf32> to vector<256xf32>
    %36 = vector.shape_cast %35 : vector<256xf32> to vector<256x1xf32>
    %37 = vector.broadcast %36 : vector<256x1xf32> to vector<256x256xf32>
    %38 = arith.subf %34, %37 : vector<256x256xf32>
    %39 = math.exp %38 : vector<256x256xf32>
    %cst_18 = arith.constant dense<0.000000e+00> : vector<256xf32>
    %40 = vector.multi_reduction <add>, %39, %cst_18 [1] : vector<256x256xf32> to vector<256xf32>
    %41 = vector.shape_cast %40 : vector<256xf32> to vector<256x1xf32>
    %42 = vector.broadcast %41 : vector<256x1xf32> to vector<256x256xf32>
    %43 = arith.divf %39, %42 : vector<256x256xf32>
    %cst_19 = arith.constant dense<0.000000e+00> : vector<256x8xf32>
    %44 = tpu.matmul %43, %31, %cst_19 {dimension_numbers = #tpu.dot_dimension_numbers<[1], [0], [0], [1], [0, 0, 1, 1], [], []>} : vector<256x256xf32>, vector<256x8xf32>, vector<256x8xf32> -> vector<256x8xf32>
    %45 = vector.extract_strided_slice %8 {offsets = [8, 0], sizes = [8, 32], strides = [1, 1]} : vector<32x32xf32> to vector<8x32xf32>
    %cst_20 = arith.constant dense<0.000000e+00> : vector<256x32xf32>
    %46 = tpu.matmul %44, %45, %cst_20 {dimension_numbers = #tpu.dot_dimension_numbers<[1], [0], [0], [1], [0, 0, 1, 1], [], []>} : vector<256x8xf32>, vector<8x32xf32>, vector<256x32xf32> -> vector<256x32xf32>
    %47 = arith.addf %28, %46 : vector<256x32xf32>
    %48 = vector.extract_strided_slice %7 {offsets = [0, 16], sizes = [256, 8], strides = [1, 1]} : vector<256x96xf32> to vector<256x8xf32>
    %49 = vector.extract_strided_slice %7 {offsets = [0, 48], sizes = [256, 8], strides = [1, 1]} : vector<256x96xf32> to vector<256x8xf32>
    %50 = vector.extract_strided_slice %7 {offsets = [0, 80], sizes = [256, 8], strides = [1, 1]} : vector<256x96xf32> to vector<256x8xf32>
    %cst_21 = arith.constant dense<0.000000e+00> : vector<256x256xf32>
    %51 = tpu.matmul %48, %49, %cst_21 {dimension_numbers = #tpu.dot_dimension_numbers<[1], [1], [0], [0], [0, 0, 1, 0], [], []>} : vector<256x8xf32>, vector<256x8xf32>, vector<256x256xf32> -> vector<256x256xf32>
    %cst_22 = arith.constant 0.353553385 : f32
    %52 = vector.broadcast %cst_22 : f32 to vector<256x256xf32>
    %53 = arith.mulf %51, %52 : vector<256x256xf32>
    %cst_23 = arith.constant dense<0xFF800000> : vector<256xf32>
    %54 = vector.multi_reduction <maximumf>, %53, %cst_23 [1] : vector<256x256xf32> to vector<256xf32>
    %55 = vector.shape_cast %54 : vector<256xf32> to vector<256x1xf32>
    %56 = vector.broadcast %55 : vector<256x1xf32> to vector<256x256xf32>
    %57 = arith.subf %53, %56 : vector<256x256xf32>
    %58 = math.exp %57 : vector<256x256xf32>
    %cst_24 = arith.constant dense<0.000000e+00> : vector<256xf32>
    %59 = vector.multi_reduction <add>, %58, %cst_24 [1] : vector<256x256xf32> to vector<256xf32>
    %60 = vector.shape_cast %59 : vector<256xf32> to vector<256x1xf32>
    %61 = vector.broadcast %60 : vector<256x1xf32> to vector<256x256xf32>
    %62 = arith.divf %58, %61 : vector<256x256xf32>
    %cst_25 = arith.constant dense<0.000000e+00> : vector<256x8xf32>
    %63 = tpu.matmul %62, %50, %cst_25 {dimension_numbers = #tpu.dot_dimension_numbers<[1], [0], [0], [1], [0, 0, 1, 1], [], []>} : vector<256x256xf32>, vector<256x8xf32>, vector<256x8xf32> -> vector<256x8xf32>
    %64 = vector.extract_strided_slice %8 {offsets = [16, 0], sizes = [8, 32], strides = [1, 1]} : vector<32x32xf32> to vector<8x32xf32>
    %cst_26 = arith.constant dense<0.000000e+00> : vector<256x32xf32>
    %65 = tpu.matmul %63, %64, %cst_26 {dimension_numbers = #tpu.dot_dimension_numbers<[1], [0], [0], [1], [0, 0, 1, 1], [], []>} : vector<256x8xf32>, vector<8x32xf32>, vector<256x32xf32> -> vector<256x32xf32>
    %66 = arith.addf %47, %65 : vector<256x32xf32>
    %67 = vector.extract_strided_slice %7 {offsets = [0, 24], sizes = [256, 8], strides = [1, 1]} : vector<256x96xf32> to vector<256x8xf32>
    %68 = vector.extract_strided_slice %7 {offsets = [0, 56], sizes = [256, 8], strides = [1, 1]} : vector<256x96xf32> to vector<256x8xf32>
    %69 = vector.extract_strided_slice %7 {offsets = [0, 88], sizes = [256, 8], strides = [1, 1]} : vector<256x96xf32> to vector<256x8xf32>
    %cst_27 = arith.constant dense<0.000000e+00> : vector<256x256xf32>
    %70 = tpu.matmul %67, %68, %cst_27 {dimension_numbers = #tpu.dot_dimension_numbers<[1], [1], [0], [0], [0, 0, 1, 0], [], []>} : vector<256x8xf32>, vector<256x8xf32>, vector<256x256xf32> -> vector<256x256xf32>
    %cst_28 = arith.constant 0.353553385 : f32
    %71 = vector.broadcast %cst_28 : f32 to vector<256x256xf32>
    %72 = arith.mulf %70, %71 : vector<256x256xf32>
    %cst_29 = arith.constant dense<0xFF800000> : vector<256xf32>
    %73 = vector.multi_reduction <maximumf>, %72, %cst_29 [1] : vector<256x256xf32> to vector<256xf32>
    %74 = vector.shape_cast %73 : vector<256xf32> to vector<256x1xf32>
    %75 = vector.broadcast %74 : vector<256x1xf32> to vector<256x256xf32>
    %76 = arith.subf %72, %75 : vector<256x256xf32>
    %77 = math.exp %76 : vector<256x256xf32>
    %cst_30 = arith.constant dense<0.000000e+00> : vector<256xf32>
    %78 = vector.multi_reduction <add>, %77, %cst_30 [1] : vector<256x256xf32> to vector<256xf32>
    %79 = vector.shape_cast %78 : vector<256xf32> to vector<256x1xf32>
    %80 = vector.broadcast %79 : vector<256x1xf32> to vector<256x256xf32>
    %81 = arith.divf %77, %80 : vector<256x256xf32>
    %cst_31 = arith.constant dense<0.000000e+00> : vector<256x8xf32>
    %82 = tpu.matmul %81, %69, %cst_31 {dimension_numbers = #tpu.dot_dimension_numbers<[1], [0], [0], [1], [0, 0, 1, 1], [], []>} : vector<256x256xf32>, vector<256x8xf32>, vector<256x8xf32> -> vector<256x8xf32>
    %83 = vector.extract_strided_slice %8 {offsets = [24, 0], sizes = [8, 32], strides = [1, 1]} : vector<32x32xf32> to vector<8x32xf32>
    %cst_32 = arith.constant dense<0.000000e+00> : vector<256x32xf32>
    %84 = tpu.matmul %82, %83, %cst_32 {dimension_numbers = #tpu.dot_dimension_numbers<[1], [0], [0], [1], [0, 0, 1, 1], [], []>} : vector<256x8xf32>, vector<8x32xf32>, vector<256x32xf32> -> vector<256x32xf32>
    %85 = arith.addf %66, %84 : vector<256x32xf32>
    %c0_33 = arith.constant 0 : index
    %c0_34 = arith.constant 0 : index
    %86 = vector.load %arg5[%c0_33, %c0_34] : memref<1x32xf32, #tpu.memory_space<vmem>>, vector<1x32xf32>
    %87 = vector.broadcast %86 : vector<1x32xf32> to vector<256x32xf32>
    %88 = arith.addf %85, %87 : vector<256x32xf32>
    %89 = arith.addf %88, %2 : vector<256x32xf32>
    %cst_35 = arith.constant dense<0.000000e+00> : vector<256xf32>
    %90 = vector.multi_reduction <add>, %89, %cst_35 [1] : vector<256x32xf32> to vector<256xf32>
    %91 = vector.shape_cast %90 : vector<256xf32> to vector<256x1xf32>
    %cst_36 = arith.constant 3.200000e+01 : f32
    %92 = vector.broadcast %cst_36 : f32 to vector<256x1xf32>
    %93 = arith.divf %91, %92 : vector<256x1xf32>
    %94 = vector.broadcast %93 : vector<256x1xf32> to vector<256x32xf32>
    %95 = arith.subf %89, %94 : vector<256x32xf32>
    %96 = arith.mulf %95, %95 : vector<256x32xf32>
    %cst_37 = arith.constant dense<0.000000e+00> : vector<256xf32>
    %97 = vector.multi_reduction <add>, %96, %cst_37 [1] : vector<256x32xf32> to vector<256xf32>
    %98 = vector.shape_cast %97 : vector<256xf32> to vector<256x1xf32>
    %cst_38 = arith.constant 3.200000e+01 : f32
    %99 = vector.broadcast %cst_38 : f32 to vector<256x1xf32>
    %100 = arith.divf %98, %99 : vector<256x1xf32>
    %cst_39 = arith.constant 9.99999974E-6 : f32
    %101 = vector.broadcast %cst_39 : f32 to vector<256x1xf32>
    %102 = arith.addf %100, %101 : vector<256x1xf32>
    %103 = math.rsqrt %102 : vector<256x1xf32>
    %104 = vector.broadcast %103 : vector<256x1xf32> to vector<256x32xf32>
    %105 = arith.mulf %95, %104 : vector<256x32xf32>
    %c0_40 = arith.constant 0 : index
    %c0_41 = arith.constant 0 : index
    %106 = vector.load %arg6[%c0_40, %c0_41] : memref<1x32xf32, #tpu.memory_space<vmem>>, vector<1x32xf32>
    %107 = vector.broadcast %106 : vector<1x32xf32> to vector<256x32xf32>
    %108 = arith.mulf %105, %107 : vector<256x32xf32>
    %c0_42 = arith.constant 0 : index
    %c0_43 = arith.constant 0 : index
    %109 = vector.load %arg7[%c0_42, %c0_43] : memref<1x32xf32, #tpu.memory_space<vmem>>, vector<1x32xf32>
    %110 = vector.broadcast %109 : vector<1x32xf32> to vector<256x32xf32>
    %111 = arith.addf %108, %110 : vector<256x32xf32>
    %112 = tpu.transpose %111, [1, 0] : vector<256x32xf32> -> vector<32x256xf32>
    %c0_44 = arith.constant 0 : index
    %c0_45 = arith.constant 0 : index
    %c0_46 = arith.constant 0 : index
    %113 = vector.load %arg8[%c0_44, %c0_45, %c0_46] : memref<1x32x256xf32, #tpu.memory_space<vmem>>, vector<1x32x256xf32>
    %114 = vector.shape_cast %113 : vector<1x32x256xf32> to vector<32x256xf32>
    %115 = vector.shape_cast %112 : vector<32x256xf32> to vector<1x32x256xf32>
    tpu.vector_store %arg8[%c0_44, %c0_45, %c0_46], %115 {strides = array<i32>} : memref<1x32x256xf32, #tpu.memory_space<vmem>>, vector<1x32x256xf32>,
    return
  }
  func.func @transform_0(%arg0: i32) -> (i32, i32, i32) {
    %c0_i32 = arith.constant 0 : i32
    %c0_i32_0 = arith.constant 0 : i32
    %c0_i32_1 = arith.constant 0 : i32
    return %arg0, %c0_i32, %c0_i32_0 : i32, i32, i32
  }
  func.func @transform_1(%arg0: i32) -> (i32, i32) {
    %c0_i32 = arith.constant 0 : i32
    %c0_i32_0 = arith.constant 0 : i32
    %c0_i32_1 = arith.constant 0 : i32
    return %c0_i32, %c0_i32_0 : i32, i32
  }
  func.func @transform_2(%arg0: i32) -> (i32, i32) {
    %c0_i32 = arith.constant 0 : i32
    %c0_i32_0 = arith.constant 0 : i32
    %c0_i32_1 = arith.constant 0 : i32
    return %c0_i32, %c0_i32_0 : i32, i32
  }
  func.func @transform_3(%arg0: i32) -> (i32, i32) {
    %c0_i32 = arith.constant 0 : i32
    %c0_i32_0 = arith.constant 0 : i32
    %c0_i32_1 = arith.constant 0 : i32
    return %c0_i32, %c0_i32_0 : i32, i32
  }
  func.func @transform_4(%arg0: i32) -> (i32, i32) {
    %c0_i32 = arith.constant 0 : i32
    %c0_i32_0 = arith.constant 0 : i32
    %c0_i32_1 = arith.constant 0 : i32
    return %c0_i32, %c0_i32_0 : i32, i32
  }
  func.func @transform_5(%arg0: i32) -> (i32, i32) {
    %c0_i32 = arith.constant 0 : i32
    %c0_i32_0 = arith.constant 0 : i32
    %c0_i32_1 = arith.constant 0 : i32
    return %c0_i32, %c0_i32_0 : i32, i32
  }
  func.func @transform_6(%arg0: i32) -> (i32, i32) {
    %c0_i32 = arith.constant 0 : i32
    %c0_i32_0 = arith.constant 0 : i32
    %c0_i32_1 = arith.constant 0 : i32
    return %c0_i32, %c0_i32_0 : i32, i32
  }
  func.func @transform_7(%arg0: i32) -> (i32, i32, i32) {
    %c0_i32 = arith.constant 0 : i32
    %c0_i32_0 = arith.constant 0 : i32
    %c0_i32_1 = arith.constant 0 : i32
    return %arg0, %c0_i32, %c0_i32_0 : i32, i32, i32
  }
}

</mosaic_0001>

<llo_original>
// kernel: tpu_custom_call.1
$region0: #{tpu_custom_call.1}
  #allocation0 [shape = 'u32[]', space=smem, size = 0x4, offset = 0x4, fixed_abs, tag = 'smem constant byte address 0x4 - core index']
  #allocation1 [shape = 'u32[72,128]{1,0:T(1,128)}', space=vmem, size = 0x9000, scoped, tag = 'internal scratch']
  %s0 = inlined_call_operand.hbm [shape: f32[2,32,256], index: 0, kind: input, shape index: {}]
  %s1 = inlined_call_operand.hbm [shape: f32[32,96], index: 1, kind: input, shape index: {}]
  %s2 = inlined_call_operand.vmem [shape: f32[1,96], index: 2, kind: input, shape index: {}]
  %s3 = inlined_call_operand.hbm [shape: f32[32,32], index: 3, kind: input, shape index: {}]
  %s4 = inlined_call_operand.vmem [shape: f32[1,32], index: 4, kind: input, shape index: {}]
  %s5 = inlined_call_operand.vmem [shape: f32[1,32], index: 5, kind: input, shape index: {}]
  %s6 = inlined_call_operand.vmem [shape: f32[1,32], index: 6, kind: input, shape index: {}]
  %s7 = inlined_call_operand.hbm [shape: f32[2,32,256], index: 7, kind: output, shape index: {}]
  %s8 = sld [smem:[#allocation0]]
  $region73: #{tpu_custom_call.1} parent=0
    _
  %s10 = ssub.s32 1, %s8
  %s11 = scalar_select 0, %s10, %s8
  $region1: #{tpu_custom_call.1} parent=0
    #allocation2 [shape = 'u8[65536]{0}', space=vmem, size = 0x10000, scoped, tag = 'input window, operand 0']
    #allocation3 [shape = 's32[2]{0}', space=sflag, size = 0x8, scoped, tag = 'scoped memory for tpu_custom_call.1']
    #allocation4 [shape = 's32[2]{0}', space=sflag, size = 0x8, scoped, tag = 'scoped memory for tpu_custom_call.1']
    #allocation5 [shape = 'u8[16384]{0}', space=vmem, size = 0x4000, scoped, tag = 'input window, operand 1, single buffered']
    #allocation6 [shape = 's32[1]{0}', space=sflag, size = 0x4, scoped, tag = 'scoped memory for tpu_custom_call.1']
    #allocation7 [shape = 'u8[16384]{0}', space=vmem, size = 0x4000, scoped, tag = 'input window, operand 3, single buffered']
    #allocation8 [shape = 'u8[65536]{0}', space=vmem, size = 0x10000, scoped, tag = 'output window, operand 0']
    %12 = vsyncpa [#allocation3], 0
    %s13 = scalar_lea.sflag [#allocation3], 1
    %14 = vsyncpa %s13, 0
    %15 = vsyncpa [#allocation6], 0
    %16 = vsyncpa [#allocation4], 0
    %s17 = scalar_lea.sflag [#allocation4], 1
    %18 = vsyncpa %s17, 0
    loop: start=0, step=1, limit=4
    $region2: #{tpu_custom_call.1} parent=1 // loop_pre_header
      _
    $region3: #{tpu_custom_call.1} parent=1 // loop_header
      %s20 = sphi 0, %s24
      %p21 = scmp.ge.s32.totalorder %s20, 4
      %s30 = sphi 0, %s32
      %s33 = sphi 0, %s30
      %s34 = sphi 0, %s33
      %s50 = sphi 0, %s34
      %s54 = sphi 0, %s54
      %s56 = sphi 0, %s54
      %s57 = sphi 0, %s56
      %s71 = sphi 0, %s57
      %s75 = sphi 0, %s75
      %s77 = sphi 0, %s75
      %s78 = sphi 0, %s77
      %s92 = sphi 0, %s78
      %s96 = sphi 0, %s96
      %s98 = sphi 0, %s96
      %s99 = sphi 0, %s98
      %s113 = sphi 0, %s99
      %s117 = sphi 0, %s117
      %s119 = sphi 0, %s117
      %s120 = sphi 0, %s119
      %s134 = sphi 0, %s120
      %s138 = sphi 0, %s138
      %s140 = sphi 0, %s138
      %s141 = sphi 0, %s140
      %s155 = sphi 0, %s141
      %s159 = sphi 0, %s159
      %s161 = sphi 0, %s159
      %s162 = sphi 0, %s161
      %s176 = sphi 0, %s162
      %s182 = sphi 0, %s184
      %s185 = sphi 0, %s182
      %s186 = sphi 0, %s185
      %s202 = sphi 0, %s186
    $region4: #{tpu_custom_call.1} parent=1 // loop_header_branch
      %23 = sbr.rel (%p21) target = $region8
    $region5: #{tpu_custom_call.1} parent=1 // loop_body
      %s25 = ssub.s32 %s20, 1
      %s26 = ssub.s32 %s20, 2
      %s27 = sadd.s32 %s20, 1
      %s28 = ssub.s32 %s20, %s27
      %p29 = scmp.eq.s32.totalorder %s28, 0
      %s31 = sadd.s32 %s30, 1
      %s32 = scalar_select %p29, %s30, %s31
      %p35 = pneg %p29
      %p36 = scmp.eq.s32.totalorder %s20, 1
      %p37 = por %p35, %p36
      %p38 = scmp.ne.s32.totalorder %s30, %s33
      %p39 = scmp.eq.s32.totalorder %s20, 0
      %p40 = por %p38, %p39
      %p41 = scmp.ne.s32.totalorder %s30, %s33
      %p42 = scmp.eq.s32.totalorder %s25, 1
      %p43 = por %p41, %p42
      %p44 = scmp.ne.s32.totalorder %s33, %s34
      %p45 = scmp.eq.s32.totalorder %s25, 0
      %p46 = por %p44, %p45
      %p47 = scmp.ne.s32.totalorder %s33, %s34
      %p48 = scmp.eq.s32.totalorder %s26, 1
      %p49 = por %p47, %p48
      %p51 = scmp.ne.s32.totalorder %s34, %s50
      %p52 = scmp.eq.s32.totalorder %s26, 0
      %p53 = por %p51, %p52
      %s55 = sadd.s32 %s54, 1
      %p58 = scmp.eq.s32.totalorder %s20, 1
      %p59 = scmp.ne.s32.totalorder %s54, %s56
      %p60 = scmp.eq.s32.totalorder %s20, 0
      %p61 = por %p59, %p60
      %p62 = scmp.ne.s32.totalorder %s54, %s56
      %p63 = scmp.eq.s32.totalorder %s25, 1
      %p64 = por %p62, %p63
      %p65 = scmp.ne.s32.totalorder %s56, %s57
      %p66 = scmp.eq.s32.totalorder %s25, 0
      %p67 = por %p65, %p66
      %p68 = scmp.ne.s32.totalorder %s56, %s57
      %p69 = scmp.eq.s32.totalorder %s26, 1
      %p70 = por %p68, %p69
      %p72 = scmp.ne.s32.totalorder %s57, %s71
      %p73 = scmp.eq.s32.totalorder %s26, 0
      %p74 = por %p72, %p73
      %s76 = sadd.s32 %s75, 1
      %p79 = scmp.eq.s32.totalorder %s20, 1
      %p80 = scmp.ne.s32.totalorder %s75, %s77
      %p81 = scmp.eq.s32.totalorder %s20, 0
      %p82 = por %p80, %p81
      %p83 = scmp.ne.s32.totalorder %s75, %s77
      %p84 = scmp.eq.s32.totalorder %s25, 1
      %p85 = por %p83, %p84
      %p86 = scmp.ne.s32.totalorder %s77, %s78
      %p87 = scmp.eq.s32.totalorder %s25, 0
      %p88 = por %p86, %p87
      %p89 = scmp.ne.s32.totalorder %s77, %s78
      %p90 = scmp.eq.s32.totalorder %s26, 1
      %p91 = por %p89, %p90
      %p93 = scmp.ne.s32.totalorder %s78, %s92
      %p94 = scmp.eq.s32.totalorder %s26, 0
      %p95 = por %p93, %p94
      %s97 = sadd.s32 %s96, 1
      %p100 = scmp.eq.s32.totalorder %s20, 1
      %p101 = scmp.ne.s32.totalorder %s96, %s98
      %p102 = scmp.eq.s32.totalorder %s20, 0
      %p103 = por %p101, %p102
      %p104 = scmp.ne.s32.totalorder %s96, %s98
      %p105 = scmp.eq.s32.totalorder %s25, 1
      %p106 = por %p104, %p105
      %p107 = scmp.ne.s32.totalorder %s98, %s99
      %p108 = scmp.eq.s32.totalorder %s25, 0
      %p109 = por %p107, %p108
      %p110 = scmp.ne.s32.totalorder %s98, %s99
      %p111 = scmp.eq.s32.totalorder %s26, 1
      %p112 = por %p110, %p111
      %p114 = scmp.ne.s32.totalorder %s99, %s113
      %p115 = scmp.eq.s32.totalorder %s26, 0
      %p116 = por %p114, %p115
      %s118 = sadd.s32 %s117, 1
      %p121 = scmp.eq.s32.totalorder %s20, 1
      %p122 = scmp.ne.s32.totalorder %s117, %s119
      %p123 = scmp.eq.s32.totalorder %s20, 0
      %p124 = por %p122, %p123
      %p125 = scmp.ne.s32.totalorder %s117, %s119
      %p126 = scmp.eq.s32.totalorder %s25, 1
      %p127 = por %p125, %p126
      %p128 = scmp.ne.s32.totalorder %s119, %s120
      %p129 = scmp.eq.s32.totalorder %s25, 0
      %p130 = por %p128, %p129
      %p131 = scmp.ne.s32.totalorder %s119, %s120
      %p132 = scmp.eq.s32.totalorder %s26, 1
      %p133 = por %p131, %p132
      %p135 = scmp.ne.s32.totalorder %s120, %s134
      %p136 = scmp.eq.s32.totalorder %s26, 0
      %p137 = por %p135, %p136
      %s139 = sadd.s32 %s138, 1
      %p142 = scmp.eq.s32.totalorder %s20, 1
      %p143 = scmp.ne.s32.totalorder %s138, %s140
      %p144 = scmp.eq.s32.totalorder %s20, 0
      %p145 = por %p143, %p144
      %p146 = scmp.ne.s32.totalorder %s138, %s140
      %p147 = scmp.eq.s32.totalorder %s25, 1
      %p148 = por %p146, %p147
      %p149 = scmp.ne.s32.totalorder %s140, %s141
      %p150 = scmp.eq.s32.totalorder %s25, 0
      %p151 = por %p149, %p150
      %p152 = scmp.ne.s32.totalorder %s140, %s141
      %p153 = scmp.eq.s32.totalorder %s26, 1
      %p154 = por %p152, %p153
      %p156 = scmp.ne.s32.totalorder %s141, %s155
      %p157 = scmp.eq.s32.totalorder %s26, 0
      %p158 = por %p156, %p157
      %s160 = sadd.s32 %s159, 1
      %p163 = scmp.eq.s32.totalorder %s20, 1
      %p164 = scmp.ne.s32.totalorder %s159, %s161
      %p165 = scmp.eq.s32.totalorder %s20, 0
      %p166 = por %p164, %p165
      %p167 = scmp.ne.s32.totalorder %s159, %s161
      %p168 = scmp.eq.s32.totalorder %s25, 1
      %p169 = por %p167, %p168
      %p170 = scmp.ne.s32.totalorder %s161, %s162
      %p171 = scmp.eq.s32.totalorder %s25, 0
      %p172 = por %p170, %p171
      %p173 = scmp.ne.s32.totalorder %s161, %s162
      %p174 = scmp.eq.s32.totalorder %s26, 1
      %p175 = por %p173, %p174
      %p177 = scmp.ne.s32.totalorder %s162, %s176
      %p178 = scmp.eq.s32.totalorder %s26, 0
      %p179 = por %p177, %p178
      %s180 = ssub.s32 %s20, %s27
      %p181 = scmp.eq.s32.totalorder %s180, 0
      %s183 = sadd.s32 %s182, 1
      %s184 = scalar_select %p181, %s182, %s183
      %p187 = pneg %p181
      %p188 = scmp.eq.s32.totalorder %s20, 1
      %p189 = por %p187, %p188
      %p190 = scmp.ne.s32.totalorder %s182, %s185
      %p191 = scmp.eq.s32.totalorder %s20, 0
      %p192 = por %p190, %p191
      %p193 = scmp.ne.s32.totalorder %s182, %s185
      %p194 = scmp.eq.s32.totalorder %s25, 1
      %p195 = por %p193, %p194
      %p196 = scmp.ne.s32.totalorder %s185, %s186
      %p197 = scmp.eq.s32.totalorder %s25, 0
      %p198 = por %p196, %p197
      %p199 = scmp.ne.s32.totalorder %s185, %s186
      %p200 = scmp.eq.s32.totalorder %s26, 1
      %p201 = por %p199, %p200
      %p203 = scmp.ne.s32.totalorder %s186, %s202
      %p204 = scmp.eq.s32.totalorder %s26, 0
      %p205 = por %p203, %p204
      %p206 = scmp.le.s32.totalorder 1, %s20
      %p207 = scmp.lt.s32.totalorder %s20, 3
      %p208 = pnand %p206, %p207
      %p209 = pneg %p208
      // Predicated region
      $region9: #{tpu_custom_call.1} parent=5 // pred_check
        _
      $region10: #{tpu_custom_call.1} parent=5 // pred_check_branch
        %211 = sbr.rel (%p208) target = $region12
      $region11: #{tpu_custom_call.1} parent=5 // pred_region
        %s212 = ssub.s32 %s20, 1
        // Predicated region
        $region13: #{tpu_custom_call.1} parent=11 // pred_check
          %p213 = pneg %p67
        $region14: #{tpu_custom_call.1} parent=11 // pred_check_branch
          %215 = sbr.rel (%p213) target = $region16
        $region15: #{tpu_custom_call.1} parent=11 // pred_region
          %217 = vsyncadd [#allocation6], 0
          %s218 = sshll.u32 %s1, 4
          %s219 = int_to_ptr.hbm [resolvable:$true] %s218
          %s220 = sshll.u32 [#allocation5], 4
          %s221 = int_to_ptr.vmem [resolvable:$true] %s220
          %226 = dma.hbm_to_vmem [thread:$0]  %s219, 512, %s221, [#allocation6], 128, 128, 8
        $region16: #{tpu_custom_call.1} parent=11 // pred_fallthru
          _
        // Predicated region
        $region17: #{tpu_custom_call.1} parent=11 // pred_check
          %p227 = pneg %p88
        $region18: #{tpu_custom_call.1} parent=11 // pred_check_branch
          %229 = sbr.rel (%p227) target = $region20
        $region19: #{tpu_custom_call.1} parent=11 // pred_region
          _
        $region20: #{tpu_custom_call.1} parent=11 // pred_fallthru
          _
        // Predicated region
        $region21: #{tpu_custom_call.1} parent=11 // pred_check
          %p230 = pneg %p109
        $region22: #{tpu_custom_call.1} parent=11 // pred_check_branch
          %232 = sbr.rel (%p230) target = $region24
        $region23: #{tpu_custom_call.1} parent=11 // pred_region
          %234 = vsyncadd [#allocation6], 0
          %s235 = sshll.u32 %s3, 4
          %s236 = int_to_ptr.hbm [resolvable:$true] %s235
          %s237 = sshll.u32 [#allocation7], 4
          %s238 = int_to_ptr.vmem [resolvable:$true] %s237
          %243 = dma.hbm_to_vmem [thread:$0]  %s236, 512, %s238, [#allocation6], 128, 128, 8
        $region24: #{tpu_custom_call.1} parent=11 // pred_fallthru
          _
        // Predicated region
        $region25: #{tpu_custom_call.1} parent=11 // pred_check
          %p244 = pneg %p130
        $region26: #{tpu_custom_call.1} parent=11 // pred_check_branch
          %246 = sbr.rel (%p244) target = $region28
        $region27: #{tpu_custom_call.1} parent=11 // pred_region
          _
        $region28: #{tpu_custom_call.1} parent=11 // pred_fallthru
          _
        // Predicated region
        $region29: #{tpu_custom_call.1} parent=11 // pred_check
          %p247 = pneg %p151
        $region30: #{tpu_custom_call.1} parent=11 // pred_check_branch
          %249 = sbr.rel (%p247) target = $region32
        $region31: #{tpu_custom_call.1} parent=11 // pred_region
          _
        $region32: #{tpu_custom_call.1} parent=11 // pred_fallthru
          _
        // Predicated region
        $region33: #{tpu_custom_call.1} parent=11 // pred_check
          %p250 = pneg %p172
        $region34: #{tpu_custom_call.1} parent=11 // pred_check_branch
          %252 = sbr.rel (%p250) target = $region36
        $region35: #{tpu_custom_call.1} parent=11 // pred_region
          _
        $region36: #{tpu_custom_call.1} parent=11 // pred_fallthru
          _
      $region12: #{tpu_custom_call.1} parent=5 // pred_fallthru
        _
      %p253 = scmp.lt.s32.totalorder %s20, 2
      // Predicated region
      $region37: #{tpu_custom_call.1} parent=5 // pred_check
        %p254 = pneg %p253
      $region38: #{tpu_custom_call.1} parent=5 // pred_check_branch
        %256 = sbr.rel (%p254) target = $region40
      $region39: #{tpu_custom_call.1} parent=5 // pred_region
        // Predicated region
        $region41: #{tpu_custom_call.1} parent=39 // pred_check
          %p257 = pneg %p40
        $region42: #{tpu_custom_call.1} parent=39 // pred_check_branch
          %259 = sbr.rel (%p257) target = $region44
        $region43: #{tpu_custom_call.1} parent=39 // pred_region
          %s260 = sand.u32 %s30, 1
          %s261 = scalar_lea.sflag [#allocation3], %s260
          %s262 = sand.u32 %s30, 1
          %s263 = smul.addr %s262, 64
          %s264 = scalar_lea.vmem [#allocation2], %s263
          %266 = vsyncadd %s261, 0
          %s267 = smul.addr %s20, 8
          %s268 = smul.addr %s267, 8
          %s269 = scalar_lea.hbm %s0, %s268
          %s270 = sshll.u32 %s269, 4
          %s271 = int_to_ptr.hbm [resolvable:$true] %s270
          %s272 = sshll.u32 %s264, 4
          %s273 = int_to_ptr.vmem [resolvable:$true] %s272
          %278 = dma.hbm_to_vmem [thread:$0]  %s271, 1024, %s273, %s261, 256, 256, 16
        $region44: #{tpu_custom_call.1} parent=39 // pred_fallthru
          _
      $region40: #{tpu_custom_call.1} parent=5 // pred_fallthru
        _
      %p279 = scmp.le.s32.totalorder 1, %s20
      %p280 = scmp.lt.s32.totalorder %s20, 3
      %p281 = pnand %p279, %p280
      %p282 = pneg %p281
      // Predicated region
      $region45: #{tpu_custom_call.1} parent=5 // pred_check
        _
      $region46: #{tpu_custom_call.1} parent=5 // pred_check_branch
        %284 = sbr.rel (%p281) target = $region48
      $region47: #{tpu_custom_call.1} parent=5 // pred_region
        %s285 = ssub.s32 %s20, 1
        %s286 = sand.u32 %s33, 1
        %s287 = scalar_lea.sflag [#allocation3], %s286
        %s288 = sand.u32 %s33, 1
        %s289 = smul.addr %s288, 64
        %s290 = scalar_lea.vmem [#allocation2], %s289
        // Predicated region
        $region49: #{tpu_custom_call.1} parent=47 // pred_check
          %p291 = pneg %p46
        $region50: #{tpu_custom_call.1} parent=47 // pred_check_branch
          %293 = sbr.rel (%p291) target = $region52
        $region51: #{tpu_custom_call.1} parent=47 // pred_region
          %295 = dma.done %s287, 1024
        $region52: #{tpu_custom_call.1} parent=47 // pred_fallthru
          _
        // Predicated region
        $region53: #{tpu_custom_call.1} parent=47 // pred_check
          %p296 = pneg %p67
        $region54: #{tpu_custom_call.1} parent=47 // pred_check_branch
          %298 = sbr.rel (%p296) target = $region56
        $region55: #{tpu_custom_call.1} parent=47 // pred_region
          %300 = dma.done [#allocation6], 512
        $region56: #{tpu_custom_call.1} parent=47 // pred_fallthru
          _
        // Predicated region
        $region57: #{tpu_custom_call.1} parent=47 // pred_check
          %p301 = pneg %p109
        $region58: #{tpu_custom_call.1} parent=47 // pred_check_branch
          %303 = sbr.rel (%p301) target = $region60
        $region59: #{tpu_custom_call.1} parent=47 // pred_region
          %305 = dma.done [#allocation6], 512
        $region60: #{tpu_custom_call.1} parent=47 // pred_fallthru
          _
        %s306 = sand.u32 %s33, 1
        %s307 = scalar_lea.sflag [#allocation3], %s306
        %s308 = sand.u32 %s33, 1
        %s309 = smul.addr %s308, 64
        %s310 = scalar_lea.vmem [#allocation2], %s309
        %p311 = pneg %p46
        %p312 = pneg %p43
        %p313 = pneg %p67
        %p314 = pneg %p64
        %p315 = pneg %p88
        %p316 = pneg %p85
        %p317 = pneg %p109
        %p318 = pneg %p106
        %p319 = pneg %p130
        %p320 = pneg %p127
        %p321 = pneg %p151
        %p322 = pneg %p148
        %p323 = pneg %p172
        %p324 = pneg %p169
        %p325 = pneg %p198
        %p326 = pneg %p195
        %s327 = sand.u32 %s185, 1
        %s328 = scalar_lea.sflag [#allocation4], %s327
        %s329 = sand.u32 %s185, 1
        %s330 = smul.addr %s329, 64
        %s331 = scalar_lea.vmem [#allocation8], %s330
        %v332 = vld [vmem:[%s290] sm:$0xff]
        %v333 = vld [vmem:[%s290 + $0x8] sm:$0xff]
        %v334 = vld [vmem:[%s290 + $0x10] sm:$0xff]
        %v335 = vld [vmem:[%s290 + $0x18] sm:$0xff]
        %v336 = vld [vmem:[%s290 + $0x20] sm:$0xff]
        %v337 = vld [vmem:[%s290 + $0x28] sm:$0xff]
        %v338 = vld [vmem:[%s290 + $0x30] sm:$0xff]
        %v339 = vld [vmem:[%s290 + $0x38] sm:$0xff]
        %340 = vxpose.xlu0.b32.start [1/16] %v332, 128
        %341 = vxpose.xlu0.b32.cont [2/16] %v334, 128
        %342 = vxpose.xlu0.b32.cont [3/16] %v336, 128
        %343 = vxpose.xlu0.b32.cont [4/16] %v338, 128
        %344 = vxpose.xlu0.b32.cont [5/16] 0.0, 128
        %345 = vxpose.xlu0.b32.cont [6/16] 0.0, 128
        %346 = vxpose.xlu0.b32.cont [7/16] 0.0, 128
        %347 = vxpose.xlu0.b32.cont [8/16] 0.0, 128
        %348 = vxpose.xlu0.b32.cont [9/16] 0.0, 128
        %349 = vxpose.xlu0.b32.cont [10/16] 0.0, 128
        %350 = vxpose.xlu0.b32.cont [11/16] 0.0, 128
        %351 = vxpose.xlu0.b32.cont [12/16] 0.0, 128
        %352 = vxpose.xlu0.b32.cont [13/16] 0.0, 128
        %353 = vxpose.xlu0.b32.cont [14/16] 0.0, 128
        %354 = vxpose.xlu0.b32.cont [15/16] 0.0, 128
        %355 = vxpose.xlu0.b32.end [16/16] 0.0, 128
        %v356 = vpop.trf.xlu0
        %v357 = vpop.trf.xlu0
        %v358 = vpop.trf.xlu0
        %v359 = vpop.trf.xlu0
        %v360 = vpop.trf.xlu0
        %v361 = vpop.trf.xlu0
        %v362 = vpop.trf.xlu0
        %v363 = vpop.trf.xlu0
        %v364 = vpop.trf.xlu0
        %v365 = vpop.trf.xlu0
        %v366 = vpop.trf.xlu0
        %v367 = vpop.trf.xlu0
        %v368 = vpop.trf.xlu0
        %v369 = vpop.trf.xlu0
        %v370 = vpop.trf.xlu0
        %v371 = vpop.trf.xlu0
        %372 = vxpose.xlu0.b32.start [1/16] %v333, 128
        %373 = vxpose.xlu0.b32.cont [2/16] %v335, 128
        %374 = vxpose.xlu0.b32.cont [3/16] %v337, 128
        %375 = vxpose.xlu0.b32.cont [4/16] %v339, 128
        %376 = vxpose.xlu0.b32.cont [5/16] 0.0, 128
        %377 = vxpose.xlu0.b32.cont [6/16] 0.0, 128
        %378 = vxpose.xlu0.b32.cont [7/16] 0.0, 128
        %379 = vxpose.xlu0.b32.cont [8/16] 0.0, 128
        %380 = vxpose.xlu0.b32.cont [9/16] 0.0, 128
        %381 = vxpose.xlu0.b32.cont [10/16] 0.0, 128
        %382 = vxpose.xlu0.b32.cont [11/16] 0.0, 128
        %383 = vxpose.xlu0.b32.cont [12/16] 0.0, 128
        %384 = vxpose.xlu0.b32.cont [13/16] 0.0, 128
        %385 = vxpose.xlu0.b32.cont [14/16] 0.0, 128
        %386 = vxpose.xlu0.b32.cont [15/16] 0.0, 128
        %387 = vxpose.xlu0.b32.end [16/16] 0.0, 128
        %v388 = vpop.trf.xlu0
        %v389 = vpop.trf.xlu0
        %v390 = vpop.trf.xlu0
        %v391 = vpop.trf.xlu0
        %v392 = vpop.trf.xlu0
        %v393 = vpop.trf.xlu0
        %v394 = vpop.trf.xlu0
        %v395 = vpop.trf.xlu0
        %v396 = vpop.trf.xlu0
        %v397 = vpop.trf.xlu0
        %v398 = vpop.trf.xlu0
        %v399 = vpop.trf.xlu0
        %v400 = vpop.trf.xlu0
        %v401 = vpop.trf.xlu0
        %v402 = vpop.trf.xlu0
        %v403 = vpop.trf.xlu0
        %v404 = vld [vmem:[#allocation5] sm:$0xff]
        %v405 = vld [vmem:[#allocation5 + $0x8] sm:$0xff]
        %v406 = vld [vmem:[#allocation5 + $0x10] sm:$0xff]
        %v407 = vld [vmem:[#allocation5 + $0x18] sm:$0xff]
        %v408 = vld [vmem:[%s2] sm:$0x1]
        %v410 = vperm.slane %v408, 0
        %vm412 = vcmask 261120
        %v414 = vsel %vm412, %v356, 0
        %v417 = vsel %vm412, %v357, 0
        %v420 = vsel %vm412, %v358, 0
        %v423 = vsel %vm412, %v359, 0
        %v426 = vsel %vm412, %v360, 0
        %v429 = vsel %vm412, %v361, 0
        %v432 = vsel %vm412, %v362, 0
        %v435 = vsel %vm412, %v363, 0
        %v438 = vsel %vm412, %v364, 0
        %v441 = vsel %vm412, %v365, 0
        %v444 = vsel %vm412, %v366, 0
        %v447 = vsel %vm412, %v367, 0
        %v450 = vsel %vm412, %v368, 0
        %v453 = vsel %vm412, %v369, 0
        %v456 = vsel %vm412, %v370, 0
        %v459 = vsel %vm412, %v371, 0
        %v462 = vsel %vm412, %v388, 0
        %v465 = vsel %vm412, %v389, 0
        %v468 = vsel %vm412, %v390, 0
        %v471 = vsel %vm412, %v391, 0
        %v474 = vsel %vm412, %v392, 0
        %v477 = vsel %vm412, %v393, 0
        %v480 = vsel %vm412, %v394, 0
        %v483 = vsel %vm412, %v395, 0
        %v486 = vsel %vm412, %v396, 0
        %v489 = vsel %vm412, %v397, 0
        %v492 = vsel %vm412, %v398, 0
        %v495 = vsel %vm412, %v399, 0
        %v498 = vsel %vm412, %v400, 0
        %v501 = vsel %vm412, %v401, 0
        %v504 = vsel %vm412, %v402, 0
        %v507 = vsel %vm412, %v403, 0
        %509 = vmatpush.msra.mxu0 0.0
        %510 = vmatpush.msra.mxu0 0.0
        %511 = vmatpush.msra.mxu0 0.0
        %512 = vmatpush.msra.mxu0 0.0
        %513 = vmatpush.msra.mxu0 0.0
        %514 = vmatpush.msra.mxu0 0.0
        %515 = vmatpush.msra.mxu0 0.0
        %516 = vmatpush.msra.mxu0 0.0
        %517 = vmatpush.msra.mxu0 0.0
        %518 = vmatpush.msra.mxu0 0.0
        %519 = vmatpush.msra.mxu0 0.0
        %520 = vmatpush.msra.mxu0 0.0
        %521 = vmatpush.msra.mxu0 %v407
        %522 = vmatpush.msra.mxu0 %v406
        %523 = vmatpush.msra.mxu0 %v405
        %524 = vmatpush.msra.mxu0 %v404
        %525 = vmatmul.f32.gmra.mxu0 %v414
        %v526 = vpop.f32.mrf.mxu0
        %v527 = vadd.f32 %v410, %v526
        %528 = vmatmul.f32.gmra.mxu0 %v417
        %v529 = vpop.f32.mrf.mxu0
        %v530 = vadd.f32 %v410, %v529
        %531 = vmatmul.f32.gmra.mxu0 %v420
        %v532 = vpop.f32.mrf.mxu0
        %v533 = vadd.f32 %v410, %v532
        %534 = vmatmul.f32.gmra.mxu0 %v423
        %v535 = vpop.f32.mrf.mxu0
        %v536 = vadd.f32 %v410, %v535
        %537 = vmatmul.f32.gmra.mxu0 %v426
        %v538 = vpop.f32.mrf.mxu0
        %v539 = vadd.f32 %v410, %v538
        %540 = vmatmul.f32.gmra.mxu0 %v429
        %v541 = vpop.f32.mrf.mxu0
        %v542 = vadd.f32 %v410, %v541
        %543 = vmatmul.f32.gmra.mxu0 %v432
        %v544 = vpop.f32.mrf.mxu0
        %v545 = vadd.f32 %v410, %v544
        %546 = vmatmul.f32.gmra.mxu0 %v435
        %v547 = vpop.f32.mrf.mxu0
        %v548 = vadd.f32 %v410, %v547
        %549 = vmatmul.f32.gmra.mxu0 %v438
        %v550 = vpop.f32.mrf.mxu0
        %v551 = vadd.f32 %v410, %v550
        %552 = vmatmul.f32.gmra.mxu0 %v441
        %v553 = vpop.f32.mrf.mxu0
        %v554 = vadd.f32 %v410, %v553
        %555 = vmatmul.f32.gmra.mxu0 %v444
        %v556 = vpop.f32.mrf.mxu0
        %v557 = vadd.f32 %v410, %v556
        %558 = vmatmul.f32.gmra.mxu0 %v447
        %v559 = vpop.f32.mrf.mxu0
        %v560 = vadd.f32 %v410, %v559
        %561 = vmatmul.f32.gmra.mxu0 %v450
        %v562 = vpop.f32.mrf.mxu0
        %v563 = vadd.f32 %v410, %v562
        %564 = vmatmul.f32.gmra.mxu0 %v453
        %v565 = vpop.f32.mrf.mxu0
        %v566 = vadd.f32 %v410, %v565
        %567 = vmatmul.f32.gmra.mxu0 %v456
        %v568 = vpop.f32.mrf.mxu0
        %v569 = vadd.f32 %v410, %v568
        %570 = vmatmul.f32.gmra.mxu0 %v459
        %v571 = vpop.f32.mrf.mxu0
        %v572 = vadd.f32 %v410, %v571
        %573 = vmatmul.f32.gmra.mxu0 %v462
        %v574 = vpop.f32.mrf.mxu0
        %v575 = vadd.f32 %v410, %v574
        %576 = vmatmul.f32.gmra.mxu0 %v465
        %v577 = vpop.f32.mrf.mxu0
        %v578 = vadd.f32 %v410, %v577
        %579 = vmatmul.f32.gmra.mxu0 %v468
        %v580 = vpop.f32.mrf.mxu0
        %v581 = vadd.f32 %v410, %v580
        %582 = vmatmul.f32.gmra.mxu0 %v471
        %v583 = vpop.f32.mrf.mxu0
        %v584 = vadd.f32 %v410, %v583
        %585 = vmatmul.f32.gmra.mxu0 %v474
        %v586 = vpop.f32.mrf.mxu0
        %v587 = vadd.f32 %v410, %v586
        %588 = vmatmul.f32.gmra.mxu0 %v477
        %v589 = vpop.f32.mrf.mxu0
        %v590 = vadd.f32 %v410, %v589
        %591 = vmatmul.f32.gmra.mxu0 %v480
        %v592 = vpop.f32.mrf.mxu0
        %v593 = vadd.f32 %v410, %v592
        %594 = vmatmul.f32.gmra.mxu0 %v483
        %v595 = vpop.f32.mrf.mxu0
        %v596 = vadd.f32 %v410, %v595
        %597 = vmatmul.f32.gmra.mxu0 %v486
        %v598 = vpop.f32.mrf.mxu0
        %v599 = vadd.f32 %v410, %v598
        %600 = vmatmul.f32.gmra.mxu0 %v489
        %v601 = vpop.f32.mrf.mxu0
        %v602 = vadd.f32 %v410, %v601
        %603 = vmatmul.f32.gmra.mxu0 %v492
        %v604 = vpop.f32.mrf.mxu0
        %v605 = vadd.f32 %v410, %v604
        %606 = vmatmul.f32.gmra.mxu0 %v495
        %v607 = vpop.f32.mrf.mxu0
        %v608 = vadd.f32 %v410, %v607
        %609 = vmatmul.f32.gmra.mxu0 %v498
        %v610 = vpop.f32.mrf.mxu0
        %v611 = vadd.f32 %v410, %v610
        %612 = vmatmul.f32.gmra.mxu0 %v501
        %v613 = vpop.f32.mrf.mxu0
        %v614 = vadd.f32 %v410, %v613
        %615 = vmatmul.f32.gmra.mxu0 %v504
        %v616 = vpop.f32.mrf.mxu0
        %v617 = vadd.f32 %v410, %v616
        %618 = vmatmul.f32.gmra.mxu0 %v507
        %v619 = vpop.f32.mrf.mxu0
        %v620 = vadd.f32 %v410, %v619
        %621 = vdwg.mxu0
        %v622 = vld [vmem:[#allocation7] sm:$0xff]
        %v623 = vld [vmem:[#allocation7 + $0x8] sm:$0xff]
        %v624 = vld [vmem:[#allocation7 + $0x10] sm:$0xff]
        %v625 = vld [vmem:[#allocation7 + $0x18] sm:$0xff]
        %658 = vrot.lane.b32.xlu0 %v527, 96
        %v659 = vpop.permute.xlu0 %658
        %660 = vrot.lane.b32.xlu0 %v530, 96
        %v661 = vpop.permute.xlu0 %660
        %662 = vrot.lane.b32.xlu0 %v533, 96
        %v663 = vpop.permute.xlu0 %662
        %664 = vrot.lane.b32.xlu0 %v536, 96
        %v665 = vpop.permute.xlu0 %664
        %666 = vrot.lane.b32.xlu0 %v539, 96
        %v667 = vpop.permute.xlu0 %666
        %668 = vrot.lane.b32.xlu0 %v542, 96
        %v669 = vpop.permute.xlu0 %668
        %670 = vrot.lane.b32.xlu0 %v545, 96
        %v671 = vpop.permute.xlu0 %670
        %672 = vrot.lane.b32.xlu0 %v548, 96
        %v673 = vpop.permute.xlu0 %672
        %674 = vrot.lane.b32.xlu0 %v551, 96
        %v675 = vpop.permute.xlu0 %674
        %676 = vrot.lane.b32.xlu0 %v554, 96
        %v677 = vpop.permute.xlu0 %676
        %678 = vrot.lane.b32.xlu0 %v557, 96
        %v679 = vpop.permute.xlu0 %678
        %680 = vrot.lane.b32.xlu0 %v560, 96
        %v681 = vpop.permute.xlu0 %680
        %682 = vrot.lane.b32.xlu0 %v563, 96
        %v683 = vpop.permute.xlu0 %682
        %684 = vrot.lane.b32.xlu0 %v566, 96
        %v685 = vpop.permute.xlu0 %684
        %686 = vrot.lane.b32.xlu0 %v569, 96
        %v687 = vpop.permute.xlu0 %686
        %688 = vrot.lane.b32.xlu0 %v572, 96
        %v689 = vpop.permute.xlu0 %688
        %690 = vrot.lane.b32.xlu0 %v575, 96
        %v691 = vpop.permute.xlu0 %690
        %692 = vrot.lane.b32.xlu0 %v578, 96
        %v693 = vpop.permute.xlu0 %692
        %694 = vrot.lane.b32.xlu0 %v581, 96
        %v695 = vpop.permute.xlu0 %694
        %696 = vrot.lane.b32.xlu0 %v584, 96
        %v697 = vpop.permute.xlu0 %696
        %698 = vrot.lane.b32.xlu0 %v587, 96
        %v699 = vpop.permute.xlu0 %698
        %700 = vrot.lane.b32.xlu0 %v590, 96
        %v701 = vpop.permute.xlu0 %700
        %702 = vrot.lane.b32.xlu0 %v593, 96
        %v703 = vpop.permute.xlu0 %702
        %704 = vrot.lane.b32.xlu0 %v596, 96
        %v705 = vpop.permute.xlu0 %704
        %706 = vrot.lane.b32.xlu0 %v599, 96
        %v707 = vpop.permute.xlu0 %706
        %708 = vrot.lane.b32.xlu0 %v602, 96
        %v709 = vpop.permute.xlu0 %708
        %710 = vrot.lane.b32.xlu0 %v605, 96
        %v711 = vpop.permute.xlu0 %710
        %712 = vrot.lane.b32.xlu0 %v608, 96
        %v713 = vpop.permute.xlu0 %712
        %714 = vrot.lane.b32.xlu0 %v611, 96
        %v715 = vpop.permute.xlu0 %714
        %716 = vrot.lane.b32.xlu0 %v614, 96
        %v717 = vpop.permute.xlu0 %716
        %718 = vrot.lane.b32.xlu0 %v617, 96
        %v719 = vpop.permute.xlu0 %718
        %720 = vrot.lane.b32.xlu0 %v620, 96
        %v721 = vpop.permute.xlu0 %720
        %vm722 = vcmask 64512
        %v723 = vsel %vm722, %v527, 0
        %v725 = vsel %vm722, %v530, 0
        %v727 = vsel %vm722, %v533, 0
        %v729 = vsel %vm722, %v536, 0
        %v731 = vsel %vm722, %v539, 0
        %v733 = vsel %vm722, %v542, 0
        %v735 = vsel %vm722, %v545, 0
        %v737 = vsel %vm722, %v548, 0
        %v739 = vsel %vm722, %v551, 0
        %v741 = vsel %vm722, %v554, 0
        %v743 = vsel %vm722, %v557, 0
        %v745 = vsel %vm722, %v560, 0
        %v747 = vsel %vm722, %v563, 0
        %v749 = vsel %vm722, %v566, 0
        %v751 = vsel %vm722, %v569, 0
        %v753 = vsel %vm722, %v572, 0
        %v755 = vsel %vm722, %v575, 0
        %v757 = vsel %vm722, %v578, 0
        %v759 = vsel %vm722, %v581, 0
        %v761 = vsel %vm722, %v584, 0
        %v763 = vsel %vm722, %v587, 0
        %v765 = vsel %vm722, %v590, 0
        %v767 = vsel %vm722, %v593, 0
        %v769 = vsel %vm722, %v596, 0
        %v771 = vsel %vm722, %v599, 0
        %v773 = vsel %vm722, %v602, 0
        %v775 = vsel %vm722, %v605, 0
        %v777 = vsel %vm722, %v608, 0
        %v779 = vsel %vm722, %v611, 0
        %v781 = vsel %vm722, %v614, 0
        %v783 = vsel %vm722, %v617, 0
        %v785 = vsel %vm722, %v620, 0
        %v787 = vsel %vm722, %v659, 0
        %v789 = vsel %vm722, %v661, 0
        %v791 = vsel %vm722, %v663, 0
        %v793 = vsel %vm722, %v665, 0
        %v795 = vsel %vm722, %v667, 0
        %v797 = vsel %vm722, %v669, 0
        %v799 = vsel %vm722, %v671, 0
        %v801 = vsel %vm722, %v673, 0
        %v803 = vsel %vm722, %v675, 0
        %v805 = vsel %vm722, %v677, 0
        %v807 = vsel %vm722, %v679, 0
        %v809 = vsel %vm722, %v681, 0
        %v811 = vsel %vm722, %v683, 0
        %v813 = vsel %vm722, %v685, 0
        %v815 = vsel %vm722, %v687, 0
        %v817 = vsel %vm722, %v689, 0
        %v819 = vsel %vm722, %v691, 0
        %v821 = vsel %vm722, %v693, 0
        %v823 = vsel %vm722, %v695, 0
        %v825 = vsel %vm722, %v697, 0
        %v827 = vsel %vm722, %v699, 0
        %v829 = vsel %vm722, %v701, 0
        %v831 = vsel %vm722, %v703, 0
        %v833 = vsel %vm722, %v705, 0
        %v835 = vsel %vm722, %v707, 0
        %v837 = vsel %vm722, %v709, 0
        %v839 = vsel %vm722, %v711, 0
        %v841 = vsel %vm722, %v713, 0
        %v843 = vsel %vm722, %v715, 0
        %v845 = vsel %vm722, %v717, 0
        %v847 = vsel %vm722, %v719, 0
        %v849 = vsel %vm722, %v721, 0
        %851 = vmatpush.xpose.msra.mxu0 %v817
        %852 = vmatpush.xpose.msra.mxu0 %v815
        %853 = vmatpush.xpose.msra.mxu0 %v813
        %854 = vmatpush.xpose.msra.mxu0 %v811
        %855 = vmatpush.xpose.msra.mxu0 %v809
        %856 = vmatpush.xpose.msra.mxu0 %v807
        %857 = vmatpush.xpose.msra.mxu0 %v805
        %858 = vmatpush.xpose.msra.mxu0 %v803
        %859 = vmatpush.xpose.msra.mxu0 %v801
        %860 = vmatpush.xpose.msra.mxu0 %v799
        %861 = vmatpush.xpose.msra.mxu0 %v797
        %862 = vmatpush.xpose.msra.mxu0 %v795
        %863 = vmatpush.xpose.msra.mxu0 %v793
        %864 = vmatpush.xpose.msra.mxu0 %v791
        %865 = vmatpush.xpose.msra.mxu0 %v789
        %866 = vmatpush.xpose.msra.mxu0 %v787
        %867 = vmatmul.f32.gmra.mxu0 %v723
        %v868 = vpop.f32.mrf.mxu0
        %v869 = vadd.f32 0.0, %v868
        %870 = vmatmul.f32.gmra.mxu0 %v725
        %v871 = vpop.f32.mrf.mxu0
        %v872 = vadd.f32 0.0, %v871
        %873 = vmatmul.f32.gmra.mxu0 %v727
        %v874 = vpop.f32.mrf.mxu0
        %v875 = vadd.f32 0.0, %v874
        %876 = vmatmul.f32.gmra.mxu0 %v729
        %v877 = vpop.f32.mrf.mxu0
        %v878 = vadd.f32 0.0, %v877
        %879 = vmatmul.f32.gmra.mxu0 %v731
        %v880 = vpop.f32.mrf.mxu0
        %v881 = vadd.f32 0.0, %v880
        %882 = vmatmul.f32.gmra.mxu0 %v733
        %v883 = vpop.f32.mrf.mxu0
        %v884 = vadd.f32 0.0, %v883
        %885 = vmatmul.f32.gmra.mxu0 %v735
        %v886 = vpop.f32.mrf.mxu0
        %v887 = vadd.f32 0.0, %v886
        %888 = vmatmul.f32.gmra.mxu0 %v737
        %v889 = vpop.f32.mrf.mxu0
        %v890 = vadd.f32 0.0, %v889
        %891 = vmatmul.f32.gmra.mxu0 %v739
        %v892 = vpop.f32.mrf.mxu0
        %v893 = vadd.f32 0.0, %v892
        %894 = vmatmul.f32.gmra.mxu0 %v741
        %v895 = vpop.f32.mrf.mxu0
        %v896 = vadd.f32 0.0, %v895
        %897 = vmatmul.f32.gmra.mxu0 %v743
        %v898 = vpop.f32.mrf.mxu0
        %v899 = vadd.f32 0.0, %v898
        %900 = vmatmul.f32.gmra.mxu0 %v745
        %v901 = vpop.f32.mrf.mxu0
        %v902 = vadd.f32 0.0, %v901
        %903 = vmatmul.f32.gmra.mxu0 %v747
        %v904 = vpop.f32.mrf.mxu0
        %v905 = vadd.f32 0.0, %v904
        %906 = vmatmul.f32.gmra.mxu0 %v749
        %v907 = vpop.f32.mrf.mxu0
        %v908 = vadd.f32 0.0, %v907
        %909 = vmatmul.f32.gmra.mxu0 %v751
        %v910 = vpop.f32.mrf.mxu0
        %v911 = vadd.f32 0.0, %v910
        %912 = vmatmul.f32.gmra.mxu0 %v753
        %v913 = vpop.f32.mrf.mxu0
        %v914 = vadd.f32 0.0, %v913
        %915 = vmatmul.f32.gmra.mxu0 %v755
        %v916 = vpop.f32.mrf.mxu0
        %v917 = vadd.f32 0.0, %v916
        %918 = vmatmul.f32.gmra.mxu0 %v757
        %v919 = vpop.f32.mrf.mxu0
        %v920 = vadd.f32 0.0, %v919
        %921 = vmatmul.f32.gmra.mxu0 %v759
        %v922 = vpop.f32.mrf.mxu0
        %v923 = vadd.f32 0.0, %v922
        %924 = vmatmul.f32.gmra.mxu0 %v761
        %v925 = vpop.f32.mrf.mxu0
        %v926 = vadd.f32 0.0, %v925
        %927 = vmatmul.f32.gmra.mxu0 %v763
        %v928 = vpop.f32.mrf.mxu0
        %v929 = vadd.f32 0.0, %v928
        %930 = vmatmul.f32.gmra.mxu0 %v765
        %v931 = vpop.f32.mrf.mxu0
        %v932 = vadd.f32 0.0, %v931
        %933 = vmatmul.f32.gmra.mxu0 %v767
        %v934 = vpop.f32.mrf.mxu0
        %v935 = vadd.f32 0.0, %v934
        %936 = vmatmul.f32.gmra.mxu0 %v769
        %v937 = vpop.f32.mrf.mxu0
        %v938 = vadd.f32 0.0, %v937
        %939 = vmatmul.f32.gmra.mxu0 %v771
        %v940 = vpop.f32.mrf.mxu0
        %v941 = vadd.f32 0.0, %v940
        %942 = vmatmul.f32.gmra.mxu0 %v773
        %v943 = vpop.f32.mrf.mxu0
        %v944 = vadd.f32 0.0, %v943
        %945 = vmatmul.f32.gmra.mxu0 %v775
        %v946 = vpop.f32.mrf.mxu0
        %v947 = vadd.f32 0.0, %v946
        %948 = vmatmul.f32.gmra.mxu0 %v777
        %v949 = vpop.f32.mrf.mxu0
        %v950 = vadd.f32 0.0, %v949
        %951 = vmatmul.f32.gmra.mxu0 %v779
        %v952 = vpop.f32.mrf.mxu0
        %v953 = vadd.f32 0.0, %v952
        %954 = vmatmul.f32.gmra.mxu0 %v781
        %v955 = vpop.f32.mrf.mxu0
        %v956 = vadd.f32 0.0, %v955
        %957 = vmatmul.f32.gmra.mxu0 %v783
        %v958 = vpop.f32.mrf.mxu0
        %v959 = vadd.f32 0.0, %v958
        %960 = vmatmul.f32.gmra.mxu0 %v785
        %v961 = vpop.f32.mrf.mxu0
        %v962 = vadd.f32 0.0, %v961
        %963 = vdwg.mxu0
        %964 = vmatpush.xpose.msra.mxu0 %v849
        %965 = vmatpush.xpose.msra.mxu0 %v847
        %966 = vmatpush.xpose.msra.mxu0 %v845
        %967 = vmatpush.xpose.msra.mxu0 %v843
        %968 = vmatpush.xpose.msra.mxu0 %v841
        %969 = vmatpush.xpose.msra.mxu0 %v839
        %970 = vmatpush.xpose.msra.mxu0 %v837
        %971 = vmatpush.xpose.msra.mxu0 %v835
        %972 = vmatpush.xpose.msra.mxu0 %v833
        %973 = vmatpush.xpose.msra.mxu0 %v831
        %974 = vmatpush.xpose.msra.mxu0 %v829
        %975 = vmatpush.xpose.msra.mxu0 %v827
        %976 = vmatpush.xpose.msra.mxu0 %v825
        %977 = vmatpush.xpose.msra.mxu0 %v823
        %978 = vmatpush.xpose.msra.mxu0 %v821
        %979 = vmatpush.xpose.msra.mxu0 %v819
        %980 = vmatmul.f32.gmra.mxu0 %v723
        %v981 = vpop.f32.mrf.mxu0
        %v982 = vadd.f32 0.0, %v981
        %983 = vmatmul.f32.gmra.mxu0 %v725
        %v984 = vpop.f32.mrf.mxu0
        %v985 = vadd.f32 0.0, %v984
        %986 = vmatmul.f32.gmra.mxu0 %v727
        %v987 = vpop.f32.mrf.mxu0
        %v988 = vadd.f32 0.0, %v987
        %989 = vmatmul.f32.gmra.mxu0 %v729
        %v990 = vpop.f32.mrf.mxu0
        %v991 = vadd.f32 0.0, %v990
        %992 = vmatmul.f32.gmra.mxu0 %v731
        %v993 = vpop.f32.mrf.mxu0
        %v994 = vadd.f32 0.0, %v993
        %995 = vmatmul.f32.gmra.mxu0 %v733
        %v996 = vpop.f32.mrf.mxu0
        %v997 = vadd.f32 0.0, %v996
        %998 = vmatmul.f32.gmra.mxu0 %v735
        %v999 = vpop.f32.mrf.mxu0
        %v1000 = vadd.f32 0.0, %v999
        %1001 = vmatmul.f32.gmra.mxu0 %v737
        %v1002 = vpop.f32.mrf.mxu0
        %v1003 = vadd.f32 0.0, %v1002
        %1004 = vmatmul.f32.gmra.mxu0 %v739
        %v1005 = vpop.f32.mrf.mxu0
        %v1006 = vadd.f32 0.0, %v1005
        %1007 = vmatmul.f32.gmra.mxu0 %v741
        %v1008 = vpop.f32.mrf.mxu0
        %v1009 = vadd.f32 0.0, %v1008
        %1010 = vmatmul.f32.gmra.mxu0 %v743
        %v1011 = vpop.f32.mrf.mxu0
        %v1012 = vadd.f32 0.0, %v1011
        %1013 = vmatmul.f32.gmra.mxu0 %v745
        %v1014 = vpop.f32.mrf.mxu0
        %v1015 = vadd.f32 0.0, %v1014
        %1016 = vmatmul.f32.gmra.mxu0 %v747
        %v1017 = vpop.f32.mrf.mxu0
        %v1018 = vadd.f32 0.0, %v1017
        %1019 = vmatmul.f32.gmra.mxu0 %v749
        %v1020 = vpop.f32.mrf.mxu0
        %v1021 = vadd.f32 0.0, %v1020
        %1022 = vmatmul.f32.gmra.mxu0 %v751
        %v1023 = vpop.f32.mrf.mxu0
        %v1024 = vadd.f32 0.0, %v1023
        %1025 = vmatmul.f32.gmra.mxu0 %v753
        %v1026 = vpop.f32.mrf.mxu0
        %v1027 = vadd.f32 0.0, %v1026
        %1028 = vmatmul.f32.gmra.mxu0 %v755
        %v1029 = vpop.f32.mrf.mxu0
        %v1030 = vadd.f32 0.0, %v1029
        %1031 = vmatmul.f32.gmra.mxu0 %v757
        %v1032 = vpop.f32.mrf.mxu0
        %v1033 = vadd.f32 0.0, %v1032
        %1034 = vmatmul.f32.gmra.mxu0 %v759
        %v1035 = vpop.f32.mrf.mxu0
        %v1036 = vadd.f32 0.0, %v1035
        %1037 = vmatmul.f32.gmra.mxu0 %v761
        %v1038 = vpop.f32.mrf.mxu0
        %v1039 = vadd.f32 0.0, %v1038
        %1040 = vmatmul.f32.gmra.mxu0 %v763
        %v1041 = vpop.f32.mrf.mxu0
        %v1042 = vadd.f32 0.0, %v1041
        %1043 = vmatmul.f32.gmra.mxu0 %v765
        %v1044 = vpop.f32.mrf.mxu0
        %v1045 = vadd.f32 0.0, %v1044
        %1046 = vmatmul.f32.gmra.mxu0 %v767
        %v1047 = vpop.f32.mrf.mxu0
        %v1048 = vadd.f32 0.0, %v1047
        %1049 = vmatmul.f32.gmra.mxu0 %v769
        %v1050 = vpop.f32.mrf.mxu0
        %v1051 = vadd.f32 0.0, %v1050
        %1052 = vmatmul.f32.gmra.mxu0 %v771
        %v1053 = vpop.f32.mrf.mxu0
        %v1054 = vadd.f32 0.0, %v1053
        %1055 = vmatmul.f32.gmra.mxu0 %v773
        %v1056 = vpop.f32.mrf.mxu0
        %v1057 = vadd.f32 0.0, %v1056
        %1058 = vmatmul.f32.gmra.mxu0 %v775
        %v1059 = vpop.f32.mrf.mxu0
        %v1060 = vadd.f32 0.0, %v1059
        %1061 = vmatmul.f32.gmra.mxu0 %v777
        %v1062 = vpop.f32.mrf.mxu0
        %v1063 = vadd.f32 0.0, %v1062
        %1064 = vmatmul.f32.gmra.mxu0 %v779
        %v1065 = vpop.f32.mrf.mxu0
        %v1066 = vadd.f32 0.0, %v1065
        %1067 = vmatmul.f32.gmra.mxu0 %v781
        %v1068 = vpop.f32.mrf.mxu0
        %v1069 = vadd.f32 0.0, %v1068
        %1070 = vmatmul.f32.gmra.mxu0 %v783
        %v1071 = vpop.f32.mrf.mxu0
        %v1072 = vadd.f32 0.0, %v1071
        %1073 = vmatmul.f32.gmra.mxu0 %v785
        %v1074 = vpop.f32.mrf.mxu0
        %v1075 = vadd.f32 0.0, %v1074
        %1076 = vdwg.mxu0
        %v1077 = vmul.f32 %v869, 0.35355338
        %v1078 = vmul.f32 %v982, 0.35355338
        %v1079 = vmul.f32 %v872, 0.35355338
        %v1080 = vmul.f32 %v985, 0.35355338
        %v1081 = vmul.f32 %v875, 0.35355338
        %v1082 = vmul.f32 %v988, 0.35355338
        %v1083 = vmul.f32 %v878, 0.35355338
        %v1084 = vmul.f32 %v991, 0.35355338
        %v1085 = vmul.f32 %v881, 0.35355338
        %v1086 = vmul.f32 %v994, 0.35355338
        %v1087 = vmul.f32 %v884, 0.35355338
        %v1088 = vmul.f32 %v997, 0.35355338
        %v1089 = vmul.f32 %v887, 0.35355338
        %v1090 = vmul.f32 %v1000, 0.35355338
        %v1091 = vmul.f32 %v890, 0.35355338
        %v1092 = vmul.f32 %v1003, 0.35355338
        %v1093 = vmul.f32 %v893, 0.35355338
        %v1094 = vmul.f32 %v1006, 0.35355338
        %v1095 = vmul.f32 %v896, 0.35355338
        %v1096 = vmul.f32 %v1009, 0.35355338
        %v1097 = vmul.f32 %v899, 0.35355338
        %v1098 = vmul.f32 %v1012, 0.35355338
        %v1099 = vmul.f32 %v902, 0.35355338
        %v1100 = vmul.f32 %v1015, 0.35355338
        %v1101 = vmul.f32 %v905, 0.35355338
        %v1102 = vmul.f32 %v1018, 0.35355338
        %v1103 = vmul.f32 %v908, 0.35355338
        %v1104 = vmul.f32 %v1021, 0.35355338
        %v1105 = vmul.f32 %v911, 0.35355338
        %v1106 = vmul.f32 %v1024, 0.35355338
        %v1107 = vmul.f32 %v914, 0.35355338
        %v1108 = vmul.f32 %v1027, 0.35355338
        %v1109 = vmul.f32 %v917, 0.35355338
        %v1110 = vmul.f32 %v1030, 0.35355338
        %v1111 = vmul.f32 %v920, 0.35355338
        %v1112 = vmul.f32 %v1033, 0.35355338
        %v1113 = vmul.f32 %v923, 0.35355338
        %v1114 = vmul.f32 %v1036, 0.35355338
        %v1115 = vmul.f32 %v926, 0.35355338
        %v1116 = vmul.f32 %v1039, 0.35355338
        %v1117 = vmul.f32 %v929, 0.35355338
        %v1118 = vmul.f32 %v1042, 0.35355338
        %v1119 = vmul.f32 %v932, 0.35355338
        %v1120 = vmul.f32 %v1045, 0.35355338
        %v1121 = vmul.f32 %v935, 0.35355338
        %v1122 = vmul.f32 %v1048, 0.35355338
        %v1123 = vmul.f32 %v938, 0.35355338
        %v1124 = vmul.f32 %v1051, 0.35355338
        %v1125 = vmul.f32 %v941, 0.35355338
        %v1126 = vmul.f32 %v1054, 0.35355338
        %v1127 = vmul.f32 %v944, 0.35355338
        %v1128 = vmul.f32 %v1057, 0.35355338
        %v1129 = vmul.f32 %v947, 0.35355338
        %v1130 = vmul.f32 %v1060, 0.35355338
        %v1131 = vmul.f32 %v950, 0.35355338
        %v1132 = vmul.f32 %v1063, 0.35355338
        %v1133 = vmul.f32 %v953, 0.35355338
        %v1134 = vmul.f32 %v1066, 0.35355338
        %v1135 = vmul.f32 %v956, 0.35355338
        %v1136 = vmul.f32 %v1069, 0.35355338
        %v1137 = vmul.f32 %v959, 0.35355338
        %v1138 = vmul.f32 %v1072, 0.35355338
        %v1139 = vmul.f32 %v962, 0.35355338
        %v1140 = vmul.f32 %v1075, 0.35355338
        %v1141 = vmax.f32 %v1077, %v1078
        %1142 = vmax.xlane.f32.xlu0 %v1141
        %v1143 = vpop.xlane.xlu0 %1142
        %v1144 = vmax.f32 %v1079, %v1080
        %1145 = vmax.xlane.f32.xlu0 %v1144
        %v1146 = vpop.xlane.xlu0 %1145
        %v1147 = vmax.f32 %v1081, %v1082
        %1148 = vmax.xlane.f32.xlu0 %v1147
        %v1149 = vpop.xlane.xlu0 %1148
        %v1150 = vmax.f32 %v1083, %v1084
        %1151 = vmax.xlane.f32.xlu0 %v1150
        %v1152 = vpop.xlane.xlu0 %1151
        %v1153 = vmax.f32 %v1085, %v1086
        %1154 = vmax.xlane.f32.xlu0 %v1153
        %v1155 = vpop.xlane.xlu0 %1154
        %v1156 = vmax.f32 %v1087, %v1088
        %1157 = vmax.xlane.f32.xlu0 %v1156
        %v1158 = vpop.xlane.xlu0 %1157
        %v1159 = vmax.f32 %v1089, %v1090
        %1160 = vmax.xlane.f32.xlu0 %v1159
        %v1161 = vpop.xlane.xlu0 %1160
        %v1162 = vmax.f32 %v1091, %v1092
        %1163 = vmax.xlane.f32.xlu0 %v1162
        %v1164 = vpop.xlane.xlu0 %1163
        %v1165 = vmax.f32 %v1093, %v1094
        %1166 = vmax.xlane.f32.xlu0 %v1165
        %v1167 = vpop.xlane.xlu0 %1166
        %v1168 = vmax.f32 %v1095, %v1096
        %1169 = vmax.xlane.f32.xlu0 %v1168
        %v1170 = vpop.xlane.xlu0 %1169
        %v1171 = vmax.f32 %v1097, %v1098
        %1172 = vmax.xlane.f32.xlu0 %v1171
        %v1173 = vpop.xlane.xlu0 %1172
        %v1174 = vmax.f32 %v1099, %v1100
        %1175 = vmax.xlane.f32.xlu0 %v1174
        %v1176 = vpop.xlane.xlu0 %1175
        %v1177 = vmax.f32 %v1101, %v1102
        %1178 = vmax.xlane.f32.xlu0 %v1177
        %v1179 = vpop.xlane.xlu0 %1178
        %v1180 = vmax.f32 %v1103, %v1104
        %1181 = vmax.xlane.f32.xlu0 %v1180
        %v1182 = vpop.xlane.xlu0 %1181
        %v1183 = vmax.f32 %v1105, %v1106
        %1184 = vmax.xlane.f32.xlu0 %v1183
        %v1185 = vpop.xlane.xlu0 %1184
        %v1186 = vmax.f32 %v1107, %v1108
        %1187 = vmax.xlane.f32.xlu0 %v1186
        %v1188 = vpop.xlane.xlu0 %1187
        %v1189 = vmax.f32 %v1109, %v1110
        %1190 = vmax.xlane.f32.xlu0 %v1189
        %v1191 = vpop.xlane.xlu0 %1190
        %v1192 = vmax.f32 %v1111, %v1112
        %1193 = vmax.xlane.f32.xlu0 %v1192
        %v1194 = vpop.xlane.xlu0 %1193
        %v1195 = vmax.f32 %v1113, %v1114
        %1196 = vmax.xlane.f32.xlu0 %v1195
        %v1197 = vpop.xlane.xlu0 %1196
        %v1198 = vmax.f32 %v1115, %v1116
        %1199 = vmax.xlane.f32.xlu0 %v1198
        %v1200 = vpop.xlane.xlu0 %1199
        %v1201 = vmax.f32 %v1117, %v1118
        %1202 = vmax.xlane.f32.xlu0 %v1201
        %v1203 = vpop.xlane.xlu0 %1202
        %v1204 = vmax.f32 %v1119, %v1120
        %1205 = vmax.xlane.f32.xlu0 %v1204
        %v1206 = vpop.xlane.xlu0 %1205
        %v1207 = vmax.f32 %v1121, %v1122
        %1208 = vmax.xlane.f32.xlu0 %v1207
        %v1209 = vpop.xlane.xlu0 %1208
        %v1210 = vmax.f32 %v1123, %v1124
        %1211 = vmax.xlane.f32.xlu0 %v1210
        %v1212 = vpop.xlane.xlu0 %1211
        %v1213 = vmax.f32 %v1125, %v1126
        %1214 = vmax.xlane.f32.xlu0 %v1213
        %v1215 = vpop.xlane.xlu0 %1214
        %v1216 = vmax.f32 %v1127, %v1128
        %1217 = vmax.xlane.f32.xlu0 %v1216
        %v1218 = vpop.xlane.xlu0 %1217
        %v1219 = vmax.f32 %v1129, %v1130
        %1220 = vmax.xlane.f32.xlu0 %v1219
        %v1221 = vpop.xlane.xlu0 %1220
        %v1222 = vmax.f32 %v1131, %v1132
        %1223 = vmax.xlane.f32.xlu0 %v1222
        %v1224 = vpop.xlane.xlu0 %1223
        %v1225 = vmax.f32 %v1133, %v1134
        %1226 = vmax.xlane.f32.xlu0 %v1225
        %v1227 = vpop.xlane.xlu0 %1226
        %v1228 = vmax.f32 %v1135, %v1136
        %1229 = vmax.xlane.f32.xlu0 %v1228
        %v1230 = vpop.xlane.xlu0 %1229
        %v1231 = vmax.f32 %v1137, %v1138
        %1232 = vmax.xlane.f32.xlu0 %v1231
        %v1233 = vpop.xlane.xlu0 %1232
        %v1234 = vmax.f32 %v1139, %v1140
        %1235 = vmax.xlane.f32.xlu0 %v1234
        %v1236 = vpop.xlane.xlu0 %1235
        %v1237 = vsub.f32 %v1077, %v1143
        %v1238 = vsub.f32 %v1078, %v1143
        %v1239 = vsub.f32 %v1079, %v1146
        %v1240 = vsub.f32 %v1080, %v1146
        %v1241 = vsub.f32 %v1081, %v1149
        %v1242 = vsub.f32 %v1082, %v1149
        %v1243 = vsub.f32 %v1083, %v1152
        %v1244 = vsub.f32 %v1084, %v1152
        %v1245 = vsub.f32 %v1085, %v1155
        %v1246 = vsub.f32 %v1086, %v1155
        %v1247 = vsub.f32 %v1087, %v1158
        %v1248 = vsub.f32 %v1088, %v1158
        %v1249 = vsub.f32 %v1089, %v1161
        %v1250 = vsub.f32 %v1090, %v1161
        %v1251 = vsub.f32 %v1091, %v1164
        %v1252 = vsub.f32 %v1092, %v1164
        %v1253 = vsub.f32 %v1093, %v1167
        %v1254 = vsub.f32 %v1094, %v1167
        %v1255 = vsub.f32 %v1095, %v1170
        %v1256 = vsub.f32 %v1096, %v1170
        %v1257 = vsub.f32 %v1097, %v1173
        %v1258 = vsub.f32 %v1098, %v1173
        %v1259 = vsub.f32 %v1099, %v1176
        %v1260 = vsub.f32 %v1100, %v1176
        %v1261 = vsub.f32 %v1101, %v1179
        %v1262 = vsub.f32 %v1102, %v1179
        %v1263 = vsub.f32 %v1103, %v1182
        %v1264 = vsub.f32 %v1104, %v1182
        %v1265 = vsub.f32 %v1105, %v1185
        %v1266 = vsub.f32 %v1106, %v1185
        %v1267 = vsub.f32 %v1107, %v1188
        %v1268 = vsub.f32 %v1108, %v1188
        %v1269 = vsub.f32 %v1109, %v1191
        %v1270 = vsub.f32 %v1110, %v1191
        %v1271 = vsub.f32 %v1111, %v1194
        %v1272 = vsub.f32 %v1112, %v1194
        %v1273 = vsub.f32 %v1113, %v1197
        %v1274 = vsub.f32 %v1114, %v1197
        %v1275 = vsub.f32 %v1115, %v1200
        %v1276 = vsub.f32 %v1116, %v1200
        %v1277 = vsub.f32 %v1117, %v1203
        %v1278 = vsub.f32 %v1118, %v1203
        %v1279 = vsub.f32 %v1119, %v1206
        %v1280 = vsub.f32 %v1120, %v1206
        %v1281 = vsub.f32 %v1121, %v1209
        %v1282 = vsub.f32 %v1122, %v1209
        %v1283 = vsub.f32 %v1123, %v1212
        %v1284 = vsub.f32 %v1124, %v1212
        %v1285 = vsub.f32 %v1125, %v1215
        %v1286 = vsub.f32 %v1126, %v1215
        %v1287 = vsub.f32 %v1127, %v1218
        %v1288 = vsub.f32 %v1128, %v1218
        %v1289 = vsub.f32 %v1129, %v1221
        %v1290 = vsub.f32 %v1130, %v1221
        %v1291 = vsub.f32 %v1131, %v1224
        %v1292 = vsub.f32 %v1132, %v1224
        %v1293 = vsub.f32 %v1133, %v1227
        %v1294 = vsub.f32 %v1134, %v1227
        %v1295 = vsub.f32 %v1135, %v1230
        %v1296 = vsub.f32 %v1136, %v1230
        %v1297 = vsub.f32 %v1137, %v1233
        %v1298 = vsub.f32 %v1138, %v1233
        %v1299 = vsub.f32 %v1139, %v1236
        %v1300 = vsub.f32 %v1140, %v1236
        %v1301 = vmul.f32 %v1237, 1.442695
        %v1302 = vpow.pop %v1301
        %v1303 = vmul.f32 %v1238, 1.442695
        %v1304 = vpow.pop %v1303
        %v1305 = vmul.f32 %v1239, 1.442695
        %v1306 = vpow.pop %v1305
        %v1307 = vmul.f32 %v1240, 1.442695
        %v1308 = vpow.pop %v1307
        %v1309 = vmul.f32 %v1241, 1.442695
        %v1310 = vpow.pop %v1309
        %v1311 = vmul.f32 %v1242, 1.442695
        %v1312 = vpow.pop %v1311
        %v1313 = vmul.f32 %v1243, 1.442695
        %v1314 = vpow.pop %v1313
        %v1315 = vmul.f32 %v1244, 1.442695
        %v1316 = vpow.pop %v1315
        %v1317 = vmul.f32 %v1245, 1.442695
        %v1318 = vpow.pop %v1317
        %v1319 = vmul.f32 %v1246, 1.442695
        %v1320 = vpow.pop %v1319
        %v1321 = vmul.f32 %v1247, 1.442695
        %v1322 = vpow.pop %v1321
        %v1323 = vmul.f32 %v1248, 1.442695
        %v1324 = vpow.pop %v1323
        %v1325 = vmul.f32 %v1249, 1.442695
        %v1326 = vpow.pop %v1325
        %v1327 = vmul.f32 %v1250, 1.442695
        %v1328 = vpow.pop %v1327
        %v1329 = vmul.f32 %v1251, 1.442695
        %v1330 = vpow.pop %v1329
        %v1331 = vmul.f32 %v1252, 1.442695
        %v1332 = vpow.pop %v1331
        %v1333 = vmul.f32 %v1253, 1.442695
        %v1334 = vpow.pop %v1333
        %v1335 = vmul.f32 %v1254, 1.442695
        %v1336 = vpow.pop %v1335
        %v1337 = vmul.f32 %v1255, 1.442695
        %v1338 = vpow.pop %v1337
        %v1339 = vmul.f32 %v1256, 1.442695
        %v1340 = vpow.pop %v1339
        %v1341 = vmul.f32 %v1257, 1.442695
        %v1342 = vpow.pop %v1341
        %v1343 = vmul.f32 %v1258, 1.442695
        %v1344 = vpow.pop %v1343
        %v1345 = vmul.f32 %v1259, 1.442695
        %v1346 = vpow.pop %v1345
        %v1347 = vmul.f32 %v1260, 1.442695
        %v1348 = vpow.pop %v1347
        %v1349 = vmul.f32 %v1261, 1.442695
        %v1350 = vpow.pop %v1349
        %v1351 = vmul.f32 %v1262, 1.442695
        %v1352 = vpow.pop %v1351
        %v1353 = vmul.f32 %v1263, 1.442695
        %v1354 = vpow.pop %v1353
        %v1355 = vmul.f32 %v1264, 1.442695
        %v1356 = vpow.pop %v1355
        %v1357 = vmul.f32 %v1265, 1.442695
        %v1358 = vpow.pop %v1357
        %v1359 = vmul.f32 %v1266, 1.442695
        %v1360 = vpow.pop %v1359
        %v1361 = vmul.f32 %v1267, 1.442695
        %v1362 = vpow.pop %v1361
        %v1363 = vmul.f32 %v1268, 1.442695
        %v1364 = vpow.pop %v1363
        %v1365 = vmul.f32 %v1269, 1.442695
        %v1366 = vpow.pop %v1365
        %v1367 = vmul.f32 %v1270, 1.442695
        %v1368 = vpow.pop %v1367
        %v1369 = vmul.f32 %v1271, 1.442695
        %v1370 = vpow.pop %v1369
        %v1371 = vmul.f32 %v1272, 1.442695
        %v1372 = vpow.pop %v1371
        %v1373 = vmul.f32 %v1273, 1.442695
        %v1374 = vpow.pop %v1373
        %v1375 = vmul.f32 %v1274, 1.442695
        %v1376 = vpow.pop %v1375
        %v1377 = vmul.f32 %v1275, 1.442695
        %v1378 = vpow.pop %v1377
        %v1379 = vmul.f32 %v1276, 1.442695
        %v1380 = vpow.pop %v1379
        %v1381 = vmul.f32 %v1277, 1.442695
        %v1382 = vpow.pop %v1381
        %v1383 = vmul.f32 %v1278, 1.442695
        %v1384 = vpow.pop %v1383
        %v1385 = vmul.f32 %v1279, 1.442695
        %v1386 = vpow.pop %v1385
        %v1387 = vmul.f32 %v1280, 1.442695
        %v1388 = vpow.pop %v1387
        %v1389 = vmul.f32 %v1281, 1.442695
        %v1390 = vpow.pop %v1389
        %v1391 = vmul.f32 %v1282, 1.442695
        %v1392 = vpow.pop %v1391
        %v1393 = vmul.f32 %v1283, 1.442695
        %v1394 = vpow.pop %v1393
        %v1395 = vmul.f32 %v1284, 1.442695
        %v1396 = vpow.pop %v1395
        %v1397 = vmul.f32 %v1285, 1.442695
        %v1398 = vpow.pop %v1397
        %v1399 = vmul.f32 %v1286, 1.442695
        %v1400 = vpow.pop %v1399
        %v1401 = vmul.f32 %v1287, 1.442695
        %v1402 = vpow.pop %v1401
        %v1403 = vmul.f32 %v1288, 1.442695
        %v1404 = vpow.pop %v1403
        %v1405 = vmul.f32 %v1289, 1.442695
        %v1406 = vpow.pop %v1405
        %v1407 = vmul.f32 %v1290, 1.442695
        %v1408 = vpow.pop %v1407
        %v1409 = vmul.f32 %v1291, 1.442695
        %v1410 = vpow.pop %v1409
        %v1411 = vmul.f32 %v1292, 1.442695
        %v1412 = vpow.pop %v1411
        %v1413 = vmul.f32 %v1293, 1.442695
        %v1414 = vpow.pop %v1413
        %v1415 = vmul.f32 %v1294, 1.442695
        %v1416 = vpow.pop %v1415
        %v1417 = vmul.f32 %v1295, 1.442695
        %v1418 = vpow.pop %v1417
        %v1419 = vmul.f32 %v1296, 1.442695
        %v1420 = vpow.pop %v1419
        %v1421 = vmul.f32 %v1297, 1.442695
        %v1422 = vpow.pop %v1421
        %v1423 = vmul.f32 %v1298, 1.442695
        %v1424 = vpow.pop %v1423
        %v1425 = vmul.f32 %v1299, 1.442695
        %v1426 = vpow.pop %v1425
        %v1427 = vmul.f32 %v1300, 1.442695
        %v1428 = vpow.pop %v1427
        %v1429 = vadd.f32 %v1302, %v1304
        %1430 = vadd.xlane.f32.xlu0 %v1429
        %v1431 = vpop.xlane.xlu0 %1430
        %v1432 = vadd.f32 %v1306, %v1308
        %1433 = vadd.xlane.f32.xlu0 %v1432
        %v1434 = vpop.xlane.xlu0 %1433
        %v1435 = vadd.f32 %v1310, %v1312
        %1436 = vadd.xlane.f32.xlu0 %v1435
        %v1437 = vpop.xlane.xlu0 %1436
        %v1438 = vadd.f32 %v1314, %v1316
        %1439 = vadd.xlane.f32.xlu0 %v1438
        %v1440 = vpop.xlane.xlu0 %1439
        %v1441 = vadd.f32 %v1318, %v1320
        %1442 = vadd.xlane.f32.xlu0 %v1441
        %v1443 = vpop.xlane.xlu0 %1442
        %v1444 = vadd.f32 %v1322, %v1324
        %1445 = vadd.xlane.f32.xlu0 %v1444
        %v1446 = vpop.xlane.xlu0 %1445
        %v1447 = vadd.f32 %v1326, %v1328
        %1448 = vadd.xlane.f32.xlu0 %v1447
        %v1449 = vpop.xlane.xlu0 %1448
        %v1450 = vadd.f32 %v1330, %v1332
        %1451 = vadd.xlane.f32.xlu0 %v1450
        %v1452 = vpop.xlane.xlu0 %1451
        %v1453 = vadd.f32 %v1334, %v1336
        %1454 = vadd.xlane.f32.xlu0 %v1453
        %v1455 = vpop.xlane.xlu0 %1454
        %v1456 = vadd.f32 %v1338, %v1340
        %1457 = vadd.xlane.f32.xlu0 %v1456
        %v1458 = vpop.xlane.xlu0 %1457
        %v1459 = vadd.f32 %v1342, %v1344
        %1460 = vadd.xlane.f32.xlu0 %v1459
        %v1461 = vpop.xlane.xlu0 %1460
        %v1462 = vadd.f32 %v1346, %v1348
        %1463 = vadd.xlane.f32.xlu0 %v1462
        %v1464 = vpop.xlane.xlu0 %1463
        %v1465 = vadd.f32 %v1350, %v1352
        %1466 = vadd.xlane.f32.xlu0 %v1465
        %v1467 = vpop.xlane.xlu0 %1466
        %v1468 = vadd.f32 %v1354, %v1356
        %1469 = vadd.xlane.f32.xlu0 %v1468
        %v1470 = vpop.xlane.xlu0 %1469
        %v1471 = vadd.f32 %v1358, %v1360
        %1472 = vadd.xlane.f32.xlu0 %v1471
        %v1473 = vpop.xlane.xlu0 %1472
        %v1474 = vadd.f32 %v1362, %v1364
        %1475 = vadd.xlane.f32.xlu0 %v1474
        %v1476 = vpop.xlane.xlu0 %1475
        %v1477 = vadd.f32 %v1366, %v1368
        %1478 = vadd.xlane.f32.xlu0 %v1477
        %v1479 = vpop.xlane.xlu0 %1478
        %v1480 = vadd.f32 %v1370, %v1372
        %1481 = vadd.xlane.f32.xlu0 %v1480
        %v1482 = vpop.xlane.xlu0 %1481
        %v1483 = vadd.f32 %v1374, %v1376
        %1484 = vadd.xlane.f32.xlu0 %v1483
        %v1485 = vpop.xlane.xlu0 %1484
        %v1486 = vadd.f32 %v1378, %v1380
        %1487 = vadd.xlane.f32.xlu0 %v1486
        %v1488 = vpop.xlane.xlu0 %1487
        %v1489 = vadd.f32 %v1382, %v1384
        %1490 = vadd.xlane.f32.xlu0 %v1489
        %v1491 = vpop.xlane.xlu0 %1490
        %v1492 = vadd.f32 %v1386, %v1388
        %1493 = vadd.xlane.f32.xlu0 %v1492
        %v1494 = vpop.xlane.xlu0 %1493
        %v1495 = vadd.f32 %v1390, %v1392
        %1496 = vadd.xlane.f32.xlu0 %v1495
        %v1497 = vpop.xlane.xlu0 %1496
        %v1498 = vadd.f32 %v1394, %v1396
        %1499 = vadd.xlane.f32.xlu0 %v1498
        %v1500 = vpop.xlane.xlu0 %1499
        %v1501 = vadd.f32 %v1398, %v1400
        %1502 = vadd.xlane.f32.xlu0 %v1501
        %v1503 = vpop.xlane.xlu0 %1502
        %v1504 = vadd.f32 %v1402, %v1404
        %1505 = vadd.xlane.f32.xlu0 %v1504
        %v1506 = vpop.xlane.xlu0 %1505
        %v1507 = vadd.f32 %v1406, %v1408
        %1508 = vadd.xlane.f32.xlu0 %v1507
        %v1509 = vpop.xlane.xlu0 %1508
        %v1510 = vadd.f32 %v1410, %v1412
        %1511 = vadd.xlane.f32.xlu0 %v1510
        %v1512 = vpop.xlane.xlu0 %1511
        %v1513 = vadd.f32 %v1414, %v1416
        %1514 = vadd.xlane.f32.xlu0 %v1513
        %v1515 = vpop.xlane.xlu0 %1514
        %v1516 = vadd.f32 %v1418, %v1420
        %1517 = vadd.xlane.f32.xlu0 %v1516
        %v1518 = vpop.xlane.xlu0 %1517
        %v1519 = vadd.f32 %v1422, %v1424
        %1520 = vadd.xlane.f32.xlu0 %v1519
        %v1521 = vpop.xlane.xlu0 %1520
        %v1522 = vadd.f32 %v1426, %v1428
        %1523 = vadd.xlane.f32.xlu0 %v1522
        %v1524 = vpop.xlane.xlu0 %1523
        %v1525 = vrcp.pop %v1431
        %v1526 = vmul.f32 %v1431, %v1525
        %v1527 = vsub.f32 1.0, %v1526
        %v1528 = vmul.f32 %v1525, %v1527
        %v1529 = vadd.f32 %v1525, %v1528
        %vm1530 = vweird.f32 %v1431
        %vm1531 = vweird.f32 %v1525
        %vm1532 = vmor %vm1530, %vm1531
        %v1533 = vsel %vm1532, %v1525, %v1529
        %v1534 = vand.u32 2147483647, %v1431
        %vm1535 = vcmp.eq.f32.partialorder %v1534, 8.507059e+37
        %v1536 = vand.u32 %v1431, 2147483648
        %v1537 = vor.u32 1.1754944e-38, %v1536
        %v1538 = vsel %vm1535, %v1537, %v1533
        %v1539 = vmul.f32 %v1302, %v1538
        %v1540 = vmul.f32 %v1304, %v1538
        %v1541 = vrcp.pop %v1434
        %v1542 = vmul.f32 %v1434, %v1541
        %v1543 = vsub.f32 1.0, %v1542
        %v1544 = vmul.f32 %v1541, %v1543
        %v1545 = vadd.f32 %v1541, %v1544
        %vm1546 = vweird.f32 %v1434
        %vm1547 = vweird.f32 %v1541
        %vm1548 = vmor %vm1546, %vm1547
        %v1549 = vsel %vm1548, %v1541, %v1545
        %v1550 = vand.u32 2147483647, %v1434
        %vm1551 = vcmp.eq.f32.partialorder %v1550, 8.507059e+37
        %v1552 = vand.u32 %v1434, 2147483648
        %v1553 = vor.u32 1.1754944e-38, %v1552
        %v1554 = vsel %vm1551, %v1553, %v1549
        %v1555 = vmul.f32 %v1306, %v1554
        %v1556 = vmul.f32 %v1308, %v1554
        %v1557 = vrcp.pop %v1437
        %v1558 = vmul.f32 %v1437, %v1557
        %v1559 = vsub.f32 1.0, %v1558
        %v1560 = vmul.f32 %v1557, %v1559
        %v1561 = vadd.f32 %v1557, %v1560
        %vm1562 = vweird.f32 %v1437
        %vm1563 = vweird.f32 %v1557
        %vm1564 = vmor %vm1562, %vm1563
        %v1565 = vsel %vm1564, %v1557, %v1561
        %v1566 = vand.u32 2147483647, %v1437
        %vm1567 = vcmp.eq.f32.partialorder %v1566, 8.507059e+37
        %v1568 = vand.u32 %v1437, 2147483648
        %v1569 = vor.u32 1.1754944e-38, %v1568
        %v1570 = vsel %vm1567, %v1569, %v1565
        %v1571 = vmul.f32 %v1310, %v1570
        %v1572 = vmul.f32 %v1312, %v1570
        %v1573 = vrcp.pop %v1440
        %v1574 = vmul.f32 %v1440, %v1573
        %v1575 = vsub.f32 1.0, %v1574
        %v1576 = vmul.f32 %v1573, %v1575
        %v1577 = vadd.f32 %v1573, %v1576
        %vm1578 = vweird.f32 %v1440
        %vm1579 = vweird.f32 %v1573
        %vm1580 = vmor %vm1578, %vm1579
        %v1581 = vsel %vm1580, %v1573, %v1577
        %v1582 = vand.u32 2147483647, %v1440
        %vm1583 = vcmp.eq.f32.partialorder %v1582, 8.507059e+37
        %v1584 = vand.u32 %v1440, 2147483648
        %v1585 = vor.u32 1.1754944e-38, %v1584
        %v1586 = vsel %vm1583, %v1585, %v1581
        %v1587 = vmul.f32 %v1314, %v1586
        %v1588 = vmul.f32 %v1316, %v1586
        %v1589 = vrcp.pop %v1443
        %v1590 = vmul.f32 %v1443, %v1589
        %v1591 = vsub.f32 1.0, %v1590
        %v1592 = vmul.f32 %v1589, %v1591
        %v1593 = vadd.f32 %v1589, %v1592
        %vm1594 = vweird.f32 %v1443
        %vm1595 = vweird.f32 %v1589
        %vm1596 = vmor %vm1594, %vm1595
        %v1597 = vsel %vm1596, %v1589, %v1593
        %v1598 = vand.u32 2147483647, %v1443
        %vm1599 = vcmp.eq.f32.partialorder %v1598, 8.507059e+37
        %v1600 = vand.u32 %v1443, 2147483648
        %v1601 = vor.u32 1.1754944e-38, %v1600
        %v1602 = vsel %vm1599, %v1601, %v1597
        %v1603 = vmul.f32 %v1318, %v1602
        %v1604 = vmul.f32 %v1320, %v1602
        %v1605 = vrcp.pop %v1446
        %v1606 = vmul.f32 %v1446, %v1605
        %v1607 = vsub.f32 1.0, %v1606
        %v1608 = vmul.f32 %v1605, %v1607
        %v1609 = vadd.f32 %v1605, %v1608
        %vm1610 = vweird.f32 %v1446
        %vm1611 = vweird.f32 %v1605
        %vm1612 = vmor %vm1610, %vm1611
        %v1613 = vsel %vm1612, %v1605, %v1609
        %v1614 = vand.u32 2147483647, %v1446
        %vm1615 = vcmp.eq.f32.partialorder %v1614, 8.507059e+37
        %v1616 = vand.u32 %v1446, 2147483648
        %v1617 = vor.u32 1.1754944e-38, %v1616
        %v1618 = vsel %vm1615, %v1617, %v1613
        %v1619 = vmul.f32 %v1322, %v1618
        %v1620 = vmul.f32 %v1324, %v1618
        %v1621 = vrcp.pop %v1449
        %v1622 = vmul.f32 %v1449, %v1621
        %v1623 = vsub.f32 1.0, %v1622
        %v1624 = vmul.f32 %v1621, %v1623
        %v1625 = vadd.f32 %v1621, %v1624
        %vm1626 = vweird.f32 %v1449
        %vm1627 = vweird.f32 %v1621
        %vm1628 = vmor %vm1626, %vm1627
        %v1629 = vsel %vm1628, %v1621, %v1625
        %v1630 = vand.u32 2147483647, %v1449
        %vm1631 = vcmp.eq.f32.partialorder %v1630, 8.507059e+37
        %v1632 = vand.u32 %v1449, 2147483648
        %v1633 = vor.u32 1.1754944e-38, %v1632
        %v1634 = vsel %vm1631, %v1633, %v1629
        %v1635 = vmul.f32 %v1326, %v1634
        %v1636 = vmul.f32 %v1328, %v1634
        %v1637 = vrcp.pop %v1452
        %v1638 = vmul.f32 %v1452, %v1637
        %v1639 = vsub.f32 1.0, %v1638
        %v1640 = vmul.f32 %v1637, %v1639
        %v1641 = vadd.f32 %v1637, %v1640
        %vm1642 = vweird.f32 %v1452
        %vm1643 = vweird.f32 %v1637
        %vm1644 = vmor %vm1642, %vm1643
        %v1645 = vsel %vm1644, %v1637, %v1641
        %v1646 = vand.u32 2147483647, %v1452
        %vm1647 = vcmp.eq.f32.partialorder %v1646, 8.507059e+37
        %v1648 = vand.u32 %v1452, 2147483648
        %v1649 = vor.u32 1.1754944e-38, %v1648
        %v1650 = vsel %vm1647, %v1649, %v1645
        %v1651 = vmul.f32 %v1330, %v1650
        %v1652 = vmul.f32 %v1332, %v1650
        %v1653 = vrcp.pop %v1455
        %v1654 = vmul.f32 %v1455, %v1653
        %v1655 = vsub.f32 1.0, %v1654
        %v1656 = vmul.f32 %v1653, %v1655
        %v1657 = vadd.f32 %v1653, %v1656
        %vm1658 = vweird.f32 %v1455
        %vm1659 = vweird.f32 %v1653
        %vm1660 = vmor %vm1658, %vm1659
        %v1661 = vsel %vm1660, %v1653, %v1657
        %v1662 = vand.u32 2147483647, %v1455
        %vm1663 = vcmp.eq.f32.partialorder %v1662, 8.507059e+37
        %v1664 = vand.u32 %v1455, 2147483648
        %v1665 = vor.u32 1.1754944e-38, %v1664
        %v1666 = vsel %vm1663, %v1665, %v1661
        %v1667 = vmul.f32 %v1334, %v1666
        %v1668 = vmul.f32 %v1336, %v1666
        %v1669 = vrcp.pop %v1458
        %v1670 = vmul.f32 %v1458, %v1669
        %v1671 = vsub.f32 1.0, %v1670
        %v1672 = vmul.f32 %v1669, %v1671
        %v1673 = vadd.f32 %v1669, %v1672
        %vm1674 = vweird.f32 %v1458
        %vm1675 = vweird.f32 %v1669
        %vm1676 = vmor %vm1674, %vm1675
        %v1677 = vsel %vm1676, %v1669, %v1673
        %v1678 = vand.u32 2147483647, %v1458
        %vm1679 = vcmp.eq.f32.partialorder %v1678, 8.507059e+37
        %v1680 = vand.u32 %v1458, 2147483648
        %v1681 = vor.u32 1.1754944e-38, %v1680
        %v1682 = vsel %vm1679, %v1681, %v1677
        %v1683 = vmul.f32 %v1338, %v1682
        %v1684 = vmul.f32 %v1340, %v1682
        %v1685 = vrcp.pop %v1461
        %v1686 = vmul.f32 %v1461, %v1685
        %v1687 = vsub.f32 1.0, %v1686
        %v1688 = vmul.f32 %v1685, %v1687
        %v1689 = vadd.f32 %v1685, %v1688
        %vm1690 = vweird.f32 %v1461
        %vm1691 = vweird.f32 %v1685
        %vm1692 = vmor %vm1690, %vm1691
        %v1693 = vsel %vm1692, %v1685, %v1689
        %v1694 = vand.u32 2147483647, %v1461
        %vm1695 = vcmp.eq.f32.partialorder %v1694, 8.507059e+37
        %v1696 = vand.u32 %v1461, 2147483648
        %v1697 = vor.u32 1.1754944e-38, %v1696
        %v1698 = vsel %vm1695, %v1697, %v1693
        %v1699 = vmul.f32 %v1342, %v1698
        %v1700 = vmul.f32 %v1344, %v1698
        %v1701 = vrcp.pop %v1464
        %v1702 = vmul.f32 %v1464, %v1701
        %v1703 = vsub.f32 1.0, %v1702
        %v1704 = vmul.f32 %v1701, %v1703
        %v1705 = vadd.f32 %v1701, %v1704
        %vm1706 = vweird.f32 %v1464
        %vm1707 = vweird.f32 %v1701
        %vm1708 = vmor %vm1706, %vm1707
        %v1709 = vsel %vm1708, %v1701, %v1705
        %v1710 = vand.u32 2147483647, %v1464
        %vm1711 = vcmp.eq.f32.partialorder %v1710, 8.507059e+37
        %v1712 = vand.u32 %v1464, 2147483648
        %v1713 = vor.u32 1.1754944e-38, %v1712
        %v1714 = vsel %vm1711, %v1713, %v1709
        %v1715 = vmul.f32 %v1346, %v1714
        %v1716 = vmul.f32 %v1348, %v1714
        %v1717 = vrcp.pop %v1467
        %v1718 = vmul.f32 %v1467, %v1717
        %v1719 = vsub.f32 1.0, %v1718
        %v1720 = vmul.f32 %v1717, %v1719
        %v1721 = vadd.f32 %v1717, %v1720
        %vm1722 = vweird.f32 %v1467
        %vm1723 = vweird.f32 %v1717
        %vm1724 = vmor %vm1722, %vm1723
        %v1725 = vsel %vm1724, %v1717, %v1721
        %v1726 = vand.u32 2147483647, %v1467
        %vm1727 = vcmp.eq.f32.partialorder %v1726, 8.507059e+37
        %v1728 = vand.u32 %v1467, 2147483648
        %v1729 = vor.u32 1.1754944e-38, %v1728
        %v1730 = vsel %vm1727, %v1729, %v1725
        %v1731 = vmul.f32 %v1350, %v1730
        %v1732 = vmul.f32 %v1352, %v1730
        %v1733 = vrcp.pop %v1470
        %v1734 = vmul.f32 %v1470, %v1733
        %v1735 = vsub.f32 1.0, %v1734
        %v1736 = vmul.f32 %v1733, %v1735
        %v1737 = vadd.f32 %v1733, %v1736
        %vm1738 = vweird.f32 %v1470
        %vm1739 = vweird.f32 %v1733
        %vm1740 = vmor %vm1738, %vm1739
        %v1741 = vsel %vm1740, %v1733, %v1737
        %v1742 = vand.u32 2147483647, %v1470
        %vm1743 = vcmp.eq.f32.partialorder %v1742, 8.507059e+37
        %v1744 = vand.u32 %v1470, 2147483648
        %v1745 = vor.u32 1.1754944e-38, %v1744
        %v1746 = vsel %vm1743, %v1745, %v1741
        %v1747 = vmul.f32 %v1354, %v1746
        %v1748 = vmul.f32 %v1356, %v1746
        %v1749 = vrcp.pop %v1473
        %v1750 = vmul.f32 %v1473, %v1749
        %v1751 = vsub.f32 1.0, %v1750
        %v1752 = vmul.f32 %v1749, %v1751
        %v1753 = vadd.f32 %v1749, %v1752
        %vm1754 = vweird.f32 %v1473
        %vm1755 = vweird.f32 %v1749
        %vm1756 = vmor %vm1754, %vm1755
        %v1757 = vsel %vm1756, %v1749, %v1753
        %v1758 = vand.u32 2147483647, %v1473
        %vm1759 = vcmp.eq.f32.partialorder %v1758, 8.507059e+37
        %v1760 = vand.u32 %v1473, 2147483648
        %v1761 = vor.u32 1.1754944e-38, %v1760
        %v1762 = vsel %vm1759, %v1761, %v1757
        %v1763 = vmul.f32 %v1358, %v1762
        %v1764 = vmul.f32 %v1360, %v1762
        %v1765 = vrcp.pop %v1476
        %v1766 = vmul.f32 %v1476, %v1765
        %v1767 = vsub.f32 1.0, %v1766
        %v1768 = vmul.f32 %v1765, %v1767
        %v1769 = vadd.f32 %v1765, %v1768
        %vm1770 = vweird.f32 %v1476
        %vm1771 = vweird.f32 %v1765
        %vm1772 = vmor %vm1770, %vm1771
        %v1773 = vsel %vm1772, %v1765, %v1769
        %v1774 = vand.u32 2147483647, %v1476
        %vm1775 = vcmp.eq.f32.partialorder %v1774, 8.507059e+37
        %v1776 = vand.u32 %v1476, 2147483648
        %v1777 = vor.u32 1.1754944e-38, %v1776
        %v1778 = vsel %vm1775, %v1777, %v1773
        %v1779 = vmul.f32 %v1362, %v1778
        %v1780 = vmul.f32 %v1364, %v1778
        %v1781 = vrcp.pop %v1479
        %v1782 = vmul.f32 %v1479, %v1781
        %v1783 = vsub.f32 1.0, %v1782
        %v1784 = vmul.f32 %v1781, %v1783
        %v1785 = vadd.f32 %v1781, %v1784
        %vm1786 = vweird.f32 %v1479
        %vm1787 = vweird.f32 %v1781
        %vm1788 = vmor %vm1786, %vm1787
        %v1789 = vsel %vm1788, %v1781, %v1785
        %v1790 = vand.u32 2147483647, %v1479
        %vm1791 = vcmp.eq.f32.partialorder %v1790, 8.507059e+37
        %v1792 = vand.u32 %v1479, 2147483648
        %v1793 = vor.u32 1.1754944e-38, %v1792
        %v1794 = vsel %vm1791, %v1793, %v1789
        %v1795 = vmul.f32 %v1366, %v1794
        %v1796 = vmul.f32 %v1368, %v1794
        %v1797 = vrcp.pop %v1482
        %v1798 = vmul.f32 %v1482, %v1797
        %v1799 = vsub.f32 1.0, %v1798
        %v1800 = vmul.f32 %v1797, %v1799
        %v1801 = vadd.f32 %v1797, %v1800
        %vm1802 = vweird.f32 %v1482
        %vm1803 = vweird.f32 %v1797
        %vm1804 = vmor %vm1802, %vm1803
        %v1805 = vsel %vm1804, %v1797, %v1801
        %v1806 = vand.u32 2147483647, %v1482
        %vm1807 = vcmp.eq.f32.partialorder %v1806, 8.507059e+37
        %v1808 = vand.u32 %v1482, 2147483648
        %v1809 = vor.u32 1.1754944e-38, %v1808
        %v1810 = vsel %vm1807, %v1809, %v1805
        %v1811 = vmul.f32 %v1370, %v1810
        %v1812 = vmul.f32 %v1372, %v1810
        %v1813 = vrcp.pop %v1485
        %v1814 = vmul.f32 %v1485, %v1813
        %v1815 = vsub.f32 1.0, %v1814
        %v1816 = vmul.f32 %v1813, %v1815
        %v1817 = vadd.f32 %v1813, %v1816
        %vm1818 = vweird.f32 %v1485
        %vm1819 = vweird.f32 %v1813
        %vm1820 = vmor %vm1818, %vm1819
        %v1821 = vsel %vm1820, %v1813, %v1817
        %v1822 = vand.u32 2147483647, %v1485
        %vm1823 = vcmp.eq.f32.partialorder %v1822, 8.507059e+37
        %v1824 = vand.u32 %v1485, 2147483648
        %v1825 = vor.u32 1.1754944e-38, %v1824
        %v1826 = vsel %vm1823, %v1825, %v1821
        %v1827 = vmul.f32 %v1374, %v1826
        %v1828 = vmul.f32 %v1376, %v1826
        %v1829 = vrcp.pop %v1488
        %v1830 = vmul.f32 %v1488, %v1829
        %v1831 = vsub.f32 1.0, %v1830
        %v1832 = vmul.f32 %v1829, %v1831
        %v1833 = vadd.f32 %v1829, %v1832
        %vm1834 = vweird.f32 %v1488
        %vm1835 = vweird.f32 %v1829
        %vm1836 = vmor %vm1834, %vm1835
        %v1837 = vsel %vm1836, %v1829, %v1833
        %v1838 = vand.u32 2147483647, %v1488
        %vm1839 = vcmp.eq.f32.partialorder %v1838, 8.507059e+37
        %v1840 = vand.u32 %v1488, 2147483648
        %v1841 = vor.u32 1.1754944e-38, %v1840
        %v1842 = vsel %vm1839, %v1841, %v1837
        %v1843 = vmul.f32 %v1378, %v1842
        %v1844 = vmul.f32 %v1380, %v1842
        %v1845 = vrcp.pop %v1491
        %v1846 = vmul.f32 %v1491, %v1845
        %v1847 = vsub.f32 1.0, %v1846
        %v1848 = vmul.f32 %v1845, %v1847
        %v1849 = vadd.f32 %v1845, %v1848
        %vm1850 = vweird.f32 %v1491
        %vm1851 = vweird.f32 %v1845
        %vm1852 = vmor %vm1850, %vm1851
        %v1853 = vsel %vm1852, %v1845, %v1849
        %v1854 = vand.u32 2147483647, %v1491
        %vm1855 = vcmp.eq.f32.partialorder %v1854, 8.507059e+37
        %v1856 = vand.u32 %v1491, 2147483648
        %v1857 = vor.u32 1.1754944e-38, %v1856
        %v1858 = vsel %vm1855, %v1857, %v1853
        %v1859 = vmul.f32 %v1382, %v1858
        %v1860 = vmul.f32 %v1384, %v1858
        %v1861 = vrcp.pop %v1494
        %v1862 = vmul.f32 %v1494, %v1861
        %v1863 = vsub.f32 1.0, %v1862
        %v1864 = vmul.f32 %v1861, %v1863
        %v1865 = vadd.f32 %v1861, %v1864
        %vm1866 = vweird.f32 %v1494
        %vm1867 = vweird.f32 %v1861
        %vm1868 = vmor %vm1866, %vm1867
        %v1869 = vsel %vm1868, %v1861, %v1865
        %v1870 = vand.u32 2147483647, %v1494
        %vm1871 = vcmp.eq.f32.partialorder %v1870, 8.507059e+37
        %v1872 = vand.u32 %v1494, 2147483648
        %v1873 = vor.u32 1.1754944e-38, %v1872
        %v1874 = vsel %vm1871, %v1873, %v1869
        %v1875 = vmul.f32 %v1386, %v1874
        %v1876 = vmul.f32 %v1388, %v1874
        %v1877 = vrcp.pop %v1497
        %v1878 = vmul.f32 %v1497, %v1877
        %v1879 = vsub.f32 1.0, %v1878
        %v1880 = vmul.f32 %v1877, %v1879
        %v1881 = vadd.f32 %v1877, %v1880
        %vm1882 = vweird.f32 %v1497
        %vm1883 = vweird.f32 %v1877
        %vm1884 = vmor %vm1882, %vm1883
        %v1885 = vsel %vm1884, %v1877, %v1881
        %v1886 = vand.u32 2147483647, %v1497
        %vm1887 = vcmp.eq.f32.partialorder %v1886, 8.507059e+37
        %v1888 = vand.u32 %v1497, 2147483648
        %v1889 = vor.u32 1.1754944e-38, %v1888
        %v1890 = vsel %vm1887, %v1889, %v1885
        %v1891 = vmul.f32 %v1390, %v1890
        %v1892 = vmul.f32 %v1392, %v1890
        %v1893 = vrcp.pop %v1500
        %v1894 = vmul.f32 %v1500, %v1893
        %v1895 = vsub.f32 1.0, %v1894
        %v1896 = vmul.f32 %v1893, %v1895
        %v1897 = vadd.f32 %v1893, %v1896
        %vm1898 = vweird.f32 %v1500
        %vm1899 = vweird.f32 %v1893
        %vm1900 = vmor %vm1898, %vm1899
        %v1901 = vsel %vm1900, %v1893, %v1897
        %v1902 = vand.u32 2147483647, %v1500
        %vm1903 = vcmp.eq.f32.partialorder %v1902, 8.507059e+37
        %v1904 = vand.u32 %v1500, 2147483648
        %v1905 = vor.u32 1.1754944e-38, %v1904
        %v1906 = vsel %vm1903, %v1905, %v1901
        %v1907 = vmul.f32 %v1394, %v1906
        %v1908 = vmul.f32 %v1396, %v1906
        %v1909 = vrcp.pop %v1503
        %v1910 = vmul.f32 %v1503, %v1909
        %v1911 = vsub.f32 1.0, %v1910
        %v1912 = vmul.f32 %v1909, %v1911
        %v1913 = vadd.f32 %v1909, %v1912
        %vm1914 = vweird.f32 %v1503
        %vm1915 = vweird.f32 %v1909
        %vm1916 = vmor %vm1914, %vm1915
        %v1917 = vsel %vm1916, %v1909, %v1913
        %v1918 = vand.u32 2147483647, %v1503
        %vm1919 = vcmp.eq.f32.partialorder %v1918, 8.507059e+37
        %v1920 = vand.u32 %v1503, 2147483648
        %v1921 = vor.u32 1.1754944e-38, %v1920
        %v1922 = vsel %vm1919, %v1921, %v1917
        %v1923 = vmul.f32 %v1398, %v1922
        %v1924 = vmul.f32 %v1400, %v1922
        %v1925 = vrcp.pop %v1506
        %v1926 = vmul.f32 %v1506, %v1925
        %v1927 = vsub.f32 1.0, %v1926
        %v1928 = vmul.f32 %v1925, %v1927
        %v1929 = vadd.f32 %v1925, %v1928
        %vm1930 = vweird.f32 %v1506
        %vm1931 = vweird.f32 %v1925
        %vm1932 = vmor %vm1930, %vm1931
        %v1933 = vsel %vm1932, %v1925, %v1929
        %v1934 = vand.u32 2147483647, %v1506
        %vm1935 = vcmp.eq.f32.partialorder %v1934, 8.507059e+37
        %v1936 = vand.u32 %v1506, 2147483648
        %v1937 = vor.u32 1.1754944e-38, %v1936
        %v1938 = vsel %vm1935, %v1937, %v1933
        %v1939 = vmul.f32 %v1402, %v1938
        %v1940 = vmul.f32 %v1404, %v1938
        %v1941 = vrcp.pop %v1509
        %v1942 = vmul.f32 %v1509, %v1941
        %v1943 = vsub.f32 1.0, %v1942
        %v1944 = vmul.f32 %v1941, %v1943
        %v1945 = vadd.f32 %v1941, %v1944
        %vm1946 = vweird.f32 %v1509
        %vm1947 = vweird.f32 %v1941
        %vm1948 = vmor %vm1946, %vm1947
        %v1949 = vsel %vm1948, %v1941, %v1945
        %v1950 = vand.u32 2147483647, %v1509
        %vm1951 = vcmp.eq.f32.partialorder %v1950, 8.507059e+37
        %v1952 = vand.u32 %v1509, 2147483648
        %v1953 = vor.u32 1.1754944e-38, %v1952
        %v1954 = vsel %vm1951, %v1953, %v1949
        %v1955 = vmul.f32 %v1406, %v1954
        %v1956 = vmul.f32 %v1408, %v1954
        %v1957 = vrcp.pop %v1512
        %v1958 = vmul.f32 %v1512, %v1957
        %v1959 = vsub.f32 1.0, %v1958
        %v1960 = vmul.f32 %v1957, %v1959
        %v1961 = vadd.f32 %v1957, %v1960
        %vm1962 = vweird.f32 %v1512
        %vm1963 = vweird.f32 %v1957
        %vm1964 = vmor %vm1962, %vm1963
        %v1965 = vsel %vm1964, %v1957, %v1961
        %v1966 = vand.u32 2147483647, %v1512
        %vm1967 = vcmp.eq.f32.partialorder %v1966, 8.507059e+37
        %v1968 = vand.u32 %v1512, 2147483648
        %v1969 = vor.u32 1.1754944e-38, %v1968
        %v1970 = vsel %vm1967, %v1969, %v1965
        %v1971 = vmul.f32 %v1410, %v1970
        %v1972 = vmul.f32 %v1412, %v1970
        %v1973 = vrcp.pop %v1515
        %v1974 = vmul.f32 %v1515, %v1973
        %v1975 = vsub.f32 1.0, %v1974
        %v1976 = vmul.f32 %v1973, %v1975
        %v1977 = vadd.f32 %v1973, %v1976
        %vm1978 = vweird.f32 %v1515
        %vm1979 = vweird.f32 %v1973
        %vm1980 = vmor %vm1978, %vm1979
        %v1981 = vsel %vm1980, %v1973, %v1977
        %v1982 = vand.u32 2147483647, %v1515
        %vm1983 = vcmp.eq.f32.partialorder %v1982, 8.507059e+37
        %v1984 = vand.u32 %v1515, 2147483648
        %v1985 = vor.u32 1.1754944e-38, %v1984
        %v1986 = vsel %vm1983, %v1985, %v1981
        %v1987 = vmul.f32 %v1414, %v1986
        %v1988 = vmul.f32 %v1416, %v1986
        %v1989 = vrcp.pop %v1518
        %v1990 = vmul.f32 %v1518, %v1989
        %v1991 = vsub.f32 1.0, %v1990
        %v1992 = vmul.f32 %v1989, %v1991
        %v1993 = vadd.f32 %v1989, %v1992
        %vm1994 = vweird.f32 %v1518
        %vm1995 = vweird.f32 %v1989
        %vm1996 = vmor %vm1994, %vm1995
        %v1997 = vsel %vm1996, %v1989, %v1993
        %v1998 = vand.u32 2147483647, %v1518
        %vm1999 = vcmp.eq.f32.partialorder %v1998, 8.507059e+37
        %v2000 = vand.u32 %v1518, 2147483648
        %v2001 = vor.u32 1.1754944e-38, %v2000
        %v2002 = vsel %vm1999, %v2001, %v1997
        %v2003 = vmul.f32 %v1418, %v2002
        %v2004 = vmul.f32 %v1420, %v2002
        %v2005 = vrcp.pop %v1521
        %v2006 = vmul.f32 %v1521, %v2005
        %v2007 = vsub.f32 1.0, %v2006
        %v2008 = vmul.f32 %v2005, %v2007
        %v2009 = vadd.f32 %v2005, %v2008
        %vm2010 = vweird.f32 %v1521
        %vm2011 = vweird.f32 %v2005
        %vm2012 = vmor %vm2010, %vm2011
        %v2013 = vsel %vm2012, %v2005, %v2009
        %v2014 = vand.u32 2147483647, %v1521
        %vm2015 = vcmp.eq.f32.partialorder %v2014, 8.507059e+37
        %v2016 = vand.u32 %v1521, 2147483648
        %v2017 = vor.u32 1.1754944e-38, %v2016
        %v2018 = vsel %vm2015, %v2017, %v2013
        %v2019 = vmul.f32 %v1422, %v2018
        %v2020 = vmul.f32 %v1424, %v2018
        %v2021 = vrcp.pop %v1524
        %v2022 = vmul.f32 %v1524, %v2021
        %v2023 = vsub.f32 1.0, %v2022
        %v2024 = vmul.f32 %v2021, %v2023
        %v2025 = vadd.f32 %v2021, %v2024
        %vm2026 = vweird.f32 %v1524
        %vm2027 = vweird.f32 %v2021
        %vm2028 = vmor %vm2026, %vm2027
        %v2029 = vsel %vm2028, %v2021, %v2025
        %v2030 = vand.u32 2147483647, %v1524
        %vm2031 = vcmp.eq.f32.partialorder %v2030, 8.507059e+37
        %v2032 = vand.u32 %v1524, 2147483648
        %v2033 = vor.u32 1.1754944e-38, %v2032
        %v2034 = vsel %vm2031, %v2033, %v2029
        %v2035 = vmul.f32 %v1426, %v2034
        %v2036 = vmul.f32 %v1428, %v2034
        %2037 = vrot.lane.b32.xlu0 %v527, 64
        %v2038 = vpop.permute.xlu0 %2037
        %2039 = vrot.lane.b32.xlu0 %v530, 64
        %v2040 = vpop.permute.xlu0 %2039
        %2041 = vrot.lane.b32.xlu0 %v533, 64
        %v2042 = vpop.permute.xlu0 %2041
        %2043 = vrot.lane.b32.xlu0 %v536, 64
        %v2044 = vpop.permute.xlu0 %2043
        %2045 = vrot.lane.b32.xlu0 %v539, 64
        %v2046 = vpop.permute.xlu0 %2045
        %2047 = vrot.lane.b32.xlu0 %v542, 64
        %v2048 = vpop.permute.xlu0 %2047
        %2049 = vrot.lane.b32.xlu0 %v545, 64
        %v2050 = vpop.permute.xlu0 %2049
        %2051 = vrot.lane.b32.xlu0 %v548, 64
        %v2052 = vpop.permute.xlu0 %2051
        %2053 = vrot.lane.b32.xlu0 %v551, 64
        %v2054 = vpop.permute.xlu0 %2053
        %2055 = vrot.lane.b32.xlu0 %v554, 64
        %v2056 = vpop.permute.xlu0 %2055
        %2057 = vrot.lane.b32.xlu0 %v557, 64
        %v2058 = vpop.permute.xlu0 %2057
        %2059 = vrot.lane.b32.xlu0 %v560, 64
        %v2060 = vpop.permute.xlu0 %2059
        %2061 = vrot.lane.b32.xlu0 %v563, 64
        %v2062 = vpop.permute.xlu0 %2061
        %2063 = vrot.lane.b32.xlu0 %v566, 64
        %v2064 = vpop.permute.xlu0 %2063
        %2065 = vrot.lane.b32.xlu0 %v569, 64
        %v2066 = vpop.permute.xlu0 %2065
        %2067 = vrot.lane.b32.xlu0 %v572, 64
        %v2068 = vpop.permute.xlu0 %2067
        %2069 = vrot.lane.b32.xlu0 %v575, 64
        %v2070 = vpop.permute.xlu0 %2069
        %2071 = vrot.lane.b32.xlu0 %v578, 64
        %v2072 = vpop.permute.xlu0 %2071
        %2073 = vrot.lane.b32.xlu0 %v581, 64
        %v2074 = vpop.permute.xlu0 %2073
        %2075 = vrot.lane.b32.xlu0 %v584, 64
        %v2076 = vpop.permute.xlu0 %2075
        %2077 = vrot.lane.b32.xlu0 %v587, 64
        %v2078 = vpop.permute.xlu0 %2077
        %2079 = vrot.lane.b32.xlu0 %v590, 64
        %v2080 = vpop.permute.xlu0 %2079
        %2081 = vrot.lane.b32.xlu0 %v593, 64
        %v2082 = vpop.permute.xlu0 %2081
        %2083 = vrot.lane.b32.xlu0 %v596, 64
        %v2084 = vpop.permute.xlu0 %2083
        %2085 = vrot.lane.b32.xlu0 %v599, 64
        %v2086 = vpop.permute.xlu0 %2085
        %2087 = vrot.lane.b32.xlu0 %v602, 64
        %v2088 = vpop.permute.xlu0 %2087
        %2089 = vrot.lane.b32.xlu0 %v605, 64
        %v2090 = vpop.permute.xlu0 %2089
        %2091 = vrot.lane.b32.xlu0 %v608, 64
        %v2092 = vpop.permute.xlu0 %2091
        %2093 = vrot.lane.b32.xlu0 %v611, 64
        %v2094 = vpop.permute.xlu0 %2093
        %2095 = vrot.lane.b32.xlu0 %v614, 64
        %v2096 = vpop.permute.xlu0 %2095
        %2097 = vrot.lane.b32.xlu0 %v617, 64
        %v2098 = vpop.permute.xlu0 %2097
        %2099 = vrot.lane.b32.xlu0 %v620, 64
        %v2100 = vpop.permute.xlu0 %2099
        %2133 = vmatpush.msra.mxu0 %v2068
        %2134 = vmatpush.msra.mxu0 %v2066
        %2135 = vmatpush.msra.mxu0 %v2064
        %2136 = vmatpush.msra.mxu0 %v2062
        %2137 = vmatpush.msra.mxu0 %v2060
        %2138 = vmatpush.msra.mxu0 %v2058
        %2139 = vmatpush.msra.mxu0 %v2056
        %2140 = vmatpush.msra.mxu0 %v2054
        %2141 = vmatpush.msra.mxu0 %v2052
        %2142 = vmatpush.msra.mxu0 %v2050
        %2143 = vmatpush.msra.mxu0 %v2048
        %2144 = vmatpush.msra.mxu0 %v2046
        %2145 = vmatpush.msra.mxu0 %v2044
        %2146 = vmatpush.msra.mxu0 %v2042
        %2147 = vmatpush.msra.mxu0 %v2040
        %2148 = vmatpush.msra.mxu0 %v2038
        %2149 = vmatmul.f32.gmra.mxu0 %v1539
        %v2150 = vpop.f32.mrf.mxu0
        %v2151 = vadd.f32 0.0, %v2150
        %2152 = vmatmul.f32.gmra.mxu0 %v1555
        %v2153 = vpop.f32.mrf.mxu0
        %v2154 = vadd.f32 0.0, %v2153
        %2155 = vmatmul.f32.gmra.mxu0 %v1571
        %v2156 = vpop.f32.mrf.mxu0
        %v2157 = vadd.f32 0.0, %v2156
        %2158 = vmatmul.f32.gmra.mxu0 %v1587
        %v2159 = vpop.f32.mrf.mxu0
        %v2160 = vadd.f32 0.0, %v2159
        %2161 = vmatmul.f32.gmra.mxu0 %v1603
        %v2162 = vpop.f32.mrf.mxu0
        %v2163 = vadd.f32 0.0, %v2162
        %2164 = vmatmul.f32.gmra.mxu0 %v1619
        %v2165 = vpop.f32.mrf.mxu0
        %v2166 = vadd.f32 0.0, %v2165
        %2167 = vmatmul.f32.gmra.mxu0 %v1635
        %v2168 = vpop.f32.mrf.mxu0
        %v2169 = vadd.f32 0.0, %v2168
        %2170 = vmatmul.f32.gmra.mxu0 %v1651
        %v2171 = vpop.f32.mrf.mxu0
        %v2172 = vadd.f32 0.0, %v2171
        %2173 = vmatmul.f32.gmra.mxu0 %v1667
        %v2174 = vpop.f32.mrf.mxu0
        %v2175 = vadd.f32 0.0, %v2174
        %2176 = vmatmul.f32.gmra.mxu0 %v1683
        %v2177 = vpop.f32.mrf.mxu0
        %v2178 = vadd.f32 0.0, %v2177
        %2179 = vmatmul.f32.gmra.mxu0 %v1699
        %v2180 = vpop.f32.mrf.mxu0
        %v2181 = vadd.f32 0.0, %v2180
        %2182 = vmatmul.f32.gmra.mxu0 %v1715
        %v2183 = vpop.f32.mrf.mxu0
        %v2184 = vadd.f32 0.0, %v2183
        %2185 = vmatmul.f32.gmra.mxu0 %v1731
        %v2186 = vpop.f32.mrf.mxu0
        %v2187 = vadd.f32 0.0, %v2186
        %2188 = vmatmul.f32.gmra.mxu0 %v1747
        %v2189 = vpop.f32.mrf.mxu0
        %v2190 = vadd.f32 0.0, %v2189
        %2191 = vmatmul.f32.gmra.mxu0 %v1763
        %v2192 = vpop.f32.mrf.mxu0
        %v2193 = vadd.f32 0.0, %v2192
        %2194 = vmatmul.f32.gmra.mxu0 %v1779
        %v2195 = vpop.f32.mrf.mxu0
        %v2196 = vadd.f32 0.0, %v2195
        %2197 = vmatmul.f32.gmra.mxu0 %v1795
        %v2198 = vpop.f32.mrf.mxu0
        %v2199 = vadd.f32 0.0, %v2198
        %2200 = vmatmul.f32.gmra.mxu0 %v1811
        %v2201 = vpop.f32.mrf.mxu0
        %v2202 = vadd.f32 0.0, %v2201
        %2203 = vmatmul.f32.gmra.mxu0 %v1827
        %v2204 = vpop.f32.mrf.mxu0
        %v2205 = vadd.f32 0.0, %v2204
        %2206 = vmatmul.f32.gmra.mxu0 %v1843
        %v2207 = vpop.f32.mrf.mxu0
        %v2208 = vadd.f32 0.0, %v2207
        %2209 = vmatmul.f32.gmra.mxu0 %v1859
        %v2210 = vpop.f32.mrf.mxu0
        %v2211 = vadd.f32 0.0, %v2210
        %2212 = vmatmul.f32.gmra.mxu0 %v1875
        %v2213 = vpop.f32.mrf.mxu0
        %v2214 = vadd.f32 0.0, %v2213
        %2215 = vmatmul.f32.gmra.mxu0 %v1891
        %v2216 = vpop.f32.mrf.mxu0
        %v2217 = vadd.f32 0.0, %v2216
        %2218 = vmatmul.f32.gmra.mxu0 %v1907
        %v2219 = vpop.f32.mrf.mxu0
        %v2220 = vadd.f32 0.0, %v2219
        %2221 = vmatmul.f32.gmra.mxu0 %v1923
        %v2222 = vpop.f32.mrf.mxu0
        %v2223 = vadd.f32 0.0, %v2222
        %2224 = vmatmul.f32.gmra.mxu0 %v1939
        %v2225 = vpop.f32.mrf.mxu0
        %v2226 = vadd.f32 0.0, %v2225
        %2227 = vmatmul.f32.gmra.mxu0 %v1955
        %v2228 = vpop.f32.mrf.mxu0
        %v2229 = vadd.f32 0.0, %v2228
        %2230 = vmatmul.f32.gmra.mxu0 %v1971
        %v2231 = vpop.f32.mrf.mxu0
        %v2232 = vadd.f32 0.0, %v2231
        %2233 = vmatmul.f32.gmra.mxu0 %v1987
        %v2234 = vpop.f32.mrf.mxu0
        %v2235 = vadd.f32 0.0, %v2234
        %2236 = vmatmul.f32.gmra.mxu0 %v2003
        %v2237 = vpop.f32.mrf.mxu0
        %v2238 = vadd.f32 0.0, %v2237
        %2239 = vmatmul.f32.gmra.mxu0 %v2019
        %v2240 = vpop.f32.mrf.mxu0
        %v2241 = vadd.f32 0.0, %v2240
        %2242 = vmatmul.f32.gmra.mxu0 %v2035
        %v2243 = vpop.f32.mrf.mxu0
        %v2244 = vadd.f32 0.0, %v2243
        %2245 = vdwg.mxu0
        %2246 = vmatpush.msra.mxu0 %v2100
        %2247 = vmatpush.msra.mxu0 %v2098
        %2248 = vmatpush.msra.mxu0 %v2096
        %2249 = vmatpush.msra.mxu0 %v2094
        %2250 = vmatpush.msra.mxu0 %v2092
        %2251 = vmatpush.msra.mxu0 %v2090
        %2252 = vmatpush.msra.mxu0 %v2088
        %2253 = vmatpush.msra.mxu0 %v2086
        %2254 = vmatpush.msra.mxu0 %v2084
        %2255 = vmatpush.msra.mxu0 %v2082
        %2256 = vmatpush.msra.mxu0 %v2080
        %2257 = vmatpush.msra.mxu0 %v2078
        %2258 = vmatpush.msra.mxu0 %v2076
        %2259 = vmatpush.msra.mxu0 %v2074
        %2260 = vmatpush.msra.mxu0 %v2072
        %2261 = vmatpush.msra.mxu0 %v2070
        %2262 = vmatmul.f32.gmra.mxu0 %v1540
        %v2263 = vpop.f32.mrf.mxu0
        %v2264 = vadd.f32 %v2151, %v2263
        %2265 = vmatmul.f32.gmra.mxu0 %v1556
        %v2266 = vpop.f32.mrf.mxu0
        %v2267 = vadd.f32 %v2154, %v2266
        %2268 = vmatmul.f32.gmra.mxu0 %v1572
        %v2269 = vpop.f32.mrf.mxu0
        %v2270 = vadd.f32 %v2157, %v2269
        %2271 = vmatmul.f32.gmra.mxu0 %v1588
        %v2272 = vpop.f32.mrf.mxu0
        %v2273 = vadd.f32 %v2160, %v2272
        %2274 = vmatmul.f32.gmra.mxu0 %v1604
        %v2275 = vpop.f32.mrf.mxu0
        %v2276 = vadd.f32 %v2163, %v2275
        %2277 = vmatmul.f32.gmra.mxu0 %v1620
        %v2278 = vpop.f32.mrf.mxu0
        %v2279 = vadd.f32 %v2166, %v2278
        %2280 = vmatmul.f32.gmra.mxu0 %v1636
        %v2281 = vpop.f32.mrf.mxu0
        %v2282 = vadd.f32 %v2169, %v2281
        %2283 = vmatmul.f32.gmra.mxu0 %v1652
        %v2284 = vpop.f32.mrf.mxu0
        %v2285 = vadd.f32 %v2172, %v2284
        %2286 = vmatmul.f32.gmra.mxu0 %v1668
        %v2287 = vpop.f32.mrf.mxu0
        %v2288 = vadd.f32 %v2175, %v2287
        %2289 = vmatmul.f32.gmra.mxu0 %v1684
        %v2290 = vpop.f32.mrf.mxu0
        %v2291 = vadd.f32 %v2178, %v2290
        %2292 = vmatmul.f32.gmra.mxu0 %v1700
        %v2293 = vpop.f32.mrf.mxu0
        %v2294 = vadd.f32 %v2181, %v2293
        %2295 = vmatmul.f32.gmra.mxu0 %v1716
        %v2296 = vpop.f32.mrf.mxu0
        %v2297 = vadd.f32 %v2184, %v2296
        %2298 = vmatmul.f32.gmra.mxu0 %v1732
        %v2299 = vpop.f32.mrf.mxu0
        %v2300 = vadd.f32 %v2187, %v2299
        %2301 = vmatmul.f32.gmra.mxu0 %v1748
        %v2302 = vpop.f32.mrf.mxu0
        %v2303 = vadd.f32 %v2190, %v2302
        %2304 = vmatmul.f32.gmra.mxu0 %v1764
        %v2305 = vpop.f32.mrf.mxu0
        %v2306 = vadd.f32 %v2193, %v2305
        %2307 = vmatmul.f32.gmra.mxu0 %v1780
        %v2308 = vpop.f32.mrf.mxu0
        %v2309 = vadd.f32 %v2196, %v2308
        %2310 = vmatmul.f32.gmra.mxu0 %v1796
        %v2311 = vpop.f32.mrf.mxu0
        %v2312 = vadd.f32 %v2199, %v2311
        %2313 = vmatmul.f32.gmra.mxu0 %v1812
        %v2314 = vpop.f32.mrf.mxu0
        %v2315 = vadd.f32 %v2202, %v2314
        %2316 = vmatmul.f32.gmra.mxu0 %v1828
        %v2317 = vpop.f32.mrf.mxu0
        %v2318 = vadd.f32 %v2205, %v2317
        %2319 = vmatmul.f32.gmra.mxu0 %v1844
        %v2320 = vpop.f32.mrf.mxu0
        %v2321 = vadd.f32 %v2208, %v2320
        %2322 = vmatmul.f32.gmra.mxu0 %v1860
        %v2323 = vpop.f32.mrf.mxu0
        %v2324 = vadd.f32 %v2211, %v2323
        %2325 = vmatmul.f32.gmra.mxu0 %v1876
        %v2326 = vpop.f32.mrf.mxu0
        %v2327 = vadd.f32 %v2214, %v2326
        %2328 = vmatmul.f32.gmra.mxu0 %v1892
        %v2329 = vpop.f32.mrf.mxu0
        %v2330 = vadd.f32 %v2217, %v2329
        %2331 = vmatmul.f32.gmra.mxu0 %v1908
        %v2332 = vpop.f32.mrf.mxu0
        %v2333 = vadd.f32 %v2220, %v2332
        %2334 = vmatmul.f32.gmra.mxu0 %v1924
        %v2335 = vpop.f32.mrf.mxu0
        %v2336 = vadd.f32 %v2223, %v2335
        %2337 = vmatmul.f32.gmra.mxu0 %v1940
        %v2338 = vpop.f32.mrf.mxu0
        %v2339 = vadd.f32 %v2226, %v2338
        %2340 = vmatmul.f32.gmra.mxu0 %v1956
        %v2341 = vpop.f32.mrf.mxu0
        %v2342 = vadd.f32 %v2229, %v2341
        %2343 = vmatmul.f32.gmra.mxu0 %v1972
        %v2344 = vpop.f32.mrf.mxu0
        %v2345 = vadd.f32 %v2232, %v2344
        %2346 = vmatmul.f32.gmra.mxu0 %v1988
        %v2347 = vpop.f32.mrf.mxu0
        %v2348 = vadd.f32 %v2235, %v2347
        %2349 = vmatmul.f32.gmra.mxu0 %v2004
        %v2350 = vpop.f32.mrf.mxu0
        %v2351 = vadd.f32 %v2238, %v2350
        %2352 = vmatmul.f32.gmra.mxu0 %v2020
        %v2353 = vpop.f32.mrf.mxu0
        %v2354 = vadd.f32 %v2241, %v2353
        %2355 = vmatmul.f32.gmra.mxu0 %v2036
        %v2356 = vpop.f32.mrf.mxu0
        %v2357 = vadd.f32 %v2244, %v2356
        %2358 = vdwg.mxu0
        %2359 = vrot.lane.b32.xlu0 %v527, 120
        %v2360 = vpop.permute.xlu0 %2359
        %2361 = vrot.lane.b32.xlu0 %v530, 120
        %v2362 = vpop.permute.xlu0 %2361
        %2363 = vrot.lane.b32.xlu0 %v533, 120
        %v2364 = vpop.permute.xlu0 %2363
        %2365 = vrot.lane.b32.xlu0 %v536, 120
        %v2366 = vpop.permute.xlu0 %2365
        %2367 = vrot.lane.b32.xlu0 %v539, 120
        %v2368 = vpop.permute.xlu0 %2367
        %2369 = vrot.lane.b32.xlu0 %v542, 120
        %v2370 = vpop.permute.xlu0 %2369
        %2371 = vrot.lane.b32.xlu0 %v545, 120
        %v2372 = vpop.permute.xlu0 %2371
        %2373 = vrot.lane.b32.xlu0 %v548, 120
        %v2374 = vpop.permute.xlu0 %2373
        %2375 = vrot.lane.b32.xlu0 %v551, 120
        %v2376 = vpop.permute.xlu0 %2375
        %2377 = vrot.lane.b32.xlu0 %v554, 120
        %v2378 = vpop.permute.xlu0 %2377
        %2379 = vrot.lane.b32.xlu0 %v557, 120
        %v2380 = vpop.permute.xlu0 %2379
        %2381 = vrot.lane.b32.xlu0 %v560, 120
        %v2382 = vpop.permute.xlu0 %2381
        %2383 = vrot.lane.b32.xlu0 %v563, 120
        %v2384 = vpop.permute.xlu0 %2383
        %2385 = vrot.lane.b32.xlu0 %v566, 120
        %v2386 = vpop.permute.xlu0 %2385
        %2387 = vrot.lane.b32.xlu0 %v569, 120
        %v2388 = vpop.permute.xlu0 %2387
        %2389 = vrot.lane.b32.xlu0 %v572, 120
        %v2390 = vpop.permute.xlu0 %2389
        %2391 = vrot.lane.b32.xlu0 %v575, 120
        %v2392 = vpop.permute.xlu0 %2391
        %2393 = vrot.lane.b32.xlu0 %v578, 120
        %v2394 = vpop.permute.xlu0 %2393
        %2395 = vrot.lane.b32.xlu0 %v581, 120
        %v2396 = vpop.permute.xlu0 %2395
        %2397 = vrot.lane.b32.xlu0 %v584, 120
        %v2398 = vpop.permute.xlu0 %2397
        %2399 = vrot.lane.b32.xlu0 %v587, 120
        %v2400 = vpop.permute.xlu0 %2399
        %2401 = vrot.lane.b32.xlu0 %v590, 120
        %v2402 = vpop.permute.xlu0 %2401
        %2403 = vrot.lane.b32.xlu0 %v593, 120
        %v2404 = vpop.permute.xlu0 %2403
        %2405 = vrot.lane.b32.xlu0 %v596, 120
        %v2406 = vpop.permute.xlu0 %2405
        %2407 = vrot.lane.b32.xlu0 %v599, 120
        %v2408 = vpop.permute.xlu0 %2407
        %2409 = vrot.lane.b32.xlu0 %v602, 120
        %v2410 = vpop.permute.xlu0 %2409
        %2411 = vrot.lane.b32.xlu0 %v605, 120
        %v2412 = vpop.permute.xlu0 %2411
        %2413 = vrot.lane.b32.xlu0 %v608, 120
        %v2414 = vpop.permute.xlu0 %2413
        %2415 = vrot.lane.b32.xlu0 %v611, 120
        %v2416 = vpop.permute.xlu0 %2415
        %2417 = vrot.lane.b32.xlu0 %v614, 120
        %v2418 = vpop.permute.xlu0 %2417
        %2419 = vrot.lane.b32.xlu0 %v617, 120
        %v2420 = vpop.permute.xlu0 %2419
        %2421 = vrot.lane.b32.xlu0 %v620, 120
        %v2422 = vpop.permute.xlu0 %2421
        %2423 = vrot.lane.b32.xlu0 %v527, 88
        %v2424 = vpop.permute.xlu0 %2423
        %2425 = vrot.lane.b32.xlu0 %v530, 88
        %v2426 = vpop.permute.xlu0 %2425
        %2427 = vrot.lane.b32.xlu0 %v533, 88
        %v2428 = vpop.permute.xlu0 %2427
        %2429 = vrot.lane.b32.xlu0 %v536, 88
        %v2430 = vpop.permute.xlu0 %2429
        %2431 = vrot.lane.b32.xlu0 %v539, 88
        %v2432 = vpop.permute.xlu0 %2431
        %2433 = vrot.lane.b32.xlu0 %v542, 88
        %v2434 = vpop.permute.xlu0 %2433
        %2435 = vrot.lane.b32.xlu0 %v545, 88
        %v2436 = vpop.permute.xlu0 %2435
        %2437 = vrot.lane.b32.xlu0 %v548, 88
        %v2438 = vpop.permute.xlu0 %2437
        %2439 = vrot.lane.b32.xlu0 %v551, 88
        %v2440 = vpop.permute.xlu0 %2439
        %2441 = vrot.lane.b32.xlu0 %v554, 88
        %v2442 = vpop.permute.xlu0 %2441
        %2443 = vrot.lane.b32.xlu0 %v557, 88
        %v2444 = vpop.permute.xlu0 %2443
        %2445 = vrot.lane.b32.xlu0 %v560, 88
        %v2446 = vpop.permute.xlu0 %2445
        %2447 = vrot.lane.b32.xlu0 %v563, 88
        %v2448 = vpop.permute.xlu0 %2447
        %2449 = vrot.lane.b32.xlu0 %v566, 88
        %v2450 = vpop.permute.xlu0 %2449
        %2451 = vrot.lane.b32.xlu0 %v569, 88
        %v2452 = vpop.permute.xlu0 %2451
        %2453 = vrot.lane.b32.xlu0 %v572, 88
        %v2454 = vpop.permute.xlu0 %2453
        %2455 = vrot.lane.b32.xlu0 %v575, 88
        %v2456 = vpop.permute.xlu0 %2455
        %2457 = vrot.lane.b32.xlu0 %v578, 88
        %v2458 = vpop.permute.xlu0 %2457
        %2459 = vrot.lane.b32.xlu0 %v581, 88
        %v2460 = vpop.permute.xlu0 %2459
        %2461 = vrot.lane.b32.xlu0 %v584, 88
        %v2462 = vpop.permute.xlu0 %2461
        %2463 = vrot.lane.b32.xlu0 %v587, 88
        %v2464 = vpop.permute.xlu0 %2463
        %2465 = vrot.lane.b32.xlu0 %v590, 88
        %v2466 = vpop.permute.xlu0 %2465
        %2467 = vrot.lane.b32.xlu0 %v593, 88
        %v2468 = vpop.permute.xlu0 %2467
        %2469 = vrot.lane.b32.xlu0 %v596, 88
        %v2470 = vpop.permute.xlu0 %2469
        %2471 = vrot.lane.b32.xlu0 %v599, 88
        %v2472 = vpop.permute.xlu0 %2471
        %2473 = vrot.lane.b32.xlu0 %v602, 88
        %v2474 = vpop.permute.xlu0 %2473
        %2475 = vrot.lane.b32.xlu0 %v605, 88
        %v2476 = vpop.permute.xlu0 %2475
        %2477 = vrot.lane.b32.xlu0 %v608, 88
        %v2478 = vpop.permute.xlu0 %2477
        %2479 = vrot.lane.b32.xlu0 %v611, 88
        %v2480 = vpop.permute.xlu0 %2479
        %2481 = vrot.lane.b32.xlu0 %v614, 88
        %v2482 = vpop.permute.xlu0 %2481
        %2483 = vrot.lane.b32.xlu0 %v617, 88
        %v2484 = vpop.permute.xlu0 %2483
        %2485 = vrot.lane.b32.xlu0 %v620, 88
        %v2486 = vpop.permute.xlu0 %2485
        %v2487 = vsel %vm722, %v2360, 0
        %v2489 = vsel %vm722, %v2362, 0
        %v2491 = vsel %vm722, %v2364, 0
        %v2493 = vsel %vm722, %v2366, 0
        %v2495 = vsel %vm722, %v2368, 0
        %v2497 = vsel %vm722, %v2370, 0
        %v2499 = vsel %vm722, %v2372, 0
        %v2501 = vsel %vm722, %v2374, 0
        %v2503 = vsel %vm722, %v2376, 0
        %v2505 = vsel %vm722, %v2378, 0
        %v2507 = vsel %vm722, %v2380, 0
        %v2509 = vsel %vm722, %v2382, 0
        %v2511 = vsel %vm722, %v2384, 0
        %v2513 = vsel %vm722, %v2386, 0
        %v2515 = vsel %vm722, %v2388, 0
        %v2517 = vsel %vm722, %v2390, 0
        %v2519 = vsel %vm722, %v2392, 0
        %v2521 = vsel %vm722, %v2394, 0
        %v2523 = vsel %vm722, %v2396, 0
        %v2525 = vsel %vm722, %v2398, 0
        %v2527 = vsel %vm722, %v2400, 0
        %v2529 = vsel %vm722, %v2402, 0
        %v2531 = vsel %vm722, %v2404, 0
        %v2533 = vsel %vm722, %v2406, 0
        %v2535 = vsel %vm722, %v2408, 0
        %v2537 = vsel %vm722, %v2410, 0
        %v2539 = vsel %vm722, %v2412, 0
        %v2541 = vsel %vm722, %v2414, 0
        %v2543 = vsel %vm722, %v2416, 0
        %v2545 = vsel %vm722, %v2418, 0
        %v2547 = vsel %vm722, %v2420, 0
        %v2549 = vsel %vm722, %v2422, 0
        %v2551 = vsel %vm722, %v2424, 0
        %v2553 = vsel %vm722, %v2426, 0
        %v2555 = vsel %vm722, %v2428, 0
        %v2557 = vsel %vm722, %v2430, 0
        %v2559 = vsel %vm722, %v2432, 0
        %v2561 = vsel %vm722, %v2434, 0
        %v2563 = vsel %vm722, %v2436, 0
        %v2565 = vsel %vm722, %v2438, 0
        %v2567 = vsel %vm722, %v2440, 0
        %v2569 = vsel %vm722, %v2442, 0
        %v2571 = vsel %vm722, %v2444, 0
        %v2573 = vsel %vm722, %v2446, 0
        %v2575 = vsel %vm722, %v2448, 0
        %v2577 = vsel %vm722, %v2450, 0
        %v2579 = vsel %vm722, %v2452, 0
        %v2581 = vsel %vm722, %v2454, 0
        %v2583 = vsel %vm722, %v2456, 0
        %v2585 = vsel %vm722, %v2458, 0
        %v2587 = vsel %vm722, %v2460, 0
        %v2589 = vsel %vm722, %v2462, 0
        %v2591 = vsel %vm722, %v2464, 0
        %v2593 = vsel %vm722, %v2466, 0
        %v2595 = vsel %vm722, %v2468, 0
        %v2597 = vsel %vm722, %v2470, 0
        %v2599 = vsel %vm722, %v2472, 0
        %v2601 = vsel %vm722, %v2474, 0
        %v2603 = vsel %vm722, %v2476, 0
        %v2605 = vsel %vm722, %v2478, 0
        %v2607 = vsel %vm722, %v2480, 0
        %v2609 = vsel %vm722, %v2482, 0
        %v2611 = vsel %vm722, %v2484, 0
        %v2613 = vsel %vm722, %v2486, 0
        %2615 = vmatpush.xpose.msra.mxu0 %v2581
        %2616 = vmatpush.xpose.msra.mxu0 %v2579
        %2617 = vmatpush.xpose.msra.mxu0 %v2577
        %2618 = vmatpush.xpose.msra.mxu0 %v2575
        %2619 = vmatpush.xpose.msra.mxu0 %v2573
        %2620 = vmatpush.xpose.msra.mxu0 %v2571
        %2621 = vmatpush.xpose.msra.mxu0 %v2569
        %2622 = vmatpush.xpose.msra.mxu0 %v2567
        %2623 = vmatpush.xpose.msra.mxu0 %v2565
        %2624 = vmatpush.xpose.msra.mxu0 %v2563
        %2625 = vmatpush.xpose.msra.mxu0 %v2561
        %2626 = vmatpush.xpose.msra.mxu0 %v2559
        %2627 = vmatpush.xpose.msra.mxu0 %v2557
        %2628 = vmatpush.xpose.msra.mxu0 %v2555
        %2629 = vmatpush.xpose.msra.mxu0 %v2553
        %2630 = vmatpush.xpose.msra.mxu0 %v2551
        %2631 = vmatmul.f32.gmra.mxu0 %v2487
        %v2632 = vpop.f32.mrf.mxu0
        %v2633 = vadd.f32 0.0, %v2632
        %2634 = vmatmul.f32.gmra.mxu0 %v2489
        %v2635 = vpop.f32.mrf.mxu0
        %v2636 = vadd.f32 0.0, %v2635
        %2637 = vmatmul.f32.gmra.mxu0 %v2491
        %v2638 = vpop.f32.mrf.mxu0
        %v2639 = vadd.f32 0.0, %v2638
        %2640 = vmatmul.f32.gmra.mxu0 %v2493
        %v2641 = vpop.f32.mrf.mxu0
        %v2642 = vadd.f32 0.0, %v2641
        %2643 = vmatmul.f32.gmra.mxu0 %v2495
        %v2644 = vpop.f32.mrf.mxu0
        %v2645 = vadd.f32 0.0, %v2644
        %2646 = vmatmul.f32.gmra.mxu0 %v2497
        %v2647 = vpop.f32.mrf.mxu0
        %v2648 = vadd.f32 0.0, %v2647
        %2649 = vmatmul.f32.gmra.mxu0 %v2499
        %v2650 = vpop.f32.mrf.mxu0
        %v2651 = vadd.f32 0.0, %v2650
        %2652 = vmatmul.f32.gmra.mxu0 %v2501
        %v2653 = vpop.f32.mrf.mxu0
        %v2654 = vadd.f32 0.0, %v2653
        %2655 = vmatmul.f32.gmra.mxu0 %v2503
        %v2656 = vpop.f32.mrf.mxu0
        %v2657 = vadd.f32 0.0, %v2656
        %2658 = vmatmul.f32.gmra.mxu0 %v2505
        %v2659 = vpop.f32.mrf.mxu0
        %v2660 = vadd.f32 0.0, %v2659
        %2661 = vmatmul.f32.gmra.mxu0 %v2507
        %v2662 = vpop.f32.mrf.mxu0
        %v2663 = vadd.f32 0.0, %v2662
        %2664 = vmatmul.f32.gmra.mxu0 %v2509
        %v2665 = vpop.f32.mrf.mxu0
        %v2666 = vadd.f32 0.0, %v2665
        %2667 = vmatmul.f32.gmra.mxu0 %v2511
        %v2668 = vpop.f32.mrf.mxu0
        %v2669 = vadd.f32 0.0, %v2668
        %2670 = vmatmul.f32.gmra.mxu0 %v2513
        %v2671 = vpop.f32.mrf.mxu0
        %v2672 = vadd.f32 0.0, %v2671
        %2673 = vmatmul.f32.gmra.mxu0 %v2515
        %v2674 = vpop.f32.mrf.mxu0
        %v2675 = vadd.f32 0.0, %v2674
        %2676 = vmatmul.f32.gmra.mxu0 %v2517
        %v2677 = vpop.f32.mrf.mxu0
        %v2678 = vadd.f32 0.0, %v2677
        %2679 = vmatmul.f32.gmra.mxu0 %v2519
        %v2680 = vpop.f32.mrf.mxu0
        %v2681 = vadd.f32 0.0, %v2680
        %2682 = vmatmul.f32.gmra.mxu0 %v2521
        %v2683 = vpop.f32.mrf.mxu0
        %v2684 = vadd.f32 0.0, %v2683
        %2685 = vmatmul.f32.gmra.mxu0 %v2523
        %v2686 = vpop.f32.mrf.mxu0
        %v2687 = vadd.f32 0.0, %v2686
        %2688 = vmatmul.f32.gmra.mxu0 %v2525
        %v2689 = vpop.f32.mrf.mxu0
        %v2690 = vadd.f32 0.0, %v2689
        %2691 = vmatmul.f32.gmra.mxu0 %v2527
        %v2692 = vpop.f32.mrf.mxu0
        %v2693 = vadd.f32 0.0, %v2692
        %2694 = vmatmul.f32.gmra.mxu0 %v2529
        %v2695 = vpop.f32.mrf.mxu0
        %v2696 = vadd.f32 0.0, %v2695
        %2697 = vmatmul.f32.gmra.mxu0 %v2531
        %v2698 = vpop.f32.mrf.mxu0
        %v2699 = vadd.f32 0.0, %v2698
        %2700 = vmatmul.f32.gmra.mxu0 %v2533
        %v2701 = vpop.f32.mrf.mxu0
        %v2702 = vadd.f32 0.0, %v2701
        %2703 = vmatmul.f32.gmra.mxu0 %v2535
        %v2704 = vpop.f32.mrf.mxu0
        %v2705 = vadd.f32 0.0, %v2704
        %2706 = vmatmul.f32.gmra.mxu0 %v2537
        %v2707 = vpop.f32.mrf.mxu0
        %v2708 = vadd.f32 0.0, %v2707
        %2709 = vmatmul.f32.gmra.mxu0 %v2539
        %v2710 = vpop.f32.mrf.mxu0
        %v2711 = vadd.f32 0.0, %v2710
        %2712 = vmatmul.f32.gmra.mxu0 %v2541
        %v2713 = vpop.f32.mrf.mxu0
        %v2714 = vadd.f32 0.0, %v2713
        %2715 = vmatmul.f32.gmra.mxu0 %v2543
        %v2716 = vpop.f32.mrf.mxu0
        %v2717 = vadd.f32 0.0, %v2716
        %2718 = vmatmul.f32.gmra.mxu0 %v2545
        %v2719 = vpop.f32.mrf.mxu0
        %v2720 = vadd.f32 0.0, %v2719
        %2721 = vmatmul.f32.gmra.mxu0 %v2547
        %v2722 = vpop.f32.mrf.mxu0
        %v2723 = vadd.f32 0.0, %v2722
        %2724 = vmatmul.f32.gmra.mxu0 %v2549
        %v2725 = vpop.f32.mrf.mxu0
        %v2726 = vadd.f32 0.0, %v2725
        %2727 = vdwg.mxu0
        %2728 = vmatpush.xpose.msra.mxu0 %v2613
        %2729 = vmatpush.xpose.msra.mxu0 %v2611
        %2730 = vmatpush.xpose.msra.mxu0 %v2609
        %2731 = vmatpush.xpose.msra.mxu0 %v2607
        %2732 = vmatpush.xpose.msra.mxu0 %v2605
        %2733 = vmatpush.xpose.msra.mxu0 %v2603
        %2734 = vmatpush.xpose.msra.mxu0 %v2601
        %2735 = vmatpush.xpose.msra.mxu0 %v2599
        %2736 = vmatpush.xpose.msra.mxu0 %v2597
        %2737 = vmatpush.xpose.msra.mxu0 %v2595
        %2738 = vmatpush.xpose.msra.mxu0 %v2593
        %2739 = vmatpush.xpose.msra.mxu0 %v2591
        %2740 = vmatpush.xpose.msra.mxu0 %v2589
        %2741 = vmatpush.xpose.msra.mxu0 %v2587
        %2742 = vmatpush.xpose.msra.mxu0 %v2585
        %2743 = vmatpush.xpose.msra.mxu0 %v2583
        %2744 = vmatmul.f32.gmra.mxu0 %v2487
        %v2745 = vpop.f32.mrf.mxu0
        %v2746 = vadd.f32 0.0, %v2745
        %2747 = vmatmul.f32.gmra.mxu0 %v2489
        %v2748 = vpop.f32.mrf.mxu0
        %v2749 = vadd.f32 0.0, %v2748
        %2750 = vmatmul.f32.gmra.mxu0 %v2491
        %v2751 = vpop.f32.mrf.mxu0
        %v2752 = vadd.f32 0.0, %v2751
        %2753 = vmatmul.f32.gmra.mxu0 %v2493
        %v2754 = vpop.f32.mrf.mxu0
        %v2755 = vadd.f32 0.0, %v2754
        %2756 = vmatmul.f32.gmra.mxu0 %v2495
        %v2757 = vpop.f32.mrf.mxu0
        %v2758 = vadd.f32 0.0, %v2757
        %2759 = vmatmul.f32.gmra.mxu0 %v2497
        %v2760 = vpop.f32.mrf.mxu0
        %v2761 = vadd.f32 0.0, %v2760
        %2762 = vmatmul.f32.gmra.mxu0 %v2499
        %v2763 = vpop.f32.mrf.mxu0
        %v2764 = vadd.f32 0.0, %v2763
        %2765 = vmatmul.f32.gmra.mxu0 %v2501
        %v2766 = vpop.f32.mrf.mxu0
        %v2767 = vadd.f32 0.0, %v2766
        %2768 = vmatmul.f32.gmra.mxu0 %v2503
        %v2769 = vpop.f32.mrf.mxu0
        %v2770 = vadd.f32 0.0, %v2769
        %2771 = vmatmul.f32.gmra.mxu0 %v2505
        %v2772 = vpop.f32.mrf.mxu0
        %v2773 = vadd.f32 0.0, %v2772
        %2774 = vmatmul.f32.gmra.mxu0 %v2507
        %v2775 = vpop.f32.mrf.mxu0
        %v2776 = vadd.f32 0.0, %v2775
        %2777 = vmatmul.f32.gmra.mxu0 %v2509
        %v2778 = vpop.f32.mrf.mxu0
        %v2779 = vadd.f32 0.0, %v2778
        %2780 = vmatmul.f32.gmra.mxu0 %v2511
        %v2781 = vpop.f32.mrf.mxu0
        %v2782 = vadd.f32 0.0, %v2781
        %2783 = vmatmul.f32.gmra.mxu0 %v2513
        %v2784 = vpop.f32.mrf.mxu0
        %v2785 = vadd.f32 0.0, %v2784
        %2786 = vmatmul.f32.gmra.mxu0 %v2515
        %v2787 = vpop.f32.mrf.mxu0
        %v2788 = vadd.f32 0.0, %v2787
        %2789 = vmatmul.f32.gmra.mxu0 %v2517
        %v2790 = vpop.f32.mrf.mxu0
        %v2791 = vadd.f32 0.0, %v2790
        %2792 = vmatmul.f32.gmra.mxu0 %v2519
        %v2793 = vpop.f32.mrf.mxu0
        %v2794 = vadd.f32 0.0, %v2793
        %2795 = vmatmul.f32.gmra.mxu0 %v2521
        %v2796 = vpop.f32.mrf.mxu0
        %v2797 = vadd.f32 0.0, %v2796
        %2798 = vmatmul.f32.gmra.mxu0 %v2523
        %v2799 = vpop.f32.mrf.mxu0
        %v2800 = vadd.f32 0.0, %v2799
        %2801 = vmatmul.f32.gmra.mxu0 %v2525
        %v2802 = vpop.f32.mrf.mxu0
        %v2803 = vadd.f32 0.0, %v2802
        %2804 = vmatmul.f32.gmra.mxu0 %v2527
        %v2805 = vpop.f32.mrf.mxu0
        %v2806 = vadd.f32 0.0, %v2805
        %2807 = vmatmul.f32.gmra.mxu0 %v2529
        %v2808 = vpop.f32.mrf.mxu0
        %v2809 = vadd.f32 0.0, %v2808
        %2810 = vmatmul.f32.gmra.mxu0 %v2531
        %v2811 = vpop.f32.mrf.mxu0
        %v2812 = vadd.f32 0.0, %v2811
        %2813 = vmatmul.f32.gmra.mxu0 %v2533
        %v2814 = vpop.f32.mrf.mxu0
        %v2815 = vadd.f32 0.0, %v2814
        %2816 = vmatmul.f32.gmra.mxu0 %v2535
        %v2817 = vpop.f32.mrf.mxu0
        %v2818 = vadd.f32 0.0, %v2817
        %2819 = vmatmul.f32.gmra.mxu0 %v2537
        %v2820 = vpop.f32.mrf.mxu0
        %v2821 = vadd.f32 0.0, %v2820
        %2822 = vmatmul.f32.gmra.mxu0 %v2539
        %v2823 = vpop.f32.mrf.mxu0
        %v2824 = vadd.f32 0.0, %v2823
        %2825 = vmatmul.f32.gmra.mxu0 %v2541
        %v2826 = vpop.f32.mrf.mxu0
        %v2827 = vadd.f32 0.0, %v2826
        %2828 = vmatmul.f32.gmra.mxu0 %v2543
        %v2829 = vpop.f32.mrf.mxu0
        %v2830 = vadd.f32 0.0, %v2829
        %2831 = vmatmul.f32.gmra.mxu0 %v2545
        %v2832 = vpop.f32.mrf.mxu0
        %v2833 = vadd.f32 0.0, %v2832
        %2834 = vmatmul.f32.gmra.mxu0 %v2547
        %v2835 = vpop.f32.mrf.mxu0
        %v2836 = vadd.f32 0.0, %v2835
        %2837 = vmatmul.f32.gmra.mxu0 %v2549
        %v2838 = vpop.f32.mrf.mxu0
        %v2839 = vadd.f32 0.0, %v2838
        %2840 = vdwg.mxu0
        %v2841 = vmul.f32 %v2633, 0.35355338
        %v2842 = vmul.f32 %v2746, 0.35355338
        %v2843 = vmul.f32 %v2636, 0.35355338
        %v2844 = vmul.f32 %v2749, 0.35355338
        %v2845 = vmul.f32 %v2639, 0.35355338
        %v2846 = vmul.f32 %v2752, 0.35355338
        %v2847 = vmul.f32 %v2642, 0.35355338
        %v2848 = vmul.f32 %v2755, 0.35355338
        %v2849 = vmul.f32 %v2645, 0.35355338
        %v2850 = vmul.f32 %v2758, 0.35355338
        %v2851 = vmul.f32 %v2648, 0.35355338
        %v2852 = vmul.f32 %v2761, 0.35355338
        %v2853 = vmul.f32 %v2651, 0.35355338
        %v2854 = vmul.f32 %v2764, 0.35355338
        %v2855 = vmul.f32 %v2654, 0.35355338
        %v2856 = vmul.f32 %v2767, 0.35355338
        %v2857 = vmul.f32 %v2657, 0.35355338
        %v2858 = vmul.f32 %v2770, 0.35355338
        %v2859 = vmul.f32 %v2660, 0.35355338
        %v2860 = vmul.f32 %v2773, 0.35355338
        %v2861 = vmul.f32 %v2663, 0.35355338
        %v2862 = vmul.f32 %v2776, 0.35355338
        %v2863 = vmul.f32 %v2666, 0.35355338
        %v2864 = vmul.f32 %v2779, 0.35355338
        %v2865 = vmul.f32 %v2669, 0.35355338
        %v2866 = vmul.f32 %v2782, 0.35355338
        %v2867 = vmul.f32 %v2672, 0.35355338
        %v2868 = vmul.f32 %v2785, 0.35355338
        %v2869 = vmul.f32 %v2675, 0.35355338
        %v2870 = vmul.f32 %v2788, 0.35355338
        %v2871 = vmul.f32 %v2678, 0.35355338
        %v2872 = vmul.f32 %v2791, 0.35355338
        %v2873 = vmul.f32 %v2681, 0.35355338
        %v2874 = vmul.f32 %v2794, 0.35355338
        %v2875 = vmul.f32 %v2684, 0.35355338
        %v2876 = vmul.f32 %v2797, 0.35355338
        %v2877 = vmul.f32 %v2687, 0.35355338
        %v2878 = vmul.f32 %v2800, 0.35355338
        %v2879 = vmul.f32 %v2690, 0.35355338
        %v2880 = vmul.f32 %v2803, 0.35355338
        %v2881 = vmul.f32 %v2693, 0.35355338
        %v2882 = vmul.f32 %v2806, 0.35355338
        %v2883 = vmul.f32 %v2696, 0.35355338
        %v2884 = vmul.f32 %v2809, 0.35355338
        %v2885 = vmul.f32 %v2699, 0.35355338
        %v2886 = vmul.f32 %v2812, 0.35355338
        %v2887 = vmul.f32 %v2702, 0.35355338
        %v2888 = vmul.f32 %v2815, 0.35355338
        %v2889 = vmul.f32 %v2705, 0.35355338
        %v2890 = vmul.f32 %v2818, 0.35355338
        %v2891 = vmul.f32 %v2708, 0.35355338
        %v2892 = vmul.f32 %v2821, 0.35355338
        %v2893 = vmul.f32 %v2711, 0.35355338
        %v2894 = vmul.f32 %v2824, 0.35355338
        %v2895 = vmul.f32 %v2714, 0.35355338
        %v2896 = vmul.f32 %v2827, 0.35355338
        %v2897 = vmul.f32 %v2717, 0.35355338
        %v2898 = vmul.f32 %v2830, 0.35355338
        %v2899 = vmul.f32 %v2720, 0.35355338
        %v2900 = vmul.f32 %v2833, 0.35355338
        %v2901 = vmul.f32 %v2723, 0.35355338
        %v2902 = vmul.f32 %v2836, 0.35355338
        %v2903 = vmul.f32 %v2726, 0.35355338
        %v2904 = vmul.f32 %v2839, 0.35355338
        %v2905 = vmax.f32 %v2841, %v2842
        %2906 = vmax.xlane.f32.xlu0 %v2905
        %v2907 = vpop.xlane.xlu0 %2906
        %v2908 = vmax.f32 %v2843, %v2844
        %2909 = vmax.xlane.f32.xlu0 %v2908
        %v2910 = vpop.xlane.xlu0 %2909
        %v2911 = vmax.f32 %v2845, %v2846
        %2912 = vmax.xlane.f32.xlu0 %v2911
        %v2913 = vpop.xlane.xlu0 %2912
        %v2914 = vmax.f32 %v2847, %v2848
        %2915 = vmax.xlane.f32.xlu0 %v2914
        %v2916 = vpop.xlane.xlu0 %2915
        %v2917 = vmax.f32 %v2849, %v2850
        %2918 = vmax.xlane.f32.xlu0 %v2917
        %v2919 = vpop.xlane.xlu0 %2918
        %v2920 = vmax.f32 %v2851, %v2852
        %2921 = vmax.xlane.f32.xlu0 %v2920
        %v2922 = vpop.xlane.xlu0 %2921
        %v2923 = vmax.f32 %v2853, %v2854
        %2924 = vmax.xlane.f32.xlu0 %v2923
        %v2925 = vpop.xlane.xlu0 %2924
        %v2926 = vmax.f32 %v2855, %v2856
        %2927 = vmax.xlane.f32.xlu0 %v2926
        %v2928 = vpop.xlane.xlu0 %2927
        %v2929 = vmax.f32 %v2857, %v2858
        %2930 = vmax.xlane.f32.xlu0 %v2929
        %v2931 = vpop.xlane.xlu0 %2930
        %v2932 = vmax.f32 %v2859, %v2860
        %2933 = vmax.xlane.f32.xlu0 %v2932
        %v2934 = vpop.xlane.xlu0 %2933
        %v2935 = vmax.f32 %v2861, %v2862
        %2936 = vmax.xlane.f32.xlu0 %v2935
        %v2937 = vpop.xlane.xlu0 %2936
        %v2938 = vmax.f32 %v2863, %v2864
        %2939 = vmax.xlane.f32.xlu0 %v2938
        %v2940 = vpop.xlane.xlu0 %2939
        %v2941 = vmax.f32 %v2865, %v2866
        %2942 = vmax.xlane.f32.xlu0 %v2941
        %v2943 = vpop.xlane.xlu0 %2942
        %v2944 = vmax.f32 %v2867, %v2868
        %2945 = vmax.xlane.f32.xlu0 %v2944
        %v2946 = vpop.xlane.xlu0 %2945
        %v2947 = vmax.f32 %v2869, %v2870
        %2948 = vmax.xlane.f32.xlu0 %v2947
        %v2949 = vpop.xlane.xlu0 %2948
        %v2950 = vmax.f32 %v2871, %v2872
        %2951 = vmax.xlane.f32.xlu0 %v2950
        %v2952 = vpop.xlane.xlu0 %2951
        %v2953 = vmax.f32 %v2873, %v2874
        %2954 = vmax.xlane.f32.xlu0 %v2953
        %v2955 = vpop.xlane.xlu0 %2954
        %v2956 = vmax.f32 %v2875, %v2876
        %2957 = vmax.xlane.f32.xlu0 %v2956
        %v2958 = vpop.xlane.xlu0 %2957
        %v2959 = vmax.f32 %v2877, %v2878
        %2960 = vmax.xlane.f32.xlu0 %v2959
        %v2961 = vpop.xlane.xlu0 %2960
        %v2962 = vmax.f32 %v2879, %v2880
        %2963 = vmax.xlane.f32.xlu0 %v2962
        %v2964 = vpop.xlane.xlu0 %2963
        %v2965 = vmax.f32 %v2881, %v2882
        %2966 = vmax.xlane.f32.xlu0 %v2965
        %v2967 = vpop.xlane.xlu0 %2966
        %v2968 = vmax.f32 %v2883, %v2884
        %2969 = vmax.xlane.f32.xlu0 %v2968
        %v2970 = vpop.xlane.xlu0 %2969
        %v2971 = vmax.f32 %v2885, %v2886
        %2972 = vmax.xlane.f32.xlu0 %v2971
        %v2973 = vpop.xlane.xlu0 %2972
        %v2974 = vmax.f32 %v2887, %v2888
        %2975 = vmax.xlane.f32.xlu0 %v2974
        %v2976 = vpop.xlane.xlu0 %2975
        %v2977 = vmax.f32 %v2889, %v2890
        %2978 = vmax.xlane.f32.xlu0 %v2977
        %v2979 = vpop.xlane.xlu0 %2978
        %v2980 = vmax.f32 %v2891, %v2892
        %2981 = vmax.xlane.f32.xlu0 %v2980
        %v2982 = vpop.xlane.xlu0 %2981
        %v2983 = vmax.f32 %v2893, %v2894
        %2984 = vmax.xlane.f32.xlu0 %v2983
        %v2985 = vpop.xlane.xlu0 %2984
        %v2986 = vmax.f32 %v2895, %v2896
        %2987 = vmax.xlane.f32.xlu0 %v2986
        %v2988 = vpop.xlane.xlu0 %2987
        %v2989 = vmax.f32 %v2897, %v2898
        %2990 = vmax.xlane.f32.xlu0 %v2989
        %v2991 = vpop.xlane.xlu0 %2990
        %v2992 = vmax.f32 %v2899, %v2900
        %2993 = vmax.xlane.f32.xlu0 %v2992
        %v2994 = vpop.xlane.xlu0 %2993
        %v2995 = vmax.f32 %v2901, %v2902
        %2996 = vmax.xlane.f32.xlu0 %v2995
        %v2997 = vpop.xlane.xlu0 %2996
        %v2998 = vmax.f32 %v2903, %v2904
        %2999 = vmax.xlane.f32.xlu0 %v2998
        %v3000 = vpop.xlane.xlu0 %2999
        %v3001 = vsub.f32 %v2841, %v2907
        %v3002 = vsub.f32 %v2842, %v2907
        %v3003 = vsub.f32 %v2843, %v2910
        %v3004 = vsub.f32 %v2844, %v2910
        %v3005 = vsub.f32 %v2845, %v2913
        %v3006 = vsub.f32 %v2846, %v2913
        %v3007 = vsub.f32 %v2847, %v2916
        %v3008 = vsub.f32 %v2848, %v2916
        %v3009 = vsub.f32 %v2849, %v2919
        %v3010 = vsub.f32 %v2850, %v2919
        %v3011 = vsub.f32 %v2851, %v2922
        %v3012 = vsub.f32 %v2852, %v2922
        %v3013 = vsub.f32 %v2853, %v2925
        %v3014 = vsub.f32 %v2854, %v2925
        %v3015 = vsub.f32 %v2855, %v2928
        %v3016 = vsub.f32 %v2856, %v2928
        %v3017 = vsub.f32 %v2857, %v2931
        %v3018 = vsub.f32 %v2858, %v2931
        %v3019 = vsub.f32 %v2859, %v2934
        %v3020 = vsub.f32 %v2860, %v2934
        %v3021 = vsub.f32 %v2861, %v2937
        %v3022 = vsub.f32 %v2862, %v2937
        %v3023 = vsub.f32 %v2863, %v2940
        %v3024 = vsub.f32 %v2864, %v2940
        %v3025 = vsub.f32 %v2865, %v2943
        %v3026 = vsub.f32 %v2866, %v2943
        %v3027 = vsub.f32 %v2867, %v2946
        %v3028 = vsub.f32 %v2868, %v2946
        %v3029 = vsub.f32 %v2869, %v2949
        %v3030 = vsub.f32 %v2870, %v2949
        %v3031 = vsub.f32 %v2871, %v2952
        %v3032 = vsub.f32 %v2872, %v2952
        %v3033 = vsub.f32 %v2873, %v2955
        %v3034 = vsub.f32 %v2874, %v2955
        %v3035 = vsub.f32 %v2875, %v2958
        %v3036 = vsub.f32 %v2876, %v2958
        %v3037 = vsub.f32 %v2877, %v2961
        %v3038 = vsub.f32 %v2878, %v2961
        %v3039 = vsub.f32 %v2879, %v2964
        %v3040 = vsub.f32 %v2880, %v2964
        %v3041 = vsub.f32 %v2881, %v2967
        %v3042 = vsub.f32 %v2882, %v2967
        %v3043 = vsub.f32 %v2883, %v2970
        %v3044 = vsub.f32 %v2884, %v2970
        %v3045 = vsub.f32 %v2885, %v2973
        %v3046 = vsub.f32 %v2886, %v2973
        %v3047 = vsub.f32 %v2887, %v2976
        %v3048 = vsub.f32 %v2888, %v2976
        %v3049 = vsub.f32 %v2889, %v2979
        %v3050 = vsub.f32 %v2890, %v2979
        %v3051 = vsub.f32 %v2891, %v2982
        %v3052 = vsub.f32 %v2892, %v2982
        %v3053 = vsub.f32 %v2893, %v2985
        %v3054 = vsub.f32 %v2894, %v2985
        %v3055 = vsub.f32 %v2895, %v2988
        %v3056 = vsub.f32 %v2896, %v2988
        %v3057 = vsub.f32 %v2897, %v2991
        %v3058 = vsub.f32 %v2898, %v2991
        %v3059 = vsub.f32 %v2899, %v2994
        %v3060 = vsub.f32 %v2900, %v2994
        %v3061 = vsub.f32 %v2901, %v2997
        %v3062 = vsub.f32 %v2902, %v2997
        %v3063 = vsub.f32 %v2903, %v3000
        %v3064 = vsub.f32 %v2904, %v3000
        %v3065 = vmul.f32 %v3001, 1.442695
        %v3066 = vpow.pop %v3065
        %v3067 = vmul.f32 %v3002, 1.442695
        %v3068 = vpow.pop %v3067
        %v3069 = vmul.f32 %v3003, 1.442695
        %v3070 = vpow.pop %v3069
        %v3071 = vmul.f32 %v3004, 1.442695
        %v3072 = vpow.pop %v3071
        %v3073 = vmul.f32 %v3005, 1.442695
        %v3074 = vpow.pop %v3073
        %v3075 = vmul.f32 %v3006, 1.442695
        %v3076 = vpow.pop %v3075
        %v3077 = vmul.f32 %v3007, 1.442695
        %v3078 = vpow.pop %v3077
        %v3079 = vmul.f32 %v3008, 1.442695
        %v3080 = vpow.pop %v3079
        %v3081 = vmul.f32 %v3009, 1.442695
        %v3082 = vpow.pop %v3081
        %v3083 = vmul.f32 %v3010, 1.442695
        %v3084 = vpow.pop %v3083
        %v3085 = vmul.f32 %v3011, 1.442695
        %v3086 = vpow.pop %v3085
        %v3087 = vmul.f32 %v3012, 1.442695
        %v3088 = vpow.pop %v3087
        %v3089 = vmul.f32 %v3013, 1.442695
        %v3090 = vpow.pop %v3089
        %v3091 = vmul.f32 %v3014, 1.442695
        %v3092 = vpow.pop %v3091
        %v3093 = vmul.f32 %v3015, 1.442695
        %v3094 = vpow.pop %v3093
        %v3095 = vmul.f32 %v3016, 1.442695
        %v3096 = vpow.pop %v3095
        %v3097 = vmul.f32 %v3017, 1.442695
        %v3098 = vpow.pop %v3097
        %v3099 = vmul.f32 %v3018, 1.442695
        %v3100 = vpow.pop %v3099
        %v3101 = vmul.f32 %v3019, 1.442695
        %v3102 = vpow.pop %v3101
        %v3103 = vmul.f32 %v3020, 1.442695
        %v3104 = vpow.pop %v3103
        %v3105 = vmul.f32 %v3021, 1.442695
        %v3106 = vpow.pop %v3105
        %v3107 = vmul.f32 %v3022, 1.442695
        %v3108 = vpow.pop %v3107
        %v3109 = vmul.f32 %v3023, 1.442695
        %v3110 = vpow.pop %v3109
        %v3111 = vmul.f32 %v3024, 1.442695
        %v3112 = vpow.pop %v3111
        %v3113 = vmul.f32 %v3025, 1.442695
        %v3114 = vpow.pop %v3113
        %v3115 = vmul.f32 %v3026, 1.442695
        %v3116 = vpow.pop %v3115
        %v3117 = vmul.f32 %v3027, 1.442695
        %v3118 = vpow.pop %v3117
        %v3119 = vmul.f32 %v3028, 1.442695
        %v3120 = vpow.pop %v3119
        %v3121 = vmul.f32 %v3029, 1.442695
        %v3122 = vpow.pop %v3121
        %v3123 = vmul.f32 %v3030, 1.442695
        %v3124 = vpow.pop %v3123
        %v3125 = vmul.f32 %v3031, 1.442695
        %v3126 = vpow.pop %v3125
        %v3127 = vmul.f32 %v3032, 1.442695
        %v3128 = vpow.pop %v3127
        %v3129 = vmul.f32 %v3033, 1.442695
        %v3130 = vpow.pop %v3129
        %v3131 = vmul.f32 %v3034, 1.442695
        %v3132 = vpow.pop %v3131
        %v3133 = vmul.f32 %v3035, 1.442695
        %v3134 = vpow.pop %v3133
        %v3135 = vmul.f32 %v3036, 1.442695
        %v3136 = vpow.pop %v3135
        %v3137 = vmul.f32 %v3037, 1.442695
        %v3138 = vpow.pop %v3137
        %v3139 = vmul.f32 %v3038, 1.442695
        %v3140 = vpow.pop %v3139
        %v3141 = vmul.f32 %v3039, 1.442695
        %v3142 = vpow.pop %v3141
        %v3143 = vmul.f32 %v3040, 1.442695
        %v3144 = vpow.pop %v3143
        %v3145 = vmul.f32 %v3041, 1.442695
        %v3146 = vpow.pop %v3145
        %v3147 = vmul.f32 %v3042, 1.442695
        %v3148 = vpow.pop %v3147
        %v3149 = vmul.f32 %v3043, 1.442695
        %v3150 = vpow.pop %v3149
        %v3151 = vmul.f32 %v3044, 1.442695
        %v3152 = vpow.pop %v3151
        %v3153 = vmul.f32 %v3045, 1.442695
        %v3154 = vpow.pop %v3153
        %v3155 = vmul.f32 %v3046, 1.442695
        %v3156 = vpow.pop %v3155
        %v3157 = vmul.f32 %v3047, 1.442695
        %v3158 = vpow.pop %v3157
        %v3159 = vmul.f32 %v3048, 1.442695
        %v3160 = vpow.pop %v3159
        %v3161 = vmul.f32 %v3049, 1.442695
        %v3162 = vpow.pop %v3161
        %v3163 = vmul.f32 %v3050, 1.442695
        %v3164 = vpow.pop %v3163
        %v3165 = vmul.f32 %v3051, 1.442695
        %v3166 = vpow.pop %v3165
        %v3167 = vmul.f32 %v3052, 1.442695
        %v3168 = vpow.pop %v3167
        %v3169 = vmul.f32 %v3053, 1.442695
        %v3170 = vpow.pop %v3169
        %v3171 = vmul.f32 %v3054, 1.442695
        %v3172 = vpow.pop %v3171
        %v3173 = vmul.f32 %v3055, 1.442695
        %v3174 = vpow.pop %v3173
        %v3175 = vmul.f32 %v3056, 1.442695
        %v3176 = vpow.pop %v3175
        %v3177 = vmul.f32 %v3057, 1.442695
        %v3178 = vpow.pop %v3177
        %v3179 = vmul.f32 %v3058, 1.442695
        %v3180 = vpow.pop %v3179
        %v3181 = vmul.f32 %v3059, 1.442695
        %v3182 = vpow.pop %v3181
        %v3183 = vmul.f32 %v3060, 1.442695
        %v3184 = vpow.pop %v3183
        %v3185 = vmul.f32 %v3061, 1.442695
        %v3186 = vpow.pop %v3185
        %v3187 = vmul.f32 %v3062, 1.442695
        %v3188 = vpow.pop %v3187
        %v3189 = vmul.f32 %v3063, 1.442695
        %v3190 = vpow.pop %v3189
        %v3191 = vmul.f32 %v3064, 1.442695
        %v3192 = vpow.pop %v3191
        %v3193 = vadd.f32 %v3066, %v3068
        %3194 = vadd.xlane.f32.xlu0 %v3193
        %v3195 = vpop.xlane.xlu0 %3194
        %v3196 = vadd.f32 %v3070, %v3072
        %3197 = vadd.xlane.f32.xlu0 %v3196
        %v3198 = vpop.xlane.xlu0 %3197
        %v3199 = vadd.f32 %v3074, %v3076
        %3200 = vadd.xlane.f32.xlu0 %v3199
        %v3201 = vpop.xlane.xlu0 %3200
        %v3202 = vadd.f32 %v3078, %v3080
        %3203 = vadd.xlane.f32.xlu0 %v3202
        %v3204 = vpop.xlane.xlu0 %3203
        %v3205 = vadd.f32 %v3082, %v3084
        %3206 = vadd.xlane.f32.xlu0 %v3205
        %v3207 = vpop.xlane.xlu0 %3206
        %v3208 = vadd.f32 %v3086, %v3088
        %3209 = vadd.xlane.f32.xlu0 %v3208
        %v3210 = vpop.xlane.xlu0 %3209
        %v3211 = vadd.f32 %v3090, %v3092
        %3212 = vadd.xlane.f32.xlu0 %v3211
        %v3213 = vpop.xlane.xlu0 %3212
        %v3214 = vadd.f32 %v3094, %v3096
        %3215 = vadd.xlane.f32.xlu0 %v3214
        %v3216 = vpop.xlane.xlu0 %3215
        %v3217 = vadd.f32 %v3098, %v3100
        %3218 = vadd.xlane.f32.xlu0 %v3217
        %v3219 = vpop.xlane.xlu0 %3218
        %v3220 = vadd.f32 %v3102, %v3104
        %3221 = vadd.xlane.f32.xlu0 %v3220
        %v3222 = vpop.xlane.xlu0 %3221
        %v3223 = vadd.f32 %v3106, %v3108
        %3224 = vadd.xlane.f32.xlu0 %v3223
        %v3225 = vpop.xlane.xlu0 %3224
        %v3226 = vadd.f32 %v3110, %v3112
        %3227 = vadd.xlane.f32.xlu0 %v3226
        %v3228 = vpop.xlane.xlu0 %3227
        %v3229 = vadd.f32 %v3114, %v3116
        %3230 = vadd.xlane.f32.xlu0 %v3229
        %v3231 = vpop.xlane.xlu0 %3230
        %v3232 = vadd.f32 %v3118, %v3120
        %3233 = vadd.xlane.f32.xlu0 %v3232
        %v3234 = vpop.xlane.xlu0 %3233
        %v3235 = vadd.f32 %v3122, %v3124
        %3236 = vadd.xlane.f32.xlu0 %v3235
        %v3237 = vpop.xlane.xlu0 %3236
        %v3238 = vadd.f32 %v3126, %v3128
        %3239 = vadd.xlane.f32.xlu0 %v3238
        %v3240 = vpop.xlane.xlu0 %3239
        %v3241 = vadd.f32 %v3130, %v3132
        %3242 = vadd.xlane.f32.xlu0 %v3241
        %v3243 = vpop.xlane.xlu0 %3242
        %v3244 = vadd.f32 %v3134, %v3136
        %3245 = vadd.xlane.f32.xlu0 %v3244
        %v3246 = vpop.xlane.xlu0 %3245
        %v3247 = vadd.f32 %v3138, %v3140
        %3248 = vadd.xlane.f32.xlu0 %v3247
        %v3249 = vpop.xlane.xlu0 %3248
        %v3250 = vadd.f32 %v3142, %v3144
        %3251 = vadd.xlane.f32.xlu0 %v3250
        %v3252 = vpop.xlane.xlu0 %3251
        %v3253 = vadd.f32 %v3146, %v3148
        %3254 = vadd.xlane.f32.xlu0 %v3253
        %v3255 = vpop.xlane.xlu0 %3254
        %v3256 = vadd.f32 %v3150, %v3152
        %3257 = vadd.xlane.f32.xlu0 %v3256
        %v3258 = vpop.xlane.xlu0 %3257
        %v3259 = vadd.f32 %v3154, %v3156
        %3260 = vadd.xlane.f32.xlu0 %v3259
        %v3261 = vpop.xlane.xlu0 %3260
        %v3262 = vadd.f32 %v3158, %v3160
        %3263 = vadd.xlane.f32.xlu0 %v3262
        %v3264 = vpop.xlane.xlu0 %3263
        %v3265 = vadd.f32 %v3162, %v3164
        %3266 = vadd.xlane.f32.xlu0 %v3265
        %v3267 = vpop.xlane.xlu0 %3266
        %v3268 = vadd.f32 %v3166, %v3168
        %3269 = vadd.xlane.f32.xlu0 %v3268
        %v3270 = vpop.xlane.xlu0 %3269
        %v3271 = vadd.f32 %v3170, %v3172
        %3272 = vadd.xlane.f32.xlu0 %v3271
        %v3273 = vpop.xlane.xlu0 %3272
        %v3274 = vadd.f32 %v3174, %v3176
        %3275 = vadd.xlane.f32.xlu0 %v3274
        %v3276 = vpop.xlane.xlu0 %3275
        %v3277 = vadd.f32 %v3178, %v3180
        %3278 = vadd.xlane.f32.xlu0 %v3277
        %v3279 = vpop.xlane.xlu0 %3278
        %v3280 = vadd.f32 %v3182, %v3184
        %3281 = vadd.xlane.f32.xlu0 %v3280
        %v3282 = vpop.xlane.xlu0 %3281
        %v3283 = vadd.f32 %v3186, %v3188
        %3284 = vadd.xlane.f32.xlu0 %v3283
        %v3285 = vpop.xlane.xlu0 %3284
        %v3286 = vadd.f32 %v3190, %v3192
        %3287 = vadd.xlane.f32.xlu0 %v3286
        %v3288 = vpop.xlane.xlu0 %3287
        %v3289 = vrcp.pop %v3195
        %v3290 = vmul.f32 %v3195, %v3289
        %v3291 = vsub.f32 1.0, %v3290
        %v3292 = vmul.f32 %v3289, %v3291
        %v3293 = vadd.f32 %v3289, %v3292
        %vm3294 = vweird.f32 %v3195
        %vm3295 = vweird.f32 %v3289
        %vm3296 = vmor %vm3294, %vm3295
        %v3297 = vsel %vm3296, %v3289, %v3293
        %v3298 = vand.u32 2147483647, %v3195
        %vm3299 = vcmp.eq.f32.partialorder %v3298, 8.507059e+37
        %v3300 = vand.u32 %v3195, 2147483648
        %v3301 = vor.u32 1.1754944e-38, %v3300
        %v3302 = vsel %vm3299, %v3301, %v3297
        %v3303 = vmul.f32 %v3066, %v3302
        %v3304 = vmul.f32 %v3068, %v3302
        %v3305 = vrcp.pop %v3198
        %v3306 = vmul.f32 %v3198, %v3305
        %v3307 = vsub.f32 1.0, %v3306
        %v3308 = vmul.f32 %v3305, %v3307
        %v3309 = vadd.f32 %v3305, %v3308
        %vm3310 = vweird.f32 %v3198
        %vm3311 = vweird.f32 %v3305
        %vm3312 = vmor %vm3310, %vm3311
        %v3313 = vsel %vm3312, %v3305, %v3309
        %v3314 = vand.u32 2147483647, %v3198
        %vm3315 = vcmp.eq.f32.partialorder %v3314, 8.507059e+37
        %v3316 = vand.u32 %v3198, 2147483648
        %v3317 = vor.u32 1.1754944e-38, %v3316
        %v3318 = vsel %vm3315, %v3317, %v3313
        %v3319 = vmul.f32 %v3070, %v3318
        %v3320 = vmul.f32 %v3072, %v3318
        %v3321 = vrcp.pop %v3201
        %v3322 = vmul.f32 %v3201, %v3321
        %v3323 = vsub.f32 1.0, %v3322
        %v3324 = vmul.f32 %v3321, %v3323
        %v3325 = vadd.f32 %v3321, %v3324
        %vm3326 = vweird.f32 %v3201
        %vm3327 = vweird.f32 %v3321
        %vm3328 = vmor %vm3326, %vm3327
        %v3329 = vsel %vm3328, %v3321, %v3325
        %v3330 = vand.u32 2147483647, %v3201
        %vm3331 = vcmp.eq.f32.partialorder %v3330, 8.507059e+37
        %v3332 = vand.u32 %v3201, 2147483648
        %v3333 = vor.u32 1.1754944e-38, %v3332
        %v3334 = vsel %vm3331, %v3333, %v3329
        %v3335 = vmul.f32 %v3074, %v3334
        %v3336 = vmul.f32 %v3076, %v3334
        %v3337 = vrcp.pop %v3204
        %v3338 = vmul.f32 %v3204, %v3337
        %v3339 = vsub.f32 1.0, %v3338
        %v3340 = vmul.f32 %v3337, %v3339
        %v3341 = vadd.f32 %v3337, %v3340
        %vm3342 = vweird.f32 %v3204
        %vm3343 = vweird.f32 %v3337
        %vm3344 = vmor %vm3342, %vm3343
        %v3345 = vsel %vm3344, %v3337, %v3341
        %v3346 = vand.u32 2147483647, %v3204
        %vm3347 = vcmp.eq.f32.partialorder %v3346, 8.507059e+37
        %v3348 = vand.u32 %v3204, 2147483648
        %v3349 = vor.u32 1.1754944e-38, %v3348
        %v3350 = vsel %vm3347, %v3349, %v3345
        %v3351 = vmul.f32 %v3078, %v3350
        %v3352 = vmul.f32 %v3080, %v3350
        %v3353 = vrcp.pop %v3207
        %v3354 = vmul.f32 %v3207, %v3353
        %v3355 = vsub.f32 1.0, %v3354
        %v3356 = vmul.f32 %v3353, %v3355
        %v3357 = vadd.f32 %v3353, %v3356
        %vm3358 = vweird.f32 %v3207
        %vm3359 = vweird.f32 %v3353
        %vm3360 = vmor %vm3358, %vm3359
        %v3361 = vsel %vm3360, %v3353, %v3357
        %v3362 = vand.u32 2147483647, %v3207
        %vm3363 = vcmp.eq.f32.partialorder %v3362, 8.507059e+37
        %v3364 = vand.u32 %v3207, 2147483648
        %v3365 = vor.u32 1.1754944e-38, %v3364
        %v3366 = vsel %vm3363, %v3365, %v3361
        %v3367 = vmul.f32 %v3082, %v3366
        %v3368 = vmul.f32 %v3084, %v3366
        %v3369 = vrcp.pop %v3210
        %v3370 = vmul.f32 %v3210, %v3369
        %v3371 = vsub.f32 1.0, %v3370
        %v3372 = vmul.f32 %v3369, %v3371
        %v3373 = vadd.f32 %v3369, %v3372
        %vm3374 = vweird.f32 %v3210
        %vm3375 = vweird.f32 %v3369
        %vm3376 = vmor %vm3374, %vm3375
        %v3377 = vsel %vm3376, %v3369, %v3373
        %v3378 = vand.u32 2147483647, %v3210
        %vm3379 = vcmp.eq.f32.partialorder %v3378, 8.507059e+37
        %v3380 = vand.u32 %v3210, 2147483648
        %v3381 = vor.u32 1.1754944e-38, %v3380
        %v3382 = vsel %vm3379, %v3381, %v3377
        %v3383 = vmul.f32 %v3086, %v3382
        %v3384 = vmul.f32 %v3088, %v3382
        %v3385 = vrcp.pop %v3213
        %v3386 = vmul.f32 %v3213, %v3385
        %v3387 = vsub.f32 1.0, %v3386
        %v3388 = vmul.f32 %v3385, %v3387
        %v3389 = vadd.f32 %v3385, %v3388
        %vm3390 = vweird.f32 %v3213
        %vm3391 = vweird.f32 %v3385
        %vm3392 = vmor %vm3390, %vm3391
        %v3393 = vsel %vm3392, %v3385, %v3389
        %v3394 = vand.u32 2147483647, %v3213
        %vm3395 = vcmp.eq.f32.partialorder %v3394, 8.507059e+37
        %v3396 = vand.u32 %v3213, 2147483648
        %v3397 = vor.u32 1.1754944e-38, %v3396
        %v3398 = vsel %vm3395, %v3397, %v3393
        %v3399 = vmul.f32 %v3090, %v3398
        %v3400 = vmul.f32 %v3092, %v3398
        %v3401 = vrcp.pop %v3216
        %v3402 = vmul.f32 %v3216, %v3401
        %v3403 = vsub.f32 1.0, %v3402
        %v3404 = vmul.f32 %v3401, %v3403
        %v3405 = vadd.f32 %v3401, %v3404
        %vm3406 = vweird.f32 %v3216
        %vm3407 = vweird.f32 %v3401
        %vm3408 = vmor %vm3406, %vm3407
        %v3409 = vsel %vm3408, %v3401, %v3405
        %v3410 = vand.u32 2147483647, %v3216
        %vm3411 = vcmp.eq.f32.partialorder %v3410, 8.507059e+37
        %v3412 = vand.u32 %v3216, 2147483648
        %v3413 = vor.u32 1.1754944e-38, %v3412
        %v3414 = vsel %vm3411, %v3413, %v3409
        %v3415 = vmul.f32 %v3094, %v3414
        %v3416 = vmul.f32 %v3096, %v3414
        %v3417 = vrcp.pop %v3219
        %v3418 = vmul.f32 %v3219, %v3417
        %v3419 = vsub.f32 1.0, %v3418
        %v3420 = vmul.f32 %v3417, %v3419
        %v3421 = vadd.f32 %v3417, %v3420
        %vm3422 = vweird.f32 %v3219
        %vm3423 = vweird.f32 %v3417
        %vm3424 = vmor %vm3422, %vm3423
        %v3425 = vsel %vm3424, %v3417, %v3421
        %v3426 = vand.u32 2147483647, %v3219
        %vm3427 = vcmp.eq.f32.partialorder %v3426, 8.507059e+37
        %v3428 = vand.u32 %v3219, 2147483648
        %v3429 = vor.u32 1.1754944e-38, %v3428
        %v3430 = vsel %vm3427, %v3429, %v3425
        %v3431 = vmul.f32 %v3098, %v3430
        %v3432 = vmul.f32 %v3100, %v3430
        %v3433 = vrcp.pop %v3222
        %v3434 = vmul.f32 %v3222, %v3433
        %v3435 = vsub.f32 1.0, %v3434
        %v3436 = vmul.f32 %v3433, %v3435
        %v3437 = vadd.f32 %v3433, %v3436
        %vm3438 = vweird.f32 %v3222
        %vm3439 = vweird.f32 %v3433
        %vm3440 = vmor %vm3438, %vm3439
        %v3441 = vsel %vm3440, %v3433, %v3437
        %v3442 = vand.u32 2147483647, %v3222
        %vm3443 = vcmp.eq.f32.partialorder %v3442, 8.507059e+37
        %v3444 = vand.u32 %v3222, 2147483648
        %v3445 = vor.u32 1.1754944e-38, %v3444
        %v3446 = vsel %vm3443, %v3445, %v3441
        %v3447 = vmul.f32 %v3102, %v3446
        %v3448 = vmul.f32 %v3104, %v3446
        %v3449 = vrcp.pop %v3225
        %v3450 = vmul.f32 %v3225, %v3449
        %v3451 = vsub.f32 1.0, %v3450
        %v3452 = vmul.f32 %v3449, %v3451
        %v3453 = vadd.f32 %v3449, %v3452
        %vm3454 = vweird.f32 %v3225
        %vm3455 = vweird.f32 %v3449
        %vm3456 = vmor %vm3454, %vm3455
        %v3457 = vsel %vm3456, %v3449, %v3453
        %v3458 = vand.u32 2147483647, %v3225
        %vm3459 = vcmp.eq.f32.partialorder %v3458, 8.507059e+37
        %v3460 = vand.u32 %v3225, 2147483648
        %v3461 = vor.u32 1.1754944e-38, %v3460
        %v3462 = vsel %vm3459, %v3461, %v3457
        %v3463 = vmul.f32 %v3106, %v3462
        %v3464 = vmul.f32 %v3108, %v3462
        %v3465 = vrcp.pop %v3228
        %v3466 = vmul.f32 %v3228, %v3465
        %v3467 = vsub.f32 1.0, %v3466
        %v3468 = vmul.f32 %v3465, %v3467
        %v3469 = vadd.f32 %v3465, %v3468
        %vm3470 = vweird.f32 %v3228
        %vm3471 = vweird.f32 %v3465
        %vm3472 = vmor %vm3470, %vm3471
        %v3473 = vsel %vm3472, %v3465, %v3469
        %v3474 = vand.u32 2147483647, %v3228
        %vm3475 = vcmp.eq.f32.partialorder %v3474, 8.507059e+37
        %v3476 = vand.u32 %v3228, 2147483648
        %v3477 = vor.u32 1.1754944e-38, %v3476
        %v3478 = vsel %vm3475, %v3477, %v3473
        %v3479 = vmul.f32 %v3110, %v3478
        %v3480 = vmul.f32 %v3112, %v3478
        %v3481 = vrcp.pop %v3231
        %v3482 = vmul.f32 %v3231, %v3481
        %v3483 = vsub.f32 1.0, %v3482
        %v3484 = vmul.f32 %v3481, %v3483
        %v3485 = vadd.f32 %v3481, %v3484
        %vm3486 = vweird.f32 %v3231
        %vm3487 = vweird.f32 %v3481
        %vm3488 = vmor %vm3486, %vm3487
        %v3489 = vsel %vm3488, %v3481, %v3485
        %v3490 = vand.u32 2147483647, %v3231
        %vm3491 = vcmp.eq.f32.partialorder %v3490, 8.507059e+37
        %v3492 = vand.u32 %v3231, 2147483648
        %v3493 = vor.u32 1.1754944e-38, %v3492
        %v3494 = vsel %vm3491, %v3493, %v3489
        %v3495 = vmul.f32 %v3114, %v3494
        %v3496 = vmul.f32 %v3116, %v3494
        %v3497 = vrcp.pop %v3234
        %v3498 = vmul.f32 %v3234, %v3497
        %v3499 = vsub.f32 1.0, %v3498
        %v3500 = vmul.f32 %v3497, %v3499
        %v3501 = vadd.f32 %v3497, %v3500
        %vm3502 = vweird.f32 %v3234
        %vm3503 = vweird.f32 %v3497
        %vm3504 = vmor %vm3502, %vm3503
        %v3505 = vsel %vm3504, %v3497, %v3501
        %v3506 = vand.u32 2147483647, %v3234
        %vm3507 = vcmp.eq.f32.partialorder %v3506, 8.507059e+37
        %v3508 = vand.u32 %v3234, 2147483648
        %v3509 = vor.u32 1.1754944e-38, %v3508
        %v3510 = vsel %vm3507, %v3509, %v3505
        %v3511 = vmul.f32 %v3118, %v3510
        %v3512 = vmul.f32 %v3120, %v3510
        %v3513 = vrcp.pop %v3237
        %v3514 = vmul.f32 %v3237, %v3513
        %v3515 = vsub.f32 1.0, %v3514
        %v3516 = vmul.f32 %v3513, %v3515
        %v3517 = vadd.f32 %v3513, %v3516
        %vm3518 = vweird.f32 %v3237
        %vm3519 = vweird.f32 %v3513
        %vm3520 = vmor %vm3518, %vm3519
        %v3521 = vsel %vm3520, %v3513, %v3517
        %v3522 = vand.u32 2147483647, %v3237
        %vm3523 = vcmp.eq.f32.partialorder %v3522, 8.507059e+37
        %v3524 = vand.u32 %v3237, 2147483648
        %v3525 = vor.u32 1.1754944e-38, %v3524
        %v3526 = vsel %vm3523, %v3525, %v3521
        %v3527 = vmul.f32 %v3122, %v3526
        %v3528 = vmul.f32 %v3124, %v3526
        %v3529 = vrcp.pop %v3240
        %v3530 = vmul.f32 %v3240, %v3529
        %v3531 = vsub.f32 1.0, %v3530
        %v3532 = vmul.f32 %v3529, %v3531
        %v3533 = vadd.f32 %v3529, %v3532
        %vm3534 = vweird.f32 %v3240
        %vm3535 = vweird.f32 %v3529
        %vm3536 = vmor %vm3534, %vm3535
        %v3537 = vsel %vm3536, %v3529, %v3533
        %v3538 = vand.u32 2147483647, %v3240
        %vm3539 = vcmp.eq.f32.partialorder %v3538, 8.507059e+37
        %v3540 = vand.u32 %v3240, 2147483648
        %v3541 = vor.u32 1.1754944e-38, %v3540
        %v3542 = vsel %vm3539, %v3541, %v3537
        %v3543 = vmul.f32 %v3126, %v3542
        %v3544 = vmul.f32 %v3128, %v3542
        %v3545 = vrcp.pop %v3243
        %v3546 = vmul.f32 %v3243, %v3545
        %v3547 = vsub.f32 1.0, %v3546
        %v3548 = vmul.f32 %v3545, %v3547
        %v3549 = vadd.f32 %v3545, %v3548
        %vm3550 = vweird.f32 %v3243
        %vm3551 = vweird.f32 %v3545
        %vm3552 = vmor %vm3550, %vm3551
        %v3553 = vsel %vm3552, %v3545, %v3549
        %v3554 = vand.u32 2147483647, %v3243
        %vm3555 = vcmp.eq.f32.partialorder %v3554, 8.507059e+37
        %v3556 = vand.u32 %v3243, 2147483648
        %v3557 = vor.u32 1.1754944e-38, %v3556
        %v3558 = vsel %vm3555, %v3557, %v3553
        %v3559 = vmul.f32 %v3130, %v3558
        %v3560 = vmul.f32 %v3132, %v3558
        %v3561 = vrcp.pop %v3246
        %v3562 = vmul.f32 %v3246, %v3561
        %v3563 = vsub.f32 1.0, %v3562
        %v3564 = vmul.f32 %v3561, %v3563
        %v3565 = vadd.f32 %v3561, %v3564
        %vm3566 = vweird.f32 %v3246
        %vm3567 = vweird.f32 %v3561
        %vm3568 = vmor %vm3566, %vm3567
        %v3569 = vsel %vm3568, %v3561, %v3565
        %v3570 = vand.u32 2147483647, %v3246
        %vm3571 = vcmp.eq.f32.partialorder %v3570, 8.507059e+37
        %v3572 = vand.u32 %v3246, 2147483648
        %v3573 = vor.u32 1.1754944e-38, %v3572
        %v3574 = vsel %vm3571, %v3573, %v3569
        %v3575 = vmul.f32 %v3134, %v3574
        %v3576 = vmul.f32 %v3136, %v3574
        %v3577 = vrcp.pop %v3249
        %v3578 = vmul.f32 %v3249, %v3577
        %v3579 = vsub.f32 1.0, %v3578
        %v3580 = vmul.f32 %v3577, %v3579
        %v3581 = vadd.f32 %v3577, %v3580
        %vm3582 = vweird.f32 %v3249
        %vm3583 = vweird.f32 %v3577
        %vm3584 = vmor %vm3582, %vm3583
        %v3585 = vsel %vm3584, %v3577, %v3581
        %v3586 = vand.u32 2147483647, %v3249
        %vm3587 = vcmp.eq.f32.partialorder %v3586, 8.507059e+37
        %v3588 = vand.u32 %v3249, 2147483648
        %v3589 = vor.u32 1.1754944e-38, %v3588
        %v3590 = vsel %vm3587, %v3589, %v3585
        %v3591 = vmul.f32 %v3138, %v3590
        %v3592 = vmul.f32 %v3140, %v3590
        %v3593 = vrcp.pop %v3252
        %v3594 = vmul.f32 %v3252, %v3593
        %v3595 = vsub.f32 1.0, %v3594
        %v3596 = vmul.f32 %v3593, %v3595
        %v3597 = vadd.f32 %v3593, %v3596
        %vm3598 = vweird.f32 %v3252
        %vm3599 = vweird.f32 %v3593
        %vm3600 = vmor %vm3598, %vm3599
        %v3601 = vsel %vm3600, %v3593, %v3597
        %v3602 = vand.u32 2147483647, %v3252
        %vm3603 = vcmp.eq.f32.partialorder %v3602, 8.507059e+37
        %v3604 = vand.u32 %v3252, 2147483648
        %v3605 = vor.u32 1.1754944e-38, %v3604
        %v3606 = vsel %vm3603, %v3605, %v3601
        %v3607 = vmul.f32 %v3142, %v3606
        %v3608 = vmul.f32 %v3144, %v3606
        %v3609 = vrcp.pop %v3255
        %v3610 = vmul.f32 %v3255, %v3609
        %v3611 = vsub.f32 1.0, %v3610
        %v3612 = vmul.f32 %v3609, %v3611
        %v3613 = vadd.f32 %v3609, %v3612
        %vm3614 = vweird.f32 %v3255
        %vm3615 = vweird.f32 %v3609
        %vm3616 = vmor %vm3614, %vm3615
        %v3617 = vsel %vm3616, %v3609, %v3613
        %v3618 = vand.u32 2147483647, %v3255
        %vm3619 = vcmp.eq.f32.partialorder %v3618, 8.507059e+37
        %v3620 = vand.u32 %v3255, 2147483648
        %v3621 = vor.u32 1.1754944e-38, %v3620
        %v3622 = vsel %vm3619, %v3621, %v3617
        %v3623 = vmul.f32 %v3146, %v3622
        %v3624 = vmul.f32 %v3148, %v3622
        %v3625 = vrcp.pop %v3258
        %v3626 = vmul.f32 %v3258, %v3625
        %v3627 = vsub.f32 1.0, %v3626
        %v3628 = vmul.f32 %v3625, %v3627
        %v3629 = vadd.f32 %v3625, %v3628
        %vm3630 = vweird.f32 %v3258
        %vm3631 = vweird.f32 %v3625
        %vm3632 = vmor %vm3630, %vm3631
        %v3633 = vsel %vm3632, %v3625, %v3629
        %v3634 = vand.u32 2147483647, %v3258
        %vm3635 = vcmp.eq.f32.partialorder %v3634, 8.507059e+37
        %v3636 = vand.u32 %v3258, 2147483648
        %v3637 = vor.u32 1.1754944e-38, %v3636
        %v3638 = vsel %vm3635, %v3637, %v3633
        %v3639 = vmul.f32 %v3150, %v3638
        %v3640 = vmul.f32 %v3152, %v3638
        %v3641 = vrcp.pop %v3261
        %v3642 = vmul.f32 %v3261, %v3641
        %v3643 = vsub.f32 1.0, %v3642
        %v3644 = vmul.f32 %v3641, %v3643
        %v3645 = vadd.f32 %v3641, %v3644
        %vm3646 = vweird.f32 %v3261
        %vm3647 = vweird.f32 %v3641
        %vm3648 = vmor %vm3646, %vm3647
        %v3649 = vsel %vm3648, %v3641, %v3645
        %v3650 = vand.u32 2147483647, %v3261
        %vm3651 = vcmp.eq.f32.partialorder %v3650, 8.507059e+37
        %v3652 = vand.u32 %v3261, 2147483648
        %v3653 = vor.u32 1.1754944e-38, %v3652
        %v3654 = vsel %vm3651, %v3653, %v3649
        %v3655 = vmul.f32 %v3154, %v3654
        %v3656 = vmul.f32 %v3156, %v3654
        %v3657 = vrcp.pop %v3264
        %v3658 = vmul.f32 %v3264, %v3657
        %v3659 = vsub.f32 1.0, %v3658
        %v3660 = vmul.f32 %v3657, %v3659
        %v3661 = vadd.f32 %v3657, %v3660
        %vm3662 = vweird.f32 %v3264
        %vm3663 = vweird.f32 %v3657
        %vm3664 = vmor %vm3662, %vm3663
        %v3665 = vsel %vm3664, %v3657, %v3661
        %v3666 = vand.u32 2147483647, %v3264
        %vm3667 = vcmp.eq.f32.partialorder %v3666, 8.507059e+37
        %v3668 = vand.u32 %v3264, 2147483648
        %v3669 = vor.u32 1.1754944e-38, %v3668
        %v3670 = vsel %vm3667, %v3669, %v3665
        %v3671 = vmul.f32 %v3158, %v3670
        %v3672 = vmul.f32 %v3160, %v3670
        %v3673 = vrcp.pop %v3267
        %v3674 = vmul.f32 %v3267, %v3673
        %v3675 = vsub.f32 1.0, %v3674
        %v3676 = vmul.f32 %v3673, %v3675
        %v3677 = vadd.f32 %v3673, %v3676
        %vm3678 = vweird.f32 %v3267
        %vm3679 = vweird.f32 %v3673
        %vm3680 = vmor %vm3678, %vm3679
        %v3681 = vsel %vm3680, %v3673, %v3677
        %v3682 = vand.u32 2147483647, %v3267
        %vm3683 = vcmp.eq.f32.partialorder %v3682, 8.507059e+37
        %v3684 = vand.u32 %v3267, 2147483648
        %v3685 = vor.u32 1.1754944e-38, %v3684
        %v3686 = vsel %vm3683, %v3685, %v3681
        %v3687 = vmul.f32 %v3162, %v3686
        %v3688 = vmul.f32 %v3164, %v3686
        %v3689 = vrcp.pop %v3270
        %v3690 = vmul.f32 %v3270, %v3689
        %v3691 = vsub.f32 1.0, %v3690
        %v3692 = vmul.f32 %v3689, %v3691
        %v3693 = vadd.f32 %v3689, %v3692
        %vm3694 = vweird.f32 %v3270
        %vm3695 = vweird.f32 %v3689
        %vm3696 = vmor %vm3694, %vm3695
        %v3697 = vsel %vm3696, %v3689, %v3693
        %v3698 = vand.u32 2147483647, %v3270
        %vm3699 = vcmp.eq.f32.partialorder %v3698, 8.507059e+37
        %v3700 = vand.u32 %v3270, 2147483648
        %v3701 = vor.u32 1.1754944e-38, %v3700
        %v3702 = vsel %vm3699, %v3701, %v3697
        %v3703 = vmul.f32 %v3166, %v3702
        %v3704 = vmul.f32 %v3168, %v3702
        %v3705 = vrcp.pop %v3273
        %v3706 = vmul.f32 %v3273, %v3705
        %v3707 = vsub.f32 1.0, %v3706
        %v3708 = vmul.f32 %v3705, %v3707
        %v3709 = vadd.f32 %v3705, %v3708
        %vm3710 = vweird.f32 %v3273
        %vm3711 = vweird.f32 %v3705
        %vm3712 = vmor %vm3710, %vm3711
        %v3713 = vsel %vm3712, %v3705, %v3709
        %v3714 = vand.u32 2147483647, %v3273
        %vm3715 = vcmp.eq.f32.partialorder %v3714, 8.507059e+37
        %v3716 = vand.u32 %v3273, 2147483648
        %v3717 = vor.u32 1.1754944e-38, %v3716
        %v3718 = vsel %vm3715, %v3717, %v3713
        %v3719 = vmul.f32 %v3170, %v3718
        %v3720 = vmul.f32 %v3172, %v3718
        %v3721 = vrcp.pop %v3276
        %v3722 = vmul.f32 %v3276, %v3721
        %v3723 = vsub.f32 1.0, %v3722
        %v3724 = vmul.f32 %v3721, %v3723
        %v3725 = vadd.f32 %v3721, %v3724
        %vm3726 = vweird.f32 %v3276
        %vm3727 = vweird.f32 %v3721
        %vm3728 = vmor %vm3726, %vm3727
        %v3729 = vsel %vm3728, %v3721, %v3725
        %v3730 = vand.u32 2147483647, %v3276
        %vm3731 = vcmp.eq.f32.partialorder %v3730, 8.507059e+37
        %v3732 = vand.u32 %v3276, 2147483648
        %v3733 = vor.u32 1.1754944e-38, %v3732
        %v3734 = vsel %vm3731, %v3733, %v3729
        %v3735 = vmul.f32 %v3174, %v3734
        %v3736 = vmul.f32 %v3176, %v3734
        %v3737 = vrcp.pop %v3279
        %v3738 = vmul.f32 %v3279, %v3737
        %v3739 = vsub.f32 1.0, %v3738
        %v3740 = vmul.f32 %v3737, %v3739
        %v3741 = vadd.f32 %v3737, %v3740
        %vm3742 = vweird.f32 %v3279
        %vm3743 = vweird.f32 %v3737
        %vm3744 = vmor %vm3742, %vm3743
        %v3745 = vsel %vm3744, %v3737, %v3741
        %v3746 = vand.u32 2147483647, %v3279
        %vm3747 = vcmp.eq.f32.partialorder %v3746, 8.507059e+37
        %v3748 = vand.u32 %v3279, 2147483648
        %v3749 = vor.u32 1.1754944e-38, %v3748
        %v3750 = vsel %vm3747, %v3749, %v3745
        %v3751 = vmul.f32 %v3178, %v3750
        %v3752 = vmul.f32 %v3180, %v3750
        %v3753 = vrcp.pop %v3282
        %v3754 = vmul.f32 %v3282, %v3753
        %v3755 = vsub.f32 1.0, %v3754
        %v3756 = vmul.f32 %v3753, %v3755
        %v3757 = vadd.f32 %v3753, %v3756
        %vm3758 = vweird.f32 %v3282
        %vm3759 = vweird.f32 %v3753
        %vm3760 = vmor %vm3758, %vm3759
        %v3761 = vsel %vm3760, %v3753, %v3757
        %v3762 = vand.u32 2147483647, %v3282
        %vm3763 = vcmp.eq.f32.partialorder %v3762, 8.507059e+37
        %v3764 = vand.u32 %v3282, 2147483648
        %v3765 = vor.u32 1.1754944e-38, %v3764
        %v3766 = vsel %vm3763, %v3765, %v3761
        %v3767 = vmul.f32 %v3182, %v3766
        %v3768 = vmul.f32 %v3184, %v3766
        %v3769 = vrcp.pop %v3285
        %v3770 = vmul.f32 %v3285, %v3769
        %v3771 = vsub.f32 1.0, %v3770
        %v3772 = vmul.f32 %v3769, %v3771
        %v3773 = vadd.f32 %v3769, %v3772
        %vm3774 = vweird.f32 %v3285
        %vm3775 = vweird.f32 %v3769
        %vm3776 = vmor %vm3774, %vm3775
        %v3777 = vsel %vm3776, %v3769, %v3773
        %v3778 = vand.u32 2147483647, %v3285
        %vm3779 = vcmp.eq.f32.partialorder %v3778, 8.507059e+37
        %v3780 = vand.u32 %v3285, 2147483648
        %v3781 = vor.u32 1.1754944e-38, %v3780
        %v3782 = vsel %vm3779, %v3781, %v3777
        %v3783 = vmul.f32 %v3186, %v3782
        %v3784 = vmul.f32 %v3188, %v3782
        %v3785 = vrcp.pop %v3288
        %v3786 = vmul.f32 %v3288, %v3785
        %v3787 = vsub.f32 1.0, %v3786
        %v3788 = vmul.f32 %v3785, %v3787
        %v3789 = vadd.f32 %v3785, %v3788
        %vm3790 = vweird.f32 %v3288
        %vm3791 = vweird.f32 %v3785
        %vm3792 = vmor %vm3790, %vm3791
        %v3793 = vsel %vm3792, %v3785, %v3789
        %v3794 = vand.u32 2147483647, %v3288
        %vm3795 = vcmp.eq.f32.partialorder %v3794, 8.507059e+37
        %v3796 = vand.u32 %v3288, 2147483648
        %v3797 = vor.u32 1.1754944e-38, %v3796
        %v3798 = vsel %vm3795, %v3797, %v3793
        %v3799 = vmul.f32 %v3190, %v3798
        %v3800 = vmul.f32 %v3192, %v3798
        %3801 = vrot.lane.b32.xlu0 %v527, 56
        %v3802 = vpop.permute.xlu0 %3801
        %3803 = vrot.lane.b32.xlu0 %v530, 56
        %v3804 = vpop.permute.xlu0 %3803
        %3805 = vrot.lane.b32.xlu0 %v533, 56
        %v3806 = vpop.permute.xlu0 %3805
        %3807 = vrot.lane.b32.xlu0 %v536, 56
        %v3808 = vpop.permute.xlu0 %3807
        %3809 = vrot.lane.b32.xlu0 %v539, 56
        %v3810 = vpop.permute.xlu0 %3809
        %3811 = vrot.lane.b32.xlu0 %v542, 56
        %v3812 = vpop.permute.xlu0 %3811
        %3813 = vrot.lane.b32.xlu0 %v545, 56
        %v3814 = vpop.permute.xlu0 %3813
        %3815 = vrot.lane.b32.xlu0 %v548, 56
        %v3816 = vpop.permute.xlu0 %3815
        %3817 = vrot.lane.b32.xlu0 %v551, 56
        %v3818 = vpop.permute.xlu0 %3817
        %3819 = vrot.lane.b32.xlu0 %v554, 56
        %v3820 = vpop.permute.xlu0 %3819
        %3821 = vrot.lane.b32.xlu0 %v557, 56
        %v3822 = vpop.permute.xlu0 %3821
        %3823 = vrot.lane.b32.xlu0 %v560, 56
        %v3824 = vpop.permute.xlu0 %3823
        %3825 = vrot.lane.b32.xlu0 %v563, 56
        %v3826 = vpop.permute.xlu0 %3825
        %3827 = vrot.lane.b32.xlu0 %v566, 56
        %v3828 = vpop.permute.xlu0 %3827
        %3829 = vrot.lane.b32.xlu0 %v569, 56
        %v3830 = vpop.permute.xlu0 %3829
        %3831 = vrot.lane.b32.xlu0 %v572, 56
        %v3832 = vpop.permute.xlu0 %3831
        %3833 = vrot.lane.b32.xlu0 %v575, 56
        %v3834 = vpop.permute.xlu0 %3833
        %3835 = vrot.lane.b32.xlu0 %v578, 56
        %v3836 = vpop.permute.xlu0 %3835
        %3837 = vrot.lane.b32.xlu0 %v581, 56
        %v3838 = vpop.permute.xlu0 %3837
        %3839 = vrot.lane.b32.xlu0 %v584, 56
        %v3840 = vpop.permute.xlu0 %3839
        %3841 = vrot.lane.b32.xlu0 %v587, 56
        %v3842 = vpop.permute.xlu0 %3841
        %3843 = vrot.lane.b32.xlu0 %v590, 56
        %v3844 = vpop.permute.xlu0 %3843
        %3845 = vrot.lane.b32.xlu0 %v593, 56
        %v3846 = vpop.permute.xlu0 %3845
        %3847 = vrot.lane.b32.xlu0 %v596, 56
        %v3848 = vpop.permute.xlu0 %3847
        %3849 = vrot.lane.b32.xlu0 %v599, 56
        %v3850 = vpop.permute.xlu0 %3849
        %3851 = vrot.lane.b32.xlu0 %v602, 56
        %v3852 = vpop.permute.xlu0 %3851
        %3853 = vrot.lane.b32.xlu0 %v605, 56
        %v3854 = vpop.permute.xlu0 %3853
        %3855 = vrot.lane.b32.xlu0 %v608, 56
        %v3856 = vpop.permute.xlu0 %3855
        %3857 = vrot.lane.b32.xlu0 %v611, 56
        %v3858 = vpop.permute.xlu0 %3857
        %3859 = vrot.lane.b32.xlu0 %v614, 56
        %v3860 = vpop.permute.xlu0 %3859
        %3861 = vrot.lane.b32.xlu0 %v617, 56
        %v3862 = vpop.permute.xlu0 %3861
        %3863 = vrot.lane.b32.xlu0 %v620, 56
        %v3864 = vpop.permute.xlu0 %3863
        %3897 = vmatpush.msra.mxu0 %v3832
        %3898 = vmatpush.msra.mxu0 %v3830
        %3899 = vmatpush.msra.mxu0 %v3828
        %3900 = vmatpush.msra.mxu0 %v3826
        %3901 = vmatpush.msra.mxu0 %v3824
        %3902 = vmatpush.msra.mxu0 %v3822
        %3903 = vmatpush.msra.mxu0 %v3820
        %3904 = vmatpush.msra.mxu0 %v3818
        %3905 = vmatpush.msra.mxu0 %v3816
        %3906 = vmatpush.msra.mxu0 %v3814
        %3907 = vmatpush.msra.mxu0 %v3812
        %3908 = vmatpush.msra.mxu0 %v3810
        %3909 = vmatpush.msra.mxu0 %v3808
        %3910 = vmatpush.msra.mxu0 %v3806
        %3911 = vmatpush.msra.mxu0 %v3804
        %3912 = vmatpush.msra.mxu0 %v3802
        %3913 = vmatmul.f32.gmra.mxu0 %v3303
        %v3914 = vpop.f32.mrf.mxu0
        %v3915 = vadd.f32 0.0, %v3914
        %3916 = vmatmul.f32.gmra.mxu0 %v3319
        %v3917 = vpop.f32.mrf.mxu0
        %v3918 = vadd.f32 0.0, %v3917
        %3919 = vmatmul.f32.gmra.mxu0 %v3335
        %v3920 = vpop.f32.mrf.mxu0
        %v3921 = vadd.f32 0.0, %v3920
        %3922 = vmatmul.f32.gmra.mxu0 %v3351
        %v3923 = vpop.f32.mrf.mxu0
        %v3924 = vadd.f32 0.0, %v3923
        %3925 = vmatmul.f32.gmra.mxu0 %v3367
        %v3926 = vpop.f32.mrf.mxu0
        %v3927 = vadd.f32 0.0, %v3926
        %3928 = vmatmul.f32.gmra.mxu0 %v3383
        %v3929 = vpop.f32.mrf.mxu0
        %v3930 = vadd.f32 0.0, %v3929
        %3931 = vmatmul.f32.gmra.mxu0 %v3399
        %v3932 = vpop.f32.mrf.mxu0
        %v3933 = vadd.f32 0.0, %v3932
        %3934 = vmatmul.f32.gmra.mxu0 %v3415
        %v3935 = vpop.f32.mrf.mxu0
        %v3936 = vadd.f32 0.0, %v3935
        %3937 = vmatmul.f32.gmra.mxu0 %v3431
        %v3938 = vpop.f32.mrf.mxu0
        %v3939 = vadd.f32 0.0, %v3938
        %3940 = vmatmul.f32.gmra.mxu0 %v3447
        %v3941 = vpop.f32.mrf.mxu0
        %v3942 = vadd.f32 0.0, %v3941
        %3943 = vmatmul.f32.gmra.mxu0 %v3463
        %v3944 = vpop.f32.mrf.mxu0
        %v3945 = vadd.f32 0.0, %v3944
        %3946 = vmatmul.f32.gmra.mxu0 %v3479
        %v3947 = vpop.f32.mrf.mxu0
        %v3948 = vadd.f32 0.0, %v3947
        %3949 = vmatmul.f32.gmra.mxu0 %v3495
        %v3950 = vpop.f32.mrf.mxu0
        %v3951 = vadd.f32 0.0, %v3950
        %3952 = vmatmul.f32.gmra.mxu0 %v3511
        %v3953 = vpop.f32.mrf.mxu0
        %v3954 = vadd.f32 0.0, %v3953
        %3955 = vmatmul.f32.gmra.mxu0 %v3527
        %v3956 = vpop.f32.mrf.mxu0
        %v3957 = vadd.f32 0.0, %v3956
        %3958 = vmatmul.f32.gmra.mxu0 %v3543
        %v3959 = vpop.f32.mrf.mxu0
        %v3960 = vadd.f32 0.0, %v3959
        %3961 = vmatmul.f32.gmra.mxu0 %v3559
        %v3962 = vpop.f32.mrf.mxu0
        %v3963 = vadd.f32 0.0, %v3962
        %3964 = vmatmul.f32.gmra.mxu0 %v3575
        %v3965 = vpop.f32.mrf.mxu0
        %v3966 = vadd.f32 0.0, %v3965
        %3967 = vmatmul.f32.gmra.mxu0 %v3591
        %v3968 = vpop.f32.mrf.mxu0
        %v3969 = vadd.f32 0.0, %v3968
        %3970 = vmatmul.f32.gmra.mxu0 %v3607
        %v3971 = vpop.f32.mrf.mxu0
        %v3972 = vadd.f32 0.0, %v3971
        %3973 = vmatmul.f32.gmra.mxu0 %v3623
        %v3974 = vpop.f32.mrf.mxu0
        %v3975 = vadd.f32 0.0, %v3974
        %3976 = vmatmul.f32.gmra.mxu0 %v3639
        %v3977 = vpop.f32.mrf.mxu0
        %v3978 = vadd.f32 0.0, %v3977
        %3979 = vmatmul.f32.gmra.mxu0 %v3655
        %v3980 = vpop.f32.mrf.mxu0
        %v3981 = vadd.f32 0.0, %v3980
        %3982 = vmatmul.f32.gmra.mxu0 %v3671
        %v3983 = vpop.f32.mrf.mxu0
        %v3984 = vadd.f32 0.0, %v3983
        %3985 = vmatmul.f32.gmra.mxu0 %v3687
        %v3986 = vpop.f32.mrf.mxu0
        %v3987 = vadd.f32 0.0, %v3986
        %3988 = vmatmul.f32.gmra.mxu0 %v3703
        %v3989 = vpop.f32.mrf.mxu0
        %v3990 = vadd.f32 0.0, %v3989
        %3991 = vmatmul.f32.gmra.mxu0 %v3719
        %v3992 = vpop.f32.mrf.mxu0
        %v3993 = vadd.f32 0.0, %v3992
        %3994 = vmatmul.f32.gmra.mxu0 %v3735
        %v3995 = vpop.f32.mrf.mxu0
        %v3996 = vadd.f32 0.0, %v3995
        %3997 = vmatmul.f32.gmra.mxu0 %v3751
        %v3998 = vpop.f32.mrf.mxu0
        %v3999 = vadd.f32 0.0, %v3998
        %4000 = vmatmul.f32.gmra.mxu0 %v3767
        %v4001 = vpop.f32.mrf.mxu0
        %v4002 = vadd.f32 0.0, %v4001
        %4003 = vmatmul.f32.gmra.mxu0 %v3783
        %v4004 = vpop.f32.mrf.mxu0
        %v4005 = vadd.f32 0.0, %v4004
        %4006 = vmatmul.f32.gmra.mxu0 %v3799
        %v4007 = vpop.f32.mrf.mxu0
        %v4008 = vadd.f32 0.0, %v4007
        %4009 = vdwg.mxu0
        %4010 = vmatpush.msra.mxu0 %v3864
        %4011 = vmatpush.msra.mxu0 %v3862
        %4012 = vmatpush.msra.mxu0 %v3860
        %4013 = vmatpush.msra.mxu0 %v3858
        %4014 = vmatpush.msra.mxu0 %v3856
        %4015 = vmatpush.msra.mxu0 %v3854
        %4016 = vmatpush.msra.mxu0 %v3852
        %4017 = vmatpush.msra.mxu0 %v3850
        %4018 = vmatpush.msra.mxu0 %v3848
        %4019 = vmatpush.msra.mxu0 %v3846
        %4020 = vmatpush.msra.mxu0 %v3844
        %4021 = vmatpush.msra.mxu0 %v3842
        %4022 = vmatpush.msra.mxu0 %v3840
        %4023 = vmatpush.msra.mxu0 %v3838
        %4024 = vmatpush.msra.mxu0 %v3836
        %4025 = vmatpush.msra.mxu0 %v3834
        %4026 = vmatmul.f32.gmra.mxu0 %v3304
        %v4027 = vpop.f32.mrf.mxu0
        %v4028 = vadd.f32 %v3915, %v4027
        %4029 = vmatmul.f32.gmra.mxu0 %v3320
        %v4030 = vpop.f32.mrf.mxu0
        %v4031 = vadd.f32 %v3918, %v4030
        %4032 = vmatmul.f32.gmra.mxu0 %v3336
        %v4033 = vpop.f32.mrf.mxu0
        %v4034 = vadd.f32 %v3921, %v4033
        %4035 = vmatmul.f32.gmra.mxu0 %v3352
        %v4036 = vpop.f32.mrf.mxu0
        %v4037 = vadd.f32 %v3924, %v4036
        %4038 = vmatmul.f32.gmra.mxu0 %v3368
        %v4039 = vpop.f32.mrf.mxu0
        %v4040 = vadd.f32 %v3927, %v4039
        %4041 = vmatmul.f32.gmra.mxu0 %v3384
        %v4042 = vpop.f32.mrf.mxu0
        %v4043 = vadd.f32 %v3930, %v4042
        %4044 = vmatmul.f32.gmra.mxu0 %v3400
        %v4045 = vpop.f32.mrf.mxu0
        %v4046 = vadd.f32 %v3933, %v4045
        %4047 = vmatmul.f32.gmra.mxu0 %v3416
        %v4048 = vpop.f32.mrf.mxu0
        %v4049 = vadd.f32 %v3936, %v4048
        %4050 = vmatmul.f32.gmra.mxu0 %v3432
        %v4051 = vpop.f32.mrf.mxu0
        %v4052 = vadd.f32 %v3939, %v4051
        %4053 = vmatmul.f32.gmra.mxu0 %v3448
        %v4054 = vpop.f32.mrf.mxu0
        %v4055 = vadd.f32 %v3942, %v4054
        %4056 = vmatmul.f32.gmra.mxu0 %v3464
        %v4057 = vpop.f32.mrf.mxu0
        %v4058 = vadd.f32 %v3945, %v4057
        %4059 = vmatmul.f32.gmra.mxu0 %v3480
        %v4060 = vpop.f32.mrf.mxu0
        %v4061 = vadd.f32 %v3948, %v4060
        %4062 = vmatmul.f32.gmra.mxu0 %v3496
        %v4063 = vpop.f32.mrf.mxu0
        %v4064 = vadd.f32 %v3951, %v4063
        %4065 = vmatmul.f32.gmra.mxu0 %v3512
        %v4066 = vpop.f32.mrf.mxu0
        %v4067 = vadd.f32 %v3954, %v4066
        %4068 = vmatmul.f32.gmra.mxu0 %v3528
        %v4069 = vpop.f32.mrf.mxu0
        %v4070 = vadd.f32 %v3957, %v4069
        %4071 = vmatmul.f32.gmra.mxu0 %v3544
        %v4072 = vpop.f32.mrf.mxu0
        %v4073 = vadd.f32 %v3960, %v4072
        %4074 = vmatmul.f32.gmra.mxu0 %v3560
        %v4075 = vpop.f32.mrf.mxu0
        %v4076 = vadd.f32 %v3963, %v4075
        %4077 = vmatmul.f32.gmra.mxu0 %v3576
        %v4078 = vpop.f32.mrf.mxu0
        %v4079 = vadd.f32 %v3966, %v4078
        %4080 = vmatmul.f32.gmra.mxu0 %v3592
        %v4081 = vpop.f32.mrf.mxu0
        %v4082 = vadd.f32 %v3969, %v4081
        %4083 = vmatmul.f32.gmra.mxu0 %v3608
        %v4084 = vpop.f32.mrf.mxu0
        %v4085 = vadd.f32 %v3972, %v4084
        %4086 = vmatmul.f32.gmra.mxu0 %v3624
        %v4087 = vpop.f32.mrf.mxu0
        %v4088 = vadd.f32 %v3975, %v4087
        %4089 = vmatmul.f32.gmra.mxu0 %v3640
        %v4090 = vpop.f32.mrf.mxu0
        %v4091 = vadd.f32 %v3978, %v4090
        %4092 = vmatmul.f32.gmra.mxu0 %v3656
        %v4093 = vpop.f32.mrf.mxu0
        %v4094 = vadd.f32 %v3981, %v4093
        %4095 = vmatmul.f32.gmra.mxu0 %v3672
        %v4096 = vpop.f32.mrf.mxu0
        %v4097 = vadd.f32 %v3984, %v4096
        %4098 = vmatmul.f32.gmra.mxu0 %v3688
        %v4099 = vpop.f32.mrf.mxu0
        %v4100 = vadd.f32 %v3987, %v4099
        %4101 = vmatmul.f32.gmra.mxu0 %v3704
        %v4102 = vpop.f32.mrf.mxu0
        %v4103 = vadd.f32 %v3990, %v4102
        %4104 = vmatmul.f32.gmra.mxu0 %v3720
        %v4105 = vpop.f32.mrf.mxu0
        %v4106 = vadd.f32 %v3993, %v4105
        %4107 = vmatmul.f32.gmra.mxu0 %v3736
        %v4108 = vpop.f32.mrf.mxu0
        %v4109 = vadd.f32 %v3996, %v4108
        %4110 = vmatmul.f32.gmra.mxu0 %v3752
        %v4111 = vpop.f32.mrf.mxu0
        %v4112 = vadd.f32 %v3999, %v4111
        %4113 = vmatmul.f32.gmra.mxu0 %v3768
        %v4114 = vpop.f32.mrf.mxu0
        %v4115 = vadd.f32 %v4002, %v4114
        %4116 = vmatmul.f32.gmra.mxu0 %v3784
        %v4117 = vpop.f32.mrf.mxu0
        %v4118 = vadd.f32 %v4005, %v4117
        %4119 = vmatmul.f32.gmra.mxu0 %v3800
        %v4120 = vpop.f32.mrf.mxu0
        %v4121 = vadd.f32 %v4008, %v4120
        %4122 = vdwg.mxu0
        %v4124 = vsel %vm722, %v4028, 0
        %v4127 = vsel %vm722, %v4031, 0
        %v4130 = vsel %vm722, %v4034, 0
        %v4133 = vsel %vm722, %v4037, 0
        %v4136 = vsel %vm722, %v4040, 0
        %v4139 = vsel %vm722, %v4043, 0
        %v4142 = vsel %vm722, %v4046, 0
        %v4145 = vsel %vm722, %v4049, 0
        %v4148 = vsel %vm722, %v4052, 0
        %v4151 = vsel %vm722, %v4055, 0
        %v4154 = vsel %vm722, %v4058, 0
        %v4157 = vsel %vm722, %v4061, 0
        %v4160 = vsel %vm722, %v4064, 0
        %v4163 = vsel %vm722, %v4067, 0
        %v4166 = vsel %vm722, %v4070, 0
        %v4169 = vsel %vm722, %v4073, 0
        %v4172 = vsel %vm722, %v4076, 0
        %v4175 = vsel %vm722, %v4079, 0
        %v4178 = vsel %vm722, %v4082, 0
        %v4181 = vsel %vm722, %v4085, 0
        %v4184 = vsel %vm722, %v4088, 0
        %v4187 = vsel %vm722, %v4091, 0
        %v4190 = vsel %vm722, %v4094, 0
        %v4193 = vsel %vm722, %v4097, 0
        %v4196 = vsel %vm722, %v4100, 0
        %v4199 = vsel %vm722, %v4103, 0
        %v4202 = vsel %vm722, %v4106, 0
        %v4205 = vsel %vm722, %v4109, 0
        %v4208 = vsel %vm722, %v4112, 0
        %v4211 = vsel %vm722, %v4115, 0
        %v4214 = vsel %vm722, %v4118, 0
        %v4217 = vsel %vm722, %v4121, 0
        %4219 = vmatpush.msra.mxu0 0.0
        %4220 = vmatpush.msra.mxu0 0.0
        %4221 = vmatpush.msra.mxu0 0.0
        %4222 = vmatpush.msra.mxu0 0.0
        %4223 = vmatpush.msra.mxu0 0.0
        %4224 = vmatpush.msra.mxu0 0.0
        %4225 = vmatpush.msra.mxu0 0.0
        %4226 = vmatpush.msra.mxu0 0.0
        %4227 = vmatpush.msra.mxu0 0.0
        %4228 = vmatpush.msra.mxu0 0.0
        %4229 = vmatpush.msra.mxu0 0.0
        %4230 = vmatpush.msra.mxu0 0.0
        %4231 = vmatpush.msra.mxu0 0.0
        %4232 = vmatpush.msra.mxu0 0.0
        %4233 = vmatpush.msra.mxu0 0.0
        %4234 = vmatpush.msra.mxu0 %v623
        %4235 = vmatmul.f32.gmra.mxu0 %v4124
        %v4236 = vpop.f32.mrf.mxu0
        %v4237 = vadd.f32 0.0, %v4236
        %4238 = vmatmul.f32.gmra.mxu0 %v4127
        %v4239 = vpop.f32.mrf.mxu0
        %v4240 = vadd.f32 0.0, %v4239
        %4241 = vmatmul.f32.gmra.mxu0 %v4130
        %v4242 = vpop.f32.mrf.mxu0
        %v4243 = vadd.f32 0.0, %v4242
        %4244 = vmatmul.f32.gmra.mxu0 %v4133
        %v4245 = vpop.f32.mrf.mxu0
        %v4246 = vadd.f32 0.0, %v4245
        %4247 = vmatmul.f32.gmra.mxu0 %v4136
        %v4248 = vpop.f32.mrf.mxu0
        %v4249 = vadd.f32 0.0, %v4248
        %4250 = vmatmul.f32.gmra.mxu0 %v4139
        %v4251 = vpop.f32.mrf.mxu0
        %v4252 = vadd.f32 0.0, %v4251
        %4253 = vmatmul.f32.gmra.mxu0 %v4142
        %v4254 = vpop.f32.mrf.mxu0
        %v4255 = vadd.f32 0.0, %v4254
        %4256 = vmatmul.f32.gmra.mxu0 %v4145
        %v4257 = vpop.f32.mrf.mxu0
        %v4258 = vadd.f32 0.0, %v4257
        %4259 = vmatmul.f32.gmra.mxu0 %v4148
        %v4260 = vpop.f32.mrf.mxu0
        %v4261 = vadd.f32 0.0, %v4260
        %4262 = vmatmul.f32.gmra.mxu0 %v4151
        %v4263 = vpop.f32.mrf.mxu0
        %v4264 = vadd.f32 0.0, %v4263
        %4265 = vmatmul.f32.gmra.mxu0 %v4154
        %v4266 = vpop.f32.mrf.mxu0
        %v4267 = vadd.f32 0.0, %v4266
        %4268 = vmatmul.f32.gmra.mxu0 %v4157
        %v4269 = vpop.f32.mrf.mxu0
        %v4270 = vadd.f32 0.0, %v4269
        %4271 = vmatmul.f32.gmra.mxu0 %v4160
        %v4272 = vpop.f32.mrf.mxu0
        %v4273 = vadd.f32 0.0, %v4272
        %4274 = vmatmul.f32.gmra.mxu0 %v4163
        %v4275 = vpop.f32.mrf.mxu0
        %v4276 = vadd.f32 0.0, %v4275
        %4277 = vmatmul.f32.gmra.mxu0 %v4166
        %v4278 = vpop.f32.mrf.mxu0
        %v4279 = vadd.f32 0.0, %v4278
        %4280 = vmatmul.f32.gmra.mxu0 %v4169
        %v4281 = vpop.f32.mrf.mxu0
        %v4282 = vadd.f32 0.0, %v4281
        %4283 = vmatmul.f32.gmra.mxu0 %v4172
        %v4284 = vpop.f32.mrf.mxu0
        %v4285 = vadd.f32 0.0, %v4284
        %4286 = vmatmul.f32.gmra.mxu0 %v4175
        %v4287 = vpop.f32.mrf.mxu0
        %v4288 = vadd.f32 0.0, %v4287
        %4289 = vmatmul.f32.gmra.mxu0 %v4178
        %v4290 = vpop.f32.mrf.mxu0
        %v4291 = vadd.f32 0.0, %v4290
        %4292 = vmatmul.f32.gmra.mxu0 %v4181
        %v4293 = vpop.f32.mrf.mxu0
        %v4294 = vadd.f32 0.0, %v4293
        %4295 = vmatmul.f32.gmra.mxu0 %v4184
        %v4296 = vpop.f32.mrf.mxu0
        %v4297 = vadd.f32 0.0, %v4296
        %4298 = vmatmul.f32.gmra.mxu0 %v4187
        %v4299 = vpop.f32.mrf.mxu0
        %v4300 = vadd.f32 0.0, %v4299
        %4301 = vmatmul.f32.gmra.mxu0 %v4190
        %v4302 = vpop.f32.mrf.mxu0
        %v4303 = vadd.f32 0.0, %v4302
        %4304 = vmatmul.f32.gmra.mxu0 %v4193
        %v4305 = vpop.f32.mrf.mxu0
        %v4306 = vadd.f32 0.0, %v4305
        %4307 = vmatmul.f32.gmra.mxu0 %v4196
        %v4308 = vpop.f32.mrf.mxu0
        %v4309 = vadd.f32 0.0, %v4308
        %4310 = vmatmul.f32.gmra.mxu0 %v4199
        %v4311 = vpop.f32.mrf.mxu0
        %v4312 = vadd.f32 0.0, %v4311
        %4313 = vmatmul.f32.gmra.mxu0 %v4202
        %v4314 = vpop.f32.mrf.mxu0
        %v4315 = vadd.f32 0.0, %v4314
        %4316 = vmatmul.f32.gmra.mxu0 %v4205
        %v4317 = vpop.f32.mrf.mxu0
        %v4318 = vadd.f32 0.0, %v4317
        %4319 = vmatmul.f32.gmra.mxu0 %v4208
        %v4320 = vpop.f32.mrf.mxu0
        %v4321 = vadd.f32 0.0, %v4320
        %4322 = vmatmul.f32.gmra.mxu0 %v4211
        %v4323 = vpop.f32.mrf.mxu0
        %v4324 = vadd.f32 0.0, %v4323
        %4325 = vmatmul.f32.gmra.mxu0 %v4214
        %v4326 = vpop.f32.mrf.mxu0
        %v4327 = vadd.f32 0.0, %v4326
        %4328 = vmatmul.f32.gmra.mxu0 %v4217
        %v4329 = vpop.f32.mrf.mxu0
        %v4330 = vadd.f32 0.0, %v4329
        %4331 = vdwg.mxu0
        %v4333 = vsel %vm722, %v2264, 0
        %v4336 = vsel %vm722, %v2267, 0
        %v4339 = vsel %vm722, %v2270, 0
        %v4342 = vsel %vm722, %v2273, 0
        %v4345 = vsel %vm722, %v2276, 0
        %v4348 = vsel %vm722, %v2279, 0
        %v4351 = vsel %vm722, %v2282, 0
        %v4354 = vsel %vm722, %v2285, 0
        %v4357 = vsel %vm722, %v2288, 0
        %v4360 = vsel %vm722, %v2291, 0
        %v4363 = vsel %vm722, %v2294, 0
        %v4366 = vsel %vm722, %v2297, 0
        %v4369 = vsel %vm722, %v2300, 0
        %v4372 = vsel %vm722, %v2303, 0
        %v4375 = vsel %vm722, %v2306, 0
        %v4378 = vsel %vm722, %v2309, 0
        %v4381 = vsel %vm722, %v2312, 0
        %v4384 = vsel %vm722, %v2315, 0
        %v4387 = vsel %vm722, %v2318, 0
        %v4390 = vsel %vm722, %v2321, 0
        %v4393 = vsel %vm722, %v2324, 0
        %v4396 = vsel %vm722, %v2327, 0
        %v4399 = vsel %vm722, %v2330, 0
        %v4402 = vsel %vm722, %v2333, 0
        %v4405 = vsel %vm722, %v2336, 0
        %v4408 = vsel %vm722, %v2339, 0
        %v4411 = vsel %vm722, %v2342, 0
        %v4414 = vsel %vm722, %v2345, 0
        %v4417 = vsel %vm722, %v2348, 0
        %v4420 = vsel %vm722, %v2351, 0
        %v4423 = vsel %vm722, %v2354, 0
        %v4426 = vsel %vm722, %v2357, 0
        %4428 = vmatpush.msra.mxu0 0.0
        %4429 = vmatpush.msra.mxu0 0.0
        %4430 = vmatpush.msra.mxu0 0.0
        %4431 = vmatpush.msra.mxu0 0.0
        %4432 = vmatpush.msra.mxu0 0.0
        %4433 = vmatpush.msra.mxu0 0.0
        %4434 = vmatpush.msra.mxu0 0.0
        %4435 = vmatpush.msra.mxu0 0.0
        %4436 = vmatpush.msra.mxu0 0.0
        %4437 = vmatpush.msra.mxu0 0.0
        %4438 = vmatpush.msra.mxu0 0.0
        %4439 = vmatpush.msra.mxu0 0.0
        %4440 = vmatpush.msra.mxu0 0.0
        %4441 = vmatpush.msra.mxu0 0.0
        %4442 = vmatpush.msra.mxu0 0.0
        %4443 = vmatpush.msra.mxu0 %v622
        %4444 = vmatmul.f32.gmra.mxu0 %v4333
        %v4445 = vpop.f32.mrf.mxu0
        %v4446 = vadd.f32 %v4237, %v4445
        %4447 = vmatmul.f32.gmra.mxu0 %v4336
        %v4448 = vpop.f32.mrf.mxu0
        %v4449 = vadd.f32 %v4240, %v4448
        %4450 = vmatmul.f32.gmra.mxu0 %v4339
        %v4451 = vpop.f32.mrf.mxu0
        %v4452 = vadd.f32 %v4243, %v4451
        %4453 = vmatmul.f32.gmra.mxu0 %v4342
        %v4454 = vpop.f32.mrf.mxu0
        %v4455 = vadd.f32 %v4246, %v4454
        %4456 = vmatmul.f32.gmra.mxu0 %v4345
        %v4457 = vpop.f32.mrf.mxu0
        %v4458 = vadd.f32 %v4249, %v4457
        %4459 = vmatmul.f32.gmra.mxu0 %v4348
        %v4460 = vpop.f32.mrf.mxu0
        %v4461 = vadd.f32 %v4252, %v4460
        %4462 = vmatmul.f32.gmra.mxu0 %v4351
        %v4463 = vpop.f32.mrf.mxu0
        %v4464 = vadd.f32 %v4255, %v4463
        %4465 = vmatmul.f32.gmra.mxu0 %v4354
        %v4466 = vpop.f32.mrf.mxu0
        %v4467 = vadd.f32 %v4258, %v4466
        %4468 = vmatmul.f32.gmra.mxu0 %v4357
        %v4469 = vpop.f32.mrf.mxu0
        %v4470 = vadd.f32 %v4261, %v4469
        %4471 = vmatmul.f32.gmra.mxu0 %v4360
        %v4472 = vpop.f32.mrf.mxu0
        %v4473 = vadd.f32 %v4264, %v4472
        %4474 = vmatmul.f32.gmra.mxu0 %v4363
        %v4475 = vpop.f32.mrf.mxu0
        %v4476 = vadd.f32 %v4267, %v4475
        %4477 = vmatmul.f32.gmra.mxu0 %v4366
        %v4478 = vpop.f32.mrf.mxu0
        %v4479 = vadd.f32 %v4270, %v4478
        %4480 = vmatmul.f32.gmra.mxu0 %v4369
        %v4481 = vpop.f32.mrf.mxu0
        %v4482 = vadd.f32 %v4273, %v4481
        %4483 = vmatmul.f32.gmra.mxu0 %v4372
        %v4484 = vpop.f32.mrf.mxu0
        %v4485 = vadd.f32 %v4276, %v4484
        %4486 = vmatmul.f32.gmra.mxu0 %v4375
        %v4487 = vpop.f32.mrf.mxu0
        %v4488 = vadd.f32 %v4279, %v4487
        %4489 = vmatmul.f32.gmra.mxu0 %v4378
        %v4490 = vpop.f32.mrf.mxu0
        %v4491 = vadd.f32 %v4282, %v4490
        %4492 = vmatmul.f32.gmra.mxu0 %v4381
        %v4493 = vpop.f32.mrf.mxu0
        %v4494 = vadd.f32 %v4285, %v4493
        %4495 = vmatmul.f32.gmra.mxu0 %v4384
        %v4496 = vpop.f32.mrf.mxu0
        %v4497 = vadd.f32 %v4288, %v4496
        %4498 = vmatmul.f32.gmra.mxu0 %v4387
        %v4499 = vpop.f32.mrf.mxu0
        %v4500 = vadd.f32 %v4291, %v4499
        %4501 = vmatmul.f32.gmra.mxu0 %v4390
        %v4502 = vpop.f32.mrf.mxu0
        %v4503 = vadd.f32 %v4294, %v4502
        %4504 = vmatmul.f32.gmra.mxu0 %v4393
        %v4505 = vpop.f32.mrf.mxu0
        %v4506 = vadd.f32 %v4297, %v4505
        %4507 = vmatmul.f32.gmra.mxu0 %v4396
        %v4508 = vpop.f32.mrf.mxu0
        %v4509 = vadd.f32 %v4300, %v4508
        %4510 = vmatmul.f32.gmra.mxu0 %v4399
        %v4511 = vpop.f32.mrf.mxu0
        %v4512 = vadd.f32 %v4303, %v4511
        %4513 = vmatmul.f32.gmra.mxu0 %v4402
        %v4514 = vpop.f32.mrf.mxu0
        %v4515 = vadd.f32 %v4306, %v4514
        %4516 = vmatmul.f32.gmra.mxu0 %v4405
        %v4517 = vpop.f32.mrf.mxu0
        %v4518 = vadd.f32 %v4309, %v4517
        %4519 = vmatmul.f32.gmra.mxu0 %v4408
        %v4520 = vpop.f32.mrf.mxu0
        %v4521 = vadd.f32 %v4312, %v4520
        %4522 = vmatmul.f32.gmra.mxu0 %v4411
        %v4523 = vpop.f32.mrf.mxu0
        %v4524 = vadd.f32 %v4315, %v4523
        %4525 = vmatmul.f32.gmra.mxu0 %v4414
        %v4526 = vpop.f32.mrf.mxu0
        %v4527 = vadd.f32 %v4318, %v4526
        %4528 = vmatmul.f32.gmra.mxu0 %v4417
        %v4529 = vpop.f32.mrf.mxu0
        %v4530 = vadd.f32 %v4321, %v4529
        %4531 = vmatmul.f32.gmra.mxu0 %v4420
        %v4532 = vpop.f32.mrf.mxu0
        %v4533 = vadd.f32 %v4324, %v4532
        %4534 = vmatmul.f32.gmra.mxu0 %v4423
        %v4535 = vpop.f32.mrf.mxu0
        %v4536 = vadd.f32 %v4327, %v4535
        %4537 = vmatmul.f32.gmra.mxu0 %v4426
        %v4538 = vpop.f32.mrf.mxu0
        %v4539 = vadd.f32 %v4330, %v4538
        %4540 = vdwg.mxu0
        %4541 = vrot.lane.b32.xlu0 %v527, 112
        %v4542 = vpop.permute.xlu0 %4541
        %4543 = vrot.lane.b32.xlu0 %v530, 112
        %v4544 = vpop.permute.xlu0 %4543
        %4545 = vrot.lane.b32.xlu0 %v533, 112
        %v4546 = vpop.permute.xlu0 %4545
        %4547 = vrot.lane.b32.xlu0 %v536, 112
        %v4548 = vpop.permute.xlu0 %4547
        %4549 = vrot.lane.b32.xlu0 %v539, 112
        %v4550 = vpop.permute.xlu0 %4549
        %4551 = vrot.lane.b32.xlu0 %v542, 112
        %v4552 = vpop.permute.xlu0 %4551
        %4553 = vrot.lane.b32.xlu0 %v545, 112
        %v4554 = vpop.permute.xlu0 %4553
        %4555 = vrot.lane.b32.xlu0 %v548, 112
        %v4556 = vpop.permute.xlu0 %4555
        %4557 = vrot.lane.b32.xlu0 %v551, 112
        %v4558 = vpop.permute.xlu0 %4557
        %4559 = vrot.lane.b32.xlu0 %v554, 112
        %v4560 = vpop.permute.xlu0 %4559
        %4561 = vrot.lane.b32.xlu0 %v557, 112
        %v4562 = vpop.permute.xlu0 %4561
        %4563 = vrot.lane.b32.xlu0 %v560, 112
        %v4564 = vpop.permute.xlu0 %4563
        %4565 = vrot.lane.b32.xlu0 %v563, 112
        %v4566 = vpop.permute.xlu0 %4565
        %4567 = vrot.lane.b32.xlu0 %v566, 112
        %v4568 = vpop.permute.xlu0 %4567
        %4569 = vrot.lane.b32.xlu0 %v569, 112
        %v4570 = vpop.permute.xlu0 %4569
        %4571 = vrot.lane.b32.xlu0 %v572, 112
        %v4572 = vpop.permute.xlu0 %4571
        %4573 = vrot.lane.b32.xlu0 %v575, 112
        %v4574 = vpop.permute.xlu0 %4573
        %4575 = vrot.lane.b32.xlu0 %v578, 112
        %v4576 = vpop.permute.xlu0 %4575
        %4577 = vrot.lane.b32.xlu0 %v581, 112
        %v4578 = vpop.permute.xlu0 %4577
        %4579 = vrot.lane.b32.xlu0 %v584, 112
        %v4580 = vpop.permute.xlu0 %4579
        %4581 = vrot.lane.b32.xlu0 %v587, 112
        %v4582 = vpop.permute.xlu0 %4581
        %4583 = vrot.lane.b32.xlu0 %v590, 112
        %v4584 = vpop.permute.xlu0 %4583
        %4585 = vrot.lane.b32.xlu0 %v593, 112
        %v4586 = vpop.permute.xlu0 %4585
        %4587 = vrot.lane.b32.xlu0 %v596, 112
        %v4588 = vpop.permute.xlu0 %4587
        %4589 = vrot.lane.b32.xlu0 %v599, 112
        %v4590 = vpop.permute.xlu0 %4589
        %4591 = vrot.lane.b32.xlu0 %v602, 112
        %v4592 = vpop.permute.xlu0 %4591
        %4593 = vrot.lane.b32.xlu0 %v605, 112
        %v4594 = vpop.permute.xlu0 %4593
        %4595 = vrot.lane.b32.xlu0 %v608, 112
        %v4596 = vpop.permute.xlu0 %4595
        %4597 = vrot.lane.b32.xlu0 %v611, 112
        %v4598 = vpop.permute.xlu0 %4597
        %4599 = vrot.lane.b32.xlu0 %v614, 112
        %v4600 = vpop.permute.xlu0 %4599
        %4601 = vrot.lane.b32.xlu0 %v617, 112
        %v4602 = vpop.permute.xlu0 %4601
        %4603 = vrot.lane.b32.xlu0 %v620, 112
        %v4604 = vpop.permute.xlu0 %4603
        %4605 = vrot.lane.b32.xlu0 %v527, 80
        %v4606 = vpop.permute.xlu0 %4605
        %4607 = vrot.lane.b32.xlu0 %v530, 80
        %v4608 = vpop.permute.xlu0 %4607
        %4609 = vrot.lane.b32.xlu0 %v533, 80
        %v4610 = vpop.permute.xlu0 %4609
        %4611 = vrot.lane.b32.xlu0 %v536, 80
        %v4612 = vpop.permute.xlu0 %4611
        %4613 = vrot.lane.b32.xlu0 %v539, 80
        %v4614 = vpop.permute.xlu0 %4613
        %4615 = vrot.lane.b32.xlu0 %v542, 80
        %v4616 = vpop.permute.xlu0 %4615
        %4617 = vrot.lane.b32.xlu0 %v545, 80
        %v4618 = vpop.permute.xlu0 %4617
        %4619 = vrot.lane.b32.xlu0 %v548, 80
        %v4620 = vpop.permute.xlu0 %4619
        %4621 = vrot.lane.b32.xlu0 %v551, 80
        %v4622 = vpop.permute.xlu0 %4621
        %4623 = vrot.lane.b32.xlu0 %v554, 80
        %v4624 = vpop.permute.xlu0 %4623
        %4625 = vrot.lane.b32.xlu0 %v557, 80
        %v4626 = vpop.permute.xlu0 %4625
        %4627 = vrot.lane.b32.xlu0 %v560, 80
        %v4628 = vpop.permute.xlu0 %4627
        %4629 = vrot.lane.b32.xlu0 %v563, 80
        %v4630 = vpop.permute.xlu0 %4629
        %4631 = vrot.lane.b32.xlu0 %v566, 80
        %v4632 = vpop.permute.xlu0 %4631
        %4633 = vrot.lane.b32.xlu0 %v569, 80
        %v4634 = vpop.permute.xlu0 %4633
        %4635 = vrot.lane.b32.xlu0 %v572, 80
        %v4636 = vpop.permute.xlu0 %4635
        %4637 = vrot.lane.b32.xlu0 %v575, 80
        %v4638 = vpop.permute.xlu0 %4637
        %4639 = vrot.lane.b32.xlu0 %v578, 80
        %v4640 = vpop.permute.xlu0 %4639
        %4641 = vrot.lane.b32.xlu0 %v581, 80
        %v4642 = vpop.permute.xlu0 %4641
        %4643 = vrot.lane.b32.xlu0 %v584, 80
        %v4644 = vpop.permute.xlu0 %4643
        %4645 = vrot.lane.b32.xlu0 %v587, 80
        %v4646 = vpop.permute.xlu0 %4645
        %4647 = vrot.lane.b32.xlu0 %v590, 80
        %v4648 = vpop.permute.xlu0 %4647
        %4649 = vrot.lane.b32.xlu0 %v593, 80
        %v4650 = vpop.permute.xlu0 %4649
        %4651 = vrot.lane.b32.xlu0 %v596, 80
        %v4652 = vpop.permute.xlu0 %4651
        %4653 = vrot.lane.b32.xlu0 %v599, 80
        %v4654 = vpop.permute.xlu0 %4653
        %4655 = vrot.lane.b32.xlu0 %v602, 80
        %v4656 = vpop.permute.xlu0 %4655
        %4657 = vrot.lane.b32.xlu0 %v605, 80
        %v4658 = vpop.permute.xlu0 %4657
        %4659 = vrot.lane.b32.xlu0 %v608, 80
        %v4660 = vpop.permute.xlu0 %4659
        %4661 = vrot.lane.b32.xlu0 %v611, 80
        %v4662 = vpop.permute.xlu0 %4661
        %4663 = vrot.lane.b32.xlu0 %v614, 80
        %v4664 = vpop.permute.xlu0 %4663
        %4665 = vrot.lane.b32.xlu0 %v617, 80
        %v4666 = vpop.permute.xlu0 %4665
        %4667 = vrot.lane.b32.xlu0 %v620, 80
        %v4668 = vpop.permute.xlu0 %4667
        %v4669 = vsel %vm722, %v4542, 0
        %v4671 = vsel %vm722, %v4544, 0
        %v4673 = vsel %vm722, %v4546, 0
        %v4675 = vsel %vm722, %v4548, 0
        %v4677 = vsel %vm722, %v4550, 0
        %v4679 = vsel %vm722, %v4552, 0
        %v4681 = vsel %vm722, %v4554, 0
        %v4683 = vsel %vm722, %v4556, 0
        %v4685 = vsel %vm722, %v4558, 0
        %v4687 = vsel %vm722, %v4560, 0
        %v4689 = vsel %vm722, %v4562, 0
        %v4691 = vsel %vm722, %v4564, 0
        %v4693 = vsel %vm722, %v4566, 0
        %v4695 = vsel %vm722, %v4568, 0
        %v4697 = vsel %vm722, %v4570, 0
        %v4699 = vsel %vm722, %v4572, 0
        %v4701 = vsel %vm722, %v4574, 0
        %v4703 = vsel %vm722, %v4576, 0
        %v4705 = vsel %vm722, %v4578, 0
        %v4707 = vsel %vm722, %v4580, 0
        %v4709 = vsel %vm722, %v4582, 0
        %v4711 = vsel %vm722, %v4584, 0
        %v4713 = vsel %vm722, %v4586, 0
        %v4715 = vsel %vm722, %v4588, 0
        %v4717 = vsel %vm722, %v4590, 0
        %v4719 = vsel %vm722, %v4592, 0
        %v4721 = vsel %vm722, %v4594, 0
        %v4723 = vsel %vm722, %v4596, 0
        %v4725 = vsel %vm722, %v4598, 0
        %v4727 = vsel %vm722, %v4600, 0
        %v4729 = vsel %vm722, %v4602, 0
        %v4731 = vsel %vm722, %v4604, 0
        %v4733 = vsel %vm722, %v4606, 0
        %v4735 = vsel %vm722, %v4608, 0
        %v4737 = vsel %vm722, %v4610, 0
        %v4739 = vsel %vm722, %v4612, 0
        %v4741 = vsel %vm722, %v4614, 0
        %v4743 = vsel %vm722, %v4616, 0
        %v4745 = vsel %vm722, %v4618, 0
        %v4747 = vsel %vm722, %v4620, 0
        %v4749 = vsel %vm722, %v4622, 0
        %v4751 = vsel %vm722, %v4624, 0
        %v4753 = vsel %vm722, %v4626, 0
        %v4755 = vsel %vm722, %v4628, 0
        %v4757 = vsel %vm722, %v4630, 0
        %v4759 = vsel %vm722, %v4632, 0
        %v4761 = vsel %vm722, %v4634, 0
        %v4763 = vsel %vm722, %v4636, 0
        %v4765 = vsel %vm722, %v4638, 0
        %v4767 = vsel %vm722, %v4640, 0
        %v4769 = vsel %vm722, %v4642, 0
        %v4771 = vsel %vm722, %v4644, 0
        %v4773 = vsel %vm722, %v4646, 0
        %v4775 = vsel %vm722, %v4648, 0
        %v4777 = vsel %vm722, %v4650, 0
        %v4779 = vsel %vm722, %v4652, 0
        %v4781 = vsel %vm722, %v4654, 0
        %v4783 = vsel %vm722, %v4656, 0
        %v4785 = vsel %vm722, %v4658, 0
        %v4787 = vsel %vm722, %v4660, 0
        %v4789 = vsel %vm722, %v4662, 0
        %v4791 = vsel %vm722, %v4664, 0
        %v4793 = vsel %vm722, %v4666, 0
        %v4795 = vsel %vm722, %v4668, 0
        %4797 = vmatpush.xpose.msra.mxu0 %v4763
        %4798 = vmatpush.xpose.msra.mxu0 %v4761
        %4799 = vmatpush.xpose.msra.mxu0 %v4759
        %4800 = vmatpush.xpose.msra.mxu0 %v4757
        %4801 = vmatpush.xpose.msra.mxu0 %v4755
        %4802 = vmatpush.xpose.msra.mxu0 %v4753
        %4803 = vmatpush.xpose.msra.mxu0 %v4751
        %4804 = vmatpush.xpose.msra.mxu0 %v4749
        %4805 = vmatpush.xpose.msra.mxu0 %v4747
        %4806 = vmatpush.xpose.msra.mxu0 %v4745
        %4807 = vmatpush.xpose.msra.mxu0 %v4743
        %4808 = vmatpush.xpose.msra.mxu0 %v4741
        %4809 = vmatpush.xpose.msra.mxu0 %v4739
        %4810 = vmatpush.xpose.msra.mxu0 %v4737
        %4811 = vmatpush.xpose.msra.mxu0 %v4735
        %4812 = vmatpush.xpose.msra.mxu0 %v4733
        %4813 = vmatmul.f32.gmra.mxu0 %v4669
        %v4814 = vpop.f32.mrf.mxu0
        %v4815 = vadd.f32 0.0, %v4814
        %4816 = vmatmul.f32.gmra.mxu0 %v4671
        %v4817 = vpop.f32.mrf.mxu0
        %v4818 = vadd.f32 0.0, %v4817
        %4819 = vmatmul.f32.gmra.mxu0 %v4673
        %v4820 = vpop.f32.mrf.mxu0
        %v4821 = vadd.f32 0.0, %v4820
        %4822 = vmatmul.f32.gmra.mxu0 %v4675
        %v4823 = vpop.f32.mrf.mxu0
        %v4824 = vadd.f32 0.0, %v4823
        %4825 = vmatmul.f32.gmra.mxu0 %v4677
        %v4826 = vpop.f32.mrf.mxu0
        %v4827 = vadd.f32 0.0, %v4826
        %4828 = vmatmul.f32.gmra.mxu0 %v4679
        %v4829 = vpop.f32.mrf.mxu0
        %v4830 = vadd.f32 0.0, %v4829
        %4831 = vmatmul.f32.gmra.mxu0 %v4681
        %v4832 = vpop.f32.mrf.mxu0
        %v4833 = vadd.f32 0.0, %v4832
        %4834 = vmatmul.f32.gmra.mxu0 %v4683
        %v4835 = vpop.f32.mrf.mxu0
        %v4836 = vadd.f32 0.0, %v4835
        %4837 = vmatmul.f32.gmra.mxu0 %v4685
        %v4838 = vpop.f32.mrf.mxu0
        %v4839 = vadd.f32 0.0, %v4838
        %4840 = vmatmul.f32.gmra.mxu0 %v4687
        %v4841 = vpop.f32.mrf.mxu0
        %v4842 = vadd.f32 0.0, %v4841
        %4843 = vmatmul.f32.gmra.mxu0 %v4689
        %v4844 = vpop.f32.mrf.mxu0
        %v4845 = vadd.f32 0.0, %v4844
        %4846 = vmatmul.f32.gmra.mxu0 %v4691
        %v4847 = vpop.f32.mrf.mxu0
        %v4848 = vadd.f32 0.0, %v4847
        %4849 = vmatmul.f32.gmra.mxu0 %v4693
        %v4850 = vpop.f32.mrf.mxu0
        %v4851 = vadd.f32 0.0, %v4850
        %4852 = vmatmul.f32.gmra.mxu0 %v4695
        %v4853 = vpop.f32.mrf.mxu0
        %v4854 = vadd.f32 0.0, %v4853
        %4855 = vmatmul.f32.gmra.mxu0 %v4697
        %v4856 = vpop.f32.mrf.mxu0
        %v4857 = vadd.f32 0.0, %v4856
        %4858 = vmatmul.f32.gmra.mxu0 %v4699
        %v4859 = vpop.f32.mrf.mxu0
        %v4860 = vadd.f32 0.0, %v4859
        %4861 = vmatmul.f32.gmra.mxu0 %v4701
        %v4862 = vpop.f32.mrf.mxu0
        %v4863 = vadd.f32 0.0, %v4862
        %4864 = vmatmul.f32.gmra.mxu0 %v4703
        %v4865 = vpop.f32.mrf.mxu0
        %v4866 = vadd.f32 0.0, %v4865
        %4867 = vmatmul.f32.gmra.mxu0 %v4705
        %v4868 = vpop.f32.mrf.mxu0
        %v4869 = vadd.f32 0.0, %v4868
        %4870 = vmatmul.f32.gmra.mxu0 %v4707
        %v4871 = vpop.f32.mrf.mxu0
        %v4872 = vadd.f32 0.0, %v4871
        %4873 = vmatmul.f32.gmra.mxu0 %v4709
        %v4874 = vpop.f32.mrf.mxu0
        %v4875 = vadd.f32 0.0, %v4874
        %4876 = vmatmul.f32.gmra.mxu0 %v4711
        %v4877 = vpop.f32.mrf.mxu0
        %v4878 = vadd.f32 0.0, %v4877
        %4879 = vmatmul.f32.gmra.mxu0 %v4713
        %v4880 = vpop.f32.mrf.mxu0
        %v4881 = vadd.f32 0.0, %v4880
        %4882 = vmatmul.f32.gmra.mxu0 %v4715
        %v4883 = vpop.f32.mrf.mxu0
        %v4884 = vadd.f32 0.0, %v4883
        %4885 = vmatmul.f32.gmra.mxu0 %v4717
        %v4886 = vpop.f32.mrf.mxu0
        %v4887 = vadd.f32 0.0, %v4886
        %4888 = vmatmul.f32.gmra.mxu0 %v4719
        %v4889 = vpop.f32.mrf.mxu0
        %v4890 = vadd.f32 0.0, %v4889
        %4891 = vmatmul.f32.gmra.mxu0 %v4721
        %v4892 = vpop.f32.mrf.mxu0
        %v4893 = vadd.f32 0.0, %v4892
        %4894 = vmatmul.f32.gmra.mxu0 %v4723
        %v4895 = vpop.f32.mrf.mxu0
        %v4896 = vadd.f32 0.0, %v4895
        %4897 = vmatmul.f32.gmra.mxu0 %v4725
        %v4898 = vpop.f32.mrf.mxu0
        %v4899 = vadd.f32 0.0, %v4898
        %4900 = vmatmul.f32.gmra.mxu0 %v4727
        %v4901 = vpop.f32.mrf.mxu0
        %v4902 = vadd.f32 0.0, %v4901
        %4903 = vmatmul.f32.gmra.mxu0 %v4729
        %v4904 = vpop.f32.mrf.mxu0
        %v4905 = vadd.f32 0.0, %v4904
        %4906 = vmatmul.f32.gmra.mxu0 %v4731
        %v4907 = vpop.f32.mrf.mxu0
        %v4908 = vadd.f32 0.0, %v4907
        %4909 = vdwg.mxu0
        %4910 = vmatpush.xpose.msra.mxu0 %v4795
        %4911 = vmatpush.xpose.msra.mxu0 %v4793
        %4912 = vmatpush.xpose.msra.mxu0 %v4791
        %4913 = vmatpush.xpose.msra.mxu0 %v4789
        %4914 = vmatpush.xpose.msra.mxu0 %v4787
        %4915 = vmatpush.xpose.msra.mxu0 %v4785
        %4916 = vmatpush.xpose.msra.mxu0 %v4783
        %4917 = vmatpush.xpose.msra.mxu0 %v4781
        %4918 = vmatpush.xpose.msra.mxu0 %v4779
        %4919 = vmatpush.xpose.msra.mxu0 %v4777
        %4920 = vmatpush.xpose.msra.mxu0 %v4775
        %4921 = vmatpush.xpose.msra.mxu0 %v4773
        %4922 = vmatpush.xpose.msra.mxu0 %v4771
        %4923 = vmatpush.xpose.msra.mxu0 %v4769
        %4924 = vmatpush.xpose.msra.mxu0 %v4767
        %4925 = vmatpush.xpose.msra.mxu0 %v4765
        %4926 = vmatmul.f32.gmra.mxu0 %v4669
        %v4927 = vpop.f32.mrf.mxu0
        %v4928 = vadd.f32 0.0, %v4927
        %4929 = vmatmul.f32.gmra.mxu0 %v4671
        %v4930 = vpop.f32.mrf.mxu0
        %v4931 = vadd.f32 0.0, %v4930
        %4932 = vmatmul.f32.gmra.mxu0 %v4673
        %v4933 = vpop.f32.mrf.mxu0
        %v4934 = vadd.f32 0.0, %v4933
        %4935 = vmatmul.f32.gmra.mxu0 %v4675
        %v4936 = vpop.f32.mrf.mxu0
        %v4937 = vadd.f32 0.0, %v4936
        %4938 = vmatmul.f32.gmra.mxu0 %v4677
        %v4939 = vpop.f32.mrf.mxu0
        %v4940 = vadd.f32 0.0, %v4939
        %4941 = vmatmul.f32.gmra.mxu0 %v4679
        %v4942 = vpop.f32.mrf.mxu0
        %v4943 = vadd.f32 0.0, %v4942
        %4944 = vmatmul.f32.gmra.mxu0 %v4681
        %v4945 = vpop.f32.mrf.mxu0
        %v4946 = vadd.f32 0.0, %v4945
        %4947 = vmatmul.f32.gmra.mxu0 %v4683
        %v4948 = vpop.f32.mrf.mxu0
        %v4949 = vadd.f32 0.0, %v4948
        %4950 = vmatmul.f32.gmra.mxu0 %v4685
        %v4951 = vpop.f32.mrf.mxu0
        %v4952 = vadd.f32 0.0, %v4951
        %4953 = vmatmul.f32.gmra.mxu0 %v4687
        %v4954 = vpop.f32.mrf.mxu0
        %v4955 = vadd.f32 0.0, %v4954
        %4956 = vmatmul.f32.gmra.mxu0 %v4689
        %v4957 = vpop.f32.mrf.mxu0
        %v4958 = vadd.f32 0.0, %v4957
        %4959 = vmatmul.f32.gmra.mxu0 %v4691
        %v4960 = vpop.f32.mrf.mxu0
        %v4961 = vadd.f32 0.0, %v4960
        %4962 = vmatmul.f32.gmra.mxu0 %v4693
        %v4963 = vpop.f32.mrf.mxu0
        %v4964 = vadd.f32 0.0, %v4963
        %4965 = vmatmul.f32.gmra.mxu0 %v4695
        %v4966 = vpop.f32.mrf.mxu0
        %v4967 = vadd.f32 0.0, %v4966
        %4968 = vmatmul.f32.gmra.mxu0 %v4697
        %v4969 = vpop.f32.mrf.mxu0
        %v4970 = vadd.f32 0.0, %v4969
        %4971 = vmatmul.f32.gmra.mxu0 %v4699
        %v4972 = vpop.f32.mrf.mxu0
        %v4973 = vadd.f32 0.0, %v4972
        %4974 = vmatmul.f32.gmra.mxu0 %v4701
        %v4975 = vpop.f32.mrf.mxu0
        %v4976 = vadd.f32 0.0, %v4975
        %4977 = vmatmul.f32.gmra.mxu0 %v4703
        %v4978 = vpop.f32.mrf.mxu0
        %v4979 = vadd.f32 0.0, %v4978
        %4980 = vmatmul.f32.gmra.mxu0 %v4705
        %v4981 = vpop.f32.mrf.mxu0
        %v4982 = vadd.f32 0.0, %v4981
        %4983 = vmatmul.f32.gmra.mxu0 %v4707
        %v4984 = vpop.f32.mrf.mxu0
        %v4985 = vadd.f32 0.0, %v4984
        %4986 = vmatmul.f32.gmra.mxu0 %v4709
        %v4987 = vpop.f32.mrf.mxu0
        %v4988 = vadd.f32 0.0, %v4987
        %4989 = vmatmul.f32.gmra.mxu0 %v4711
        %v4990 = vpop.f32.mrf.mxu0
        %v4991 = vadd.f32 0.0, %v4990
        %4992 = vmatmul.f32.gmra.mxu0 %v4713
        %v4993 = vpop.f32.mrf.mxu0
        %v4994 = vadd.f32 0.0, %v4993
        %4995 = vmatmul.f32.gmra.mxu0 %v4715
        %v4996 = vpop.f32.mrf.mxu0
        %v4997 = vadd.f32 0.0, %v4996
        %4998 = vmatmul.f32.gmra.mxu0 %v4717
        %v4999 = vpop.f32.mrf.mxu0
        %v5000 = vadd.f32 0.0, %v4999
        %5001 = vmatmul.f32.gmra.mxu0 %v4719
        %v5002 = vpop.f32.mrf.mxu0
        %v5003 = vadd.f32 0.0, %v5002
        %5004 = vmatmul.f32.gmra.mxu0 %v4721
        %v5005 = vpop.f32.mrf.mxu0
        %v5006 = vadd.f32 0.0, %v5005
        %5007 = vmatmul.f32.gmra.mxu0 %v4723
        %v5008 = vpop.f32.mrf.mxu0
        %v5009 = vadd.f32 0.0, %v5008
        %5010 = vmatmul.f32.gmra.mxu0 %v4725
        %v5011 = vpop.f32.mrf.mxu0
        %v5012 = vadd.f32 0.0, %v5011
        %5013 = vmatmul.f32.gmra.mxu0 %v4727
        %v5014 = vpop.f32.mrf.mxu0
        %v5015 = vadd.f32 0.0, %v5014
        %5016 = vmatmul.f32.gmra.mxu0 %v4729
        %v5017 = vpop.f32.mrf.mxu0
        %v5018 = vadd.f32 0.0, %v5017
        %5019 = vmatmul.f32.gmra.mxu0 %v4731
        %v5020 = vpop.f32.mrf.mxu0
        %v5021 = vadd.f32 0.0, %v5020
        %5022 = vdwg.mxu0
        %v5023 = vmul.f32 %v4815, 0.35355338
        %v5024 = vmul.f32 %v4928, 0.35355338
        %v5025 = vmul.f32 %v4818, 0.35355338
        %v5026 = vmul.f32 %v4931, 0.35355338
        %v5027 = vmul.f32 %v4821, 0.35355338
        %v5028 = vmul.f32 %v4934, 0.35355338
        %v5029 = vmul.f32 %v4824, 0.35355338
        %v5030 = vmul.f32 %v4937, 0.35355338
        %v5031 = vmul.f32 %v4827, 0.35355338
        %v5032 = vmul.f32 %v4940, 0.35355338
        %v5033 = vmul.f32 %v4830, 0.35355338
        %v5034 = vmul.f32 %v4943, 0.35355338
        %v5035 = vmul.f32 %v4833, 0.35355338
        %v5036 = vmul.f32 %v4946, 0.35355338
        %v5037 = vmul.f32 %v4836, 0.35355338
        %v5038 = vmul.f32 %v4949, 0.35355338
        %v5039 = vmul.f32 %v4839, 0.35355338
        %v5040 = vmul.f32 %v4952, 0.35355338
        %v5041 = vmul.f32 %v4842, 0.35355338
        %v5042 = vmul.f32 %v4955, 0.35355338
        %v5043 = vmul.f32 %v4845, 0.35355338
        %v5044 = vmul.f32 %v4958, 0.35355338
        %v5045 = vmul.f32 %v4848, 0.35355338
        %v5046 = vmul.f32 %v4961, 0.35355338
        %v5047 = vmul.f32 %v4851, 0.35355338
        %v5048 = vmul.f32 %v4964, 0.35355338
        %v5049 = vmul.f32 %v4854, 0.35355338
        %v5050 = vmul.f32 %v4967, 0.35355338
        %v5051 = vmul.f32 %v4857, 0.35355338
        %v5052 = vmul.f32 %v4970, 0.35355338
        %v5053 = vmul.f32 %v4860, 0.35355338
        %v5054 = vmul.f32 %v4973, 0.35355338
        %v5055 = vmul.f32 %v4863, 0.35355338
        %v5056 = vmul.f32 %v4976, 0.35355338
        %v5057 = vmul.f32 %v4866, 0.35355338
        %v5058 = vmul.f32 %v4979, 0.35355338
        %v5059 = vmul.f32 %v4869, 0.35355338
        %v5060 = vmul.f32 %v4982, 0.35355338
        %v5061 = vmul.f32 %v4872, 0.35355338
        %v5062 = vmul.f32 %v4985, 0.35355338
        %v5063 = vmul.f32 %v4875, 0.35355338
        %v5064 = vmul.f32 %v4988, 0.35355338
        %v5065 = vmul.f32 %v4878, 0.35355338
        %v5066 = vmul.f32 %v4991, 0.35355338
        %v5067 = vmul.f32 %v4881, 0.35355338
        %v5068 = vmul.f32 %v4994, 0.35355338
        %v5069 = vmul.f32 %v4884, 0.35355338
        %v5070 = vmul.f32 %v4997, 0.35355338
        %v5071 = vmul.f32 %v4887, 0.35355338
        %v5072 = vmul.f32 %v5000, 0.35355338
        %v5073 = vmul.f32 %v4890, 0.35355338
        %v5074 = vmul.f32 %v5003, 0.35355338
        %v5075 = vmul.f32 %v4893, 0.35355338
        %v5076 = vmul.f32 %v5006, 0.35355338
        %v5077 = vmul.f32 %v4896, 0.35355338
        %v5078 = vmul.f32 %v5009, 0.35355338
        %v5079 = vmul.f32 %v4899, 0.35355338
        %v5080 = vmul.f32 %v5012, 0.35355338
        %v5081 = vmul.f32 %v4902, 0.35355338
        %v5082 = vmul.f32 %v5015, 0.35355338
        %v5083 = vmul.f32 %v4905, 0.35355338
        %v5084 = vmul.f32 %v5018, 0.35355338
        %v5085 = vmul.f32 %v4908, 0.35355338
        %v5086 = vmul.f32 %v5021, 0.35355338
        %v5087 = vmax.f32 %v5023, %v5024
        %5088 = vmax.xlane.f32.xlu0 %v5087
        %v5089 = vpop.xlane.xlu0 %5088
        %v5090 = vmax.f32 %v5025, %v5026
        %5091 = vmax.xlane.f32.xlu0 %v5090
        %v5092 = vpop.xlane.xlu0 %5091
        %v5093 = vmax.f32 %v5027, %v5028
        %5094 = vmax.xlane.f32.xlu0 %v5093
        %v5095 = vpop.xlane.xlu0 %5094
        %v5096 = vmax.f32 %v5029, %v5030
        %5097 = vmax.xlane.f32.xlu0 %v5096
        %v5098 = vpop.xlane.xlu0 %5097
        %v5099 = vmax.f32 %v5031, %v5032
        %5100 = vmax.xlane.f32.xlu0 %v5099
        %v5101 = vpop.xlane.xlu0 %5100
        %v5102 = vmax.f32 %v5033, %v5034
        %5103 = vmax.xlane.f32.xlu0 %v5102
        %v5104 = vpop.xlane.xlu0 %5103
        %v5105 = vmax.f32 %v5035, %v5036
        %5106 = vmax.xlane.f32.xlu0 %v5105
        %v5107 = vpop.xlane.xlu0 %5106
        %v5108 = vmax.f32 %v5037, %v5038
        %5109 = vmax.xlane.f32.xlu0 %v5108
        %v5110 = vpop.xlane.xlu0 %5109
        %v5111 = vmax.f32 %v5039, %v5040
        %5112 = vmax.xlane.f32.xlu0 %v5111
        %v5113 = vpop.xlane.xlu0 %5112
        %v5114 = vmax.f32 %v5041, %v5042
        %5115 = vmax.xlane.f32.xlu0 %v5114
        %v5116 = vpop.xlane.xlu0 %5115
        %v5117 = vmax.f32 %v5043, %v5044
        %5118 = vmax.xlane.f32.xlu0 %v5117
        %v5119 = vpop.xlane.xlu0 %5118
        %v5120 = vmax.f32 %v5045, %v5046
        %5121 = vmax.xlane.f32.xlu0 %v5120
        %v5122 = vpop.xlane.xlu0 %5121
        %v5123 = vmax.f32 %v5047, %v5048
        %5124 = vmax.xlane.f32.xlu0 %v5123
        %v5125 = vpop.xlane.xlu0 %5124
        %v5126 = vmax.f32 %v5049, %v5050
        %5127 = vmax.xlane.f32.xlu0 %v5126
        %v5128 = vpop.xlane.xlu0 %5127
        %v5129 = vmax.f32 %v5051, %v5052
        %5130 = vmax.xlane.f32.xlu0 %v5129
        %v5131 = vpop.xlane.xlu0 %5130
        %v5132 = vmax.f32 %v5053, %v5054
        %5133 = vmax.xlane.f32.xlu0 %v5132
        %v5134 = vpop.xlane.xlu0 %5133
        %v5135 = vmax.f32 %v5055, %v5056
        %5136 = vmax.xlane.f32.xlu0 %v5135
        %v5137 = vpop.xlane.xlu0 %5136
        %v5138 = vmax.f32 %v5057, %v5058
        %5139 = vmax.xlane.f32.xlu0 %v5138
        %v5140 = vpop.xlane.xlu0 %5139
        %v5141 = vmax.f32 %v5059, %v5060
        %5142 = vmax.xlane.f32.xlu0 %v5141
        %v5143 = vpop.xlane.xlu0 %5142
        %v5144 = vmax.f32 %v5061, %v5062
        %5145 = vmax.xlane.f32.xlu0 %v5144
        %v5146 = vpop.xlane.xlu0 %5145
        %v5147 = vmax.f32 %v5063, %v5064
        %5148 = vmax.xlane.f32.xlu0 %v5147
        %v5149 = vpop.xlane.xlu0 %5148
        %v5150 = vmax.f32 %v5065, %v5066
        %5151 = vmax.xlane.f32.xlu0 %v5150
        %v5152 = vpop.xlane.xlu0 %5151
        %v5153 = vmax.f32 %v5067, %v5068
        %5154 = vmax.xlane.f32.xlu0 %v5153
        %v5155 = vpop.xlane.xlu0 %5154
        %v5156 = vmax.f32 %v5069, %v5070
        %5157 = vmax.xlane.f32.xlu0 %v5156
        %v5158 = vpop.xlane.xlu0 %5157
        %v5159 = vmax.f32 %v5071, %v5072
        %5160 = vmax.xlane.f32.xlu0 %v5159
        %v5161 = vpop.xlane.xlu0 %5160
        %v5162 = vmax.f32 %v5073, %v5074
        %5163 = vmax.xlane.f32.xlu0 %v5162
        %v5164 = vpop.xlane.xlu0 %5163
        %v5165 = vmax.f32 %v5075, %v5076
        %5166 = vmax.xlane.f32.xlu0 %v5165
        %v5167 = vpop.xlane.xlu0 %5166
        %v5168 = vmax.f32 %v5077, %v5078
        %5169 = vmax.xlane.f32.xlu0 %v5168
        %v5170 = vpop.xlane.xlu0 %5169
        %v5171 = vmax.f32 %v5079, %v5080
        %5172 = vmax.xlane.f32.xlu0 %v5171
        %v5173 = vpop.xlane.xlu0 %5172
        %v5174 = vmax.f32 %v5081, %v5082
        %5175 = vmax.xlane.f32.xlu0 %v5174
        %v5176 = vpop.xlane.xlu0 %5175
        %v5177 = vmax.f32 %v5083, %v5084
        %5178 = vmax.xlane.f32.xlu0 %v5177
        %v5179 = vpop.xlane.xlu0 %5178
        %v5180 = vmax.f32 %v5085, %v5086
        %5181 = vmax.xlane.f32.xlu0 %v5180
        %v5182 = vpop.xlane.xlu0 %5181
        %v5183 = vsub.f32 %v5023, %v5089
        %v5184 = vsub.f32 %v5024, %v5089
        %v5185 = vsub.f32 %v5025, %v5092
        %v5186 = vsub.f32 %v5026, %v5092
        %v5187 = vsub.f32 %v5027, %v5095
        %v5188 = vsub.f32 %v5028, %v5095
        %v5189 = vsub.f32 %v5029, %v5098
        %v5190 = vsub.f32 %v5030, %v5098
        %v5191 = vsub.f32 %v5031, %v5101
        %v5192 = vsub.f32 %v5032, %v5101
        %v5193 = vsub.f32 %v5033, %v5104
        %v5194 = vsub.f32 %v5034, %v5104
        %v5195 = vsub.f32 %v5035, %v5107
        %v5196 = vsub.f32 %v5036, %v5107
        %v5197 = vsub.f32 %v5037, %v5110
        %v5198 = vsub.f32 %v5038, %v5110
        %v5199 = vsub.f32 %v5039, %v5113
        %v5200 = vsub.f32 %v5040, %v5113
        %v5201 = vsub.f32 %v5041, %v5116
        %v5202 = vsub.f32 %v5042, %v5116
        %v5203 = vsub.f32 %v5043, %v5119
        %v5204 = vsub.f32 %v5044, %v5119
        %v5205 = vsub.f32 %v5045, %v5122
        %v5206 = vsub.f32 %v5046, %v5122
        %v5207 = vsub.f32 %v5047, %v5125
        %v5208 = vsub.f32 %v5048, %v5125
        %v5209 = vsub.f32 %v5049, %v5128
        %v5210 = vsub.f32 %v5050, %v5128
        %v5211 = vsub.f32 %v5051, %v5131
        %v5212 = vsub.f32 %v5052, %v5131
        %v5213 = vsub.f32 %v5053, %v5134
        %v5214 = vsub.f32 %v5054, %v5134
        %v5215 = vsub.f32 %v5055, %v5137
        %v5216 = vsub.f32 %v5056, %v5137
        %v5217 = vsub.f32 %v5057, %v5140
        %v5218 = vsub.f32 %v5058, %v5140
        %v5219 = vsub.f32 %v5059, %v5143
        %v5220 = vsub.f32 %v5060, %v5143
        %v5221 = vsub.f32 %v5061, %v5146
        %v5222 = vsub.f32 %v5062, %v5146
        %v5223 = vsub.f32 %v5063, %v5149
        %v5224 = vsub.f32 %v5064, %v5149
        %v5225 = vsub.f32 %v5065, %v5152
        %v5226 = vsub.f32 %v5066, %v5152
        %v5227 = vsub.f32 %v5067, %v5155
        %v5228 = vsub.f32 %v5068, %v5155
        %v5229 = vsub.f32 %v5069, %v5158
        %v5230 = vsub.f32 %v5070, %v5158
        %v5231 = vsub.f32 %v5071, %v5161
        %v5232 = vsub.f32 %v5072, %v5161
        %v5233 = vsub.f32 %v5073, %v5164
        %v5234 = vsub.f32 %v5074, %v5164
        %v5235 = vsub.f32 %v5075, %v5167
        %v5236 = vsub.f32 %v5076, %v5167
        %v5237 = vsub.f32 %v5077, %v5170
        %v5238 = vsub.f32 %v5078, %v5170
        %v5239 = vsub.f32 %v5079, %v5173
        %v5240 = vsub.f32 %v5080, %v5173
        %v5241 = vsub.f32 %v5081, %v5176
        %v5242 = vsub.f32 %v5082, %v5176
        %v5243 = vsub.f32 %v5083, %v5179
        %v5244 = vsub.f32 %v5084, %v5179
        %v5245 = vsub.f32 %v5085, %v5182
        %v5246 = vsub.f32 %v5086, %v5182
        %v5247 = vmul.f32 %v5183, 1.442695
        %v5248 = vpow.pop %v5247
        %v5249 = vmul.f32 %v5184, 1.442695
        %v5250 = vpow.pop %v5249
        %v5251 = vmul.f32 %v5185, 1.442695
        %v5252 = vpow.pop %v5251
        %v5253 = vmul.f32 %v5186, 1.442695
        %v5254 = vpow.pop %v5253
        %v5255 = vmul.f32 %v5187, 1.442695
        %v5256 = vpow.pop %v5255
        %v5257 = vmul.f32 %v5188, 1.442695
        %v5258 = vpow.pop %v5257
        %v5259 = vmul.f32 %v5189, 1.442695
        %v5260 = vpow.pop %v5259
        %v5261 = vmul.f32 %v5190, 1.442695
        %v5262 = vpow.pop %v5261
        %v5263 = vmul.f32 %v5191, 1.442695
        %v5264 = vpow.pop %v5263
        %v5265 = vmul.f32 %v5192, 1.442695
        %v5266 = vpow.pop %v5265
        %v5267 = vmul.f32 %v5193, 1.442695
        %v5268 = vpow.pop %v5267
        %v5269 = vmul.f32 %v5194, 1.442695
        %v5270 = vpow.pop %v5269
        %v5271 = vmul.f32 %v5195, 1.442695
        %v5272 = vpow.pop %v5271
        %v5273 = vmul.f32 %v5196, 1.442695
        %v5274 = vpow.pop %v5273
        %v5275 = vmul.f32 %v5197, 1.442695
        %v5276 = vpow.pop %v5275
        %v5277 = vmul.f32 %v5198, 1.442695
        %v5278 = vpow.pop %v5277
        %v5279 = vmul.f32 %v5199, 1.442695
        %v5280 = vpow.pop %v5279
        %v5281 = vmul.f32 %v5200, 1.442695
        %v5282 = vpow.pop %v5281
        %v5283 = vmul.f32 %v5201, 1.442695
        %v5284 = vpow.pop %v5283
        %v5285 = vmul.f32 %v5202, 1.442695
        %v5286 = vpow.pop %v5285
        %v5287 = vmul.f32 %v5203, 1.442695
        %v5288 = vpow.pop %v5287
        %v5289 = vmul.f32 %v5204, 1.442695
        %v5290 = vpow.pop %v5289
        %v5291 = vmul.f32 %v5205, 1.442695
        %v5292 = vpow.pop %v5291
        %v5293 = vmul.f32 %v5206, 1.442695
        %v5294 = vpow.pop %v5293
        %v5295 = vmul.f32 %v5207, 1.442695
        %v5296 = vpow.pop %v5295
        %v5297 = vmul.f32 %v5208, 1.442695
        %v5298 = vpow.pop %v5297
        %v5299 = vmul.f32 %v5209, 1.442695
        %v5300 = vpow.pop %v5299
        %v5301 = vmul.f32 %v5210, 1.442695
        %v5302 = vpow.pop %v5301
        %v5303 = vmul.f32 %v5211, 1.442695
        %v5304 = vpow.pop %v5303
        %v5305 = vmul.f32 %v5212, 1.442695
        %v5306 = vpow.pop %v5305
        %v5307 = vmul.f32 %v5213, 1.442695
        %v5308 = vpow.pop %v5307
        %v5309 = vmul.f32 %v5214, 1.442695
        %v5310 = vpow.pop %v5309
        %v5311 = vmul.f32 %v5215, 1.442695
        %v5312 = vpow.pop %v5311
        %v5313 = vmul.f32 %v5216, 1.442695
        %v5314 = vpow.pop %v5313
        %v5315 = vmul.f32 %v5217, 1.442695
        %v5316 = vpow.pop %v5315
        %v5317 = vmul.f32 %v5218, 1.442695
        %v5318 = vpow.pop %v5317
        %v5319 = vmul.f32 %v5219, 1.442695
        %v5320 = vpow.pop %v5319
        %v5321 = vmul.f32 %v5220, 1.442695
        %v5322 = vpow.pop %v5321
        %v5323 = vmul.f32 %v5221, 1.442695
        %v5324 = vpow.pop %v5323
        %v5325 = vmul.f32 %v5222, 1.442695
        %v5326 = vpow.pop %v5325
        %v5327 = vmul.f32 %v5223, 1.442695
        %v5328 = vpow.pop %v5327
        %v5329 = vmul.f32 %v5224, 1.442695
        %v5330 = vpow.pop %v5329
        %v5331 = vmul.f32 %v5225, 1.442695
        %v5332 = vpow.pop %v5331
        %v5333 = vmul.f32 %v5226, 1.442695
        %v5334 = vpow.pop %v5333
        %v5335 = vmul.f32 %v5227, 1.442695
        %v5336 = vpow.pop %v5335
        %v5337 = vmul.f32 %v5228, 1.442695
        %v5338 = vpow.pop %v5337
        %v5339 = vmul.f32 %v5229, 1.442695
        %v5340 = vpow.pop %v5339
        %v5341 = vmul.f32 %v5230, 1.442695
        %v5342 = vpow.pop %v5341
        %v5343 = vmul.f32 %v5231, 1.442695
        %v5344 = vpow.pop %v5343
        %v5345 = vmul.f32 %v5232, 1.442695
        %v5346 = vpow.pop %v5345
        %v5347 = vmul.f32 %v5233, 1.442695
        %v5348 = vpow.pop %v5347
        %v5349 = vmul.f32 %v5234, 1.442695
        %v5350 = vpow.pop %v5349
        %v5351 = vmul.f32 %v5235, 1.442695
        %v5352 = vpow.pop %v5351
        %v5353 = vmul.f32 %v5236, 1.442695
        %v5354 = vpow.pop %v5353
        %v5355 = vmul.f32 %v5237, 1.442695
        %v5356 = vpow.pop %v5355
        %v5357 = vmul.f32 %v5238, 1.442695
        %v5358 = vpow.pop %v5357
        %v5359 = vmul.f32 %v5239, 1.442695
        %v5360 = vpow.pop %v5359
        %v5361 = vmul.f32 %v5240, 1.442695
        %v5362 = vpow.pop %v5361
        %v5363 = vmul.f32 %v5241, 1.442695
        %v5364 = vpow.pop %v5363
        %v5365 = vmul.f32 %v5242, 1.442695
        %v5366 = vpow.pop %v5365
        %v5367 = vmul.f32 %v5243, 1.442695
        %v5368 = vpow.pop %v5367
        %v5369 = vmul.f32 %v5244, 1.442695
        %v5370 = vpow.pop %v5369
        %v5371 = vmul.f32 %v5245, 1.442695
        %v5372 = vpow.pop %v5371
        %v5373 = vmul.f32 %v5246, 1.442695
        %v5374 = vpow.pop %v5373
        %v5375 = vadd.f32 %v5248, %v5250
        %5376 = vadd.xlane.f32.xlu0 %v5375
        %v5377 = vpop.xlane.xlu0 %5376
        %v5378 = vadd.f32 %v5252, %v5254
        %5379 = vadd.xlane.f32.xlu0 %v5378
        %v5380 = vpop.xlane.xlu0 %5379
        %v5381 = vadd.f32 %v5256, %v5258
        %5382 = vadd.xlane.f32.xlu0 %v5381
        %v5383 = vpop.xlane.xlu0 %5382
        %v5384 = vadd.f32 %v5260, %v5262
        %5385 = vadd.xlane.f32.xlu0 %v5384
        %v5386 = vpop.xlane.xlu0 %5385
        %v5387 = vadd.f32 %v5264, %v5266
        %5388 = vadd.xlane.f32.xlu0 %v5387
        %v5389 = vpop.xlane.xlu0 %5388
        %v5390 = vadd.f32 %v5268, %v5270
        %5391 = vadd.xlane.f32.xlu0 %v5390
        %v5392 = vpop.xlane.xlu0 %5391
        %v5393 = vadd.f32 %v5272, %v5274
        %5394 = vadd.xlane.f32.xlu0 %v5393
        %v5395 = vpop.xlane.xlu0 %5394
        %v5396 = vadd.f32 %v5276, %v5278
        %5397 = vadd.xlane.f32.xlu0 %v5396
        %v5398 = vpop.xlane.xlu0 %5397
        %v5399 = vadd.f32 %v5280, %v5282
        %5400 = vadd.xlane.f32.xlu0 %v5399
        %v5401 = vpop.xlane.xlu0 %5400
        %v5402 = vadd.f32 %v5284, %v5286
        %5403 = vadd.xlane.f32.xlu0 %v5402
        %v5404 = vpop.xlane.xlu0 %5403
        %v5405 = vadd.f32 %v5288, %v5290
        %5406 = vadd.xlane.f32.xlu0 %v5405
        %v5407 = vpop.xlane.xlu0 %5406
        %v5408 = vadd.f32 %v5292, %v5294
        %5409 = vadd.xlane.f32.xlu0 %v5408
        %v5410 = vpop.xlane.xlu0 %5409
        %v5411 = vadd.f32 %v5296, %v5298
        %5412 = vadd.xlane.f32.xlu0 %v5411
        %v5413 = vpop.xlane.xlu0 %5412
        %v5414 = vadd.f32 %v5300, %v5302
        %5415 = vadd.xlane.f32.xlu0 %v5414
        %v5416 = vpop.xlane.xlu0 %5415
        %v5417 = vadd.f32 %v5304, %v5306
        %5418 = vadd.xlane.f32.xlu0 %v5417
        %v5419 = vpop.xlane.xlu0 %5418
        %v5420 = vadd.f32 %v5308, %v5310
        %5421 = vadd.xlane.f32.xlu0 %v5420
        %v5422 = vpop.xlane.xlu0 %5421
        %v5423 = vadd.f32 %v5312, %v5314
        %5424 = vadd.xlane.f32.xlu0 %v5423
        %v5425 = vpop.xlane.xlu0 %5424
        %v5426 = vadd.f32 %v5316, %v5318
        %5427 = vadd.xlane.f32.xlu0 %v5426
        %v5428 = vpop.xlane.xlu0 %5427
        %v5429 = vadd.f32 %v5320, %v5322
        %5430 = vadd.xlane.f32.xlu0 %v5429
        %v5431 = vpop.xlane.xlu0 %5430
        %v5432 = vadd.f32 %v5324, %v5326
        %5433 = vadd.xlane.f32.xlu0 %v5432
        %v5434 = vpop.xlane.xlu0 %5433
        %v5435 = vadd.f32 %v5328, %v5330
        %5436 = vadd.xlane.f32.xlu0 %v5435
        %v5437 = vpop.xlane.xlu0 %5436
        %v5438 = vadd.f32 %v5332, %v5334
        %5439 = vadd.xlane.f32.xlu0 %v5438
        %v5440 = vpop.xlane.xlu0 %5439
        %v5441 = vadd.f32 %v5336, %v5338
        %5442 = vadd.xlane.f32.xlu0 %v5441
        %v5443 = vpop.xlane.xlu0 %5442
        %v5444 = vadd.f32 %v5340, %v5342
        %5445 = vadd.xlane.f32.xlu0 %v5444
        %v5446 = vpop.xlane.xlu0 %5445
        %v5447 = vadd.f32 %v5344, %v5346
        %5448 = vadd.xlane.f32.xlu0 %v5447
        %v5449 = vpop.xlane.xlu0 %5448
        %v5450 = vadd.f32 %v5348, %v5350
        %5451 = vadd.xlane.f32.xlu0 %v5450
        %v5452 = vpop.xlane.xlu0 %5451
        %v5453 = vadd.f32 %v5352, %v5354
        %5454 = vadd.xlane.f32.xlu0 %v5453
        %v5455 = vpop.xlane.xlu0 %5454
        %v5456 = vadd.f32 %v5356, %v5358
        %5457 = vadd.xlane.f32.xlu0 %v5456
        %v5458 = vpop.xlane.xlu0 %5457
        %v5459 = vadd.f32 %v5360, %v5362
        %5460 = vadd.xlane.f32.xlu0 %v5459
        %v5461 = vpop.xlane.xlu0 %5460
        %v5462 = vadd.f32 %v5364, %v5366
        %5463 = vadd.xlane.f32.xlu0 %v5462
        %v5464 = vpop.xlane.xlu0 %5463
        %v5465 = vadd.f32 %v5368, %v5370
        %5466 = vadd.xlane.f32.xlu0 %v5465
        %v5467 = vpop.xlane.xlu0 %5466
        %v5468 = vadd.f32 %v5372, %v5374
        %5469 = vadd.xlane.f32.xlu0 %v5468
        %v5470 = vpop.xlane.xlu0 %5469
        %v5471 = vrcp.pop %v5377
        %v5472 = vmul.f32 %v5377, %v5471
        %v5473 = vsub.f32 1.0, %v5472
        %v5474 = vmul.f32 %v5471, %v5473
        %v5475 = vadd.f32 %v5471, %v5474
        %vm5476 = vweird.f32 %v5377
        %vm5477 = vweird.f32 %v5471
        %vm5478 = vmor %vm5476, %vm5477
        %v5479 = vsel %vm5478, %v5471, %v5475
        %v5480 = vand.u32 2147483647, %v5377
        %vm5481 = vcmp.eq.f32.partialorder %v5480, 8.507059e+37
        %v5482 = vand.u32 %v5377, 2147483648
        %v5483 = vor.u32 1.1754944e-38, %v5482
        %v5484 = vsel %vm5481, %v5483, %v5479
        %v5485 = vmul.f32 %v5248, %v5484
        %v5486 = vmul.f32 %v5250, %v5484
        %v5487 = vrcp.pop %v5380
        %v5488 = vmul.f32 %v5380, %v5487
        %v5489 = vsub.f32 1.0, %v5488
        %v5490 = vmul.f32 %v5487, %v5489
        %v5491 = vadd.f32 %v5487, %v5490
        %vm5492 = vweird.f32 %v5380
        %vm5493 = vweird.f32 %v5487
        %vm5494 = vmor %vm5492, %vm5493
        %v5495 = vsel %vm5494, %v5487, %v5491
        %v5496 = vand.u32 2147483647, %v5380
        %vm5497 = vcmp.eq.f32.partialorder %v5496, 8.507059e+37
        %v5498 = vand.u32 %v5380, 2147483648
        %v5499 = vor.u32 1.1754944e-38, %v5498
        %v5500 = vsel %vm5497, %v5499, %v5495
        %v5501 = vmul.f32 %v5252, %v5500
        %v5502 = vmul.f32 %v5254, %v5500
        %v5503 = vrcp.pop %v5383
        %v5504 = vmul.f32 %v5383, %v5503
        %v5505 = vsub.f32 1.0, %v5504
        %v5506 = vmul.f32 %v5503, %v5505
        %v5507 = vadd.f32 %v5503, %v5506
        %vm5508 = vweird.f32 %v5383
        %vm5509 = vweird.f32 %v5503
        %vm5510 = vmor %vm5508, %vm5509
        %v5511 = vsel %vm5510, %v5503, %v5507
        %v5512 = vand.u32 2147483647, %v5383
        %vm5513 = vcmp.eq.f32.partialorder %v5512, 8.507059e+37
        %v5514 = vand.u32 %v5383, 2147483648
        %v5515 = vor.u32 1.1754944e-38, %v5514
        %v5516 = vsel %vm5513, %v5515, %v5511
        %v5517 = vmul.f32 %v5256, %v5516
        %v5518 = vmul.f32 %v5258, %v5516
        %v5519 = vrcp.pop %v5386
        %v5520 = vmul.f32 %v5386, %v5519
        %v5521 = vsub.f32 1.0, %v5520
        %v5522 = vmul.f32 %v5519, %v5521
        %v5523 = vadd.f32 %v5519, %v5522
        %vm5524 = vweird.f32 %v5386
        %vm5525 = vweird.f32 %v5519
        %vm5526 = vmor %vm5524, %vm5525
        %v5527 = vsel %vm5526, %v5519, %v5523
        %v5528 = vand.u32 2147483647, %v5386
        %vm5529 = vcmp.eq.f32.partialorder %v5528, 8.507059e+37
        %v5530 = vand.u32 %v5386, 2147483648
        %v5531 = vor.u32 1.1754944e-38, %v5530
        %v5532 = vsel %vm5529, %v5531, %v5527
        %v5533 = vmul.f32 %v5260, %v5532
        %v5534 = vmul.f32 %v5262, %v5532
        %v5535 = vrcp.pop %v5389
        %v5536 = vmul.f32 %v5389, %v5535
        %v5537 = vsub.f32 1.0, %v5536
        %v5538 = vmul.f32 %v5535, %v5537
        %v5539 = vadd.f32 %v5535, %v5538
        %vm5540 = vweird.f32 %v5389
        %vm5541 = vweird.f32 %v5535
        %vm5542 = vmor %vm5540, %vm5541
        %v5543 = vsel %vm5542, %v5535, %v5539
        %v5544 = vand.u32 2147483647, %v5389
        %vm5545 = vcmp.eq.f32.partialorder %v5544, 8.507059e+37
        %v5546 = vand.u32 %v5389, 2147483648
        %v5547 = vor.u32 1.1754944e-38, %v5546
        %v5548 = vsel %vm5545, %v5547, %v5543
        %v5549 = vmul.f32 %v5264, %v5548
        %v5550 = vmul.f32 %v5266, %v5548
        %v5551 = vrcp.pop %v5392
        %v5552 = vmul.f32 %v5392, %v5551
        %v5553 = vsub.f32 1.0, %v5552
        %v5554 = vmul.f32 %v5551, %v5553
        %v5555 = vadd.f32 %v5551, %v5554
        %vm5556 = vweird.f32 %v5392
        %vm5557 = vweird.f32 %v5551
        %vm5558 = vmor %vm5556, %vm5557
        %v5559 = vsel %vm5558, %v5551, %v5555
        %v5560 = vand.u32 2147483647, %v5392
        %vm5561 = vcmp.eq.f32.partialorder %v5560, 8.507059e+37
        %v5562 = vand.u32 %v5392, 2147483648
        %v5563 = vor.u32 1.1754944e-38, %v5562
        %v5564 = vsel %vm5561, %v5563, %v5559
        %v5565 = vmul.f32 %v5268, %v5564
        %v5566 = vmul.f32 %v5270, %v5564
        %v5567 = vrcp.pop %v5395
        %v5568 = vmul.f32 %v5395, %v5567
        %v5569 = vsub.f32 1.0, %v5568
        %v5570 = vmul.f32 %v5567, %v5569
        %v5571 = vadd.f32 %v5567, %v5570
        %vm5572 = vweird.f32 %v5395
        %vm5573 = vweird.f32 %v5567
        %vm5574 = vmor %vm5572, %vm5573
        %v5575 = vsel %vm5574, %v5567, %v5571
        %v5576 = vand.u32 2147483647, %v5395
        %vm5577 = vcmp.eq.f32.partialorder %v5576, 8.507059e+37
        %v5578 = vand.u32 %v5395, 2147483648
        %v5579 = vor.u32 1.1754944e-38, %v5578
        %v5580 = vsel %vm5577, %v5579, %v5575
        %v5581 = vmul.f32 %v5272, %v5580
        %v5582 = vmul.f32 %v5274, %v5580
        %v5583 = vrcp.pop %v5398
        %v5584 = vmul.f32 %v5398, %v5583
        %v5585 = vsub.f32 1.0, %v5584
        %v5586 = vmul.f32 %v5583, %v5585
        %v5587 = vadd.f32 %v5583, %v5586
        %vm5588 = vweird.f32 %v5398
        %vm5589 = vweird.f32 %v5583
        %vm5590 = vmor %vm5588, %vm5589
        %v5591 = vsel %vm5590, %v5583, %v5587
        %v5592 = vand.u32 2147483647, %v5398
        %vm5593 = vcmp.eq.f32.partialorder %v5592, 8.507059e+37
        %v5594 = vand.u32 %v5398, 2147483648
        %v5595 = vor.u32 1.1754944e-38, %v5594
        %v5596 = vsel %vm5593, %v5595, %v5591
        %v5597 = vmul.f32 %v5276, %v5596
        %v5598 = vmul.f32 %v5278, %v5596
        %v5599 = vrcp.pop %v5401
        %v5600 = vmul.f32 %v5401, %v5599
        %v5601 = vsub.f32 1.0, %v5600
        %v5602 = vmul.f32 %v5599, %v5601
        %v5603 = vadd.f32 %v5599, %v5602
        %vm5604 = vweird.f32 %v5401
        %vm5605 = vweird.f32 %v5599
        %vm5606 = vmor %vm5604, %vm5605
        %v5607 = vsel %vm5606, %v5599, %v5603
        %v5608 = vand.u32 2147483647, %v5401
        %vm5609 = vcmp.eq.f32.partialorder %v5608, 8.507059e+37
        %v5610 = vand.u32 %v5401, 2147483648
        %v5611 = vor.u32 1.1754944e-38, %v5610
        %v5612 = vsel %vm5609, %v5611, %v5607
        %v5613 = vmul.f32 %v5280, %v5612
        %v5614 = vmul.f32 %v5282, %v5612
        %v5615 = vrcp.pop %v5404
        %v5616 = vmul.f32 %v5404, %v5615
        %v5617 = vsub.f32 1.0, %v5616
        %v5618 = vmul.f32 %v5615, %v5617
        %v5619 = vadd.f32 %v5615, %v5618
        %vm5620 = vweird.f32 %v5404
        %vm5621 = vweird.f32 %v5615
        %vm5622 = vmor %vm5620, %vm5621
        %v5623 = vsel %vm5622, %v5615, %v5619
        %v5624 = vand.u32 2147483647, %v5404
        %vm5625 = vcmp.eq.f32.partialorder %v5624, 8.507059e+37
        %v5626 = vand.u32 %v5404, 2147483648
        %v5627 = vor.u32 1.1754944e-38, %v5626
        %v5628 = vsel %vm5625, %v5627, %v5623
        %v5629 = vmul.f32 %v5284, %v5628
        %v5630 = vmul.f32 %v5286, %v5628
        %v5631 = vrcp.pop %v5407
        %v5632 = vmul.f32 %v5407, %v5631
        %v5633 = vsub.f32 1.0, %v5632
        %v5634 = vmul.f32 %v5631, %v5633
        %v5635 = vadd.f32 %v5631, %v5634
        %vm5636 = vweird.f32 %v5407
        %vm5637 = vweird.f32 %v5631
        %vm5638 = vmor %vm5636, %vm5637
        %v5639 = vsel %vm5638, %v5631, %v5635
        %v5640 = vand.u32 2147483647, %v5407
        %vm5641 = vcmp.eq.f32.partialorder %v5640, 8.507059e+37
        %v5642 = vand.u32 %v5407, 2147483648
        %v5643 = vor.u32 1.1754944e-38, %v5642
        %v5644 = vsel %vm5641, %v5643, %v5639
        %v5645 = vmul.f32 %v5288, %v5644
        %v5646 = vmul.f32 %v5290, %v5644
        %v5647 = vrcp.pop %v5410
        %v5648 = vmul.f32 %v5410, %v5647
        %v5649 = vsub.f32 1.0, %v5648
        %v5650 = vmul.f32 %v5647, %v5649
        %v5651 = vadd.f32 %v5647, %v5650
        %vm5652 = vweird.f32 %v5410
        %vm5653 = vweird.f32 %v5647
        %vm5654 = vmor %vm5652, %vm5653
        %v5655 = vsel %vm5654, %v5647, %v5651
        %v5656 = vand.u32 2147483647, %v5410
        %vm5657 = vcmp.eq.f32.partialorder %v5656, 8.507059e+37
        %v5658 = vand.u32 %v5410, 2147483648
        %v5659 = vor.u32 1.1754944e-38, %v5658
        %v5660 = vsel %vm5657, %v5659, %v5655
        %v5661 = vmul.f32 %v5292, %v5660
        %v5662 = vmul.f32 %v5294, %v5660
        %v5663 = vrcp.pop %v5413
        %v5664 = vmul.f32 %v5413, %v5663
        %v5665 = vsub.f32 1.0, %v5664
        %v5666 = vmul.f32 %v5663, %v5665
        %v5667 = vadd.f32 %v5663, %v5666
        %vm5668 = vweird.f32 %v5413
        %vm5669 = vweird.f32 %v5663
        %vm5670 = vmor %vm5668, %vm5669
        %v5671 = vsel %vm5670, %v5663, %v5667
        %v5672 = vand.u32 2147483647, %v5413
        %vm5673 = vcmp.eq.f32.partialorder %v5672, 8.507059e+37
        %v5674 = vand.u32 %v5413, 2147483648
        %v5675 = vor.u32 1.1754944e-38, %v5674
        %v5676 = vsel %vm5673, %v5675, %v5671
        %v5677 = vmul.f32 %v5296, %v5676
        %v5678 = vmul.f32 %v5298, %v5676
        %v5679 = vrcp.pop %v5416
        %v5680 = vmul.f32 %v5416, %v5679
        %v5681 = vsub.f32 1.0, %v5680
        %v5682 = vmul.f32 %v5679, %v5681
        %v5683 = vadd.f32 %v5679, %v5682
        %vm5684 = vweird.f32 %v5416
        %vm5685 = vweird.f32 %v5679
        %vm5686 = vmor %vm5684, %vm5685
        %v5687 = vsel %vm5686, %v5679, %v5683
        %v5688 = vand.u32 2147483647, %v5416
        %vm5689 = vcmp.eq.f32.partialorder %v5688, 8.507059e+37
        %v5690 = vand.u32 %v5416, 2147483648
        %v5691 = vor.u32 1.1754944e-38, %v5690
        %v5692 = vsel %vm5689, %v5691, %v5687
        %v5693 = vmul.f32 %v5300, %v5692
        %v5694 = vmul.f32 %v5302, %v5692
        %v5695 = vrcp.pop %v5419
        %v5696 = vmul.f32 %v5419, %v5695
        %v5697 = vsub.f32 1.0, %v5696
        %v5698 = vmul.f32 %v5695, %v5697
        %v5699 = vadd.f32 %v5695, %v5698
        %vm5700 = vweird.f32 %v5419
        %vm5701 = vweird.f32 %v5695
        %vm5702 = vmor %vm5700, %vm5701
        %v5703 = vsel %vm5702, %v5695, %v5699
        %v5704 = vand.u32 2147483647, %v5419
        %vm5705 = vcmp.eq.f32.partialorder %v5704, 8.507059e+37
        %v5706 = vand.u32 %v5419, 2147483648
        %v5707 = vor.u32 1.1754944e-38, %v5706
        %v5708 = vsel %vm5705, %v5707, %v5703
        %v5709 = vmul.f32 %v5304, %v5708
        %v5710 = vmul.f32 %v5306, %v5708
        %v5711 = vrcp.pop %v5422
        %v5712 = vmul.f32 %v5422, %v5711
        %v5713 = vsub.f32 1.0, %v5712
        %v5714 = vmul.f32 %v5711, %v5713
        %v5715 = vadd.f32 %v5711, %v5714
        %vm5716 = vweird.f32 %v5422
        %vm5717 = vweird.f32 %v5711
        %vm5718 = vmor %vm5716, %vm5717
        %v5719 = vsel %vm5718, %v5711, %v5715
        %v5720 = vand.u32 2147483647, %v5422
        %vm5721 = vcmp.eq.f32.partialorder %v5720, 8.507059e+37
        %v5722 = vand.u32 %v5422, 2147483648
        %v5723 = vor.u32 1.1754944e-38, %v5722
        %v5724 = vsel %vm5721, %v5723, %v5719
        %v5725 = vmul.f32 %v5308, %v5724
        %v5726 = vmul.f32 %v5310, %v5724
        %v5727 = vrcp.pop %v5425
        %v5728 = vmul.f32 %v5425, %v5727
        %v5729 = vsub.f32 1.0, %v5728
        %v5730 = vmul.f32 %v5727, %v5729
        %v5731 = vadd.f32 %v5727, %v5730
        %vm5732 = vweird.f32 %v5425
        %vm5733 = vweird.f32 %v5727
        %vm5734 = vmor %vm5732, %vm5733
        %v5735 = vsel %vm5734, %v5727, %v5731
        %v5736 = vand.u32 2147483647, %v5425
        %vm5737 = vcmp.eq.f32.partialorder %v5736, 8.507059e+37
        %v5738 = vand.u32 %v5425, 2147483648
        %v5739 = vor.u32 1.1754944e-38, %v5738
        %v5740 = vsel %vm5737, %v5739, %v5735
        %v5741 = vmul.f32 %v5312, %v5740
        %v5742 = vmul.f32 %v5314, %v5740
        %v5743 = vrcp.pop %v5428
        %v5744 = vmul.f32 %v5428, %v5743
        %v5745 = vsub.f32 1.0, %v5744
        %v5746 = vmul.f32 %v5743, %v5745
        %v5747 = vadd.f32 %v5743, %v5746
        %vm5748 = vweird.f32 %v5428
        %vm5749 = vweird.f32 %v5743
        %vm5750 = vmor %vm5748, %vm5749
        %v5751 = vsel %vm5750, %v5743, %v5747
        %v5752 = vand.u32 2147483647, %v5428
        %vm5753 = vcmp.eq.f32.partialorder %v5752, 8.507059e+37
        %v5754 = vand.u32 %v5428, 2147483648
        %v5755 = vor.u32 1.1754944e-38, %v5754
        %v5756 = vsel %vm5753, %v5755, %v5751
        %v5757 = vmul.f32 %v5316, %v5756
        %v5758 = vmul.f32 %v5318, %v5756
        %v5759 = vrcp.pop %v5431
        %v5760 = vmul.f32 %v5431, %v5759
        %v5761 = vsub.f32 1.0, %v5760
        %v5762 = vmul.f32 %v5759, %v5761
        %v5763 = vadd.f32 %v5759, %v5762
        %vm5764 = vweird.f32 %v5431
        %vm5765 = vweird.f32 %v5759
        %vm5766 = vmor %vm5764, %vm5765
        %v5767 = vsel %vm5766, %v5759, %v5763
        %v5768 = vand.u32 2147483647, %v5431
        %vm5769 = vcmp.eq.f32.partialorder %v5768, 8.507059e+37
        %v5770 = vand.u32 %v5431, 2147483648
        %v5771 = vor.u32 1.1754944e-38, %v5770
        %v5772 = vsel %vm5769, %v5771, %v5767
        %v5773 = vmul.f32 %v5320, %v5772
        %v5774 = vmul.f32 %v5322, %v5772
        %v5775 = vrcp.pop %v5434
        %v5776 = vmul.f32 %v5434, %v5775
        %v5777 = vsub.f32 1.0, %v5776
        %v5778 = vmul.f32 %v5775, %v5777
        %v5779 = vadd.f32 %v5775, %v5778
        %vm5780 = vweird.f32 %v5434
        %vm5781 = vweird.f32 %v5775
        %vm5782 = vmor %vm5780, %vm5781
        %v5783 = vsel %vm5782, %v5775, %v5779
        %v5784 = vand.u32 2147483647, %v5434
        %vm5785 = vcmp.eq.f32.partialorder %v5784, 8.507059e+37
        %v5786 = vand.u32 %v5434, 2147483648
        %v5787 = vor.u32 1.1754944e-38, %v5786
        %v5788 = vsel %vm5785, %v5787, %v5783
        %v5789 = vmul.f32 %v5324, %v5788
        %v5790 = vmul.f32 %v5326, %v5788
        %v5791 = vrcp.pop %v5437
        %v5792 = vmul.f32 %v5437, %v5791
        %v5793 = vsub.f32 1.0, %v5792
        %v5794 = vmul.f32 %v5791, %v5793
        %v5795 = vadd.f32 %v5791, %v5794
        %vm5796 = vweird.f32 %v5437
        %vm5797 = vweird.f32 %v5791
        %vm5798 = vmor %vm5796, %vm5797
        %v5799 = vsel %vm5798, %v5791, %v5795
        %v5800 = vand.u32 2147483647, %v5437
        %vm5801 = vcmp.eq.f32.partialorder %v5800, 8.507059e+37
        %v5802 = vand.u32 %v5437, 2147483648
        %v5803 = vor.u32 1.1754944e-38, %v5802
        %v5804 = vsel %vm5801, %v5803, %v5799
        %v5805 = vmul.f32 %v5328, %v5804
        %v5806 = vmul.f32 %v5330, %v5804
        %v5807 = vrcp.pop %v5440
        %v5808 = vmul.f32 %v5440, %v5807
        %v5809 = vsub.f32 1.0, %v5808
        %v5810 = vmul.f32 %v5807, %v5809
        %v5811 = vadd.f32 %v5807, %v5810
        %vm5812 = vweird.f32 %v5440
        %vm5813 = vweird.f32 %v5807
        %vm5814 = vmor %vm5812, %vm5813
        %v5815 = vsel %vm5814, %v5807, %v5811
        %v5816 = vand.u32 2147483647, %v5440
        %vm5817 = vcmp.eq.f32.partialorder %v5816, 8.507059e+37
        %v5818 = vand.u32 %v5440, 2147483648
        %v5819 = vor.u32 1.1754944e-38, %v5818
        %v5820 = vsel %vm5817, %v5819, %v5815
        %v5821 = vmul.f32 %v5332, %v5820
        %v5822 = vmul.f32 %v5334, %v5820
        %v5823 = vrcp.pop %v5443
        %v5824 = vmul.f32 %v5443, %v5823
        %v5825 = vsub.f32 1.0, %v5824
        %v5826 = vmul.f32 %v5823, %v5825
        %v5827 = vadd.f32 %v5823, %v5826
        %vm5828 = vweird.f32 %v5443
        %vm5829 = vweird.f32 %v5823
        %vm5830 = vmor %vm5828, %vm5829
        %v5831 = vsel %vm5830, %v5823, %v5827
        %v5832 = vand.u32 2147483647, %v5443
        %vm5833 = vcmp.eq.f32.partialorder %v5832, 8.507059e+37
        %v5834 = vand.u32 %v5443, 2147483648
        %v5835 = vor.u32 1.1754944e-38, %v5834
        %v5836 = vsel %vm5833, %v5835, %v5831
        %v5837 = vmul.f32 %v5336, %v5836
        %v5838 = vmul.f32 %v5338, %v5836
        %v5839 = vrcp.pop %v5446
        %v5840 = vmul.f32 %v5446, %v5839
        %v5841 = vsub.f32 1.0, %v5840
        %v5842 = vmul.f32 %v5839, %v5841
        %v5843 = vadd.f32 %v5839, %v5842
        %vm5844 = vweird.f32 %v5446
        %vm5845 = vweird.f32 %v5839
        %vm5846 = vmor %vm5844, %vm5845
        %v5847 = vsel %vm5846, %v5839, %v5843
        %v5848 = vand.u32 2147483647, %v5446
        %vm5849 = vcmp.eq.f32.partialorder %v5848, 8.507059e+37
        %v5850 = vand.u32 %v5446, 2147483648
        %v5851 = vor.u32 1.1754944e-38, %v5850
        %v5852 = vsel %vm5849, %v5851, %v5847
        %v5853 = vmul.f32 %v5340, %v5852
        %v5854 = vmul.f32 %v5342, %v5852
        %v5855 = vrcp.pop %v5449
        %v5856 = vmul.f32 %v5449, %v5855
        %v5857 = vsub.f32 1.0, %v5856
        %v5858 = vmul.f32 %v5855, %v5857
        %v5859 = vadd.f32 %v5855, %v5858
        %vm5860 = vweird.f32 %v5449
        %vm5861 = vweird.f32 %v5855
        %vm5862 = vmor %vm5860, %vm5861
        %v5863 = vsel %vm5862, %v5855, %v5859
        %v5864 = vand.u32 2147483647, %v5449
        %vm5865 = vcmp.eq.f32.partialorder %v5864, 8.507059e+37
        %v5866 = vand.u32 %v5449, 2147483648
        %v5867 = vor.u32 1.1754944e-38, %v5866
        %v5868 = vsel %vm5865, %v5867, %v5863
        %v5869 = vmul.f32 %v5344, %v5868
        %v5870 = vmul.f32 %v5346, %v5868
        %v5871 = vrcp.pop %v5452
        %v5872 = vmul.f32 %v5452, %v5871
        %v5873 = vsub.f32 1.0, %v5872
        %v5874 = vmul.f32 %v5871, %v5873
        %v5875 = vadd.f32 %v5871, %v5874
        %vm5876 = vweird.f32 %v5452
        %vm5877 = vweird.f32 %v5871
        %vm5878 = vmor %vm5876, %vm5877
        %v5879 = vsel %vm5878, %v5871, %v5875
        %v5880 = vand.u32 2147483647, %v5452
        %vm5881 = vcmp.eq.f32.partialorder %v5880, 8.507059e+37
        %v5882 = vand.u32 %v5452, 2147483648
        %v5883 = vor.u32 1.1754944e-38, %v5882
        %v5884 = vsel %vm5881, %v5883, %v5879
        %v5885 = vmul.f32 %v5348, %v5884
        %v5886 = vmul.f32 %v5350, %v5884
        %v5887 = vrcp.pop %v5455
        %v5888 = vmul.f32 %v5455, %v5887
        %v5889 = vsub.f32 1.0, %v5888
        %v5890 = vmul.f32 %v5887, %v5889
        %v5891 = vadd.f32 %v5887, %v5890
        %vm5892 = vweird.f32 %v5455
        %vm5893 = vweird.f32 %v5887
        %vm5894 = vmor %vm5892, %vm5893
        %v5895 = vsel %vm5894, %v5887, %v5891
        %v5896 = vand.u32 2147483647, %v5455
        %vm5897 = vcmp.eq.f32.partialorder %v5896, 8.507059e+37
        %v5898 = vand.u32 %v5455, 2147483648
        %v5899 = vor.u32 1.1754944e-38, %v5898
        %v5900 = vsel %vm5897, %v5899, %v5895
        %v5901 = vmul.f32 %v5352, %v5900
        %v5902 = vmul.f32 %v5354, %v5900
        %v5903 = vrcp.pop %v5458
        %v5904 = vmul.f32 %v5458, %v5903
        %v5905 = vsub.f32 1.0, %v5904
        %v5906 = vmul.f32 %v5903, %v5905
        %v5907 = vadd.f32 %v5903, %v5906
        %vm5908 = vweird.f32 %v5458
        %vm5909 = vweird.f32 %v5903
        %vm5910 = vmor %vm5908, %vm5909
        %v5911 = vsel %vm5910, %v5903, %v5907
        %v5912 = vand.u32 2147483647, %v5458
        %vm5913 = vcmp.eq.f32.partialorder %v5912, 8.507059e+37
        %v5914 = vand.u32 %v5458, 2147483648
        %v5915 = vor.u32 1.1754944e-38, %v5914
        %v5916 = vsel %vm5913, %v5915, %v5911
        %v5917 = vmul.f32 %v5356, %v5916
        %v5918 = vmul.f32 %v5358, %v5916
        %v5919 = vrcp.pop %v5461
        %v5920 = vmul.f32 %v5461, %v5919
        %v5921 = vsub.f32 1.0, %v5920
        %v5922 = vmul.f32 %v5919, %v5921
        %v5923 = vadd.f32 %v5919, %v5922
        %vm5924 = vweird.f32 %v5461
        %vm5925 = vweird.f32 %v5919
        %vm5926 = vmor %vm5924, %vm5925
        %v5927 = vsel %vm5926, %v5919, %v5923
        %v5928 = vand.u32 2147483647, %v5461
        %vm5929 = vcmp.eq.f32.partialorder %v5928, 8.507059e+37
        %v5930 = vand.u32 %v5461, 2147483648
        %v5931 = vor.u32 1.1754944e-38, %v5930
        %v5932 = vsel %vm5929, %v5931, %v5927
        %v5933 = vmul.f32 %v5360, %v5932
        %v5934 = vmul.f32 %v5362, %v5932
        %v5935 = vrcp.pop %v5464
        %v5936 = vmul.f32 %v5464, %v5935
        %v5937 = vsub.f32 1.0, %v5936
        %v5938 = vmul.f32 %v5935, %v5937
        %v5939 = vadd.f32 %v5935, %v5938
        %vm5940 = vweird.f32 %v5464
        %vm5941 = vweird.f32 %v5935
        %vm5942 = vmor %vm5940, %vm5941
        %v5943 = vsel %vm5942, %v5935, %v5939
        %v5944 = vand.u32 2147483647, %v5464
        %vm5945 = vcmp.eq.f32.partialorder %v5944, 8.507059e+37
        %v5946 = vand.u32 %v5464, 2147483648
        %v5947 = vor.u32 1.1754944e-38, %v5946
        %v5948 = vsel %vm5945, %v5947, %v5943
        %v5949 = vmul.f32 %v5364, %v5948
        %v5950 = vmul.f32 %v5366, %v5948
        %v5951 = vrcp.pop %v5467
        %v5952 = vmul.f32 %v5467, %v5951
        %v5953 = vsub.f32 1.0, %v5952
        %v5954 = vmul.f32 %v5951, %v5953
        %v5955 = vadd.f32 %v5951, %v5954
        %vm5956 = vweird.f32 %v5467
        %vm5957 = vweird.f32 %v5951
        %vm5958 = vmor %vm5956, %vm5957
        %v5959 = vsel %vm5958, %v5951, %v5955
        %v5960 = vand.u32 2147483647, %v5467
        %vm5961 = vcmp.eq.f32.partialorder %v5960, 8.507059e+37
        %v5962 = vand.u32 %v5467, 2147483648
        %v5963 = vor.u32 1.1754944e-38, %v5962
        %v5964 = vsel %vm5961, %v5963, %v5959
        %v5965 = vmul.f32 %v5368, %v5964
        %v5966 = vmul.f32 %v5370, %v5964
        %v5967 = vrcp.pop %v5470
        %v5968 = vmul.f32 %v5470, %v5967
        %v5969 = vsub.f32 1.0, %v5968
        %v5970 = vmul.f32 %v5967, %v5969
        %v5971 = vadd.f32 %v5967, %v5970
        %vm5972 = vweird.f32 %v5470
        %vm5973 = vweird.f32 %v5967
        %vm5974 = vmor %vm5972, %vm5973
        %v5975 = vsel %vm5974, %v5967, %v5971
        %v5976 = vand.u32 2147483647, %v5470
        %vm5977 = vcmp.eq.f32.partialorder %v5976, 8.507059e+37
        %v5978 = vand.u32 %v5470, 2147483648
        %v5979 = vor.u32 1.1754944e-38, %v5978
        %v5980 = vsel %vm5977, %v5979, %v5975
        %v5981 = vmul.f32 %v5372, %v5980
        %v5982 = vmul.f32 %v5374, %v5980
        %5983 = vrot.lane.b32.xlu0 %v527, 48
        %v5984 = vpop.permute.xlu0 %5983
        %5985 = vrot.lane.b32.xlu0 %v530, 48
        %v5986 = vpop.permute.xlu0 %5985
        %5987 = vrot.lane.b32.xlu0 %v533, 48
        %v5988 = vpop.permute.xlu0 %5987
        %5989 = vrot.lane.b32.xlu0 %v536, 48
        %v5990 = vpop.permute.xlu0 %5989
        %5991 = vrot.lane.b32.xlu0 %v539, 48
        %v5992 = vpop.permute.xlu0 %5991
        %5993 = vrot.lane.b32.xlu0 %v542, 48
        %v5994 = vpop.permute.xlu0 %5993
        %5995 = vrot.lane.b32.xlu0 %v545, 48
        %v5996 = vpop.permute.xlu0 %5995
        %5997 = vrot.lane.b32.xlu0 %v548, 48
        %v5998 = vpop.permute.xlu0 %5997
        %5999 = vrot.lane.b32.xlu0 %v551, 48
        %v6000 = vpop.permute.xlu0 %5999
        %6001 = vrot.lane.b32.xlu0 %v554, 48
        %v6002 = vpop.permute.xlu0 %6001
        %6003 = vrot.lane.b32.xlu0 %v557, 48
        %v6004 = vpop.permute.xlu0 %6003
        %6005 = vrot.lane.b32.xlu0 %v560, 48
        %v6006 = vpop.permute.xlu0 %6005
        %6007 = vrot.lane.b32.xlu0 %v563, 48
        %v6008 = vpop.permute.xlu0 %6007
        %6009 = vrot.lane.b32.xlu0 %v566, 48
        %v6010 = vpop.permute.xlu0 %6009
        %6011 = vrot.lane.b32.xlu0 %v569, 48
        %v6012 = vpop.permute.xlu0 %6011
        %6013 = vrot.lane.b32.xlu0 %v572, 48
        %v6014 = vpop.permute.xlu0 %6013
        %6015 = vrot.lane.b32.xlu0 %v575, 48
        %v6016 = vpop.permute.xlu0 %6015
        %6017 = vrot.lane.b32.xlu0 %v578, 48
        %v6018 = vpop.permute.xlu0 %6017
        %6019 = vrot.lane.b32.xlu0 %v581, 48
        %v6020 = vpop.permute.xlu0 %6019
        %6021 = vrot.lane.b32.xlu0 %v584, 48
        %v6022 = vpop.permute.xlu0 %6021
        %6023 = vrot.lane.b32.xlu0 %v587, 48
        %v6024 = vpop.permute.xlu0 %6023
        %6025 = vrot.lane.b32.xlu0 %v590, 48
        %v6026 = vpop.permute.xlu0 %6025
        %6027 = vrot.lane.b32.xlu0 %v593, 48
        %v6028 = vpop.permute.xlu0 %6027
        %6029 = vrot.lane.b32.xlu0 %v596, 48
        %v6030 = vpop.permute.xlu0 %6029
        %6031 = vrot.lane.b32.xlu0 %v599, 48
        %v6032 = vpop.permute.xlu0 %6031
        %6033 = vrot.lane.b32.xlu0 %v602, 48
        %v6034 = vpop.permute.xlu0 %6033
        %6035 = vrot.lane.b32.xlu0 %v605, 48
        %v6036 = vpop.permute.xlu0 %6035
        %6037 = vrot.lane.b32.xlu0 %v608, 48
        %v6038 = vpop.permute.xlu0 %6037
        %6039 = vrot.lane.b32.xlu0 %v611, 48
        %v6040 = vpop.permute.xlu0 %6039
        %6041 = vrot.lane.b32.xlu0 %v614, 48
        %v6042 = vpop.permute.xlu0 %6041
        %6043 = vrot.lane.b32.xlu0 %v617, 48
        %v6044 = vpop.permute.xlu0 %6043
        %6045 = vrot.lane.b32.xlu0 %v620, 48
        %v6046 = vpop.permute.xlu0 %6045
        %6079 = vmatpush.msra.mxu0 %v6014
        %6080 = vmatpush.msra.mxu0 %v6012
        %6081 = vmatpush.msra.mxu0 %v6010
        %6082 = vmatpush.msra.mxu0 %v6008
        %6083 = vmatpush.msra.mxu0 %v6006
        %6084 = vmatpush.msra.mxu0 %v6004
        %6085 = vmatpush.msra.mxu0 %v6002
        %6086 = vmatpush.msra.mxu0 %v6000
        %6087 = vmatpush.msra.mxu0 %v5998
        %6088 = vmatpush.msra.mxu0 %v5996
        %6089 = vmatpush.msra.mxu0 %v5994
        %6090 = vmatpush.msra.mxu0 %v5992
        %6091 = vmatpush.msra.mxu0 %v5990
        %6092 = vmatpush.msra.mxu0 %v5988
        %6093 = vmatpush.msra.mxu0 %v5986
        %6094 = vmatpush.msra.mxu0 %v5984
        %6095 = vmatmul.f32.gmra.mxu0 %v5485
        %v6096 = vpop.f32.mrf.mxu0
        %v6097 = vadd.f32 0.0, %v6096
        %6098 = vmatmul.f32.gmra.mxu0 %v5501
        %v6099 = vpop.f32.mrf.mxu0
        %v6100 = vadd.f32 0.0, %v6099
        %6101 = vmatmul.f32.gmra.mxu0 %v5517
        %v6102 = vpop.f32.mrf.mxu0
        %v6103 = vadd.f32 0.0, %v6102
        %6104 = vmatmul.f32.gmra.mxu0 %v5533
        %v6105 = vpop.f32.mrf.mxu0
        %v6106 = vadd.f32 0.0, %v6105
        %6107 = vmatmul.f32.gmra.mxu0 %v5549
        %v6108 = vpop.f32.mrf.mxu0
        %v6109 = vadd.f32 0.0, %v6108
        %6110 = vmatmul.f32.gmra.mxu0 %v5565
        %v6111 = vpop.f32.mrf.mxu0
        %v6112 = vadd.f32 0.0, %v6111
        %6113 = vmatmul.f32.gmra.mxu0 %v5581
        %v6114 = vpop.f32.mrf.mxu0
        %v6115 = vadd.f32 0.0, %v6114
        %6116 = vmatmul.f32.gmra.mxu0 %v5597
        %v6117 = vpop.f32.mrf.mxu0
        %v6118 = vadd.f32 0.0, %v6117
        %6119 = vmatmul.f32.gmra.mxu0 %v5613
        %v6120 = vpop.f32.mrf.mxu0
        %v6121 = vadd.f32 0.0, %v6120
        %6122 = vmatmul.f32.gmra.mxu0 %v5629
        %v6123 = vpop.f32.mrf.mxu0
        %v6124 = vadd.f32 0.0, %v6123
        %6125 = vmatmul.f32.gmra.mxu0 %v5645
        %v6126 = vpop.f32.mrf.mxu0
        %v6127 = vadd.f32 0.0, %v6126
        %6128 = vmatmul.f32.gmra.mxu0 %v5661
        %v6129 = vpop.f32.mrf.mxu0
        %v6130 = vadd.f32 0.0, %v6129
        %6131 = vmatmul.f32.gmra.mxu0 %v5677
        %v6132 = vpop.f32.mrf.mxu0
        %v6133 = vadd.f32 0.0, %v6132
        %6134 = vmatmul.f32.gmra.mxu0 %v5693
        %v6135 = vpop.f32.mrf.mxu0
        %v6136 = vadd.f32 0.0, %v6135
        %6137 = vmatmul.f32.gmra.mxu0 %v5709
        %v6138 = vpop.f32.mrf.mxu0
        %v6139 = vadd.f32 0.0, %v6138
        %6140 = vmatmul.f32.gmra.mxu0 %v5725
        %v6141 = vpop.f32.mrf.mxu0
        %v6142 = vadd.f32 0.0, %v6141
        %6143 = vmatmul.f32.gmra.mxu0 %v5741
        %v6144 = vpop.f32.mrf.mxu0
        %v6145 = vadd.f32 0.0, %v6144
        %6146 = vmatmul.f32.gmra.mxu0 %v5757
        %v6147 = vpop.f32.mrf.mxu0
        %v6148 = vadd.f32 0.0, %v6147
        %6149 = vmatmul.f32.gmra.mxu0 %v5773
        %v6150 = vpop.f32.mrf.mxu0
        %v6151 = vadd.f32 0.0, %v6150
        %6152 = vmatmul.f32.gmra.mxu0 %v5789
        %v6153 = vpop.f32.mrf.mxu0
        %v6154 = vadd.f32 0.0, %v6153
        %6155 = vmatmul.f32.gmra.mxu0 %v5805
        %v6156 = vpop.f32.mrf.mxu0
        %v6157 = vadd.f32 0.0, %v6156
        %6158 = vmatmul.f32.gmra.mxu0 %v5821
        %v6159 = vpop.f32.mrf.mxu0
        %v6160 = vadd.f32 0.0, %v6159
        %6161 = vmatmul.f32.gmra.mxu0 %v5837
        %v6162 = vpop.f32.mrf.mxu0
        %v6163 = vadd.f32 0.0, %v6162
        %6164 = vmatmul.f32.gmra.mxu0 %v5853
        %v6165 = vpop.f32.mrf.mxu0
        %v6166 = vadd.f32 0.0, %v6165
        %6167 = vmatmul.f32.gmra.mxu0 %v5869
        %v6168 = vpop.f32.mrf.mxu0
        %v6169 = vadd.f32 0.0, %v6168
        %6170 = vmatmul.f32.gmra.mxu0 %v5885
        %v6171 = vpop.f32.mrf.mxu0
        %v6172 = vadd.f32 0.0, %v6171
        %6173 = vmatmul.f32.gmra.mxu0 %v5901
        %v6174 = vpop.f32.mrf.mxu0
        %v6175 = vadd.f32 0.0, %v6174
        %6176 = vmatmul.f32.gmra.mxu0 %v5917
        %v6177 = vpop.f32.mrf.mxu0
        %v6178 = vadd.f32 0.0, %v6177
        %6179 = vmatmul.f32.gmra.mxu0 %v5933
        %v6180 = vpop.f32.mrf.mxu0
        %v6181 = vadd.f32 0.0, %v6180
        %6182 = vmatmul.f32.gmra.mxu0 %v5949
        %v6183 = vpop.f32.mrf.mxu0
        %v6184 = vadd.f32 0.0, %v6183
        %6185 = vmatmul.f32.gmra.mxu0 %v5965
        %v6186 = vpop.f32.mrf.mxu0
        %v6187 = vadd.f32 0.0, %v6186
        %6188 = vmatmul.f32.gmra.mxu0 %v5981
        %v6189 = vpop.f32.mrf.mxu0
        %v6190 = vadd.f32 0.0, %v6189
        %6191 = vdwg.mxu0
        %6192 = vmatpush.msra.mxu0 %v6046
        %6193 = vmatpush.msra.mxu0 %v6044
        %6194 = vmatpush.msra.mxu0 %v6042
        %6195 = vmatpush.msra.mxu0 %v6040
        %6196 = vmatpush.msra.mxu0 %v6038
        %6197 = vmatpush.msra.mxu0 %v6036
        %6198 = vmatpush.msra.mxu0 %v6034
        %6199 = vmatpush.msra.mxu0 %v6032
        %6200 = vmatpush.msra.mxu0 %v6030
        %6201 = vmatpush.msra.mxu0 %v6028
        %6202 = vmatpush.msra.mxu0 %v6026
        %6203 = vmatpush.msra.mxu0 %v6024
        %6204 = vmatpush.msra.mxu0 %v6022
        %6205 = vmatpush.msra.mxu0 %v6020
        %6206 = vmatpush.msra.mxu0 %v6018
        %6207 = vmatpush.msra.mxu0 %v6016
        %6208 = vmatmul.f32.gmra.mxu0 %v5486
        %v6209 = vpop.f32.mrf.mxu0
        %v6210 = vadd.f32 %v6097, %v6209
        %6211 = vmatmul.f32.gmra.mxu0 %v5502
        %v6212 = vpop.f32.mrf.mxu0
        %v6213 = vadd.f32 %v6100, %v6212
        %6214 = vmatmul.f32.gmra.mxu0 %v5518
        %v6215 = vpop.f32.mrf.mxu0
        %v6216 = vadd.f32 %v6103, %v6215
        %6217 = vmatmul.f32.gmra.mxu0 %v5534
        %v6218 = vpop.f32.mrf.mxu0
        %v6219 = vadd.f32 %v6106, %v6218
        %6220 = vmatmul.f32.gmra.mxu0 %v5550
        %v6221 = vpop.f32.mrf.mxu0
        %v6222 = vadd.f32 %v6109, %v6221
        %6223 = vmatmul.f32.gmra.mxu0 %v5566
        %v6224 = vpop.f32.mrf.mxu0
        %v6225 = vadd.f32 %v6112, %v6224
        %6226 = vmatmul.f32.gmra.mxu0 %v5582
        %v6227 = vpop.f32.mrf.mxu0
        %v6228 = vadd.f32 %v6115, %v6227
        %6229 = vmatmul.f32.gmra.mxu0 %v5598
        %v6230 = vpop.f32.mrf.mxu0
        %v6231 = vadd.f32 %v6118, %v6230
        %6232 = vmatmul.f32.gmra.mxu0 %v5614
        %v6233 = vpop.f32.mrf.mxu0
        %v6234 = vadd.f32 %v6121, %v6233
        %6235 = vmatmul.f32.gmra.mxu0 %v5630
        %v6236 = vpop.f32.mrf.mxu0
        %v6237 = vadd.f32 %v6124, %v6236
        %6238 = vmatmul.f32.gmra.mxu0 %v5646
        %v6239 = vpop.f32.mrf.mxu0
        %v6240 = vadd.f32 %v6127, %v6239
        %6241 = vmatmul.f32.gmra.mxu0 %v5662
        %v6242 = vpop.f32.mrf.mxu0
        %v6243 = vadd.f32 %v6130, %v6242
        %6244 = vmatmul.f32.gmra.mxu0 %v5678
        %v6245 = vpop.f32.mrf.mxu0
        %v6246 = vadd.f32 %v6133, %v6245
        %6247 = vmatmul.f32.gmra.mxu0 %v5694
        %v6248 = vpop.f32.mrf.mxu0
        %v6249 = vadd.f32 %v6136, %v6248
        %6250 = vmatmul.f32.gmra.mxu0 %v5710
        %v6251 = vpop.f32.mrf.mxu0
        %v6252 = vadd.f32 %v6139, %v6251
        %6253 = vmatmul.f32.gmra.mxu0 %v5726
        %v6254 = vpop.f32.mrf.mxu0
        %v6255 = vadd.f32 %v6142, %v6254
        %6256 = vmatmul.f32.gmra.mxu0 %v5742
        %v6257 = vpop.f32.mrf.mxu0
        %v6258 = vadd.f32 %v6145, %v6257
        %6259 = vmatmul.f32.gmra.mxu0 %v5758
        %v6260 = vpop.f32.mrf.mxu0
        %v6261 = vadd.f32 %v6148, %v6260
        %6262 = vmatmul.f32.gmra.mxu0 %v5774
        %v6263 = vpop.f32.mrf.mxu0
        %v6264 = vadd.f32 %v6151, %v6263
        %6265 = vmatmul.f32.gmra.mxu0 %v5790
        %v6266 = vpop.f32.mrf.mxu0
        %v6267 = vadd.f32 %v6154, %v6266
        %6268 = vmatmul.f32.gmra.mxu0 %v5806
        %v6269 = vpop.f32.mrf.mxu0
        %v6270 = vadd.f32 %v6157, %v6269
        %6271 = vmatmul.f32.gmra.mxu0 %v5822
        %v6272 = vpop.f32.mrf.mxu0
        %v6273 = vadd.f32 %v6160, %v6272
        %6274 = vmatmul.f32.gmra.mxu0 %v5838
        %v6275 = vpop.f32.mrf.mxu0
        %v6276 = vadd.f32 %v6163, %v6275
        %6277 = vmatmul.f32.gmra.mxu0 %v5854
        %v6278 = vpop.f32.mrf.mxu0
        %v6279 = vadd.f32 %v6166, %v6278
        %6280 = vmatmul.f32.gmra.mxu0 %v5870
        %v6281 = vpop.f32.mrf.mxu0
        %v6282 = vadd.f32 %v6169, %v6281
        %6283 = vmatmul.f32.gmra.mxu0 %v5886
        %v6284 = vpop.f32.mrf.mxu0
        %v6285 = vadd.f32 %v6172, %v6284
        %6286 = vmatmul.f32.gmra.mxu0 %v5902
        %v6287 = vpop.f32.mrf.mxu0
        %v6288 = vadd.f32 %v6175, %v6287
        %6289 = vmatmul.f32.gmra.mxu0 %v5918
        %v6290 = vpop.f32.mrf.mxu0
        %v6291 = vadd.f32 %v6178, %v6290
        %6292 = vmatmul.f32.gmra.mxu0 %v5934
        %v6293 = vpop.f32.mrf.mxu0
        %v6294 = vadd.f32 %v6181, %v6293
        %6295 = vmatmul.f32.gmra.mxu0 %v5950
        %v6296 = vpop.f32.mrf.mxu0
        %v6297 = vadd.f32 %v6184, %v6296
        %6298 = vmatmul.f32.gmra.mxu0 %v5966
        %v6299 = vpop.f32.mrf.mxu0
        %v6300 = vadd.f32 %v6187, %v6299
        %6301 = vmatmul.f32.gmra.mxu0 %v5982
        %v6302 = vpop.f32.mrf.mxu0
        %v6303 = vadd.f32 %v6190, %v6302
        %6304 = vdwg.mxu0
        %v6306 = vsel %vm722, %v6210, 0
        %v6309 = vsel %vm722, %v6213, 0
        %v6312 = vsel %vm722, %v6216, 0
        %v6315 = vsel %vm722, %v6219, 0
        %v6318 = vsel %vm722, %v6222, 0
        %v6321 = vsel %vm722, %v6225, 0
        %v6324 = vsel %vm722, %v6228, 0
        %v6327 = vsel %vm722, %v6231, 0
        %v6330 = vsel %vm722, %v6234, 0
        %v6333 = vsel %vm722, %v6237, 0
        %v6336 = vsel %vm722, %v6240, 0
        %v6339 = vsel %vm722, %v6243, 0
        %v6342 = vsel %vm722, %v6246, 0
        %v6345 = vsel %vm722, %v6249, 0
        %v6348 = vsel %vm722, %v6252, 0
        %v6351 = vsel %vm722, %v6255, 0
        %v6354 = vsel %vm722, %v6258, 0
        %v6357 = vsel %vm722, %v6261, 0
        %v6360 = vsel %vm722, %v6264, 0
        %v6363 = vsel %vm722, %v6267, 0
        %v6366 = vsel %vm722, %v6270, 0
        %v6369 = vsel %vm722, %v6273, 0
        %v6372 = vsel %vm722, %v6276, 0
        %v6375 = vsel %vm722, %v6279, 0
        %v6378 = vsel %vm722, %v6282, 0
        %v6381 = vsel %vm722, %v6285, 0
        %v6384 = vsel %vm722, %v6288, 0
        %v6387 = vsel %vm722, %v6291, 0
        %v6390 = vsel %vm722, %v6294, 0
        %v6393 = vsel %vm722, %v6297, 0
        %v6396 = vsel %vm722, %v6300, 0
        %v6399 = vsel %vm722, %v6303, 0
        %6401 = vmatpush.msra.mxu0 0.0
        %6402 = vmatpush.msra.mxu0 0.0
        %6403 = vmatpush.msra.mxu0 0.0
        %6404 = vmatpush.msra.mxu0 0.0
        %6405 = vmatpush.msra.mxu0 0.0
        %6406 = vmatpush.msra.mxu0 0.0
        %6407 = vmatpush.msra.mxu0 0.0
        %6408 = vmatpush.msra.mxu0 0.0
        %6409 = vmatpush.msra.mxu0 0.0
        %6410 = vmatpush.msra.mxu0 0.0
        %6411 = vmatpush.msra.mxu0 0.0
        %6412 = vmatpush.msra.mxu0 0.0
        %6413 = vmatpush.msra.mxu0 0.0
        %6414 = vmatpush.msra.mxu0 0.0
        %6415 = vmatpush.msra.mxu0 0.0
        %6416 = vmatpush.msra.mxu0 %v624
        %6417 = vmatmul.f32.gmra.mxu0 %v6306
        %v6418 = vpop.f32.mrf.mxu0
        %v6419 = vadd.f32 0.0, %v6418
        %6420 = vmatmul.f32.gmra.mxu0 %v6309
        %v6421 = vpop.f32.mrf.mxu0
        %v6422 = vadd.f32 0.0, %v6421
        %6423 = vmatmul.f32.gmra.mxu0 %v6312
        %v6424 = vpop.f32.mrf.mxu0
        %v6425 = vadd.f32 0.0, %v6424
        %6426 = vmatmul.f32.gmra.mxu0 %v6315
        %v6427 = vpop.f32.mrf.mxu0
        %v6428 = vadd.f32 0.0, %v6427
        %6429 = vmatmul.f32.gmra.mxu0 %v6318
        %v6430 = vpop.f32.mrf.mxu0
        %v6431 = vadd.f32 0.0, %v6430
        %6432 = vmatmul.f32.gmra.mxu0 %v6321
        %v6433 = vpop.f32.mrf.mxu0
        %v6434 = vadd.f32 0.0, %v6433
        %6435 = vmatmul.f32.gmra.mxu0 %v6324
        %v6436 = vpop.f32.mrf.mxu0
        %v6437 = vadd.f32 0.0, %v6436
        %6438 = vmatmul.f32.gmra.mxu0 %v6327
        %v6439 = vpop.f32.mrf.mxu0
        %v6440 = vadd.f32 0.0, %v6439
        %6441 = vmatmul.f32.gmra.mxu0 %v6330
        %v6442 = vpop.f32.mrf.mxu0
        %v6443 = vadd.f32 0.0, %v6442
        %6444 = vmatmul.f32.gmra.mxu0 %v6333
        %v6445 = vpop.f32.mrf.mxu0
        %v6446 = vadd.f32 0.0, %v6445
        %6447 = vmatmul.f32.gmra.mxu0 %v6336
        %v6448 = vpop.f32.mrf.mxu0
        %v6449 = vadd.f32 0.0, %v6448
        %6450 = vmatmul.f32.gmra.mxu0 %v6339
        %v6451 = vpop.f32.mrf.mxu0
        %v6452 = vadd.f32 0.0, %v6451
        %6453 = vmatmul.f32.gmra.mxu0 %v6342
        %v6454 = vpop.f32.mrf.mxu0
        %v6455 = vadd.f32 0.0, %v6454
        %6456 = vmatmul.f32.gmra.mxu0 %v6345
        %v6457 = vpop.f32.mrf.mxu0
        %v6458 = vadd.f32 0.0, %v6457
        %6459 = vmatmul.f32.gmra.mxu0 %v6348
        %v6460 = vpop.f32.mrf.mxu0
        %v6461 = vadd.f32 0.0, %v6460
        %6462 = vmatmul.f32.gmra.mxu0 %v6351
        %v6463 = vpop.f32.mrf.mxu0
        %v6464 = vadd.f32 0.0, %v6463
        %6465 = vmatmul.f32.gmra.mxu0 %v6354
        %v6466 = vpop.f32.mrf.mxu0
        %v6467 = vadd.f32 0.0, %v6466
        %6468 = vmatmul.f32.gmra.mxu0 %v6357
        %v6469 = vpop.f32.mrf.mxu0
        %v6470 = vadd.f32 0.0, %v6469
        %6471 = vmatmul.f32.gmra.mxu0 %v6360
        %v6472 = vpop.f32.mrf.mxu0
        %v6473 = vadd.f32 0.0, %v6472
        %6474 = vmatmul.f32.gmra.mxu0 %v6363
        %v6475 = vpop.f32.mrf.mxu0
        %v6476 = vadd.f32 0.0, %v6475
        %6477 = vmatmul.f32.gmra.mxu0 %v6366
        %v6478 = vpop.f32.mrf.mxu0
        %v6479 = vadd.f32 0.0, %v6478
        %6480 = vmatmul.f32.gmra.mxu0 %v6369
        %v6481 = vpop.f32.mrf.mxu0
        %v6482 = vadd.f32 0.0, %v6481
        %6483 = vmatmul.f32.gmra.mxu0 %v6372
        %v6484 = vpop.f32.mrf.mxu0
        %v6485 = vadd.f32 0.0, %v6484
        %6486 = vmatmul.f32.gmra.mxu0 %v6375
        %v6487 = vpop.f32.mrf.mxu0
        %v6488 = vadd.f32 0.0, %v6487
        %6489 = vmatmul.f32.gmra.mxu0 %v6378
        %v6490 = vpop.f32.mrf.mxu0
        %v6491 = vadd.f32 0.0, %v6490
        %6492 = vmatmul.f32.gmra.mxu0 %v6381
        %v6493 = vpop.f32.mrf.mxu0
        %v6494 = vadd.f32 0.0, %v6493
        %6495 = vmatmul.f32.gmra.mxu0 %v6384
        %v6496 = vpop.f32.mrf.mxu0
        %v6497 = vadd.f32 0.0, %v6496
        %6498 = vmatmul.f32.gmra.mxu0 %v6387
        %v6499 = vpop.f32.mrf.mxu0
        %v6500 = vadd.f32 0.0, %v6499
        %6501 = vmatmul.f32.gmra.mxu0 %v6390
        %v6502 = vpop.f32.mrf.mxu0
        %v6503 = vadd.f32 0.0, %v6502
        %6504 = vmatmul.f32.gmra.mxu0 %v6393
        %v6505 = vpop.f32.mrf.mxu0
        %v6506 = vadd.f32 0.0, %v6505
        %6507 = vmatmul.f32.gmra.mxu0 %v6396
        %v6508 = vpop.f32.mrf.mxu0
        %v6509 = vadd.f32 0.0, %v6508
        %6510 = vmatmul.f32.gmra.mxu0 %v6399
        %v6511 = vpop.f32.mrf.mxu0
        %v6512 = vadd.f32 0.0, %v6511
        %6513 = vdwg.mxu0
        %v6514 = vadd.f32 %v4446, %v6419
        %v6515 = vadd.f32 %v4449, %v6422
        %v6516 = vadd.f32 %v4452, %v6425
        %v6517 = vadd.f32 %v4455, %v6428
        %v6518 = vadd.f32 %v4458, %v6431
        %v6519 = vadd.f32 %v4461, %v6434
        %v6520 = vadd.f32 %v4464, %v6437
        %v6521 = vadd.f32 %v4467, %v6440
        %v6522 = vadd.f32 %v4470, %v6443
        %v6523 = vadd.f32 %v4473, %v6446
        %v6524 = vadd.f32 %v4476, %v6449
        %v6525 = vadd.f32 %v4479, %v6452
        %v6526 = vadd.f32 %v4482, %v6455
        %v6527 = vadd.f32 %v4485, %v6458
        %v6528 = vadd.f32 %v4488, %v6461
        %v6529 = vadd.f32 %v4491, %v6464
        %v6530 = vadd.f32 %v4494, %v6467
        %v6531 = vadd.f32 %v4497, %v6470
        %v6532 = vadd.f32 %v4500, %v6473
        %v6533 = vadd.f32 %v4503, %v6476
        %v6534 = vadd.f32 %v4506, %v6479
        %v6535 = vadd.f32 %v4509, %v6482
        %v6536 = vadd.f32 %v4512, %v6485
        %v6537 = vadd.f32 %v4515, %v6488
        %v6538 = vadd.f32 %v4518, %v6491
        %v6539 = vadd.f32 %v4521, %v6494
        %v6540 = vadd.f32 %v4524, %v6497
        %v6541 = vadd.f32 %v4527, %v6500
        %v6542 = vadd.f32 %v4530, %v6503
        %v6543 = vadd.f32 %v4533, %v6506
        %v6544 = vadd.f32 %v4536, %v6509
        %v6545 = vadd.f32 %v4539, %v6512
        %6546 = vrot.lane.b32.xlu0 %v527, 104
        %v6547 = vpop.permute.xlu0 %6546
        %6548 = vrot.lane.b32.xlu0 %v530, 104
        %v6549 = vpop.permute.xlu0 %6548
        %6550 = vrot.lane.b32.xlu0 %v533, 104
        %v6551 = vpop.permute.xlu0 %6550
        %6552 = vrot.lane.b32.xlu0 %v536, 104
        %v6553 = vpop.permute.xlu0 %6552
        %6554 = vrot.lane.b32.xlu0 %v539, 104
        %v6555 = vpop.permute.xlu0 %6554
        %6556 = vrot.lane.b32.xlu0 %v542, 104
        %v6557 = vpop.permute.xlu0 %6556
        %6558 = vrot.lane.b32.xlu0 %v545, 104
        %v6559 = vpop.permute.xlu0 %6558
        %6560 = vrot.lane.b32.xlu0 %v548, 104
        %v6561 = vpop.permute.xlu0 %6560
        %6562 = vrot.lane.b32.xlu0 %v551, 104
        %v6563 = vpop.permute.xlu0 %6562
        %6564 = vrot.lane.b32.xlu0 %v554, 104
        %v6565 = vpop.permute.xlu0 %6564
        %6566 = vrot.lane.b32.xlu0 %v557, 104
        %v6567 = vpop.permute.xlu0 %6566
        %6568 = vrot.lane.b32.xlu0 %v560, 104
        %v6569 = vpop.permute.xlu0 %6568
        %6570 = vrot.lane.b32.xlu0 %v563, 104
        %v6571 = vpop.permute.xlu0 %6570
        %6572 = vrot.lane.b32.xlu0 %v566, 104
        %v6573 = vpop.permute.xlu0 %6572
        %6574 = vrot.lane.b32.xlu0 %v569, 104
        %v6575 = vpop.permute.xlu0 %6574
        %6576 = vrot.lane.b32.xlu0 %v572, 104
        %v6577 = vpop.permute.xlu0 %6576
        %6578 = vrot.lane.b32.xlu0 %v575, 104
        %v6579 = vpop.permute.xlu0 %6578
        %6580 = vrot.lane.b32.xlu0 %v578, 104
        %v6581 = vpop.permute.xlu0 %6580
        %6582 = vrot.lane.b32.xlu0 %v581, 104
        %v6583 = vpop.permute.xlu0 %6582
        %6584 = vrot.lane.b32.xlu0 %v584, 104
        %v6585 = vpop.permute.xlu0 %6584
        %6586 = vrot.lane.b32.xlu0 %v587, 104
        %v6587 = vpop.permute.xlu0 %6586
        %6588 = vrot.lane.b32.xlu0 %v590, 104
        %v6589 = vpop.permute.xlu0 %6588
        %6590 = vrot.lane.b32.xlu0 %v593, 104
        %v6591 = vpop.permute.xlu0 %6590
        %6592 = vrot.lane.b32.xlu0 %v596, 104
        %v6593 = vpop.permute.xlu0 %6592
        %6594 = vrot.lane.b32.xlu0 %v599, 104
        %v6595 = vpop.permute.xlu0 %6594
        %6596 = vrot.lane.b32.xlu0 %v602, 104
        %v6597 = vpop.permute.xlu0 %6596
        %6598 = vrot.lane.b32.xlu0 %v605, 104
        %v6599 = vpop.permute.xlu0 %6598
        %6600 = vrot.lane.b32.xlu0 %v608, 104
        %v6601 = vpop.permute.xlu0 %6600
        %6602 = vrot.lane.b32.xlu0 %v611, 104
        %v6603 = vpop.permute.xlu0 %6602
        %6604 = vrot.lane.b32.xlu0 %v614, 104
        %v6605 = vpop.permute.xlu0 %6604
        %6606 = vrot.lane.b32.xlu0 %v617, 104
        %v6607 = vpop.permute.xlu0 %6606
        %6608 = vrot.lane.b32.xlu0 %v620, 104
        %v6609 = vpop.permute.xlu0 %6608
        %6610 = vrot.lane.b32.xlu0 %v527, 72
        %v6611 = vpop.permute.xlu0 %6610
        %6612 = vrot.lane.b32.xlu0 %v530, 72
        %v6613 = vpop.permute.xlu0 %6612
        %6614 = vrot.lane.b32.xlu0 %v533, 72
        %v6615 = vpop.permute.xlu0 %6614
        %6616 = vrot.lane.b32.xlu0 %v536, 72
        %v6617 = vpop.permute.xlu0 %6616
        %6618 = vrot.lane.b32.xlu0 %v539, 72
        %v6619 = vpop.permute.xlu0 %6618
        %6620 = vrot.lane.b32.xlu0 %v542, 72
        %v6621 = vpop.permute.xlu0 %6620
        %6622 = vrot.lane.b32.xlu0 %v545, 72
        %v6623 = vpop.permute.xlu0 %6622
        %6624 = vrot.lane.b32.xlu0 %v548, 72
        %v6625 = vpop.permute.xlu0 %6624
        %6626 = vrot.lane.b32.xlu0 %v551, 72
        %v6627 = vpop.permute.xlu0 %6626
        %6628 = vrot.lane.b32.xlu0 %v554, 72
        %v6629 = vpop.permute.xlu0 %6628
        %6630 = vrot.lane.b32.xlu0 %v557, 72
        %v6631 = vpop.permute.xlu0 %6630
        %6632 = vrot.lane.b32.xlu0 %v560, 72
        %v6633 = vpop.permute.xlu0 %6632
        %6634 = vrot.lane.b32.xlu0 %v563, 72
        %v6635 = vpop.permute.xlu0 %6634
        %6636 = vrot.lane.b32.xlu0 %v566, 72
        %v6637 = vpop.permute.xlu0 %6636
        %6638 = vrot.lane.b32.xlu0 %v569, 72
        %v6639 = vpop.permute.xlu0 %6638
        %6640 = vrot.lane.b32.xlu0 %v572, 72
        %v6641 = vpop.permute.xlu0 %6640
        %6642 = vrot.lane.b32.xlu0 %v575, 72
        %v6643 = vpop.permute.xlu0 %6642
        %6644 = vrot.lane.b32.xlu0 %v578, 72
        %v6645 = vpop.permute.xlu0 %6644
        %6646 = vrot.lane.b32.xlu0 %v581, 72
        %v6647 = vpop.permute.xlu0 %6646
        %6648 = vrot.lane.b32.xlu0 %v584, 72
        %v6649 = vpop.permute.xlu0 %6648
        %6650 = vrot.lane.b32.xlu0 %v587, 72
        %v6651 = vpop.permute.xlu0 %6650
        %6652 = vrot.lane.b32.xlu0 %v590, 72
        %v6653 = vpop.permute.xlu0 %6652
        %6654 = vrot.lane.b32.xlu0 %v593, 72
        %v6655 = vpop.permute.xlu0 %6654
        %6656 = vrot.lane.b32.xlu0 %v596, 72
        %v6657 = vpop.permute.xlu0 %6656
        %6658 = vrot.lane.b32.xlu0 %v599, 72
        %v6659 = vpop.permute.xlu0 %6658
        %6660 = vrot.lane.b32.xlu0 %v602, 72
        %v6661 = vpop.permute.xlu0 %6660
        %6662 = vrot.lane.b32.xlu0 %v605, 72
        %v6663 = vpop.permute.xlu0 %6662
        %6664 = vrot.lane.b32.xlu0 %v608, 72
        %v6665 = vpop.permute.xlu0 %6664
        %6666 = vrot.lane.b32.xlu0 %v611, 72
        %v6667 = vpop.permute.xlu0 %6666
        %6668 = vrot.lane.b32.xlu0 %v614, 72
        %v6669 = vpop.permute.xlu0 %6668
        %6670 = vrot.lane.b32.xlu0 %v617, 72
        %v6671 = vpop.permute.xlu0 %6670
        %6672 = vrot.lane.b32.xlu0 %v620, 72
        %v6673 = vpop.permute.xlu0 %6672
        %v6674 = vsel %vm722, %v6547, 0
        %v6676 = vsel %vm722, %v6549, 0
        %v6678 = vsel %vm722, %v6551, 0
        %v6680 = vsel %vm722, %v6553, 0
        %v6682 = vsel %vm722, %v6555, 0
        %v6684 = vsel %vm722, %v6557, 0
        %v6686 = vsel %vm722, %v6559, 0
        %v6688 = vsel %vm722, %v6561, 0
        %v6690 = vsel %vm722, %v6563, 0
        %v6692 = vsel %vm722, %v6565, 0
        %v6694 = vsel %vm722, %v6567, 0
        %v6696 = vsel %vm722, %v6569, 0
        %v6698 = vsel %vm722, %v6571, 0
        %v6700 = vsel %vm722, %v6573, 0
        %v6702 = vsel %vm722, %v6575, 0
        %v6704 = vsel %vm722, %v6577, 0
        %v6706 = vsel %vm722, %v6579, 0
        %v6708 = vsel %vm722, %v6581, 0
        %v6710 = vsel %vm722, %v6583, 0
        %v6712 = vsel %vm722, %v6585, 0
        %v6714 = vsel %vm722, %v6587, 0
        %v6716 = vsel %vm722, %v6589, 0
        %v6718 = vsel %vm722, %v6591, 0
        %v6720 = vsel %vm722, %v6593, 0
        %v6722 = vsel %vm722, %v6595, 0
        %v6724 = vsel %vm722, %v6597, 0
        %v6726 = vsel %vm722, %v6599, 0
        %v6728 = vsel %vm722, %v6601, 0
        %v6730 = vsel %vm722, %v6603, 0
        %v6732 = vsel %vm722, %v6605, 0
        %v6734 = vsel %vm722, %v6607, 0
        %v6736 = vsel %vm722, %v6609, 0
        %v6738 = vsel %vm722, %v6611, 0
        %v6740 = vsel %vm722, %v6613, 0
        %v6742 = vsel %vm722, %v6615, 0
        %v6744 = vsel %vm722, %v6617, 0
        %v6746 = vsel %vm722, %v6619, 0
        %v6748 = vsel %vm722, %v6621, 0
        %v6750 = vsel %vm722, %v6623, 0
        %v6752 = vsel %vm722, %v6625, 0
        %v6754 = vsel %vm722, %v6627, 0
        %v6756 = vsel %vm722, %v6629, 0
        %v6758 = vsel %vm722, %v6631, 0
        %v6760 = vsel %vm722, %v6633, 0
        %v6762 = vsel %vm722, %v6635, 0
        %v6764 = vsel %vm722, %v6637, 0
        %v6766 = vsel %vm722, %v6639, 0
        %v6768 = vsel %vm722, %v6641, 0
        %v6770 = vsel %vm722, %v6643, 0
        %v6772 = vsel %vm722, %v6645, 0
        %v6774 = vsel %vm722, %v6647, 0
        %v6776 = vsel %vm722, %v6649, 0
        %v6778 = vsel %vm722, %v6651, 0
        %v6780 = vsel %vm722, %v6653, 0
        %v6782 = vsel %vm722, %v6655, 0
        %v6784 = vsel %vm722, %v6657, 0
        %v6786 = vsel %vm722, %v6659, 0
        %v6788 = vsel %vm722, %v6661, 0
        %v6790 = vsel %vm722, %v6663, 0
        %v6792 = vsel %vm722, %v6665, 0
        %v6794 = vsel %vm722, %v6667, 0
        %v6796 = vsel %vm722, %v6669, 0
        %v6798 = vsel %vm722, %v6671, 0
        %v6800 = vsel %vm722, %v6673, 0
        %6802 = vmatpush.xpose.msra.mxu0 %v6768
        %6803 = vmatpush.xpose.msra.mxu0 %v6766
        %6804 = vmatpush.xpose.msra.mxu0 %v6764
        %6805 = vmatpush.xpose.msra.mxu0 %v6762
        %6806 = vmatpush.xpose.msra.mxu0 %v6760
        %6807 = vmatpush.xpose.msra.mxu0 %v6758
        %6808 = vmatpush.xpose.msra.mxu0 %v6756
        %6809 = vmatpush.xpose.msra.mxu0 %v6754
        %6810 = vmatpush.xpose.msra.mxu0 %v6752
        %6811 = vmatpush.xpose.msra.mxu0 %v6750
        %6812 = vmatpush.xpose.msra.mxu0 %v6748
        %6813 = vmatpush.xpose.msra.mxu0 %v6746
        %6814 = vmatpush.xpose.msra.mxu0 %v6744
        %6815 = vmatpush.xpose.msra.mxu0 %v6742
        %6816 = vmatpush.xpose.msra.mxu0 %v6740
        %6817 = vmatpush.xpose.msra.mxu0 %v6738
        %6818 = vmatmul.f32.gmra.mxu0 %v6674
        %v6819 = vpop.f32.mrf.mxu0
        %v6820 = vadd.f32 0.0, %v6819
        %6821 = vmatmul.f32.gmra.mxu0 %v6676
        %v6822 = vpop.f32.mrf.mxu0
        %v6823 = vadd.f32 0.0, %v6822
        %6824 = vmatmul.f32.gmra.mxu0 %v6678
        %v6825 = vpop.f32.mrf.mxu0
        %v6826 = vadd.f32 0.0, %v6825
        %6827 = vmatmul.f32.gmra.mxu0 %v6680
        %v6828 = vpop.f32.mrf.mxu0
        %v6829 = vadd.f32 0.0, %v6828
        %6830 = vmatmul.f32.gmra.mxu0 %v6682
        %v6831 = vpop.f32.mrf.mxu0
        %v6832 = vadd.f32 0.0, %v6831
        %6833 = vmatmul.f32.gmra.mxu0 %v6684
        %v6834 = vpop.f32.mrf.mxu0
        %v6835 = vadd.f32 0.0, %v6834
        %6836 = vmatmul.f32.gmra.mxu0 %v6686
        %v6837 = vpop.f32.mrf.mxu0
        %v6838 = vadd.f32 0.0, %v6837
        %6839 = vmatmul.f32.gmra.mxu0 %v6688
        %v6840 = vpop.f32.mrf.mxu0
        %v6841 = vadd.f32 0.0, %v6840
        %6842 = vmatmul.f32.gmra.mxu0 %v6690
        %v6843 = vpop.f32.mrf.mxu0
        %v6844 = vadd.f32 0.0, %v6843
        %6845 = vmatmul.f32.gmra.mxu0 %v6692
        %v6846 = vpop.f32.mrf.mxu0
        %v6847 = vadd.f32 0.0, %v6846
        %6848 = vmatmul.f32.gmra.mxu0 %v6694
        %v6849 = vpop.f32.mrf.mxu0
        %v6850 = vadd.f32 0.0, %v6849
        %6851 = vmatmul.f32.gmra.mxu0 %v6696
        %v6852 = vpop.f32.mrf.mxu0
        %v6853 = vadd.f32 0.0, %v6852
        %6854 = vmatmul.f32.gmra.mxu0 %v6698
        %v6855 = vpop.f32.mrf.mxu0
        %v6856 = vadd.f32 0.0, %v6855
        %6857 = vmatmul.f32.gmra.mxu0 %v6700
        %v6858 = vpop.f32.mrf.mxu0
        %v6859 = vadd.f32 0.0, %v6858
        %6860 = vmatmul.f32.gmra.mxu0 %v6702
        %v6861 = vpop.f32.mrf.mxu0
        %v6862 = vadd.f32 0.0, %v6861
        %6863 = vmatmul.f32.gmra.mxu0 %v6704
        %v6864 = vpop.f32.mrf.mxu0
        %v6865 = vadd.f32 0.0, %v6864
        %6866 = vmatmul.f32.gmra.mxu0 %v6706
        %v6867 = vpop.f32.mrf.mxu0
        %v6868 = vadd.f32 0.0, %v6867
        %6869 = vmatmul.f32.gmra.mxu0 %v6708
        %v6870 = vpop.f32.mrf.mxu0
        %v6871 = vadd.f32 0.0, %v6870
        %6872 = vmatmul.f32.gmra.mxu0 %v6710
        %v6873 = vpop.f32.mrf.mxu0
        %v6874 = vadd.f32 0.0, %v6873
        %6875 = vmatmul.f32.gmra.mxu0 %v6712
        %v6876 = vpop.f32.mrf.mxu0
        %v6877 = vadd.f32 0.0, %v6876
        %6878 = vmatmul.f32.gmra.mxu0 %v6714
        %v6879 = vpop.f32.mrf.mxu0
        %v6880 = vadd.f32 0.0, %v6879
        %6881 = vmatmul.f32.gmra.mxu0 %v6716
        %v6882 = vpop.f32.mrf.mxu0
        %v6883 = vadd.f32 0.0, %v6882
        %6884 = vmatmul.f32.gmra.mxu0 %v6718
        %v6885 = vpop.f32.mrf.mxu0
        %v6886 = vadd.f32 0.0, %v6885
        %6887 = vmatmul.f32.gmra.mxu0 %v6720
        %v6888 = vpop.f32.mrf.mxu0
        %v6889 = vadd.f32 0.0, %v6888
        %6890 = vmatmul.f32.gmra.mxu0 %v6722
        %v6891 = vpop.f32.mrf.mxu0
        %v6892 = vadd.f32 0.0, %v6891
        %6893 = vmatmul.f32.gmra.mxu0 %v6724
        %v6894 = vpop.f32.mrf.mxu0
        %v6895 = vadd.f32 0.0, %v6894
        %6896 = vmatmul.f32.gmra.mxu0 %v6726
        %v6897 = vpop.f32.mrf.mxu0
        %v6898 = vadd.f32 0.0, %v6897
        %6899 = vmatmul.f32.gmra.mxu0 %v6728
        %v6900 = vpop.f32.mrf.mxu0
        %v6901 = vadd.f32 0.0, %v6900
        %6902 = vmatmul.f32.gmra.mxu0 %v6730
        %v6903 = vpop.f32.mrf.mxu0
        %v6904 = vadd.f32 0.0, %v6903
        %6905 = vmatmul.f32.gmra.mxu0 %v6732
        %v6906 = vpop.f32.mrf.mxu0
        %v6907 = vadd.f32 0.0, %v6906
        %6908 = vmatmul.f32.gmra.mxu0 %v6734
        %v6909 = vpop.f32.mrf.mxu0
        %v6910 = vadd.f32 0.0, %v6909
        %6911 = vmatmul.f32.gmra.mxu0 %v6736
        %v6912 = vpop.f32.mrf.mxu0
        %v6913 = vadd.f32 0.0, %v6912
        %6914 = vdwg.mxu0
        %6915 = vmatpush.xpose.msra.mxu0 %v6800
        %6916 = vmatpush.xpose.msra.mxu0 %v6798
        %6917 = vmatpush.xpose.msra.mxu0 %v6796
        %6918 = vmatpush.xpose.msra.mxu0 %v6794
        %6919 = vmatpush.xpose.msra.mxu0 %v6792
        %6920 = vmatpush.xpose.msra.mxu0 %v6790
        %6921 = vmatpush.xpose.msra.mxu0 %v6788
        %6922 = vmatpush.xpose.msra.mxu0 %v6786
        %6923 = vmatpush.xpose.msra.mxu0 %v6784
        %6924 = vmatpush.xpose.msra.mxu0 %v6782
        %6925 = vmatpush.xpose.msra.mxu0 %v6780
        %6926 = vmatpush.xpose.msra.mxu0 %v6778
        %6927 = vmatpush.xpose.msra.mxu0 %v6776
        %6928 = vmatpush.xpose.msra.mxu0 %v6774
        %6929 = vmatpush.xpose.msra.mxu0 %v6772
        %6930 = vmatpush.xpose.msra.mxu0 %v6770
        %6931 = vmatmul.f32.gmra.mxu0 %v6674
        %v6932 = vpop.f32.mrf.mxu0
        %v6933 = vadd.f32 0.0, %v6932
        %6934 = vmatmul.f32.gmra.mxu0 %v6676
        %v6935 = vpop.f32.mrf.mxu0
        %v6936 = vadd.f32 0.0, %v6935
        %6937 = vmatmul.f32.gmra.mxu0 %v6678
        %v6938 = vpop.f32.mrf.mxu0
        %v6939 = vadd.f32 0.0, %v6938
        %6940 = vmatmul.f32.gmra.mxu0 %v6680
        %v6941 = vpop.f32.mrf.mxu0
        %v6942 = vadd.f32 0.0, %v6941
        %6943 = vmatmul.f32.gmra.mxu0 %v6682
        %v6944 = vpop.f32.mrf.mxu0
        %v6945 = vadd.f32 0.0, %v6944
        %6946 = vmatmul.f32.gmra.mxu0 %v6684
        %v6947 = vpop.f32.mrf.mxu0
        %v6948 = vadd.f32 0.0, %v6947
        %6949 = vmatmul.f32.gmra.mxu0 %v6686
        %v6950 = vpop.f32.mrf.mxu0
        %v6951 = vadd.f32 0.0, %v6950
        %6952 = vmatmul.f32.gmra.mxu0 %v6688
        %v6953 = vpop.f32.mrf.mxu0
        %v6954 = vadd.f32 0.0, %v6953
        %6955 = vmatmul.f32.gmra.mxu0 %v6690
        %v6956 = vpop.f32.mrf.mxu0
        %v6957 = vadd.f32 0.0, %v6956
        %6958 = vmatmul.f32.gmra.mxu0 %v6692
        %v6959 = vpop.f32.mrf.mxu0
        %v6960 = vadd.f32 0.0, %v6959
        %6961 = vmatmul.f32.gmra.mxu0 %v6694
        %v6962 = vpop.f32.mrf.mxu0
        %v6963 = vadd.f32 0.0, %v6962
        %6964 = vmatmul.f32.gmra.mxu0 %v6696
        %v6965 = vpop.f32.mrf.mxu0
        %v6966 = vadd.f32 0.0, %v6965
        %6967 = vmatmul.f32.gmra.mxu0 %v6698
        %v6968 = vpop.f32.mrf.mxu0
        %v6969 = vadd.f32 0.0, %v6968
        %6970 = vmatmul.f32.gmra.mxu0 %v6700
        %v6971 = vpop.f32.mrf.mxu0
        %v6972 = vadd.f32 0.0, %v6971
        %6973 = vmatmul.f32.gmra.mxu0 %v6702
        %v6974 = vpop.f32.mrf.mxu0
        %v6975 = vadd.f32 0.0, %v6974
        %6976 = vmatmul.f32.gmra.mxu0 %v6704
        %v6977 = vpop.f32.mrf.mxu0
        %v6978 = vadd.f32 0.0, %v6977
        %6979 = vmatmul.f32.gmra.mxu0 %v6706
        %v6980 = vpop.f32.mrf.mxu0
        %v6981 = vadd.f32 0.0, %v6980
        %6982 = vmatmul.f32.gmra.mxu0 %v6708
        %v6983 = vpop.f32.mrf.mxu0
        %v6984 = vadd.f32 0.0, %v6983
        %6985 = vmatmul.f32.gmra.mxu0 %v6710
        %v6986 = vpop.f32.mrf.mxu0
        %v6987 = vadd.f32 0.0, %v6986
        %6988 = vmatmul.f32.gmra.mxu0 %v6712
        %v6989 = vpop.f32.mrf.mxu0
        %v6990 = vadd.f32 0.0, %v6989
        %6991 = vmatmul.f32.gmra.mxu0 %v6714
        %v6992 = vpop.f32.mrf.mxu0
        %v6993 = vadd.f32 0.0, %v6992
        %6994 = vmatmul.f32.gmra.mxu0 %v6716
        %v6995 = vpop.f32.mrf.mxu0
        %v6996 = vadd.f32 0.0, %v6995
        %6997 = vmatmul.f32.gmra.mxu0 %v6718
        %v6998 = vpop.f32.mrf.mxu0
        %v6999 = vadd.f32 0.0, %v6998
        %7000 = vmatmul.f32.gmra.mxu0 %v6720
        %v7001 = vpop.f32.mrf.mxu0
        %v7002 = vadd.f32 0.0, %v7001
        %7003 = vmatmul.f32.gmra.mxu0 %v6722
        %v7004 = vpop.f32.mrf.mxu0
        %v7005 = vadd.f32 0.0, %v7004
        %7006 = vmatmul.f32.gmra.mxu0 %v6724
        %v7007 = vpop.f32.mrf.mxu0
        %v7008 = vadd.f32 0.0, %v7007
        %7009 = vmatmul.f32.gmra.mxu0 %v6726
        %v7010 = vpop.f32.mrf.mxu0
        %v7011 = vadd.f32 0.0, %v7010
        %7012 = vmatmul.f32.gmra.mxu0 %v6728
        %v7013 = vpop.f32.mrf.mxu0
        %v7014 = vadd.f32 0.0, %v7013
        %7015 = vmatmul.f32.gmra.mxu0 %v6730
        %v7016 = vpop.f32.mrf.mxu0
        %v7017 = vadd.f32 0.0, %v7016
        %7018 = vmatmul.f32.gmra.mxu0 %v6732
        %v7019 = vpop.f32.mrf.mxu0
        %v7020 = vadd.f32 0.0, %v7019
        %7021 = vmatmul.f32.gmra.mxu0 %v6734
        %v7022 = vpop.f32.mrf.mxu0
        %v7023 = vadd.f32 0.0, %v7022
        %7024 = vmatmul.f32.gmra.mxu0 %v6736
        %v7025 = vpop.f32.mrf.mxu0
        %v7026 = vadd.f32 0.0, %v7025
        %7027 = vdwg.mxu0
        %v7028 = vmul.f32 %v6820, 0.35355338
        %v7029 = vmul.f32 %v6933, 0.35355338
        %v7030 = vmul.f32 %v6823, 0.35355338
        %v7031 = vmul.f32 %v6936, 0.35355338
        %v7032 = vmul.f32 %v6826, 0.35355338
        %v7033 = vmul.f32 %v6939, 0.35355338
        %v7034 = vmul.f32 %v6829, 0.35355338
        %v7035 = vmul.f32 %v6942, 0.35355338
        %v7036 = vmul.f32 %v6832, 0.35355338
        %v7037 = vmul.f32 %v6945, 0.35355338
        %v7038 = vmul.f32 %v6835, 0.35355338
        %v7039 = vmul.f32 %v6948, 0.35355338
        %v7040 = vmul.f32 %v6838, 0.35355338
        %v7041 = vmul.f32 %v6951, 0.35355338
        %v7042 = vmul.f32 %v6841, 0.35355338
        %v7043 = vmul.f32 %v6954, 0.35355338
        %v7044 = vmul.f32 %v6844, 0.35355338
        %v7045 = vmul.f32 %v6957, 0.35355338
        %v7046 = vmul.f32 %v6847, 0.35355338
        %v7047 = vmul.f32 %v6960, 0.35355338
        %v7048 = vmul.f32 %v6850, 0.35355338
        %v7049 = vmul.f32 %v6963, 0.35355338
        %v7050 = vmul.f32 %v6853, 0.35355338
        %v7051 = vmul.f32 %v6966, 0.35355338
        %v7052 = vmul.f32 %v6856, 0.35355338
        %v7053 = vmul.f32 %v6969, 0.35355338
        %v7054 = vmul.f32 %v6859, 0.35355338
        %v7055 = vmul.f32 %v6972, 0.35355338
        %v7056 = vmul.f32 %v6862, 0.35355338
        %v7057 = vmul.f32 %v6975, 0.35355338
        %v7058 = vmul.f32 %v6865, 0.35355338
        %v7059 = vmul.f32 %v6978, 0.35355338
        %v7060 = vmul.f32 %v6868, 0.35355338
        %v7061 = vmul.f32 %v6981, 0.35355338
        %v7062 = vmul.f32 %v6871, 0.35355338
        %v7063 = vmul.f32 %v6984, 0.35355338
        %v7064 = vmul.f32 %v6874, 0.35355338
        %v7065 = vmul.f32 %v6987, 0.35355338
        %v7066 = vmul.f32 %v6877, 0.35355338
        %v7067 = vmul.f32 %v6990, 0.35355338
        %v7068 = vmul.f32 %v6880, 0.35355338
        %v7069 = vmul.f32 %v6993, 0.35355338
        %v7070 = vmul.f32 %v6883, 0.35355338
        %v7071 = vmul.f32 %v6996, 0.35355338
        %v7072 = vmul.f32 %v6886, 0.35355338
        %v7073 = vmul.f32 %v6999, 0.35355338
        %v7074 = vmul.f32 %v6889, 0.35355338
        %v7075 = vmul.f32 %v7002, 0.35355338
        %v7076 = vmul.f32 %v6892, 0.35355338
        %v7077 = vmul.f32 %v7005, 0.35355338
        %v7078 = vmul.f32 %v6895, 0.35355338
        %v7079 = vmul.f32 %v7008, 0.35355338
        %v7080 = vmul.f32 %v6898, 0.35355338
        %v7081 = vmul.f32 %v7011, 0.35355338
        %v7082 = vmul.f32 %v6901, 0.35355338
        %v7083 = vmul.f32 %v7014, 0.35355338
        %v7084 = vmul.f32 %v6904, 0.35355338
        %v7085 = vmul.f32 %v7017, 0.35355338
        %v7086 = vmul.f32 %v6907, 0.35355338
        %v7087 = vmul.f32 %v7020, 0.35355338
        %v7088 = vmul.f32 %v6910, 0.35355338
        %v7089 = vmul.f32 %v7023, 0.35355338
        %v7090 = vmul.f32 %v6913, 0.35355338
        %v7091 = vmul.f32 %v7026, 0.35355338
        %v7092 = vmax.f32 %v7028, %v7029
        %7093 = vmax.xlane.f32.xlu0 %v7092
        %v7094 = vpop.xlane.xlu0 %7093
        %v7095 = vmax.f32 %v7030, %v7031
        %7096 = vmax.xlane.f32.xlu0 %v7095
        %v7097 = vpop.xlane.xlu0 %7096
        %v7098 = vmax.f32 %v7032, %v7033
        %7099 = vmax.xlane.f32.xlu0 %v7098
        %v7100 = vpop.xlane.xlu0 %7099
        %v7101 = vmax.f32 %v7034, %v7035
        %7102 = vmax.xlane.f32.xlu0 %v7101
        %v7103 = vpop.xlane.xlu0 %7102
        %v7104 = vmax.f32 %v7036, %v7037
        %7105 = vmax.xlane.f32.xlu0 %v7104
        %v7106 = vpop.xlane.xlu0 %7105
        %v7107 = vmax.f32 %v7038, %v7039
        %7108 = vmax.xlane.f32.xlu0 %v7107
        %v7109 = vpop.xlane.xlu0 %7108
        %v7110 = vmax.f32 %v7040, %v7041
        %7111 = vmax.xlane.f32.xlu0 %v7110
        %v7112 = vpop.xlane.xlu0 %7111
        %v7113 = vmax.f32 %v7042, %v7043
        %7114 = vmax.xlane.f32.xlu0 %v7113
        %v7115 = vpop.xlane.xlu0 %7114
        %v7116 = vmax.f32 %v7044, %v7045
        %7117 = vmax.xlane.f32.xlu0 %v7116
        %v7118 = vpop.xlane.xlu0 %7117
        %v7119 = vmax.f32 %v7046, %v7047
        %7120 = vmax.xlane.f32.xlu0 %v7119
        %v7121 = vpop.xlane.xlu0 %7120
        %v7122 = vmax.f32 %v7048, %v7049
        %7123 = vmax.xlane.f32.xlu0 %v7122
        %v7124 = vpop.xlane.xlu0 %7123
        %v7125 = vmax.f32 %v7050, %v7051
        %7126 = vmax.xlane.f32.xlu0 %v7125
        %v7127 = vpop.xlane.xlu0 %7126
        %v7128 = vmax.f32 %v7052, %v7053
        %7129 = vmax.xlane.f32.xlu0 %v7128
        %v7130 = vpop.xlane.xlu0 %7129
        %v7131 = vmax.f32 %v7054, %v7055
        %7132 = vmax.xlane.f32.xlu0 %v7131
        %v7133 = vpop.xlane.xlu0 %7132
        %v7134 = vmax.f32 %v7056, %v7057
        %7135 = vmax.xlane.f32.xlu0 %v7134
        %v7136 = vpop.xlane.xlu0 %7135
        %v7137 = vmax.f32 %v7058, %v7059
        %7138 = vmax.xlane.f32.xlu0 %v7137
        %v7139 = vpop.xlane.xlu0 %7138
        %v7140 = vmax.f32 %v7060, %v7061
        %7141 = vmax.xlane.f32.xlu0 %v7140
        %v7142 = vpop.xlane.xlu0 %7141
        %v7143 = vmax.f32 %v7062, %v7063
        %7144 = vmax.xlane.f32.xlu0 %v7143
        %v7145 = vpop.xlane.xlu0 %7144
        %v7146 = vmax.f32 %v7064, %v7065
        %7147 = vmax.xlane.f32.xlu0 %v7146
        %v7148 = vpop.xlane.xlu0 %7147
        %v7149 = vmax.f32 %v7066, %v7067
        %7150 = vmax.xlane.f32.xlu0 %v7149
        %v7151 = vpop.xlane.xlu0 %7150
        %v7152 = vmax.f32 %v7068, %v7069
        %7153 = vmax.xlane.f32.xlu0 %v7152
        %v7154 = vpop.xlane.xlu0 %7153
        %v7155 = vmax.f32 %v7070, %v7071
        %7156 = vmax.xlane.f32.xlu0 %v7155
        %v7157 = vpop.xlane.xlu0 %7156
        %v7158 = vmax.f32 %v7072, %v7073
        %7159 = vmax.xlane.f32.xlu0 %v7158
        %v7160 = vpop.xlane.xlu0 %7159
        %v7161 = vmax.f32 %v7074, %v7075
        %7162 = vmax.xlane.f32.xlu0 %v7161
        %v7163 = vpop.xlane.xlu0 %7162
        %v7164 = vmax.f32 %v7076, %v7077
        %7165 = vmax.xlane.f32.xlu0 %v7164
        %v7166 = vpop.xlane.xlu0 %7165
        %v7167 = vmax.f32 %v7078, %v7079
        %7168 = vmax.xlane.f32.xlu0 %v7167
        %v7169 = vpop.xlane.xlu0 %7168
        %v7170 = vmax.f32 %v7080, %v7081
        %7171 = vmax.xlane.f32.xlu0 %v7170
        %v7172 = vpop.xlane.xlu0 %7171
        %v7173 = vmax.f32 %v7082, %v7083
        %7174 = vmax.xlane.f32.xlu0 %v7173
        %v7175 = vpop.xlane.xlu0 %7174
        %v7176 = vmax.f32 %v7084, %v7085
        %7177 = vmax.xlane.f32.xlu0 %v7176
        %v7178 = vpop.xlane.xlu0 %7177
        %v7179 = vmax.f32 %v7086, %v7087
        %7180 = vmax.xlane.f32.xlu0 %v7179
        %v7181 = vpop.xlane.xlu0 %7180
        %v7182 = vmax.f32 %v7088, %v7089
        %7183 = vmax.xlane.f32.xlu0 %v7182
        %v7184 = vpop.xlane.xlu0 %7183
        %v7185 = vmax.f32 %v7090, %v7091
        %7186 = vmax.xlane.f32.xlu0 %v7185
        %v7187 = vpop.xlane.xlu0 %7186
        %v7188 = vsub.f32 %v7028, %v7094
        %v7189 = vsub.f32 %v7029, %v7094
        %v7190 = vsub.f32 %v7030, %v7097
        %v7191 = vsub.f32 %v7031, %v7097
        %v7192 = vsub.f32 %v7032, %v7100
        %v7193 = vsub.f32 %v7033, %v7100
        %v7194 = vsub.f32 %v7034, %v7103
        %v7195 = vsub.f32 %v7035, %v7103
        %v7196 = vsub.f32 %v7036, %v7106
        %v7197 = vsub.f32 %v7037, %v7106
        %v7198 = vsub.f32 %v7038, %v7109
        %v7199 = vsub.f32 %v7039, %v7109
        %v7200 = vsub.f32 %v7040, %v7112
        %v7201 = vsub.f32 %v7041, %v7112
        %v7202 = vsub.f32 %v7042, %v7115
        %v7203 = vsub.f32 %v7043, %v7115
        %v7204 = vsub.f32 %v7044, %v7118
        %v7205 = vsub.f32 %v7045, %v7118
        %v7206 = vsub.f32 %v7046, %v7121
        %v7207 = vsub.f32 %v7047, %v7121
        %v7208 = vsub.f32 %v7048, %v7124
        %v7209 = vsub.f32 %v7049, %v7124
        %v7210 = vsub.f32 %v7050, %v7127
        %v7211 = vsub.f32 %v7051, %v7127
        %v7212 = vsub.f32 %v7052, %v7130
        %v7213 = vsub.f32 %v7053, %v7130
        %v7214 = vsub.f32 %v7054, %v7133
        %v7215 = vsub.f32 %v7055, %v7133
        %v7216 = vsub.f32 %v7056, %v7136
        %v7217 = vsub.f32 %v7057, %v7136
        %v7218 = vsub.f32 %v7058, %v7139
        %v7219 = vsub.f32 %v7059, %v7139
        %v7220 = vsub.f32 %v7060, %v7142
        %v7221 = vsub.f32 %v7061, %v7142
        %v7222 = vsub.f32 %v7062, %v7145
        %v7223 = vsub.f32 %v7063, %v7145
        %v7224 = vsub.f32 %v7064, %v7148
        %v7225 = vsub.f32 %v7065, %v7148
        %v7226 = vsub.f32 %v7066, %v7151
        %v7227 = vsub.f32 %v7067, %v7151
        %v7228 = vsub.f32 %v7068, %v7154
        %v7229 = vsub.f32 %v7069, %v7154
        %v7230 = vsub.f32 %v7070, %v7157
        %v7231 = vsub.f32 %v7071, %v7157
        %v7232 = vsub.f32 %v7072, %v7160
        %v7233 = vsub.f32 %v7073, %v7160
        %v7234 = vsub.f32 %v7074, %v7163
        %v7235 = vsub.f32 %v7075, %v7163
        %v7236 = vsub.f32 %v7076, %v7166
        %v7237 = vsub.f32 %v7077, %v7166
        %v7238 = vsub.f32 %v7078, %v7169
        %v7239 = vsub.f32 %v7079, %v7169
        %v7240 = vsub.f32 %v7080, %v7172
        %v7241 = vsub.f32 %v7081, %v7172
        %v7242 = vsub.f32 %v7082, %v7175
        %v7243 = vsub.f32 %v7083, %v7175
        %v7244 = vsub.f32 %v7084, %v7178
        %v7245 = vsub.f32 %v7085, %v7178
        %v7246 = vsub.f32 %v7086, %v7181
        %v7247 = vsub.f32 %v7087, %v7181
        %v7248 = vsub.f32 %v7088, %v7184
        %v7249 = vsub.f32 %v7089, %v7184
        %v7250 = vsub.f32 %v7090, %v7187
        %v7251 = vsub.f32 %v7091, %v7187
        %v7252 = vmul.f32 %v7188, 1.442695
        %v7253 = vpow.pop %v7252
        %v7254 = vmul.f32 %v7189, 1.442695
        %v7255 = vpow.pop %v7254
        %v7256 = vmul.f32 %v7190, 1.442695
        %v7257 = vpow.pop %v7256
        %v7258 = vmul.f32 %v7191, 1.442695
        %v7259 = vpow.pop %v7258
        %v7260 = vmul.f32 %v7192, 1.442695
        %v7261 = vpow.pop %v7260
        %v7262 = vmul.f32 %v7193, 1.442695
        %v7263 = vpow.pop %v7262
        %v7264 = vmul.f32 %v7194, 1.442695
        %v7265 = vpow.pop %v7264
        %v7266 = vmul.f32 %v7195, 1.442695
        %v7267 = vpow.pop %v7266
        %v7268 = vmul.f32 %v7196, 1.442695
        %v7269 = vpow.pop %v7268
        %v7270 = vmul.f32 %v7197, 1.442695
        %v7271 = vpow.pop %v7270
        %v7272 = vmul.f32 %v7198, 1.442695
        %v7273 = vpow.pop %v7272
        %v7274 = vmul.f32 %v7199, 1.442695
        %v7275 = vpow.pop %v7274
        %v7276 = vmul.f32 %v7200, 1.442695
        %v7277 = vpow.pop %v7276
        %v7278 = vmul.f32 %v7201, 1.442695
        %v7279 = vpow.pop %v7278
        %v7280 = vmul.f32 %v7202, 1.442695
        %v7281 = vpow.pop %v7280
        %v7282 = vmul.f32 %v7203, 1.442695
        %v7283 = vpow.pop %v7282
        %v7284 = vmul.f32 %v7204, 1.442695
        %v7285 = vpow.pop %v7284
        %v7286 = vmul.f32 %v7205, 1.442695
        %v7287 = vpow.pop %v7286
        %v7288 = vmul.f32 %v7206, 1.442695
        %v7289 = vpow.pop %v7288
        %v7290 = vmul.f32 %v7207, 1.442695
        %v7291 = vpow.pop %v7290
        %v7292 = vmul.f32 %v7208, 1.442695
        %v7293 = vpow.pop %v7292
        %v7294 = vmul.f32 %v7209, 1.442695
        %v7295 = vpow.pop %v7294
        %v7296 = vmul.f32 %v7210, 1.442695
        %v7297 = vpow.pop %v7296
        %v7298 = vmul.f32 %v7211, 1.442695
        %v7299 = vpow.pop %v7298
        %v7300 = vmul.f32 %v7212, 1.442695
        %v7301 = vpow.pop %v7300
        %v7302 = vmul.f32 %v7213, 1.442695
        %v7303 = vpow.pop %v7302
        %v7304 = vmul.f32 %v7214, 1.442695
        %v7305 = vpow.pop %v7304
        %v7306 = vmul.f32 %v7215, 1.442695
        %v7307 = vpow.pop %v7306
        %v7308 = vmul.f32 %v7216, 1.442695
        %v7309 = vpow.pop %v7308
        %v7310 = vmul.f32 %v7217, 1.442695
        %v7311 = vpow.pop %v7310
        %v7312 = vmul.f32 %v7218, 1.442695
        %v7313 = vpow.pop %v7312
        %v7314 = vmul.f32 %v7219, 1.442695
        %v7315 = vpow.pop %v7314
        %v7316 = vmul.f32 %v7220, 1.442695
        %v7317 = vpow.pop %v7316
        %v7318 = vmul.f32 %v7221, 1.442695
        %v7319 = vpow.pop %v7318
        %v7320 = vmul.f32 %v7222, 1.442695
        %v7321 = vpow.pop %v7320
        %v7322 = vmul.f32 %v7223, 1.442695
        %v7323 = vpow.pop %v7322
        %v7324 = vmul.f32 %v7224, 1.442695
        %v7325 = vpow.pop %v7324
        %v7326 = vmul.f32 %v7225, 1.442695
        %v7327 = vpow.pop %v7326
        %v7328 = vmul.f32 %v7226, 1.442695
        %v7329 = vpow.pop %v7328
        %v7330 = vmul.f32 %v7227, 1.442695
        %v7331 = vpow.pop %v7330
        %v7332 = vmul.f32 %v7228, 1.442695
        %v7333 = vpow.pop %v7332
        %v7334 = vmul.f32 %v7229, 1.442695
        %v7335 = vpow.pop %v7334
        %v7336 = vmul.f32 %v7230, 1.442695
        %v7337 = vpow.pop %v7336
        %v7338 = vmul.f32 %v7231, 1.442695
        %v7339 = vpow.pop %v7338
        %v7340 = vmul.f32 %v7232, 1.442695
        %v7341 = vpow.pop %v7340
        %v7342 = vmul.f32 %v7233, 1.442695
        %v7343 = vpow.pop %v7342
        %v7344 = vmul.f32 %v7234, 1.442695
        %v7345 = vpow.pop %v7344
        %v7346 = vmul.f32 %v7235, 1.442695
        %v7347 = vpow.pop %v7346
        %v7348 = vmul.f32 %v7236, 1.442695
        %v7349 = vpow.pop %v7348
        %v7350 = vmul.f32 %v7237, 1.442695
        %v7351 = vpow.pop %v7350
        %v7352 = vmul.f32 %v7238, 1.442695
        %v7353 = vpow.pop %v7352
        %v7354 = vmul.f32 %v7239, 1.442695
        %v7355 = vpow.pop %v7354
        %v7356 = vmul.f32 %v7240, 1.442695
        %v7357 = vpow.pop %v7356
        %v7358 = vmul.f32 %v7241, 1.442695
        %v7359 = vpow.pop %v7358
        %v7360 = vmul.f32 %v7242, 1.442695
        %v7361 = vpow.pop %v7360
        %v7362 = vmul.f32 %v7243, 1.442695
        %v7363 = vpow.pop %v7362
        %v7364 = vmul.f32 %v7244, 1.442695
        %v7365 = vpow.pop %v7364
        %v7366 = vmul.f32 %v7245, 1.442695
        %v7367 = vpow.pop %v7366
        %v7368 = vmul.f32 %v7246, 1.442695
        %v7369 = vpow.pop %v7368
        %v7370 = vmul.f32 %v7247, 1.442695
        %v7371 = vpow.pop %v7370
        %v7372 = vmul.f32 %v7248, 1.442695
        %v7373 = vpow.pop %v7372
        %v7374 = vmul.f32 %v7249, 1.442695
        %v7375 = vpow.pop %v7374
        %v7376 = vmul.f32 %v7250, 1.442695
        %v7377 = vpow.pop %v7376
        %v7378 = vmul.f32 %v7251, 1.442695
        %v7379 = vpow.pop %v7378
        %v7380 = vadd.f32 %v7253, %v7255
        %7381 = vadd.xlane.f32.xlu0 %v7380
        %v7382 = vpop.xlane.xlu0 %7381
        %v7383 = vadd.f32 %v7257, %v7259
        %7384 = vadd.xlane.f32.xlu0 %v7383
        %v7385 = vpop.xlane.xlu0 %7384
        %v7386 = vadd.f32 %v7261, %v7263
        %7387 = vadd.xlane.f32.xlu0 %v7386
        %v7388 = vpop.xlane.xlu0 %7387
        %v7389 = vadd.f32 %v7265, %v7267
        %7390 = vadd.xlane.f32.xlu0 %v7389
        %v7391 = vpop.xlane.xlu0 %7390
        %v7392 = vadd.f32 %v7269, %v7271
        %7393 = vadd.xlane.f32.xlu0 %v7392
        %v7394 = vpop.xlane.xlu0 %7393
        %v7395 = vadd.f32 %v7273, %v7275
        %7396 = vadd.xlane.f32.xlu0 %v7395
        %v7397 = vpop.xlane.xlu0 %7396
        %v7398 = vadd.f32 %v7277, %v7279
        %7399 = vadd.xlane.f32.xlu0 %v7398
        %v7400 = vpop.xlane.xlu0 %7399
        %v7401 = vadd.f32 %v7281, %v7283
        %7402 = vadd.xlane.f32.xlu0 %v7401
        %v7403 = vpop.xlane.xlu0 %7402
        %v7404 = vadd.f32 %v7285, %v7287
        %7405 = vadd.xlane.f32.xlu0 %v7404
        %v7406 = vpop.xlane.xlu0 %7405
        %v7407 = vadd.f32 %v7289, %v7291
        %7408 = vadd.xlane.f32.xlu0 %v7407
        %v7409 = vpop.xlane.xlu0 %7408
        %v7410 = vadd.f32 %v7293, %v7295
        %7411 = vadd.xlane.f32.xlu0 %v7410
        %v7412 = vpop.xlane.xlu0 %7411
        %v7413 = vadd.f32 %v7297, %v7299
        %7414 = vadd.xlane.f32.xlu0 %v7413
        %v7415 = vpop.xlane.xlu0 %7414
        %v7416 = vadd.f32 %v7301, %v7303
        %7417 = vadd.xlane.f32.xlu0 %v7416
        %v7418 = vpop.xlane.xlu0 %7417
        %v7419 = vadd.f32 %v7305, %v7307
        %7420 = vadd.xlane.f32.xlu0 %v7419
        %v7421 = vpop.xlane.xlu0 %7420
        %v7422 = vadd.f32 %v7309, %v7311
        %7423 = vadd.xlane.f32.xlu0 %v7422
        %v7424 = vpop.xlane.xlu0 %7423
        %v7425 = vadd.f32 %v7313, %v7315
        %7426 = vadd.xlane.f32.xlu0 %v7425
        %v7427 = vpop.xlane.xlu0 %7426
        %v7428 = vadd.f32 %v7317, %v7319
        %7429 = vadd.xlane.f32.xlu0 %v7428
        %v7430 = vpop.xlane.xlu0 %7429
        %v7431 = vadd.f32 %v7321, %v7323
        %7432 = vadd.xlane.f32.xlu0 %v7431
        %v7433 = vpop.xlane.xlu0 %7432
        %v7434 = vadd.f32 %v7325, %v7327
        %7435 = vadd.xlane.f32.xlu0 %v7434
        %v7436 = vpop.xlane.xlu0 %7435
        %v7437 = vadd.f32 %v7329, %v7331
        %7438 = vadd.xlane.f32.xlu0 %v7437
        %v7439 = vpop.xlane.xlu0 %7438
        %v7440 = vadd.f32 %v7333, %v7335
        %7441 = vadd.xlane.f32.xlu0 %v7440
        %v7442 = vpop.xlane.xlu0 %7441
        %v7443 = vadd.f32 %v7337, %v7339
        %7444 = vadd.xlane.f32.xlu0 %v7443
        %v7445 = vpop.xlane.xlu0 %7444
        %v7446 = vadd.f32 %v7341, %v7343
        %7447 = vadd.xlane.f32.xlu0 %v7446
        %v7448 = vpop.xlane.xlu0 %7447
        %v7449 = vadd.f32 %v7345, %v7347
        %7450 = vadd.xlane.f32.xlu0 %v7449
        %v7451 = vpop.xlane.xlu0 %7450
        %v7452 = vadd.f32 %v7349, %v7351
        %7453 = vadd.xlane.f32.xlu0 %v7452
        %v7454 = vpop.xlane.xlu0 %7453
        %v7455 = vadd.f32 %v7353, %v7355
        %7456 = vadd.xlane.f32.xlu0 %v7455
        %v7457 = vpop.xlane.xlu0 %7456
        %v7458 = vadd.f32 %v7357, %v7359
        %7459 = vadd.xlane.f32.xlu0 %v7458
        %v7460 = vpop.xlane.xlu0 %7459
        %v7461 = vadd.f32 %v7361, %v7363
        %7462 = vadd.xlane.f32.xlu0 %v7461
        %v7463 = vpop.xlane.xlu0 %7462
        %v7464 = vadd.f32 %v7365, %v7367
        %7465 = vadd.xlane.f32.xlu0 %v7464
        %v7466 = vpop.xlane.xlu0 %7465
        %v7467 = vadd.f32 %v7369, %v7371
        %7468 = vadd.xlane.f32.xlu0 %v7467
        %v7469 = vpop.xlane.xlu0 %7468
        %v7470 = vadd.f32 %v7373, %v7375
        %7471 = vadd.xlane.f32.xlu0 %v7470
        %v7472 = vpop.xlane.xlu0 %7471
        %v7473 = vadd.f32 %v7377, %v7379
        %7474 = vadd.xlane.f32.xlu0 %v7473
        %v7475 = vpop.xlane.xlu0 %7474
        %v7476 = vrcp.pop %v7382
        %v7477 = vmul.f32 %v7382, %v7476
        %v7478 = vsub.f32 1.0, %v7477
        %v7479 = vmul.f32 %v7476, %v7478
        %v7480 = vadd.f32 %v7476, %v7479
        %vm7481 = vweird.f32 %v7382
        %vm7482 = vweird.f32 %v7476
        %vm7483 = vmor %vm7481, %vm7482
        %v7484 = vsel %vm7483, %v7476, %v7480
        %v7485 = vand.u32 2147483647, %v7382
        %vm7486 = vcmp.eq.f32.partialorder %v7485, 8.507059e+37
        %v7487 = vand.u32 %v7382, 2147483648
        %v7488 = vor.u32 1.1754944e-38, %v7487
        %v7489 = vsel %vm7486, %v7488, %v7484
        %v7490 = vmul.f32 %v7253, %v7489
        %v7491 = vmul.f32 %v7255, %v7489
        %v7492 = vrcp.pop %v7385
        %v7493 = vmul.f32 %v7385, %v7492
        %v7494 = vsub.f32 1.0, %v7493
        %v7495 = vmul.f32 %v7492, %v7494
        %v7496 = vadd.f32 %v7492, %v7495
        %vm7497 = vweird.f32 %v7385
        %vm7498 = vweird.f32 %v7492
        %vm7499 = vmor %vm7497, %vm7498
        %v7500 = vsel %vm7499, %v7492, %v7496
        %v7501 = vand.u32 2147483647, %v7385
        %vm7502 = vcmp.eq.f32.partialorder %v7501, 8.507059e+37
        %v7503 = vand.u32 %v7385, 2147483648
        %v7504 = vor.u32 1.1754944e-38, %v7503
        %v7505 = vsel %vm7502, %v7504, %v7500
        %v7506 = vmul.f32 %v7257, %v7505
        %v7507 = vmul.f32 %v7259, %v7505
        %v7508 = vrcp.pop %v7388
        %v7509 = vmul.f32 %v7388, %v7508
        %v7510 = vsub.f32 1.0, %v7509
        %v7511 = vmul.f32 %v7508, %v7510
        %v7512 = vadd.f32 %v7508, %v7511
        %vm7513 = vweird.f32 %v7388
        %vm7514 = vweird.f32 %v7508
        %vm7515 = vmor %vm7513, %vm7514
        %v7516 = vsel %vm7515, %v7508, %v7512
        %v7517 = vand.u32 2147483647, %v7388
        %vm7518 = vcmp.eq.f32.partialorder %v7517, 8.507059e+37
        %v7519 = vand.u32 %v7388, 2147483648
        %v7520 = vor.u32 1.1754944e-38, %v7519
        %v7521 = vsel %vm7518, %v7520, %v7516
        %v7522 = vmul.f32 %v7261, %v7521
        %v7523 = vmul.f32 %v7263, %v7521
        %v7524 = vrcp.pop %v7391
        %v7525 = vmul.f32 %v7391, %v7524
        %v7526 = vsub.f32 1.0, %v7525
        %v7527 = vmul.f32 %v7524, %v7526
        %v7528 = vadd.f32 %v7524, %v7527
        %vm7529 = vweird.f32 %v7391
        %vm7530 = vweird.f32 %v7524
        %vm7531 = vmor %vm7529, %vm7530
        %v7532 = vsel %vm7531, %v7524, %v7528
        %v7533 = vand.u32 2147483647, %v7391
        %vm7534 = vcmp.eq.f32.partialorder %v7533, 8.507059e+37
        %v7535 = vand.u32 %v7391, 2147483648
        %v7536 = vor.u32 1.1754944e-38, %v7535
        %v7537 = vsel %vm7534, %v7536, %v7532
        %v7538 = vmul.f32 %v7265, %v7537
        %v7539 = vmul.f32 %v7267, %v7537
        %v7540 = vrcp.pop %v7394
        %v7541 = vmul.f32 %v7394, %v7540
        %v7542 = vsub.f32 1.0, %v7541
        %v7543 = vmul.f32 %v7540, %v7542
        %v7544 = vadd.f32 %v7540, %v7543
        %vm7545 = vweird.f32 %v7394
        %vm7546 = vweird.f32 %v7540
        %vm7547 = vmor %vm7545, %vm7546
        %v7548 = vsel %vm7547, %v7540, %v7544
        %v7549 = vand.u32 2147483647, %v7394
        %vm7550 = vcmp.eq.f32.partialorder %v7549, 8.507059e+37
        %v7551 = vand.u32 %v7394, 2147483648
        %v7552 = vor.u32 1.1754944e-38, %v7551
        %v7553 = vsel %vm7550, %v7552, %v7548
        %v7554 = vmul.f32 %v7269, %v7553
        %v7555 = vmul.f32 %v7271, %v7553
        %v7556 = vrcp.pop %v7397
        %v7557 = vmul.f32 %v7397, %v7556
        %v7558 = vsub.f32 1.0, %v7557
        %v7559 = vmul.f32 %v7556, %v7558
        %v7560 = vadd.f32 %v7556, %v7559
        %vm7561 = vweird.f32 %v7397
        %vm7562 = vweird.f32 %v7556
        %vm7563 = vmor %vm7561, %vm7562
        %v7564 = vsel %vm7563, %v7556, %v7560
        %v7565 = vand.u32 2147483647, %v7397
        %vm7566 = vcmp.eq.f32.partialorder %v7565, 8.507059e+37
        %v7567 = vand.u32 %v7397, 2147483648
        %v7568 = vor.u32 1.1754944e-38, %v7567
        %v7569 = vsel %vm7566, %v7568, %v7564
        %v7570 = vmul.f32 %v7273, %v7569
        %v7571 = vmul.f32 %v7275, %v7569
        %v7572 = vrcp.pop %v7400
        %v7573 = vmul.f32 %v7400, %v7572
        %v7574 = vsub.f32 1.0, %v7573
        %v7575 = vmul.f32 %v7572, %v7574
        %v7576 = vadd.f32 %v7572, %v7575
        %vm7577 = vweird.f32 %v7400
        %vm7578 = vweird.f32 %v7572
        %vm7579 = vmor %vm7577, %vm7578
        %v7580 = vsel %vm7579, %v7572, %v7576
        %v7581 = vand.u32 2147483647, %v7400
        %vm7582 = vcmp.eq.f32.partialorder %v7581, 8.507059e+37
        %v7583 = vand.u32 %v7400, 2147483648
        %v7584 = vor.u32 1.1754944e-38, %v7583
        %v7585 = vsel %vm7582, %v7584, %v7580
        %v7586 = vmul.f32 %v7277, %v7585
        %v7587 = vmul.f32 %v7279, %v7585
        %v7588 = vrcp.pop %v7403
        %v7589 = vmul.f32 %v7403, %v7588
        %v7590 = vsub.f32 1.0, %v7589
        %v7591 = vmul.f32 %v7588, %v7590
        %v7592 = vadd.f32 %v7588, %v7591
        %vm7593 = vweird.f32 %v7403
        %vm7594 = vweird.f32 %v7588
        %vm7595 = vmor %vm7593, %vm7594
        %v7596 = vsel %vm7595, %v7588, %v7592
        %v7597 = vand.u32 2147483647, %v7403
        %vm7598 = vcmp.eq.f32.partialorder %v7597, 8.507059e+37
        %v7599 = vand.u32 %v7403, 2147483648
        %v7600 = vor.u32 1.1754944e-38, %v7599
        %v7601 = vsel %vm7598, %v7600, %v7596
        %v7602 = vmul.f32 %v7281, %v7601
        %v7603 = vmul.f32 %v7283, %v7601
        %v7604 = vrcp.pop %v7406
        %v7605 = vmul.f32 %v7406, %v7604
        %v7606 = vsub.f32 1.0, %v7605
        %v7607 = vmul.f32 %v7604, %v7606
        %v7608 = vadd.f32 %v7604, %v7607
        %vm7609 = vweird.f32 %v7406
        %vm7610 = vweird.f32 %v7604
        %vm7611 = vmor %vm7609, %vm7610
        %v7612 = vsel %vm7611, %v7604, %v7608
        %v7613 = vand.u32 2147483647, %v7406
        %vm7614 = vcmp.eq.f32.partialorder %v7613, 8.507059e+37
        %v7615 = vand.u32 %v7406, 2147483648
        %v7616 = vor.u32 1.1754944e-38, %v7615
        %v7617 = vsel %vm7614, %v7616, %v7612
        %v7618 = vmul.f32 %v7285, %v7617
        %v7619 = vmul.f32 %v7287, %v7617
        %v7620 = vrcp.pop %v7409
        %v7621 = vmul.f32 %v7409, %v7620
        %v7622 = vsub.f32 1.0, %v7621
        %v7623 = vmul.f32 %v7620, %v7622
        %v7624 = vadd.f32 %v7620, %v7623
        %vm7625 = vweird.f32 %v7409
        %vm7626 = vweird.f32 %v7620
        %vm7627 = vmor %vm7625, %vm7626
        %v7628 = vsel %vm7627, %v7620, %v7624
        %v7629 = vand.u32 2147483647, %v7409
        %vm7630 = vcmp.eq.f32.partialorder %v7629, 8.507059e+37
        %v7631 = vand.u32 %v7409, 2147483648
        %v7632 = vor.u32 1.1754944e-38, %v7631
        %v7633 = vsel %vm7630, %v7632, %v7628
        %v7634 = vmul.f32 %v7289, %v7633
        %v7635 = vmul.f32 %v7291, %v7633
        %v7636 = vrcp.pop %v7412
        %v7637 = vmul.f32 %v7412, %v7636
        %v7638 = vsub.f32 1.0, %v7637
        %v7639 = vmul.f32 %v7636, %v7638
        %v7640 = vadd.f32 %v7636, %v7639
        %vm7641 = vweird.f32 %v7412
        %vm7642 = vweird.f32 %v7636
        %vm7643 = vmor %vm7641, %vm7642
        %v7644 = vsel %vm7643, %v7636, %v7640
        %v7645 = vand.u32 2147483647, %v7412
        %vm7646 = vcmp.eq.f32.partialorder %v7645, 8.507059e+37
        %v7647 = vand.u32 %v7412, 2147483648
        %v7648 = vor.u32 1.1754944e-38, %v7647
        %v7649 = vsel %vm7646, %v7648, %v7644
        %v7650 = vmul.f32 %v7293, %v7649
        %v7651 = vmul.f32 %v7295, %v7649
        %v7652 = vrcp.pop %v7415
        %v7653 = vmul.f32 %v7415, %v7652
        %v7654 = vsub.f32 1.0, %v7653
        %v7655 = vmul.f32 %v7652, %v7654
        %v7656 = vadd.f32 %v7652, %v7655
        %vm7657 = vweird.f32 %v7415
        %vm7658 = vweird.f32 %v7652
        %vm7659 = vmor %vm7657, %vm7658
        %v7660 = vsel %vm7659, %v7652, %v7656
        %v7661 = vand.u32 2147483647, %v7415
        %vm7662 = vcmp.eq.f32.partialorder %v7661, 8.507059e+37
        %v7663 = vand.u32 %v7415, 2147483648
        %v7664 = vor.u32 1.1754944e-38, %v7663
        %v7665 = vsel %vm7662, %v7664, %v7660
        %v7666 = vmul.f32 %v7297, %v7665
        %v7667 = vmul.f32 %v7299, %v7665
        %v7668 = vrcp.pop %v7418
        %v7669 = vmul.f32 %v7418, %v7668
        %v7670 = vsub.f32 1.0, %v7669
        %v7671 = vmul.f32 %v7668, %v7670
        %v7672 = vadd.f32 %v7668, %v7671
        %vm7673 = vweird.f32 %v7418
        %vm7674 = vweird.f32 %v7668
        %vm7675 = vmor %vm7673, %vm7674
        %v7676 = vsel %vm7675, %v7668, %v7672
        %v7677 = vand.u32 2147483647, %v7418
        %vm7678 = vcmp.eq.f32.partialorder %v7677, 8.507059e+37
        %v7679 = vand.u32 %v7418, 2147483648
        %v7680 = vor.u32 1.1754944e-38, %v7679
        %v7681 = vsel %vm7678, %v7680, %v7676
        %v7682 = vmul.f32 %v7301, %v7681
        %v7683 = vmul.f32 %v7303, %v7681
        %v7684 = vrcp.pop %v7421
        %v7685 = vmul.f32 %v7421, %v7684
        %v7686 = vsub.f32 1.0, %v7685
        %v7687 = vmul.f32 %v7684, %v7686
        %v7688 = vadd.f32 %v7684, %v7687
        %vm7689 = vweird.f32 %v7421
        %vm7690 = vweird.f32 %v7684
        %vm7691 = vmor %vm7689, %vm7690
        %v7692 = vsel %vm7691, %v7684, %v7688
        %v7693 = vand.u32 2147483647, %v7421
        %vm7694 = vcmp.eq.f32.partialorder %v7693, 8.507059e+37
        %v7695 = vand.u32 %v7421, 2147483648
        %v7696 = vor.u32 1.1754944e-38, %v7695
        %v7697 = vsel %vm7694, %v7696, %v7692
        %v7698 = vmul.f32 %v7305, %v7697
        %v7699 = vmul.f32 %v7307, %v7697
        %v7700 = vrcp.pop %v7424
        %v7701 = vmul.f32 %v7424, %v7700
        %v7702 = vsub.f32 1.0, %v7701
        %v7703 = vmul.f32 %v7700, %v7702
        %v7704 = vadd.f32 %v7700, %v7703
        %vm7705 = vweird.f32 %v7424
        %vm7706 = vweird.f32 %v7700
        %vm7707 = vmor %vm7705, %vm7706
        %v7708 = vsel %vm7707, %v7700, %v7704
        %v7709 = vand.u32 2147483647, %v7424
        %vm7710 = vcmp.eq.f32.partialorder %v7709, 8.507059e+37
        %v7711 = vand.u32 %v7424, 2147483648
        %v7712 = vor.u32 1.1754944e-38, %v7711
        %v7713 = vsel %vm7710, %v7712, %v7708
        %v7714 = vmul.f32 %v7309, %v7713
        %v7715 = vmul.f32 %v7311, %v7713
        %v7716 = vrcp.pop %v7427
        %v7717 = vmul.f32 %v7427, %v7716
        %v7718 = vsub.f32 1.0, %v7717
        %v7719 = vmul.f32 %v7716, %v7718
        %v7720 = vadd.f32 %v7716, %v7719
        %vm7721 = vweird.f32 %v7427
        %vm7722 = vweird.f32 %v7716
        %vm7723 = vmor %vm7721, %vm7722
        %v7724 = vsel %vm7723, %v7716, %v7720
        %v7725 = vand.u32 2147483647, %v7427
        %vm7726 = vcmp.eq.f32.partialorder %v7725, 8.507059e+37
        %v7727 = vand.u32 %v7427, 2147483648
        %v7728 = vor.u32 1.1754944e-38, %v7727
        %v7729 = vsel %vm7726, %v7728, %v7724
        %v7730 = vmul.f32 %v7313, %v7729
        %v7731 = vmul.f32 %v7315, %v7729
        %v7732 = vrcp.pop %v7430
        %v7733 = vmul.f32 %v7430, %v7732
        %v7734 = vsub.f32 1.0, %v7733
        %v7735 = vmul.f32 %v7732, %v7734
        %v7736 = vadd.f32 %v7732, %v7735
        %vm7737 = vweird.f32 %v7430
        %vm7738 = vweird.f32 %v7732
        %vm7739 = vmor %vm7737, %vm7738
        %v7740 = vsel %vm7739, %v7732, %v7736
        %v7741 = vand.u32 2147483647, %v7430
        %vm7742 = vcmp.eq.f32.partialorder %v7741, 8.507059e+37
        %v7743 = vand.u32 %v7430, 2147483648
        %v7744 = vor.u32 1.1754944e-38, %v7743
        %v7745 = vsel %vm7742, %v7744, %v7740
        %v7746 = vmul.f32 %v7317, %v7745
        %v7747 = vmul.f32 %v7319, %v7745
        %v7748 = vrcp.pop %v7433
        %v7749 = vmul.f32 %v7433, %v7748
        %v7750 = vsub.f32 1.0, %v7749
        %v7751 = vmul.f32 %v7748, %v7750
        %v7752 = vadd.f32 %v7748, %v7751
        %vm7753 = vweird.f32 %v7433
        %vm7754 = vweird.f32 %v7748
        %vm7755 = vmor %vm7753, %vm7754
        %v7756 = vsel %vm7755, %v7748, %v7752
        %v7757 = vand.u32 2147483647, %v7433
        %vm7758 = vcmp.eq.f32.partialorder %v7757, 8.507059e+37
        %v7759 = vand.u32 %v7433, 2147483648
        %v7760 = vor.u32 1.1754944e-38, %v7759
        %v7761 = vsel %vm7758, %v7760, %v7756
        %v7762 = vmul.f32 %v7321, %v7761
        %v7763 = vmul.f32 %v7323, %v7761
        %v7764 = vrcp.pop %v7436
        %v7765 = vmul.f32 %v7436, %v7764
        %v7766 = vsub.f32 1.0, %v7765
        %v7767 = vmul.f32 %v7764, %v7766
        %v7768 = vadd.f32 %v7764, %v7767
        %vm7769 = vweird.f32 %v7436
        %vm7770 = vweird.f32 %v7764
        %vm7771 = vmor %vm7769, %vm7770
        %v7772 = vsel %vm7771, %v7764, %v7768
        %v7773 = vand.u32 2147483647, %v7436
        %vm7774 = vcmp.eq.f32.partialorder %v7773, 8.507059e+37
        %v7775 = vand.u32 %v7436, 2147483648
        %v7776 = vor.u32 1.1754944e-38, %v7775
        %v7777 = vsel %vm7774, %v7776, %v7772
        %v7778 = vmul.f32 %v7325, %v7777
        %v7779 = vmul.f32 %v7327, %v7777
        %v7780 = vrcp.pop %v7439
        %v7781 = vmul.f32 %v7439, %v7780
        %v7782 = vsub.f32 1.0, %v7781
        %v7783 = vmul.f32 %v7780, %v7782
        %v7784 = vadd.f32 %v7780, %v7783
        %vm7785 = vweird.f32 %v7439
        %vm7786 = vweird.f32 %v7780
        %vm7787 = vmor %vm7785, %vm7786
        %v7788 = vsel %vm7787, %v7780, %v7784
        %v7789 = vand.u32 2147483647, %v7439
        %vm7790 = vcmp.eq.f32.partialorder %v7789, 8.507059e+37
        %v7791 = vand.u32 %v7439, 2147483648
        %v7792 = vor.u32 1.1754944e-38, %v7791
        %v7793 = vsel %vm7790, %v7792, %v7788
        %v7794 = vmul.f32 %v7329, %v7793
        %v7795 = vmul.f32 %v7331, %v7793
        %v7796 = vrcp.pop %v7442
        %v7797 = vmul.f32 %v7442, %v7796
        %v7798 = vsub.f32 1.0, %v7797
        %v7799 = vmul.f32 %v7796, %v7798
        %v7800 = vadd.f32 %v7796, %v7799
        %vm7801 = vweird.f32 %v7442
        %vm7802 = vweird.f32 %v7796
        %vm7803 = vmor %vm7801, %vm7802
        %v7804 = vsel %vm7803, %v7796, %v7800
        %v7805 = vand.u32 2147483647, %v7442
        %vm7806 = vcmp.eq.f32.partialorder %v7805, 8.507059e+37
        %v7807 = vand.u32 %v7442, 2147483648
        %v7808 = vor.u32 1.1754944e-38, %v7807
        %v7809 = vsel %vm7806, %v7808, %v7804
        %v7810 = vmul.f32 %v7333, %v7809
        %v7811 = vmul.f32 %v7335, %v7809
        %v7812 = vrcp.pop %v7445
        %v7813 = vmul.f32 %v7445, %v7812
        %v7814 = vsub.f32 1.0, %v7813
        %v7815 = vmul.f32 %v7812, %v7814
        %v7816 = vadd.f32 %v7812, %v7815
        %vm7817 = vweird.f32 %v7445
        %vm7818 = vweird.f32 %v7812
        %vm7819 = vmor %vm7817, %vm7818
        %v7820 = vsel %vm7819, %v7812, %v7816
        %v7821 = vand.u32 2147483647, %v7445
        %vm7822 = vcmp.eq.f32.partialorder %v7821, 8.507059e+37
        %v7823 = vand.u32 %v7445, 2147483648
        %v7824 = vor.u32 1.1754944e-38, %v7823
        %v7825 = vsel %vm7822, %v7824, %v7820
        %v7826 = vmul.f32 %v7337, %v7825
        %v7827 = vmul.f32 %v7339, %v7825
        %v7828 = vrcp.pop %v7448
        %v7829 = vmul.f32 %v7448, %v7828
        %v7830 = vsub.f32 1.0, %v7829
        %v7831 = vmul.f32 %v7828, %v7830
        %v7832 = vadd.f32 %v7828, %v7831
        %vm7833 = vweird.f32 %v7448
        %vm7834 = vweird.f32 %v7828
        %vm7835 = vmor %vm7833, %vm7834
        %v7836 = vsel %vm7835, %v7828, %v7832
        %v7837 = vand.u32 2147483647, %v7448
        %vm7838 = vcmp.eq.f32.partialorder %v7837, 8.507059e+37
        %v7839 = vand.u32 %v7448, 2147483648
        %v7840 = vor.u32 1.1754944e-38, %v7839
        %v7841 = vsel %vm7838, %v7840, %v7836
        %v7842 = vmul.f32 %v7341, %v7841
        %v7843 = vmul.f32 %v7343, %v7841
        %v7844 = vrcp.pop %v7451
        %v7845 = vmul.f32 %v7451, %v7844
        %v7846 = vsub.f32 1.0, %v7845
        %v7847 = vmul.f32 %v7844, %v7846
        %v7848 = vadd.f32 %v7844, %v7847
        %vm7849 = vweird.f32 %v7451
        %vm7850 = vweird.f32 %v7844
        %vm7851 = vmor %vm7849, %vm7850
        %v7852 = vsel %vm7851, %v7844, %v7848
        %v7853 = vand.u32 2147483647, %v7451
        %vm7854 = vcmp.eq.f32.partialorder %v7853, 8.507059e+37
        %v7855 = vand.u32 %v7451, 2147483648
        %v7856 = vor.u32 1.1754944e-38, %v7855
        %v7857 = vsel %vm7854, %v7856, %v7852
        %v7858 = vmul.f32 %v7345, %v7857
        %v7859 = vmul.f32 %v7347, %v7857
        %v7860 = vrcp.pop %v7454
        %v7861 = vmul.f32 %v7454, %v7860
        %v7862 = vsub.f32 1.0, %v7861
        %v7863 = vmul.f32 %v7860, %v7862
        %v7864 = vadd.f32 %v7860, %v7863
        %vm7865 = vweird.f32 %v7454
        %vm7866 = vweird.f32 %v7860
        %vm7867 = vmor %vm7865, %vm7866
        %v7868 = vsel %vm7867, %v7860, %v7864
        %v7869 = vand.u32 2147483647, %v7454
        %vm7870 = vcmp.eq.f32.partialorder %v7869, 8.507059e+37
        %v7871 = vand.u32 %v7454, 2147483648
        %v7872 = vor.u32 1.1754944e-38, %v7871
        %v7873 = vsel %vm7870, %v7872, %v7868
        %v7874 = vmul.f32 %v7349, %v7873
        %v7875 = vmul.f32 %v7351, %v7873
        %v7876 = vrcp.pop %v7457
        %v7877 = vmul.f32 %v7457, %v7876
        %v7878 = vsub.f32 1.0, %v7877
        %v7879 = vmul.f32 %v7876, %v7878
        %v7880 = vadd.f32 %v7876, %v7879
        %vm7881 = vweird.f32 %v7457
        %vm7882 = vweird.f32 %v7876
        %vm7883 = vmor %vm7881, %vm7882
        %v7884 = vsel %vm7883, %v7876, %v7880
        %v7885 = vand.u32 2147483647, %v7457
        %vm7886 = vcmp.eq.f32.partialorder %v7885, 8.507059e+37
        %v7887 = vand.u32 %v7457, 2147483648
        %v7888 = vor.u32 1.1754944e-38, %v7887
        %v7889 = vsel %vm7886, %v7888, %v7884
        %v7890 = vmul.f32 %v7353, %v7889
        %v7891 = vmul.f32 %v7355, %v7889
        %v7892 = vrcp.pop %v7460
        %v7893 = vmul.f32 %v7460, %v7892
        %v7894 = vsub.f32 1.0, %v7893
        %v7895 = vmul.f32 %v7892, %v7894
        %v7896 = vadd.f32 %v7892, %v7895
        %vm7897 = vweird.f32 %v7460
        %vm7898 = vweird.f32 %v7892
        %vm7899 = vmor %vm7897, %vm7898
        %v7900 = vsel %vm7899, %v7892, %v7896
        %v7901 = vand.u32 2147483647, %v7460
        %vm7902 = vcmp.eq.f32.partialorder %v7901, 8.507059e+37
        %v7903 = vand.u32 %v7460, 2147483648
        %v7904 = vor.u32 1.1754944e-38, %v7903
        %v7905 = vsel %vm7902, %v7904, %v7900
        %v7906 = vmul.f32 %v7357, %v7905
        %v7907 = vmul.f32 %v7359, %v7905
        %v7908 = vrcp.pop %v7463
        %v7909 = vmul.f32 %v7463, %v7908
        %v7910 = vsub.f32 1.0, %v7909
        %v7911 = vmul.f32 %v7908, %v7910
        %v7912 = vadd.f32 %v7908, %v7911
        %vm7913 = vweird.f32 %v7463
        %vm7914 = vweird.f32 %v7908
        %vm7915 = vmor %vm7913, %vm7914
        %v7916 = vsel %vm7915, %v7908, %v7912
        %v7917 = vand.u32 2147483647, %v7463
        %vm7918 = vcmp.eq.f32.partialorder %v7917, 8.507059e+37
        %v7919 = vand.u32 %v7463, 2147483648
        %v7920 = vor.u32 1.1754944e-38, %v7919
        %v7921 = vsel %vm7918, %v7920, %v7916
        %v7922 = vmul.f32 %v7361, %v7921
        %v7923 = vmul.f32 %v7363, %v7921
        %v7924 = vrcp.pop %v7466
        %v7925 = vmul.f32 %v7466, %v7924
        %v7926 = vsub.f32 1.0, %v7925
        %v7927 = vmul.f32 %v7924, %v7926
        %v7928 = vadd.f32 %v7924, %v7927
        %vm7929 = vweird.f32 %v7466
        %vm7930 = vweird.f32 %v7924
        %vm7931 = vmor %vm7929, %vm7930
        %v7932 = vsel %vm7931, %v7924, %v7928
        %v7933 = vand.u32 2147483647, %v7466
        %vm7934 = vcmp.eq.f32.partialorder %v7933, 8.507059e+37
        %v7935 = vand.u32 %v7466, 2147483648
        %v7936 = vor.u32 1.1754944e-38, %v7935
        %v7937 = vsel %vm7934, %v7936, %v7932
        %v7938 = vmul.f32 %v7365, %v7937
        %v7939 = vmul.f32 %v7367, %v7937
        %v7940 = vrcp.pop %v7469
        %v7941 = vmul.f32 %v7469, %v7940
        %v7942 = vsub.f32 1.0, %v7941
        %v7943 = vmul.f32 %v7940, %v7942
        %v7944 = vadd.f32 %v7940, %v7943
        %vm7945 = vweird.f32 %v7469
        %vm7946 = vweird.f32 %v7940
        %vm7947 = vmor %vm7945, %vm7946
        %v7948 = vsel %vm7947, %v7940, %v7944
        %v7949 = vand.u32 2147483647, %v7469
        %vm7950 = vcmp.eq.f32.partialorder %v7949, 8.507059e+37
        %v7951 = vand.u32 %v7469, 2147483648
        %v7952 = vor.u32 1.1754944e-38, %v7951
        %v7953 = vsel %vm7950, %v7952, %v7948
        %v7954 = vmul.f32 %v7369, %v7953
        %v7955 = vmul.f32 %v7371, %v7953
        %v7956 = vrcp.pop %v7472
        %v7957 = vmul.f32 %v7472, %v7956
        %v7958 = vsub.f32 1.0, %v7957
        %v7959 = vmul.f32 %v7956, %v7958
        %v7960 = vadd.f32 %v7956, %v7959
        %vm7961 = vweird.f32 %v7472
        %vm7962 = vweird.f32 %v7956
        %vm7963 = vmor %vm7961, %vm7962
        %v7964 = vsel %vm7963, %v7956, %v7960
        %v7965 = vand.u32 2147483647, %v7472
        %vm7966 = vcmp.eq.f32.partialorder %v7965, 8.507059e+37
        %v7967 = vand.u32 %v7472, 2147483648
        %v7968 = vor.u32 1.1754944e-38, %v7967
        %v7969 = vsel %vm7966, %v7968, %v7964
        %v7970 = vmul.f32 %v7373, %v7969
        %v7971 = vmul.f32 %v7375, %v7969
        %v7972 = vrcp.pop %v7475
        %v7973 = vmul.f32 %v7475, %v7972
        %v7974 = vsub.f32 1.0, %v7973
        %v7975 = vmul.f32 %v7972, %v7974
        %v7976 = vadd.f32 %v7972, %v7975
        %vm7977 = vweird.f32 %v7475
        %vm7978 = vweird.f32 %v7972
        %vm7979 = vmor %vm7977, %vm7978
        %v7980 = vsel %vm7979, %v7972, %v7976
        %v7981 = vand.u32 2147483647, %v7475
        %vm7982 = vcmp.eq.f32.partialorder %v7981, 8.507059e+37
        %v7983 = vand.u32 %v7475, 2147483648
        %v7984 = vor.u32 1.1754944e-38, %v7983
        %v7985 = vsel %vm7982, %v7984, %v7980
        %v7986 = vmul.f32 %v7377, %v7985
        %v7987 = vmul.f32 %v7379, %v7985
        %7988 = vrot.lane.b32.xlu0 %v527, 40
        %v7989 = vpop.permute.xlu0 %7988
        %7990 = vrot.lane.b32.xlu0 %v530, 40
        %v7991 = vpop.permute.xlu0 %7990
        %7992 = vrot.lane.b32.xlu0 %v533, 40
        %v7993 = vpop.permute.xlu0 %7992
        %7994 = vrot.lane.b32.xlu0 %v536, 40
        %v7995 = vpop.permute.xlu0 %7994
        %7996 = vrot.lane.b32.xlu0 %v539, 40
        %v7997 = vpop.permute.xlu0 %7996
        %7998 = vrot.lane.b32.xlu0 %v542, 40
        %v7999 = vpop.permute.xlu0 %7998
        %8000 = vrot.lane.b32.xlu0 %v545, 40
        %v8001 = vpop.permute.xlu0 %8000
        %8002 = vrot.lane.b32.xlu0 %v548, 40
        %v8003 = vpop.permute.xlu0 %8002
        %8004 = vrot.lane.b32.xlu0 %v551, 40
        %v8005 = vpop.permute.xlu0 %8004
        %8006 = vrot.lane.b32.xlu0 %v554, 40
        %v8007 = vpop.permute.xlu0 %8006
        %8008 = vrot.lane.b32.xlu0 %v557, 40
        %v8009 = vpop.permute.xlu0 %8008
        %8010 = vrot.lane.b32.xlu0 %v560, 40
        %v8011 = vpop.permute.xlu0 %8010
        %8012 = vrot.lane.b32.xlu0 %v563, 40
        %v8013 = vpop.permute.xlu0 %8012
        %8014 = vrot.lane.b32.xlu0 %v566, 40
        %v8015 = vpop.permute.xlu0 %8014
        %8016 = vrot.lane.b32.xlu0 %v569, 40
        %v8017 = vpop.permute.xlu0 %8016
        %8018 = vrot.lane.b32.xlu0 %v572, 40
        %v8019 = vpop.permute.xlu0 %8018
        %8020 = vrot.lane.b32.xlu0 %v575, 40
        %v8021 = vpop.permute.xlu0 %8020
        %8022 = vrot.lane.b32.xlu0 %v578, 40
        %v8023 = vpop.permute.xlu0 %8022
        %8024 = vrot.lane.b32.xlu0 %v581, 40
        %v8025 = vpop.permute.xlu0 %8024
        %8026 = vrot.lane.b32.xlu0 %v584, 40
        %v8027 = vpop.permute.xlu0 %8026
        %8028 = vrot.lane.b32.xlu0 %v587, 40
        %v8029 = vpop.permute.xlu0 %8028
        %8030 = vrot.lane.b32.xlu0 %v590, 40
        %v8031 = vpop.permute.xlu0 %8030
        %8032 = vrot.lane.b32.xlu0 %v593, 40
        %v8033 = vpop.permute.xlu0 %8032
        %8034 = vrot.lane.b32.xlu0 %v596, 40
        %v8035 = vpop.permute.xlu0 %8034
        %8036 = vrot.lane.b32.xlu0 %v599, 40
        %v8037 = vpop.permute.xlu0 %8036
        %8038 = vrot.lane.b32.xlu0 %v602, 40
        %v8039 = vpop.permute.xlu0 %8038
        %8040 = vrot.lane.b32.xlu0 %v605, 40
        %v8041 = vpop.permute.xlu0 %8040
        %8042 = vrot.lane.b32.xlu0 %v608, 40
        %v8043 = vpop.permute.xlu0 %8042
        %8044 = vrot.lane.b32.xlu0 %v611, 40
        %v8045 = vpop.permute.xlu0 %8044
        %8046 = vrot.lane.b32.xlu0 %v614, 40
        %v8047 = vpop.permute.xlu0 %8046
        %8048 = vrot.lane.b32.xlu0 %v617, 40
        %v8049 = vpop.permute.xlu0 %8048
        %8050 = vrot.lane.b32.xlu0 %v620, 40
        %v8051 = vpop.permute.xlu0 %8050
        %8084 = vmatpush.msra.mxu0 %v8019
        %8085 = vmatpush.msra.mxu0 %v8017
        %8086 = vmatpush.msra.mxu0 %v8015
        %8087 = vmatpush.msra.mxu0 %v8013
        %8088 = vmatpush.msra.mxu0 %v8011
        %8089 = vmatpush.msra.mxu0 %v8009
        %8090 = vmatpush.msra.mxu0 %v8007
        %8091 = vmatpush.msra.mxu0 %v8005
        %8092 = vmatpush.msra.mxu0 %v8003
        %8093 = vmatpush.msra.mxu0 %v8001
        %8094 = vmatpush.msra.mxu0 %v7999
        %8095 = vmatpush.msra.mxu0 %v7997
        %8096 = vmatpush.msra.mxu0 %v7995
        %8097 = vmatpush.msra.mxu0 %v7993
        %8098 = vmatpush.msra.mxu0 %v7991
        %8099 = vmatpush.msra.mxu0 %v7989
        %8100 = vmatmul.f32.gmra.mxu0 %v7490
        %v8101 = vpop.f32.mrf.mxu0
        %v8102 = vadd.f32 0.0, %v8101
        %8103 = vmatmul.f32.gmra.mxu0 %v7506
        %v8104 = vpop.f32.mrf.mxu0
        %v8105 = vadd.f32 0.0, %v8104
        %8106 = vmatmul.f32.gmra.mxu0 %v7522
        %v8107 = vpop.f32.mrf.mxu0
        %v8108 = vadd.f32 0.0, %v8107
        %8109 = vmatmul.f32.gmra.mxu0 %v7538
        %v8110 = vpop.f32.mrf.mxu0
        %v8111 = vadd.f32 0.0, %v8110
        %8112 = vmatmul.f32.gmra.mxu0 %v7554
        %v8113 = vpop.f32.mrf.mxu0
        %v8114 = vadd.f32 0.0, %v8113
        %8115 = vmatmul.f32.gmra.mxu0 %v7570
        %v8116 = vpop.f32.mrf.mxu0
        %v8117 = vadd.f32 0.0, %v8116
        %8118 = vmatmul.f32.gmra.mxu0 %v7586
        %v8119 = vpop.f32.mrf.mxu0
        %v8120 = vadd.f32 0.0, %v8119
        %8121 = vmatmul.f32.gmra.mxu0 %v7602
        %v8122 = vpop.f32.mrf.mxu0
        %v8123 = vadd.f32 0.0, %v8122
        %8124 = vmatmul.f32.gmra.mxu0 %v7618
        %v8125 = vpop.f32.mrf.mxu0
        %v8126 = vadd.f32 0.0, %v8125
        %8127 = vmatmul.f32.gmra.mxu0 %v7634
        %v8128 = vpop.f32.mrf.mxu0
        %v8129 = vadd.f32 0.0, %v8128
        %8130 = vmatmul.f32.gmra.mxu0 %v7650
        %v8131 = vpop.f32.mrf.mxu0
        %v8132 = vadd.f32 0.0, %v8131
        %8133 = vmatmul.f32.gmra.mxu0 %v7666
        %v8134 = vpop.f32.mrf.mxu0
        %v8135 = vadd.f32 0.0, %v8134
        %8136 = vmatmul.f32.gmra.mxu0 %v7682
        %v8137 = vpop.f32.mrf.mxu0
        %v8138 = vadd.f32 0.0, %v8137
        %8139 = vmatmul.f32.gmra.mxu0 %v7698
        %v8140 = vpop.f32.mrf.mxu0
        %v8141 = vadd.f32 0.0, %v8140
        %8142 = vmatmul.f32.gmra.mxu0 %v7714
        %v8143 = vpop.f32.mrf.mxu0
        %v8144 = vadd.f32 0.0, %v8143
        %8145 = vmatmul.f32.gmra.mxu0 %v7730
        %v8146 = vpop.f32.mrf.mxu0
        %v8147 = vadd.f32 0.0, %v8146
        %8148 = vmatmul.f32.gmra.mxu0 %v7746
        %v8149 = vpop.f32.mrf.mxu0
        %v8150 = vadd.f32 0.0, %v8149
        %8151 = vmatmul.f32.gmra.mxu0 %v7762
        %v8152 = vpop.f32.mrf.mxu0
        %v8153 = vadd.f32 0.0, %v8152
        %8154 = vmatmul.f32.gmra.mxu0 %v7778
        %v8155 = vpop.f32.mrf.mxu0
        %v8156 = vadd.f32 0.0, %v8155
        %8157 = vmatmul.f32.gmra.mxu0 %v7794
        %v8158 = vpop.f32.mrf.mxu0
        %v8159 = vadd.f32 0.0, %v8158
        %8160 = vmatmul.f32.gmra.mxu0 %v7810
        %v8161 = vpop.f32.mrf.mxu0
        %v8162 = vadd.f32 0.0, %v8161
        %8163 = vmatmul.f32.gmra.mxu0 %v7826
        %v8164 = vpop.f32.mrf.mxu0
        %v8165 = vadd.f32 0.0, %v8164
        %8166 = vmatmul.f32.gmra.mxu0 %v7842
        %v8167 = vpop.f32.mrf.mxu0
        %v8168 = vadd.f32 0.0, %v8167
        %8169 = vmatmul.f32.gmra.mxu0 %v7858
        %v8170 = vpop.f32.mrf.mxu0
        %v8171 = vadd.f32 0.0, %v8170
        %8172 = vmatmul.f32.gmra.mxu0 %v7874
        %v8173 = vpop.f32.mrf.mxu0
        %v8174 = vadd.f32 0.0, %v8173
        %8175 = vmatmul.f32.gmra.mxu0 %v7890
        %v8176 = vpop.f32.mrf.mxu0
        %v8177 = vadd.f32 0.0, %v8176
        %8178 = vmatmul.f32.gmra.mxu0 %v7906
        %v8179 = vpop.f32.mrf.mxu0
        %v8180 = vadd.f32 0.0, %v8179
        %8181 = vmatmul.f32.gmra.mxu0 %v7922
        %v8182 = vpop.f32.mrf.mxu0
        %v8183 = vadd.f32 0.0, %v8182
        %8184 = vmatmul.f32.gmra.mxu0 %v7938
        %v8185 = vpop.f32.mrf.mxu0
        %v8186 = vadd.f32 0.0, %v8185
        %8187 = vmatmul.f32.gmra.mxu0 %v7954
        %v8188 = vpop.f32.mrf.mxu0
        %v8189 = vadd.f32 0.0, %v8188
        %8190 = vmatmul.f32.gmra.mxu0 %v7970
        %v8191 = vpop.f32.mrf.mxu0
        %v8192 = vadd.f32 0.0, %v8191
        %8193 = vmatmul.f32.gmra.mxu0 %v7986
        %v8194 = vpop.f32.mrf.mxu0
        %v8195 = vadd.f32 0.0, %v8194
        %8196 = vdwg.mxu0
        %8197 = vmatpush.msra.mxu0 %v8051
        %8198 = vmatpush.msra.mxu0 %v8049
        %8199 = vmatpush.msra.mxu0 %v8047
        %8200 = vmatpush.msra.mxu0 %v8045
        %8201 = vmatpush.msra.mxu0 %v8043
        %8202 = vmatpush.msra.mxu0 %v8041
        %8203 = vmatpush.msra.mxu0 %v8039
        %8204 = vmatpush.msra.mxu0 %v8037
        %8205 = vmatpush.msra.mxu0 %v8035
        %8206 = vmatpush.msra.mxu0 %v8033
        %8207 = vmatpush.msra.mxu0 %v8031
        %8208 = vmatpush.msra.mxu0 %v8029
        %8209 = vmatpush.msra.mxu0 %v8027
        %8210 = vmatpush.msra.mxu0 %v8025
        %8211 = vmatpush.msra.mxu0 %v8023
        %8212 = vmatpush.msra.mxu0 %v8021
        %8213 = vmatmul.f32.gmra.mxu0 %v7491
        %v8214 = vpop.f32.mrf.mxu0
        %v8215 = vadd.f32 %v8102, %v8214
        %8216 = vmatmul.f32.gmra.mxu0 %v7507
        %v8217 = vpop.f32.mrf.mxu0
        %v8218 = vadd.f32 %v8105, %v8217
        %8219 = vmatmul.f32.gmra.mxu0 %v7523
        %v8220 = vpop.f32.mrf.mxu0
        %v8221 = vadd.f32 %v8108, %v8220
        %8222 = vmatmul.f32.gmra.mxu0 %v7539
        %v8223 = vpop.f32.mrf.mxu0
        %v8224 = vadd.f32 %v8111, %v8223
        %8225 = vmatmul.f32.gmra.mxu0 %v7555
        %v8226 = vpop.f32.mrf.mxu0
        %v8227 = vadd.f32 %v8114, %v8226
        %8228 = vmatmul.f32.gmra.mxu0 %v7571
        %v8229 = vpop.f32.mrf.mxu0
        %v8230 = vadd.f32 %v8117, %v8229
        %8231 = vmatmul.f32.gmra.mxu0 %v7587
        %v8232 = vpop.f32.mrf.mxu0
        %v8233 = vadd.f32 %v8120, %v8232
        %8234 = vmatmul.f32.gmra.mxu0 %v7603
        %v8235 = vpop.f32.mrf.mxu0
        %v8236 = vadd.f32 %v8123, %v8235
        %8237 = vmatmul.f32.gmra.mxu0 %v7619
        %v8238 = vpop.f32.mrf.mxu0
        %v8239 = vadd.f32 %v8126, %v8238
        %8240 = vmatmul.f32.gmra.mxu0 %v7635
        %v8241 = vpop.f32.mrf.mxu0
        %v8242 = vadd.f32 %v8129, %v8241
        %8243 = vmatmul.f32.gmra.mxu0 %v7651
        %v8244 = vpop.f32.mrf.mxu0
        %v8245 = vadd.f32 %v8132, %v8244
        %8246 = vmatmul.f32.gmra.mxu0 %v7667
        %v8247 = vpop.f32.mrf.mxu0
        %v8248 = vadd.f32 %v8135, %v8247
        %8249 = vmatmul.f32.gmra.mxu0 %v7683
        %v8250 = vpop.f32.mrf.mxu0
        %v8251 = vadd.f32 %v8138, %v8250
        %8252 = vmatmul.f32.gmra.mxu0 %v7699
        %v8253 = vpop.f32.mrf.mxu0
        %v8254 = vadd.f32 %v8141, %v8253
        %8255 = vmatmul.f32.gmra.mxu0 %v7715
        %v8256 = vpop.f32.mrf.mxu0
        %v8257 = vadd.f32 %v8144, %v8256
        %8258 = vmatmul.f32.gmra.mxu0 %v7731
        %v8259 = vpop.f32.mrf.mxu0
        %v8260 = vadd.f32 %v8147, %v8259
        %8261 = vmatmul.f32.gmra.mxu0 %v7747
        %v8262 = vpop.f32.mrf.mxu0
        %v8263 = vadd.f32 %v8150, %v8262
        %8264 = vmatmul.f32.gmra.mxu0 %v7763
        %v8265 = vpop.f32.mrf.mxu0
        %v8266 = vadd.f32 %v8153, %v8265
        %8267 = vmatmul.f32.gmra.mxu0 %v7779
        %v8268 = vpop.f32.mrf.mxu0
        %v8269 = vadd.f32 %v8156, %v8268
        %8270 = vmatmul.f32.gmra.mxu0 %v7795
        %v8271 = vpop.f32.mrf.mxu0
        %v8272 = vadd.f32 %v8159, %v8271
        %8273 = vmatmul.f32.gmra.mxu0 %v7811
        %v8274 = vpop.f32.mrf.mxu0
        %v8275 = vadd.f32 %v8162, %v8274
        %8276 = vmatmul.f32.gmra.mxu0 %v7827
        %v8277 = vpop.f32.mrf.mxu0
        %v8278 = vadd.f32 %v8165, %v8277
        %8279 = vmatmul.f32.gmra.mxu0 %v7843
        %v8280 = vpop.f32.mrf.mxu0
        %v8281 = vadd.f32 %v8168, %v8280
        %8282 = vmatmul.f32.gmra.mxu0 %v7859
        %v8283 = vpop.f32.mrf.mxu0
        %v8284 = vadd.f32 %v8171, %v8283
        %8285 = vmatmul.f32.gmra.mxu0 %v7875
        %v8286 = vpop.f32.mrf.mxu0
        %v8287 = vadd.f32 %v8174, %v8286
        %8288 = vmatmul.f32.gmra.mxu0 %v7891
        %v8289 = vpop.f32.mrf.mxu0
        %v8290 = vadd.f32 %v8177, %v8289
        %8291 = vmatmul.f32.gmra.mxu0 %v7907
        %v8292 = vpop.f32.mrf.mxu0
        %v8293 = vadd.f32 %v8180, %v8292
        %8294 = vmatmul.f32.gmra.mxu0 %v7923
        %v8295 = vpop.f32.mrf.mxu0
        %v8296 = vadd.f32 %v8183, %v8295
        %8297 = vmatmul.f32.gmra.mxu0 %v7939
        %v8298 = vpop.f32.mrf.mxu0
        %v8299 = vadd.f32 %v8186, %v8298
        %8300 = vmatmul.f32.gmra.mxu0 %v7955
        %v8301 = vpop.f32.mrf.mxu0
        %v8302 = vadd.f32 %v8189, %v8301
        %8303 = vmatmul.f32.gmra.mxu0 %v7971
        %v8304 = vpop.f32.mrf.mxu0
        %v8305 = vadd.f32 %v8192, %v8304
        %8306 = vmatmul.f32.gmra.mxu0 %v7987
        %v8307 = vpop.f32.mrf.mxu0
        %v8308 = vadd.f32 %v8195, %v8307
        %8309 = vdwg.mxu0
        %v8311 = vsel %vm722, %v8215, 0
        %v8314 = vsel %vm722, %v8218, 0
        %v8317 = vsel %vm722, %v8221, 0
        %v8320 = vsel %vm722, %v8224, 0
        %v8323 = vsel %vm722, %v8227, 0
        %v8326 = vsel %vm722, %v8230, 0
        %v8329 = vsel %vm722, %v8233, 0
        %v8332 = vsel %vm722, %v8236, 0
        %v8335 = vsel %vm722, %v8239, 0
        %v8338 = vsel %vm722, %v8242, 0
        %v8341 = vsel %vm722, %v8245, 0
        %v8344 = vsel %vm722, %v8248, 0
        %v8347 = vsel %vm722, %v8251, 0
        %v8350 = vsel %vm722, %v8254, 0
        %v8353 = vsel %vm722, %v8257, 0
        %v8356 = vsel %vm722, %v8260, 0
        %v8359 = vsel %vm722, %v8263, 0
        %v8362 = vsel %vm722, %v8266, 0
        %v8365 = vsel %vm722, %v8269, 0
        %v8368 = vsel %vm722, %v8272, 0
        %v8371 = vsel %vm722, %v8275, 0
        %v8374 = vsel %vm722, %v8278, 0
        %v8377 = vsel %vm722, %v8281, 0
        %v8380 = vsel %vm722, %v8284, 0
        %v8383 = vsel %vm722, %v8287, 0
        %v8386 = vsel %vm722, %v8290, 0
        %v8389 = vsel %vm722, %v8293, 0
        %v8392 = vsel %vm722, %v8296, 0
        %v8395 = vsel %vm722, %v8299, 0
        %v8398 = vsel %vm722, %v8302, 0
        %v8401 = vsel %vm722, %v8305, 0
        %v8404 = vsel %vm722, %v8308, 0
        %8406 = vmatpush.msra.mxu0 0.0
        %8407 = vmatpush.msra.mxu0 0.0
        %8408 = vmatpush.msra.mxu0 0.0
        %8409 = vmatpush.msra.mxu0 0.0
        %8410 = vmatpush.msra.mxu0 0.0
        %8411 = vmatpush.msra.mxu0 0.0
        %8412 = vmatpush.msra.mxu0 0.0
        %8413 = vmatpush.msra.mxu0 0.0
        %8414 = vmatpush.msra.mxu0 0.0
        %8415 = vmatpush.msra.mxu0 0.0
        %8416 = vmatpush.msra.mxu0 0.0
        %8417 = vmatpush.msra.mxu0 0.0
        %8418 = vmatpush.msra.mxu0 0.0
        %8419 = vmatpush.msra.mxu0 0.0
        %8420 = vmatpush.msra.mxu0 0.0
        %8421 = vmatpush.msra.mxu0 %v625
        %8422 = vmatmul.f32.gmra.mxu0 %v8311
        %v8423 = vpop.f32.mrf.mxu0
        %v8424 = vadd.f32 0.0, %v8423
        %8425 = vmatmul.f32.gmra.mxu0 %v8314
        %v8426 = vpop.f32.mrf.mxu0
        %v8427 = vadd.f32 0.0, %v8426
        %8428 = vmatmul.f32.gmra.mxu0 %v8317
        %v8429 = vpop.f32.mrf.mxu0
        %v8430 = vadd.f32 0.0, %v8429
        %8431 = vmatmul.f32.gmra.mxu0 %v8320
        %v8432 = vpop.f32.mrf.mxu0
        %v8433 = vadd.f32 0.0, %v8432
        %8434 = vmatmul.f32.gmra.mxu0 %v8323
        %v8435 = vpop.f32.mrf.mxu0
        %v8436 = vadd.f32 0.0, %v8435
        %8437 = vmatmul.f32.gmra.mxu0 %v8326
        %v8438 = vpop.f32.mrf.mxu0
        %v8439 = vadd.f32 0.0, %v8438
        %8440 = vmatmul.f32.gmra.mxu0 %v8329
        %v8441 = vpop.f32.mrf.mxu0
        %v8442 = vadd.f32 0.0, %v8441
        %8443 = vmatmul.f32.gmra.mxu0 %v8332
        %v8444 = vpop.f32.mrf.mxu0
        %v8445 = vadd.f32 0.0, %v8444
        %8446 = vmatmul.f32.gmra.mxu0 %v8335
        %v8447 = vpop.f32.mrf.mxu0
        %v8448 = vadd.f32 0.0, %v8447
        %8449 = vmatmul.f32.gmra.mxu0 %v8338
        %v8450 = vpop.f32.mrf.mxu0
        %v8451 = vadd.f32 0.0, %v8450
        %8452 = vmatmul.f32.gmra.mxu0 %v8341
        %v8453 = vpop.f32.mrf.mxu0
        %v8454 = vadd.f32 0.0, %v8453
        %8455 = vmatmul.f32.gmra.mxu0 %v8344
        %v8456 = vpop.f32.mrf.mxu0
        %v8457 = vadd.f32 0.0, %v8456
        %8458 = vmatmul.f32.gmra.mxu0 %v8347
        %v8459 = vpop.f32.mrf.mxu0
        %v8460 = vadd.f32 0.0, %v8459
        %8461 = vmatmul.f32.gmra.mxu0 %v8350
        %v8462 = vpop.f32.mrf.mxu0
        %v8463 = vadd.f32 0.0, %v8462
        %8464 = vmatmul.f32.gmra.mxu0 %v8353
        %v8465 = vpop.f32.mrf.mxu0
        %v8466 = vadd.f32 0.0, %v8465
        %8467 = vmatmul.f32.gmra.mxu0 %v8356
        %v8468 = vpop.f32.mrf.mxu0
        %v8469 = vadd.f32 0.0, %v8468
        %8470 = vmatmul.f32.gmra.mxu0 %v8359
        %v8471 = vpop.f32.mrf.mxu0
        %v8472 = vadd.f32 0.0, %v8471
        %8473 = vmatmul.f32.gmra.mxu0 %v8362
        %v8474 = vpop.f32.mrf.mxu0
        %v8475 = vadd.f32 0.0, %v8474
        %8476 = vmatmul.f32.gmra.mxu0 %v8365
        %v8477 = vpop.f32.mrf.mxu0
        %v8478 = vadd.f32 0.0, %v8477
        %8479 = vmatmul.f32.gmra.mxu0 %v8368
        %v8480 = vpop.f32.mrf.mxu0
        %v8481 = vadd.f32 0.0, %v8480
        %8482 = vmatmul.f32.gmra.mxu0 %v8371
        %v8483 = vpop.f32.mrf.mxu0
        %v8484 = vadd.f32 0.0, %v8483
        %8485 = vmatmul.f32.gmra.mxu0 %v8374
        %v8486 = vpop.f32.mrf.mxu0
        %v8487 = vadd.f32 0.0, %v8486
        %8488 = vmatmul.f32.gmra.mxu0 %v8377
        %v8489 = vpop.f32.mrf.mxu0
        %v8490 = vadd.f32 0.0, %v8489
        %8491 = vmatmul.f32.gmra.mxu0 %v8380
        %v8492 = vpop.f32.mrf.mxu0
        %v8493 = vadd.f32 0.0, %v8492
        %8494 = vmatmul.f32.gmra.mxu0 %v8383
        %v8495 = vpop.f32.mrf.mxu0
        %v8496 = vadd.f32 0.0, %v8495
        %8497 = vmatmul.f32.gmra.mxu0 %v8386
        %v8498 = vpop.f32.mrf.mxu0
        %v8499 = vadd.f32 0.0, %v8498
        %8500 = vmatmul.f32.gmra.mxu0 %v8389
        %v8501 = vpop.f32.mrf.mxu0
        %v8502 = vadd.f32 0.0, %v8501
        %8503 = vmatmul.f32.gmra.mxu0 %v8392
        %v8504 = vpop.f32.mrf.mxu0
        %v8505 = vadd.f32 0.0, %v8504
        %8506 = vmatmul.f32.gmra.mxu0 %v8395
        %v8507 = vpop.f32.mrf.mxu0
        %v8508 = vadd.f32 0.0, %v8507
        %8509 = vmatmul.f32.gmra.mxu0 %v8398
        %v8510 = vpop.f32.mrf.mxu0
        %v8511 = vadd.f32 0.0, %v8510
        %8512 = vmatmul.f32.gmra.mxu0 %v8401
        %v8513 = vpop.f32.mrf.mxu0
        %v8514 = vadd.f32 0.0, %v8513
        %8515 = vmatmul.f32.gmra.mxu0 %v8404
        %v8516 = vpop.f32.mrf.mxu0
        %v8517 = vadd.f32 0.0, %v8516
        %8518 = vdwg.mxu0
        %v8519 = vadd.f32 %v6514, %v8424
        %v8520 = vadd.f32 %v6515, %v8427
        %v8521 = vadd.f32 %v6516, %v8430
        %v8522 = vadd.f32 %v6517, %v8433
        %v8523 = vadd.f32 %v6518, %v8436
        %v8524 = vadd.f32 %v6519, %v8439
        %v8525 = vadd.f32 %v6520, %v8442
        %v8526 = vadd.f32 %v6521, %v8445
        %v8527 = vadd.f32 %v6522, %v8448
        %v8528 = vadd.f32 %v6523, %v8451
        %v8529 = vadd.f32 %v6524, %v8454
        %v8530 = vadd.f32 %v6525, %v8457
        %v8531 = vadd.f32 %v6526, %v8460
        %v8532 = vadd.f32 %v6527, %v8463
        %v8533 = vadd.f32 %v6528, %v8466
        %v8534 = vadd.f32 %v6529, %v8469
        %v8535 = vadd.f32 %v6530, %v8472
        %v8536 = vadd.f32 %v6531, %v8475
        %v8537 = vadd.f32 %v6532, %v8478
        %v8538 = vadd.f32 %v6533, %v8481
        %v8539 = vadd.f32 %v6534, %v8484
        %v8540 = vadd.f32 %v6535, %v8487
        %v8541 = vadd.f32 %v6536, %v8490
        %v8542 = vadd.f32 %v6537, %v8493
        %v8543 = vadd.f32 %v6538, %v8496
        %v8544 = vadd.f32 %v6539, %v8499
        %v8545 = vadd.f32 %v6540, %v8502
        %v8546 = vadd.f32 %v6541, %v8505
        %v8547 = vadd.f32 %v6542, %v8508
        %v8548 = vadd.f32 %v6543, %v8511
        %v8549 = vadd.f32 %v6544, %v8514
        %v8550 = vadd.f32 %v6545, %v8517
        %v8551 = vld [vmem:[%s4] sm:$0x1]
        %v8553 = vperm.slane %v8551, 0
        %v8555 = vadd.f32 %v8519, %v8553
        %v8556 = vadd.f32 %v8520, %v8553
        %v8557 = vadd.f32 %v8521, %v8553
        %v8558 = vadd.f32 %v8522, %v8553
        %v8559 = vadd.f32 %v8523, %v8553
        %v8560 = vadd.f32 %v8524, %v8553
        %v8561 = vadd.f32 %v8525, %v8553
        %v8562 = vadd.f32 %v8526, %v8553
        %v8563 = vadd.f32 %v8527, %v8553
        %v8564 = vadd.f32 %v8528, %v8553
        %v8565 = vadd.f32 %v8529, %v8553
        %v8566 = vadd.f32 %v8530, %v8553
        %v8567 = vadd.f32 %v8531, %v8553
        %v8568 = vadd.f32 %v8532, %v8553
        %v8569 = vadd.f32 %v8533, %v8553
        %v8570 = vadd.f32 %v8534, %v8553
        %v8571 = vadd.f32 %v8535, %v8553
        %v8572 = vadd.f32 %v8536, %v8553
        %v8573 = vadd.f32 %v8537, %v8553
        %v8574 = vadd.f32 %v8538, %v8553
        %v8575 = vadd.f32 %v8539, %v8553
        %v8576 = vadd.f32 %v8540, %v8553
        %v8577 = vadd.f32 %v8541, %v8553
        %v8578 = vadd.f32 %v8542, %v8553
        %v8579 = vadd.f32 %v8543, %v8553
        %v8580 = vadd.f32 %v8544, %v8553
        %v8581 = vadd.f32 %v8545, %v8553
        %v8582 = vadd.f32 %v8546, %v8553
        %v8583 = vadd.f32 %v8547, %v8553
        %v8584 = vadd.f32 %v8548, %v8553
        %v8585 = vadd.f32 %v8549, %v8553
        %v8586 = vadd.f32 %v8550, %v8553
        %v8587 = vadd.f32 %v8555, %v356
        %v8588 = vadd.f32 %v8556, %v357
        %v8589 = vadd.f32 %v8557, %v358
        %v8590 = vadd.f32 %v8558, %v359
        %v8591 = vadd.f32 %v8559, %v360
        %v8592 = vadd.f32 %v8560, %v361
        %v8593 = vadd.f32 %v8561, %v362
        %v8594 = vadd.f32 %v8562, %v363
        %v8595 = vadd.f32 %v8563, %v364
        %v8596 = vadd.f32 %v8564, %v365
        %v8597 = vadd.f32 %v8565, %v366
        %v8598 = vadd.f32 %v8566, %v367
        %v8599 = vadd.f32 %v8567, %v368
        %v8600 = vadd.f32 %v8568, %v369
        %v8601 = vadd.f32 %v8569, %v370
        %v8602 = vadd.f32 %v8570, %v371
        %v8603 = vadd.f32 %v8571, %v388
        %v8604 = vadd.f32 %v8572, %v389
        %v8605 = vadd.f32 %v8573, %v390
        %v8606 = vadd.f32 %v8574, %v391
        %v8607 = vadd.f32 %v8575, %v392
        %v8608 = vadd.f32 %v8576, %v393
        %v8609 = vadd.f32 %v8577, %v394
        %v8610 = vadd.f32 %v8578, %v395
        %v8611 = vadd.f32 %v8579, %v396
        %v8612 = vadd.f32 %v8580, %v397
        %v8613 = vadd.f32 %v8581, %v398
        %v8614 = vadd.f32 %v8582, %v399
        %v8615 = vadd.f32 %v8583, %v400
        %v8616 = vadd.f32 %v8584, %v401
        %v8617 = vadd.f32 %v8585, %v402
        %v8618 = vadd.f32 %v8586, %v403
        %v8619 = vsel %vm412, %v8587, 0.0
        %8620 = vadd.xlane.f32.xlu0 %v8619
        %v8621 = vpop.xlane.xlu0 %8620
        %v8622 = vsel %vm412, %v8588, 0.0
        %8623 = vadd.xlane.f32.xlu0 %v8622
        %v8624 = vpop.xlane.xlu0 %8623
        %v8625 = vsel %vm412, %v8589, 0.0
        %8626 = vadd.xlane.f32.xlu0 %v8625
        %v8627 = vpop.xlane.xlu0 %8626
        %v8628 = vsel %vm412, %v8590, 0.0
        %8629 = vadd.xlane.f32.xlu0 %v8628
        %v8630 = vpop.xlane.xlu0 %8629
        %v8631 = vsel %vm412, %v8591, 0.0
        %8632 = vadd.xlane.f32.xlu0 %v8631
        %v8633 = vpop.xlane.xlu0 %8632
        %v8634 = vsel %vm412, %v8592, 0.0
        %8635 = vadd.xlane.f32.xlu0 %v8634
        %v8636 = vpop.xlane.xlu0 %8635
        %v8637 = vsel %vm412, %v8593, 0.0
        %8638 = vadd.xlane.f32.xlu0 %v8637
        %v8639 = vpop.xlane.xlu0 %8638
        %v8640 = vsel %vm412, %v8594, 0.0
        %8641 = vadd.xlane.f32.xlu0 %v8640
        %v8642 = vpop.xlane.xlu0 %8641
        %v8643 = vsel %vm412, %v8595, 0.0
        %8644 = vadd.xlane.f32.xlu0 %v8643
        %v8645 = vpop.xlane.xlu0 %8644
        %v8646 = vsel %vm412, %v8596, 0.0
        %8647 = vadd.xlane.f32.xlu0 %v8646
        %v8648 = vpop.xlane.xlu0 %8647
        %v8649 = vsel %vm412, %v8597, 0.0
        %8650 = vadd.xlane.f32.xlu0 %v8649
        %v8651 = vpop.xlane.xlu0 %8650
        %v8652 = vsel %vm412, %v8598, 0.0
        %8653 = vadd.xlane.f32.xlu0 %v8652
        %v8654 = vpop.xlane.xlu0 %8653
        %v8655 = vsel %vm412, %v8599, 0.0
        %8656 = vadd.xlane.f32.xlu0 %v8655
        %v8657 = vpop.xlane.xlu0 %8656
        %v8658 = vsel %vm412, %v8600, 0.0
        %8659 = vadd.xlane.f32.xlu0 %v8658
        %v8660 = vpop.xlane.xlu0 %8659
        %v8661 = vsel %vm412, %v8601, 0.0
        %8662 = vadd.xlane.f32.xlu0 %v8661
        %v8663 = vpop.xlane.xlu0 %8662
        %v8664 = vsel %vm412, %v8602, 0.0
        %8665 = vadd.xlane.f32.xlu0 %v8664
        %v8666 = vpop.xlane.xlu0 %8665
        %v8667 = vsel %vm412, %v8603, 0.0
        %8668 = vadd.xlane.f32.xlu0 %v8667
        %v8669 = vpop.xlane.xlu0 %8668
        %v8670 = vsel %vm412, %v8604, 0.0
        %8671 = vadd.xlane.f32.xlu0 %v8670
        %v8672 = vpop.xlane.xlu0 %8671
        %v8673 = vsel %vm412, %v8605, 0.0
        %8674 = vadd.xlane.f32.xlu0 %v8673
        %v8675 = vpop.xlane.xlu0 %8674
        %v8676 = vsel %vm412, %v8606, 0.0
        %8677 = vadd.xlane.f32.xlu0 %v8676
        %v8678 = vpop.xlane.xlu0 %8677
        %v8679 = vsel %vm412, %v8607, 0.0
        %8680 = vadd.xlane.f32.xlu0 %v8679
        %v8681 = vpop.xlane.xlu0 %8680
        %v8682 = vsel %vm412, %v8608, 0.0
        %8683 = vadd.xlane.f32.xlu0 %v8682
        %v8684 = vpop.xlane.xlu0 %8683
        %v8685 = vsel %vm412, %v8609, 0.0
        %8686 = vadd.xlane.f32.xlu0 %v8685
        %v8687 = vpop.xlane.xlu0 %8686
        %v8688 = vsel %vm412, %v8610, 0.0
        %8689 = vadd.xlane.f32.xlu0 %v8688
        %v8690 = vpop.xlane.xlu0 %8689
        %v8691 = vsel %vm412, %v8611, 0.0
        %8692 = vadd.xlane.f32.xlu0 %v8691
        %v8693 = vpop.xlane.xlu0 %8692
        %v8694 = vsel %vm412, %v8612, 0.0
        %8695 = vadd.xlane.f32.xlu0 %v8694
        %v8696 = vpop.xlane.xlu0 %8695
        %v8697 = vsel %vm412, %v8613, 0.0
        %8698 = vadd.xlane.f32.xlu0 %v8697
        %v8699 = vpop.xlane.xlu0 %8698
        %v8700 = vsel %vm412, %v8614, 0.0
        %8701 = vadd.xlane.f32.xlu0 %v8700
        %v8702 = vpop.xlane.xlu0 %8701
        %v8703 = vsel %vm412, %v8615, 0.0
        %8704 = vadd.xlane.f32.xlu0 %v8703
        %v8705 = vpop.xlane.xlu0 %8704
        %v8706 = vsel %vm412, %v8616, 0.0
        %8707 = vadd.xlane.f32.xlu0 %v8706
        %v8708 = vpop.xlane.xlu0 %8707
        %v8709 = vsel %vm412, %v8617, 0.0
        %8710 = vadd.xlane.f32.xlu0 %v8709
        %v8711 = vpop.xlane.xlu0 %8710
        %v8712 = vsel %vm412, %v8618, 0.0
        %8713 = vadd.xlane.f32.xlu0 %v8712
        %v8714 = vpop.xlane.xlu0 %8713
        %v8715 = vrcp.pop 32.0
        %v8716 = vmul.f32 32.0, %v8715
        %v8717 = vsub.f32 1.0, %v8716
        %v8718 = vmul.f32 %v8715, %v8717
        %v8719 = vadd.f32 %v8715, %v8718
        %vm8720 = vweird.f32 %v8715
        %v8721 = vsel %vm8720, %v8715, %v8719
        %v8722 = vmul.f32 %v8621, %v8721
        %v8723 = vmul.f32 %v8624, %v8721
        %v8724 = vmul.f32 %v8627, %v8721
        %v8725 = vmul.f32 %v8630, %v8721
        %v8726 = vmul.f32 %v8633, %v8721
        %v8727 = vmul.f32 %v8636, %v8721
        %v8728 = vmul.f32 %v8639, %v8721
        %v8729 = vmul.f32 %v8642, %v8721
        %v8730 = vmul.f32 %v8645, %v8721
        %v8731 = vmul.f32 %v8648, %v8721
        %v8732 = vmul.f32 %v8651, %v8721
        %v8733 = vmul.f32 %v8654, %v8721
        %v8734 = vmul.f32 %v8657, %v8721
        %v8735 = vmul.f32 %v8660, %v8721
        %v8736 = vmul.f32 %v8663, %v8721
        %v8737 = vmul.f32 %v8666, %v8721
        %v8738 = vmul.f32 %v8669, %v8721
        %v8739 = vmul.f32 %v8672, %v8721
        %v8740 = vmul.f32 %v8675, %v8721
        %v8741 = vmul.f32 %v8678, %v8721
        %v8742 = vmul.f32 %v8681, %v8721
        %v8743 = vmul.f32 %v8684, %v8721
        %v8744 = vmul.f32 %v8687, %v8721
        %v8745 = vmul.f32 %v8690, %v8721
        %v8746 = vmul.f32 %v8693, %v8721
        %v8747 = vmul.f32 %v8696, %v8721
        %v8748 = vmul.f32 %v8699, %v8721
        %v8749 = vmul.f32 %v8702, %v8721
        %v8750 = vmul.f32 %v8705, %v8721
        %v8751 = vmul.f32 %v8708, %v8721
        %v8752 = vmul.f32 %v8711, %v8721
        %v8753 = vmul.f32 %v8714, %v8721
        %v8754 = vsub.f32 %v8587, %v8722
        %v8755 = vsub.f32 %v8588, %v8723
        %v8756 = vsub.f32 %v8589, %v8724
        %v8757 = vsub.f32 %v8590, %v8725
        %v8758 = vsub.f32 %v8591, %v8726
        %v8759 = vsub.f32 %v8592, %v8727
        %v8760 = vsub.f32 %v8593, %v8728
        %v8761 = vsub.f32 %v8594, %v8729
        %v8762 = vsub.f32 %v8595, %v8730
        %v8763 = vsub.f32 %v8596, %v8731
        %v8764 = vsub.f32 %v8597, %v8732
        %v8765 = vsub.f32 %v8598, %v8733
        %v8766 = vsub.f32 %v8599, %v8734
        %v8767 = vsub.f32 %v8600, %v8735
        %v8768 = vsub.f32 %v8601, %v8736
        %v8769 = vsub.f32 %v8602, %v8737
        %v8770 = vsub.f32 %v8603, %v8738
        %v8771 = vsub.f32 %v8604, %v8739
        %v8772 = vsub.f32 %v8605, %v8740
        %v8773 = vsub.f32 %v8606, %v8741
        %v8774 = vsub.f32 %v8607, %v8742
        %v8775 = vsub.f32 %v8608, %v8743
        %v8776 = vsub.f32 %v8609, %v8744
        %v8777 = vsub.f32 %v8610, %v8745
        %v8778 = vsub.f32 %v8611, %v8746
        %v8779 = vsub.f32 %v8612, %v8747
        %v8780 = vsub.f32 %v8613, %v8748
        %v8781 = vsub.f32 %v8614, %v8749
        %v8782 = vsub.f32 %v8615, %v8750
        %v8783 = vsub.f32 %v8616, %v8751
        %v8784 = vsub.f32 %v8617, %v8752
        %v8785 = vsub.f32 %v8618, %v8753
        %v8786 = vmul.f32 %v8754, %v8754
        %v8787 = vmul.f32 %v8755, %v8755
        %v8788 = vmul.f32 %v8756, %v8756
        %v8789 = vmul.f32 %v8757, %v8757
        %v8790 = vmul.f32 %v8758, %v8758
        %v8791 = vmul.f32 %v8759, %v8759
        %v8792 = vmul.f32 %v8760, %v8760
        %v8793 = vmul.f32 %v8761, %v8761
        %v8794 = vmul.f32 %v8762, %v8762
        %v8795 = vmul.f32 %v8763, %v8763
        %v8796 = vmul.f32 %v8764, %v8764
        %v8797 = vmul.f32 %v8765, %v8765
        %v8798 = vmul.f32 %v8766, %v8766
        %v8799 = vmul.f32 %v8767, %v8767
        %v8800 = vmul.f32 %v8768, %v8768
        %v8801 = vmul.f32 %v8769, %v8769
        %v8802 = vmul.f32 %v8770, %v8770
        %v8803 = vmul.f32 %v8771, %v8771
        %v8804 = vmul.f32 %v8772, %v8772
        %v8805 = vmul.f32 %v8773, %v8773
        %v8806 = vmul.f32 %v8774, %v8774
        %v8807 = vmul.f32 %v8775, %v8775
        %v8808 = vmul.f32 %v8776, %v8776
        %v8809 = vmul.f32 %v8777, %v8777
        %v8810 = vmul.f32 %v8778, %v8778
        %v8811 = vmul.f32 %v8779, %v8779
        %v8812 = vmul.f32 %v8780, %v8780
        %v8813 = vmul.f32 %v8781, %v8781
        %v8814 = vmul.f32 %v8782, %v8782
        %v8815 = vmul.f32 %v8783, %v8783
        %v8816 = vmul.f32 %v8784, %v8784
        %v8817 = vmul.f32 %v8785, %v8785
        %v8818 = vsel %vm412, %v8786, 0.0
        %8819 = vadd.xlane.f32.xlu0 %v8818
        %v8820 = vpop.xlane.xlu0 %8819
        %v8821 = vsel %vm412, %v8787, 0.0
        %8822 = vadd.xlane.f32.xlu0 %v8821
        %v8823 = vpop.xlane.xlu0 %8822
        %v8824 = vsel %vm412, %v8788, 0.0
        %8825 = vadd.xlane.f32.xlu0 %v8824
        %v8826 = vpop.xlane.xlu0 %8825
        %v8827 = vsel %vm412, %v8789, 0.0
        %8828 = vadd.xlane.f32.xlu0 %v8827
        %v8829 = vpop.xlane.xlu0 %8828
        %v8830 = vsel %vm412, %v8790, 0.0
        %8831 = vadd.xlane.f32.xlu0 %v8830
        %v8832 = vpop.xlane.xlu0 %8831
        %v8833 = vsel %vm412, %v8791, 0.0
        %8834 = vadd.xlane.f32.xlu0 %v8833
        %v8835 = vpop.xlane.xlu0 %8834
        %v8836 = vsel %vm412, %v8792, 0.0
        %8837 = vadd.xlane.f32.xlu0 %v8836
        %v8838 = vpop.xlane.xlu0 %8837
        %v8839 = vsel %vm412, %v8793, 0.0
        %8840 = vadd.xlane.f32.xlu0 %v8839
        %v8841 = vpop.xlane.xlu0 %8840
        %v8842 = vsel %vm412, %v8794, 0.0
        %8843 = vadd.xlane.f32.xlu0 %v8842
        %v8844 = vpop.xlane.xlu0 %8843
        %v8845 = vsel %vm412, %v8795, 0.0
        %8846 = vadd.xlane.f32.xlu0 %v8845
        %v8847 = vpop.xlane.xlu0 %8846
        %v8848 = vsel %vm412, %v8796, 0.0
        %8849 = vadd.xlane.f32.xlu0 %v8848
        %v8850 = vpop.xlane.xlu0 %8849
        %v8851 = vsel %vm412, %v8797, 0.0
        %8852 = vadd.xlane.f32.xlu0 %v8851
        %v8853 = vpop.xlane.xlu0 %8852
        %v8854 = vsel %vm412, %v8798, 0.0
        %8855 = vadd.xlane.f32.xlu0 %v8854
        %v8856 = vpop.xlane.xlu0 %8855
        %v8857 = vsel %vm412, %v8799, 0.0
        %8858 = vadd.xlane.f32.xlu0 %v8857
        %v8859 = vpop.xlane.xlu0 %8858
        %v8860 = vsel %vm412, %v8800, 0.0
        %8861 = vadd.xlane.f32.xlu0 %v8860
        %v8862 = vpop.xlane.xlu0 %8861
        %v8863 = vsel %vm412, %v8801, 0.0
        %8864 = vadd.xlane.f32.xlu0 %v8863
        %v8865 = vpop.xlane.xlu0 %8864
        %v8866 = vsel %vm412, %v8802, 0.0
        %8867 = vadd.xlane.f32.xlu0 %v8866
        %v8868 = vpop.xlane.xlu0 %8867
        %v8869 = vsel %vm412, %v8803, 0.0
        %8870 = vadd.xlane.f32.xlu0 %v8869
        %v8871 = vpop.xlane.xlu0 %8870
        %v8872 = vsel %vm412, %v8804, 0.0
        %8873 = vadd.xlane.f32.xlu0 %v8872
        %v8874 = vpop.xlane.xlu0 %8873
        %v8875 = vsel %vm412, %v8805, 0.0
        %8876 = vadd.xlane.f32.xlu0 %v8875
        %v8877 = vpop.xlane.xlu0 %8876
        %v8878 = vsel %vm412, %v8806, 0.0
        %8879 = vadd.xlane.f32.xlu0 %v8878
        %v8880 = vpop.xlane.xlu0 %8879
        %v8881 = vsel %vm412, %v8807, 0.0
        %8882 = vadd.xlane.f32.xlu0 %v8881
        %v8883 = vpop.xlane.xlu0 %8882
        %v8884 = vsel %vm412, %v8808, 0.0
        %8885 = vadd.xlane.f32.xlu0 %v8884
        %v8886 = vpop.xlane.xlu0 %8885
        %v8887 = vsel %vm412, %v8809, 0.0
        %8888 = vadd.xlane.f32.xlu0 %v8887
        %v8889 = vpop.xlane.xlu0 %8888
        %v8890 = vsel %vm412, %v8810, 0.0
        %8891 = vadd.xlane.f32.xlu0 %v8890
        %v8892 = vpop.xlane.xlu0 %8891
        %v8893 = vsel %vm412, %v8811, 0.0
        %8894 = vadd.xlane.f32.xlu0 %v8893
        %v8895 = vpop.xlane.xlu0 %8894
        %v8896 = vsel %vm412, %v8812, 0.0
        %8897 = vadd.xlane.f32.xlu0 %v8896
        %v8898 = vpop.xlane.xlu0 %8897
        %v8899 = vsel %vm412, %v8813, 0.0
        %8900 = vadd.xlane.f32.xlu0 %v8899
        %v8901 = vpop.xlane.xlu0 %8900
        %v8902 = vsel %vm412, %v8814, 0.0
        %8903 = vadd.xlane.f32.xlu0 %v8902
        %v8904 = vpop.xlane.xlu0 %8903
        %v8905 = vsel %vm412, %v8815, 0.0
        %8906 = vadd.xlane.f32.xlu0 %v8905
        %v8907 = vpop.xlane.xlu0 %8906
        %v8908 = vsel %vm412, %v8816, 0.0
        %8909 = vadd.xlane.f32.xlu0 %v8908
        %v8910 = vpop.xlane.xlu0 %8909
        %v8911 = vsel %vm412, %v8817, 0.0
        %8912 = vadd.xlane.f32.xlu0 %v8911
        %v8913 = vpop.xlane.xlu0 %8912
        %v8914 = vmul.f32 %v8820, %v8721
        %v8915 = vmul.f32 %v8823, %v8721
        %v8916 = vmul.f32 %v8826, %v8721
        %v8917 = vmul.f32 %v8829, %v8721
        %v8918 = vmul.f32 %v8832, %v8721
        %v8919 = vmul.f32 %v8835, %v8721
        %v8920 = vmul.f32 %v8838, %v8721
        %v8921 = vmul.f32 %v8841, %v8721
        %v8922 = vmul.f32 %v8844, %v8721
        %v8923 = vmul.f32 %v8847, %v8721
        %v8924 = vmul.f32 %v8850, %v8721
        %v8925 = vmul.f32 %v8853, %v8721
        %v8926 = vmul.f32 %v8856, %v8721
        %v8927 = vmul.f32 %v8859, %v8721
        %v8928 = vmul.f32 %v8862, %v8721
        %v8929 = vmul.f32 %v8865, %v8721
        %v8930 = vmul.f32 %v8868, %v8721
        %v8931 = vmul.f32 %v8871, %v8721
        %v8932 = vmul.f32 %v8874, %v8721
        %v8933 = vmul.f32 %v8877, %v8721
        %v8934 = vmul.f32 %v8880, %v8721
        %v8935 = vmul.f32 %v8883, %v8721
        %v8936 = vmul.f32 %v8886, %v8721
        %v8937 = vmul.f32 %v8889, %v8721
        %v8938 = vmul.f32 %v8892, %v8721
        %v8939 = vmul.f32 %v8895, %v8721
        %v8940 = vmul.f32 %v8898, %v8721
        %v8941 = vmul.f32 %v8901, %v8721
        %v8942 = vmul.f32 %v8904, %v8721
        %v8943 = vmul.f32 %v8907, %v8721
        %v8944 = vmul.f32 %v8910, %v8721
        %v8945 = vmul.f32 %v8913, %v8721
        %v8946 = vadd.f32 %v8914, 1e-05
        %v8947 = vadd.f32 %v8915, 1e-05
        %v8948 = vadd.f32 %v8916, 1e-05
        %v8949 = vadd.f32 %v8917, 1e-05
        %v8950 = vadd.f32 %v8918, 1e-05
        %v8951 = vadd.f32 %v8919, 1e-05
        %v8952 = vadd.f32 %v8920, 1e-05
        %v8953 = vadd.f32 %v8921, 1e-05
        %v8954 = vadd.f32 %v8922, 1e-05
        %v8955 = vadd.f32 %v8923, 1e-05
        %v8956 = vadd.f32 %v8924, 1e-05
        %v8957 = vadd.f32 %v8925, 1e-05
        %v8958 = vadd.f32 %v8926, 1e-05
        %v8959 = vadd.f32 %v8927, 1e-05
        %v8960 = vadd.f32 %v8928, 1e-05
        %v8961 = vadd.f32 %v8929, 1e-05
        %v8962 = vadd.f32 %v8930, 1e-05
        %v8963 = vadd.f32 %v8931, 1e-05
        %v8964 = vadd.f32 %v8932, 1e-05
        %v8965 = vadd.f32 %v8933, 1e-05
        %v8966 = vadd.f32 %v8934, 1e-05
        %v8967 = vadd.f32 %v8935, 1e-05
        %v8968 = vadd.f32 %v8936, 1e-05
        %v8969 = vadd.f32 %v8937, 1e-05
        %v8970 = vadd.f32 %v8938, 1e-05
        %v8971 = vadd.f32 %v8939, 1e-05
        %v8972 = vadd.f32 %v8940, 1e-05
        %v8973 = vadd.f32 %v8941, 1e-05
        %v8974 = vadd.f32 %v8942, 1e-05
        %v8975 = vadd.f32 %v8943, 1e-05
        %v8976 = vadd.f32 %v8944, 1e-05
        %v8977 = vadd.f32 %v8945, 1e-05
        %v8978 = vrsqrt.pop %v8946
        %v8979 = vmul.f32 %v8978, %v8946
        %v8980 = vmul.f32 %v8979, %v8978
        %v8981 = vmul.f32 0.5, %v8980
        %v8982 = vsub.f32 1.5, %v8981
        %v8983 = vmul.f32 %v8978, %v8982
        %vm8984 = vweird.f32 %v8946
        %vm8985 = vweird.f32 %v8978
        %vm8986 = vmor %vm8984, %vm8985
        %v8987 = vsel %vm8986, %v8978, %v8983
        %v8988 = vrsqrt.pop %v8947
        %v8989 = vmul.f32 %v8988, %v8947
        %v8990 = vmul.f32 %v8989, %v8988
        %v8991 = vmul.f32 0.5, %v8990
        %v8992 = vsub.f32 1.5, %v8991
        %v8993 = vmul.f32 %v8988, %v8992
        %vm8994 = vweird.f32 %v8947
        %vm8995 = vweird.f32 %v8988
        %vm8996 = vmor %vm8994, %vm8995
        %v8997 = vsel %vm8996, %v8988, %v8993
        %v8998 = vrsqrt.pop %v8948
        %v8999 = vmul.f32 %v8998, %v8948
        %v9000 = vmul.f32 %v8999, %v8998
        %v9001 = vmul.f32 0.5, %v9000
        %v9002 = vsub.f32 1.5, %v9001
        %v9003 = vmul.f32 %v8998, %v9002
        %vm9004 = vweird.f32 %v8948
        %vm9005 = vweird.f32 %v8998
        %vm9006 = vmor %vm9004, %vm9005
        %v9007 = vsel %vm9006, %v8998, %v9003
        %v9008 = vrsqrt.pop %v8949
        %v9009 = vmul.f32 %v9008, %v8949
        %v9010 = vmul.f32 %v9009, %v9008
        %v9011 = vmul.f32 0.5, %v9010
        %v9012 = vsub.f32 1.5, %v9011
        %v9013 = vmul.f32 %v9008, %v9012
        %vm9014 = vweird.f32 %v8949
        %vm9015 = vweird.f32 %v9008
        %vm9016 = vmor %vm9014, %vm9015
        %v9017 = vsel %vm9016, %v9008, %v9013
        %v9018 = vrsqrt.pop %v8950
        %v9019 = vmul.f32 %v9018, %v8950
        %v9020 = vmul.f32 %v9019, %v9018
        %v9021 = vmul.f32 0.5, %v9020
        %v9022 = vsub.f32 1.5, %v9021
        %v9023 = vmul.f32 %v9018, %v9022
        %vm9024 = vweird.f32 %v8950
        %vm9025 = vweird.f32 %v9018
        %vm9026 = vmor %vm9024, %vm9025
        %v9027 = vsel %vm9026, %v9018, %v9023
        %v9028 = vrsqrt.pop %v8951
        %v9029 = vmul.f32 %v9028, %v8951
        %v9030 = vmul.f32 %v9029, %v9028
        %v9031 = vmul.f32 0.5, %v9030
        %v9032 = vsub.f32 1.5, %v9031
        %v9033 = vmul.f32 %v9028, %v9032
        %vm9034 = vweird.f32 %v8951
        %vm9035 = vweird.f32 %v9028
        %vm9036 = vmor %vm9034, %vm9035
        %v9037 = vsel %vm9036, %v9028, %v9033
        %v9038 = vrsqrt.pop %v8952
        %v9039 = vmul.f32 %v9038, %v8952
        %v9040 = vmul.f32 %v9039, %v9038
        %v9041 = vmul.f32 0.5, %v9040
        %v9042 = vsub.f32 1.5, %v9041
        %v9043 = vmul.f32 %v9038, %v9042
        %vm9044 = vweird.f32 %v8952
        %vm9045 = vweird.f32 %v9038
        %vm9046 = vmor %vm9044, %vm9045
        %v9047 = vsel %vm9046, %v9038, %v9043
        %v9048 = vrsqrt.pop %v8953
        %v9049 = vmul.f32 %v9048, %v8953
        %v9050 = vmul.f32 %v9049, %v9048
        %v9051 = vmul.f32 0.5, %v9050
        %v9052 = vsub.f32 1.5, %v9051
        %v9053 = vmul.f32 %v9048, %v9052
        %vm9054 = vweird.f32 %v8953
        %vm9055 = vweird.f32 %v9048
        %vm9056 = vmor %vm9054, %vm9055
        %v9057 = vsel %vm9056, %v9048, %v9053
        %v9058 = vrsqrt.pop %v8954
        %v9059 = vmul.f32 %v9058, %v8954
        %v9060 = vmul.f32 %v9059, %v9058
        %v9061 = vmul.f32 0.5, %v9060
        %v9062 = vsub.f32 1.5, %v9061
        %v9063 = vmul.f32 %v9058, %v9062
        %vm9064 = vweird.f32 %v8954
        %vm9065 = vweird.f32 %v9058
        %vm9066 = vmor %vm9064, %vm9065
        %v9067 = vsel %vm9066, %v9058, %v9063
        %v9068 = vrsqrt.pop %v8955
        %v9069 = vmul.f32 %v9068, %v8955
        %v9070 = vmul.f32 %v9069, %v9068
        %v9071 = vmul.f32 0.5, %v9070
        %v9072 = vsub.f32 1.5, %v9071
        %v9073 = vmul.f32 %v9068, %v9072
        %vm9074 = vweird.f32 %v8955
        %vm9075 = vweird.f32 %v9068
        %vm9076 = vmor %vm9074, %vm9075
        %v9077 = vsel %vm9076, %v9068, %v9073
        %v9078 = vrsqrt.pop %v8956
        %v9079 = vmul.f32 %v9078, %v8956
        %v9080 = vmul.f32 %v9079, %v9078
        %v9081 = vmul.f32 0.5, %v9080
        %v9082 = vsub.f32 1.5, %v9081
        %v9083 = vmul.f32 %v9078, %v9082
        %vm9084 = vweird.f32 %v8956
        %vm9085 = vweird.f32 %v9078
        %vm9086 = vmor %vm9084, %vm9085
        %v9087 = vsel %vm9086, %v9078, %v9083
        %v9088 = vrsqrt.pop %v8957
        %v9089 = vmul.f32 %v9088, %v8957
        %v9090 = vmul.f32 %v9089, %v9088
        %v9091 = vmul.f32 0.5, %v9090
        %v9092 = vsub.f32 1.5, %v9091
        %v9093 = vmul.f32 %v9088, %v9092
        %vm9094 = vweird.f32 %v8957
        %vm9095 = vweird.f32 %v9088
        %vm9096 = vmor %vm9094, %vm9095
        %v9097 = vsel %vm9096, %v9088, %v9093
        %v9098 = vrsqrt.pop %v8958
        %v9099 = vmul.f32 %v9098, %v8958
        %v9100 = vmul.f32 %v9099, %v9098
        %v9101 = vmul.f32 0.5, %v9100
        %v9102 = vsub.f32 1.5, %v9101
        %v9103 = vmul.f32 %v9098, %v9102
        %vm9104 = vweird.f32 %v8958
        %vm9105 = vweird.f32 %v9098
        %vm9106 = vmor %vm9104, %vm9105
        %v9107 = vsel %vm9106, %v9098, %v9103
        %v9108 = vrsqrt.pop %v8959
        %v9109 = vmul.f32 %v9108, %v8959
        %v9110 = vmul.f32 %v9109, %v9108
        %v9111 = vmul.f32 0.5, %v9110
        %v9112 = vsub.f32 1.5, %v9111
        %v9113 = vmul.f32 %v9108, %v9112
        %vm9114 = vweird.f32 %v8959
        %vm9115 = vweird.f32 %v9108
        %vm9116 = vmor %vm9114, %vm9115
        %v9117 = vsel %vm9116, %v9108, %v9113
        %v9118 = vrsqrt.pop %v8960
        %v9119 = vmul.f32 %v9118, %v8960
        %v9120 = vmul.f32 %v9119, %v9118
        %v9121 = vmul.f32 0.5, %v9120
        %v9122 = vsub.f32 1.5, %v9121
        %v9123 = vmul.f32 %v9118, %v9122
        %vm9124 = vweird.f32 %v8960
        %vm9125 = vweird.f32 %v9118
        %vm9126 = vmor %vm9124, %vm9125
        %v9127 = vsel %vm9126, %v9118, %v9123
        %v9128 = vrsqrt.pop %v8961
        %v9129 = vmul.f32 %v9128, %v8961
        %v9130 = vmul.f32 %v9129, %v9128
        %v9131 = vmul.f32 0.5, %v9130
        %v9132 = vsub.f32 1.5, %v9131
        %v9133 = vmul.f32 %v9128, %v9132
        %vm9134 = vweird.f32 %v8961
        %vm9135 = vweird.f32 %v9128
        %vm9136 = vmor %vm9134, %vm9135
        %v9137 = vsel %vm9136, %v9128, %v9133
        %v9138 = vrsqrt.pop %v8962
        %v9139 = vmul.f32 %v9138, %v8962
        %v9140 = vmul.f32 %v9139, %v9138
        %v9141 = vmul.f32 0.5, %v9140
        %v9142 = vsub.f32 1.5, %v9141
        %v9143 = vmul.f32 %v9138, %v9142
        %vm9144 = vweird.f32 %v8962
        %vm9145 = vweird.f32 %v9138
        %vm9146 = vmor %vm9144, %vm9145
        %v9147 = vsel %vm9146, %v9138, %v9143
        %v9148 = vrsqrt.pop %v8963
        %v9149 = vmul.f32 %v9148, %v8963
        %v9150 = vmul.f32 %v9149, %v9148
        %v9151 = vmul.f32 0.5, %v9150
        %v9152 = vsub.f32 1.5, %v9151
        %v9153 = vmul.f32 %v9148, %v9152
        %vm9154 = vweird.f32 %v8963
        %vm9155 = vweird.f32 %v9148
        %vm9156 = vmor %vm9154, %vm9155
        %v9157 = vsel %vm9156, %v9148, %v9153
        %v9158 = vrsqrt.pop %v8964
        %v9159 = vmul.f32 %v9158, %v8964
        %v9160 = vmul.f32 %v9159, %v9158
        %v9161 = vmul.f32 0.5, %v9160
        %v9162 = vsub.f32 1.5, %v9161
        %v9163 = vmul.f32 %v9158, %v9162
        %vm9164 = vweird.f32 %v8964
        %vm9165 = vweird.f32 %v9158
        %vm9166 = vmor %vm9164, %vm9165
        %v9167 = vsel %vm9166, %v9158, %v9163
        %v9168 = vrsqrt.pop %v8965
        %v9169 = vmul.f32 %v9168, %v8965
        %v9170 = vmul.f32 %v9169, %v9168
        %v9171 = vmul.f32 0.5, %v9170
        %v9172 = vsub.f32 1.5, %v9171
        %v9173 = vmul.f32 %v9168, %v9172
        %vm9174 = vweird.f32 %v8965
        %vm9175 = vweird.f32 %v9168
        %vm9176 = vmor %vm9174, %vm9175
        %v9177 = vsel %vm9176, %v9168, %v9173
        %v9178 = vrsqrt.pop %v8966
        %v9179 = vmul.f32 %v9178, %v8966
        %v9180 = vmul.f32 %v9179, %v9178
        %v9181 = vmul.f32 0.5, %v9180
        %v9182 = vsub.f32 1.5, %v9181
        %v9183 = vmul.f32 %v9178, %v9182
        %vm9184 = vweird.f32 %v8966
        %vm9185 = vweird.f32 %v9178
        %vm9186 = vmor %vm9184, %vm9185
        %v9187 = vsel %vm9186, %v9178, %v9183
        %v9188 = vrsqrt.pop %v8967
        %v9189 = vmul.f32 %v9188, %v8967
        %v9190 = vmul.f32 %v9189, %v9188
        %v9191 = vmul.f32 0.5, %v9190
        %v9192 = vsub.f32 1.5, %v9191
        %v9193 = vmul.f32 %v9188, %v9192
        %vm9194 = vweird.f32 %v8967
        %vm9195 = vweird.f32 %v9188
        %vm9196 = vmor %vm9194, %vm9195
        %v9197 = vsel %vm9196, %v9188, %v9193
        %v9198 = vrsqrt.pop %v8968
        %v9199 = vmul.f32 %v9198, %v8968
        %v9200 = vmul.f32 %v9199, %v9198
        %v9201 = vmul.f32 0.5, %v9200
        %v9202 = vsub.f32 1.5, %v9201
        %v9203 = vmul.f32 %v9198, %v9202
        %vm9204 = vweird.f32 %v8968
        %vm9205 = vweird.f32 %v9198
        %vm9206 = vmor %vm9204, %vm9205
        %v9207 = vsel %vm9206, %v9198, %v9203
        %v9208 = vrsqrt.pop %v8969
        %v9209 = vmul.f32 %v9208, %v8969
        %v9210 = vmul.f32 %v9209, %v9208
        %v9211 = vmul.f32 0.5, %v9210
        %v9212 = vsub.f32 1.5, %v9211
        %v9213 = vmul.f32 %v9208, %v9212
        %vm9214 = vweird.f32 %v8969
        %vm9215 = vweird.f32 %v9208
        %vm9216 = vmor %vm9214, %vm9215
        %v9217 = vsel %vm9216, %v9208, %v9213
        %v9218 = vrsqrt.pop %v8970
        %v9219 = vmul.f32 %v9218, %v8970
        %v9220 = vmul.f32 %v9219, %v9218
        %v9221 = vmul.f32 0.5, %v9220
        %v9222 = vsub.f32 1.5, %v9221
        %v9223 = vmul.f32 %v9218, %v9222
        %vm9224 = vweird.f32 %v8970
        %vm9225 = vweird.f32 %v9218
        %vm9226 = vmor %vm9224, %vm9225
        %v9227 = vsel %vm9226, %v9218, %v9223
        %v9228 = vrsqrt.pop %v8971
        %v9229 = vmul.f32 %v9228, %v8971
        %v9230 = vmul.f32 %v9229, %v9228
        %v9231 = vmul.f32 0.5, %v9230
        %v9232 = vsub.f32 1.5, %v9231
        %v9233 = vmul.f32 %v9228, %v9232
        %vm9234 = vweird.f32 %v8971
        %vm9235 = vweird.f32 %v9228
        %vm9236 = vmor %vm9234, %vm9235
        %v9237 = vsel %vm9236, %v9228, %v9233
        %v9238 = vrsqrt.pop %v8972
        %v9239 = vmul.f32 %v9238, %v8972
        %v9240 = vmul.f32 %v9239, %v9238
        %v9241 = vmul.f32 0.5, %v9240
        %v9242 = vsub.f32 1.5, %v9241
        %v9243 = vmul.f32 %v9238, %v9242
        %vm9244 = vweird.f32 %v8972
        %vm9245 = vweird.f32 %v9238
        %vm9246 = vmor %vm9244, %vm9245
        %v9247 = vsel %vm9246, %v9238, %v9243
        %v9248 = vrsqrt.pop %v8973
        %v9249 = vmul.f32 %v9248, %v8973
        %v9250 = vmul.f32 %v9249, %v9248
        %v9251 = vmul.f32 0.5, %v9250
        %v9252 = vsub.f32 1.5, %v9251
        %v9253 = vmul.f32 %v9248, %v9252
        %vm9254 = vweird.f32 %v8973
        %vm9255 = vweird.f32 %v9248
        %vm9256 = vmor %vm9254, %vm9255
        %v9257 = vsel %vm9256, %v9248, %v9253
        %v9258 = vrsqrt.pop %v8974
        %v9259 = vmul.f32 %v9258, %v8974
        %v9260 = vmul.f32 %v9259, %v9258
        %v9261 = vmul.f32 0.5, %v9260
        %v9262 = vsub.f32 1.5, %v9261
        %v9263 = vmul.f32 %v9258, %v9262
        %vm9264 = vweird.f32 %v8974
        %vm9265 = vweird.f32 %v9258
        %vm9266 = vmor %vm9264, %vm9265
        %v9267 = vsel %vm9266, %v9258, %v9263
        %v9268 = vrsqrt.pop %v8975
        %v9269 = vmul.f32 %v9268, %v8975
        %v9270 = vmul.f32 %v9269, %v9268
        %v9271 = vmul.f32 0.5, %v9270
        %v9272 = vsub.f32 1.5, %v9271
        %v9273 = vmul.f32 %v9268, %v9272
        %vm9274 = vweird.f32 %v8975
        %vm9275 = vweird.f32 %v9268
        %vm9276 = vmor %vm9274, %vm9275
        %v9277 = vsel %vm9276, %v9268, %v9273
        %v9278 = vrsqrt.pop %v8976
        %v9279 = vmul.f32 %v9278, %v8976
        %v9280 = vmul.f32 %v9279, %v9278
        %v9281 = vmul.f32 0.5, %v9280
        %v9282 = vsub.f32 1.5, %v9281
        %v9283 = vmul.f32 %v9278, %v9282
        %vm9284 = vweird.f32 %v8976
        %vm9285 = vweird.f32 %v9278
        %vm9286 = vmor %vm9284, %vm9285
        %v9287 = vsel %vm9286, %v9278, %v9283
        %v9288 = vrsqrt.pop %v8977
        %v9289 = vmul.f32 %v9288, %v8977
        %v9290 = vmul.f32 %v9289, %v9288
        %v9291 = vmul.f32 0.5, %v9290
        %v9292 = vsub.f32 1.5, %v9291
        %v9293 = vmul.f32 %v9288, %v9292
        %vm9294 = vweird.f32 %v8977
        %vm9295 = vweird.f32 %v9288
        %vm9296 = vmor %vm9294, %vm9295
        %v9297 = vsel %vm9296, %v9288, %v9293
        %v9298 = vmul.f32 %v8754, %v8987
        %v9299 = vmul.f32 %v8755, %v8997
        %v9300 = vmul.f32 %v8756, %v9007
        %v9301 = vmul.f32 %v8757, %v9017
        %v9302 = vmul.f32 %v8758, %v9027
        %v9303 = vmul.f32 %v8759, %v9037
        %v9304 = vmul.f32 %v8760, %v9047
        %v9305 = vmul.f32 %v8761, %v9057
        %v9306 = vmul.f32 %v8762, %v9067
        %v9307 = vmul.f32 %v8763, %v9077
        %v9308 = vmul.f32 %v8764, %v9087
        %v9309 = vmul.f32 %v8765, %v9097
        %v9310 = vmul.f32 %v8766, %v9107
        %v9311 = vmul.f32 %v8767, %v9117
        %v9312 = vmul.f32 %v8768, %v9127
        %v9313 = vmul.f32 %v8769, %v9137
        %v9314 = vmul.f32 %v8770, %v9147
        %v9315 = vmul.f32 %v8771, %v9157
        %v9316 = vmul.f32 %v8772, %v9167
        %v9317 = vmul.f32 %v8773, %v9177
        %v9318 = vmul.f32 %v8774, %v9187
        %v9319 = vmul.f32 %v8775, %v9197
        %v9320 = vmul.f32 %v8776, %v9207
        %v9321 = vmul.f32 %v8777, %v9217
        %v9322 = vmul.f32 %v8778, %v9227
        %v9323 = vmul.f32 %v8779, %v9237
        %v9324 = vmul.f32 %v8780, %v9247
        %v9325 = vmul.f32 %v8781, %v9257
        %v9326 = vmul.f32 %v8782, %v9267
        %v9327 = vmul.f32 %v8783, %v9277
        %v9328 = vmul.f32 %v8784, %v9287
        %v9329 = vmul.f32 %v8785, %v9297
        %v9330 = vld [vmem:[%s5] sm:$0x1]
        %v9332 = vperm.slane %v9330, 0
        %v9334 = vmul.f32 %v9298, %v9332
        %v9335 = vmul.f32 %v9299, %v9332
        %v9336 = vmul.f32 %v9300, %v9332
        %v9337 = vmul.f32 %v9301, %v9332
        %v9338 = vmul.f32 %v9302, %v9332
        %v9339 = vmul.f32 %v9303, %v9332
        %v9340 = vmul.f32 %v9304, %v9332
        %v9341 = vmul.f32 %v9305, %v9332
        %v9342 = vmul.f32 %v9306, %v9332
        %v9343 = vmul.f32 %v9307, %v9332
        %v9344 = vmul.f32 %v9308, %v9332
        %v9345 = vmul.f32 %v9309, %v9332
        %v9346 = vmul.f32 %v9310, %v9332
        %v9347 = vmul.f32 %v9311, %v9332
        %v9348 = vmul.f32 %v9312, %v9332
        %v9349 = vmul.f32 %v9313, %v9332
        %v9350 = vmul.f32 %v9314, %v9332
        %v9351 = vmul.f32 %v9315, %v9332
        %v9352 = vmul.f32 %v9316, %v9332
        %v9353 = vmul.f32 %v9317, %v9332
        %v9354 = vmul.f32 %v9318, %v9332
        %v9355 = vmul.f32 %v9319, %v9332
        %v9356 = vmul.f32 %v9320, %v9332
        %v9357 = vmul.f32 %v9321, %v9332
        %v9358 = vmul.f32 %v9322, %v9332
        %v9359 = vmul.f32 %v9323, %v9332
        %v9360 = vmul.f32 %v9324, %v9332
        %v9361 = vmul.f32 %v9325, %v9332
        %v9362 = vmul.f32 %v9326, %v9332
        %v9363 = vmul.f32 %v9327, %v9332
        %v9364 = vmul.f32 %v9328, %v9332
        %v9365 = vmul.f32 %v9329, %v9332
        %v9366 = vld [vmem:[%s6] sm:$0x1]
        %v9368 = vperm.slane %v9366, 0
        %v9370 = vadd.f32 %v9334, %v9368
        %v9371 = vadd.f32 %v9335, %v9368
        %v9372 = vadd.f32 %v9336, %v9368
        %v9373 = vadd.f32 %v9337, %v9368
        %v9374 = vadd.f32 %v9338, %v9368
        %v9375 = vadd.f32 %v9339, %v9368
        %v9376 = vadd.f32 %v9340, %v9368
        %v9377 = vadd.f32 %v9341, %v9368
        %v9378 = vadd.f32 %v9342, %v9368
        %v9379 = vadd.f32 %v9343, %v9368
        %v9380 = vadd.f32 %v9344, %v9368
        %v9381 = vadd.f32 %v9345, %v9368
        %v9382 = vadd.f32 %v9346, %v9368
        %v9383 = vadd.f32 %v9347, %v9368
        %v9384 = vadd.f32 %v9348, %v9368
        %v9385 = vadd.f32 %v9349, %v9368
        %v9386 = vadd.f32 %v9350, %v9368
        %v9387 = vadd.f32 %v9351, %v9368
        %v9388 = vadd.f32 %v9352, %v9368
        %v9389 = vadd.f32 %v9353, %v9368
        %v9390 = vadd.f32 %v9354, %v9368
        %v9391 = vadd.f32 %v9355, %v9368
        %v9392 = vadd.f32 %v9356, %v9368
        %v9393 = vadd.f32 %v9357, %v9368
        %v9394 = vadd.f32 %v9358, %v9368
        %v9395 = vadd.f32 %v9359, %v9368
        %v9396 = vadd.f32 %v9360, %v9368
        %v9397 = vadd.f32 %v9361, %v9368
        %v9398 = vadd.f32 %v9362, %v9368
        %v9399 = vadd.f32 %v9363, %v9368
        %v9400 = vadd.f32 %v9364, %v9368
        %v9401 = vadd.f32 %v9365, %v9368
        %9402 = vxpose.xlu0.b32.start [1/16] %v9370, 128
        %9403 = vxpose.xlu0.b32.cont [2/16] %v9371, 128
        %9404 = vxpose.xlu0.b32.cont [3/16] %v9372, 128
        %9405 = vxpose.xlu0.b32.cont [4/16] %v9373, 128
        %9406 = vxpose.xlu0.b32.cont [5/16] %v9374, 128
        %9407 = vxpose.xlu0.b32.cont [6/16] %v9375, 128
        %9408 = vxpose.xlu0.b32.cont [7/16] %v9376, 128
        %9409 = vxpose.xlu0.b32.cont [8/16] %v9377, 128
        %9410 = vxpose.xlu0.b32.cont [9/16] %v9378, 128
        %9411 = vxpose.xlu0.b32.cont [10/16] %v9379, 128
        %9412 = vxpose.xlu0.b32.cont [11/16] %v9380, 128
        %9413 = vxpose.xlu0.b32.cont [12/16] %v9381, 128
        %9414 = vxpose.xlu0.b32.cont [13/16] %v9382, 128
        %9415 = vxpose.xlu0.b32.cont [14/16] %v9383, 128
        %9416 = vxpose.xlu0.b32.cont [15/16] %v9384, 128
        %9417 = vxpose.xlu0.b32.end [16/16] %v9385, 128
        %v9418 = vpop.trf.xlu0
        %v9419 = vpop.trf.xlu0
        %v9420 = vpop.trf.xlu0
        %v9421 = vpop.trf.xlu0
        %v9422 = vpop.trf.xlu0
        %v9423 = vpop.trf.xlu0
        %v9424 = vpop.trf.xlu0
        %v9425 = vpop.trf.xlu0
        %v9426 = vpop.trf.xlu0
        %v9427 = vpop.trf.xlu0
        %v9428 = vpop.trf.xlu0
        %v9429 = vpop.trf.xlu0
        %v9430 = vpop.trf.xlu0
        %v9431 = vpop.trf.xlu0
        %v9432 = vpop.trf.xlu0
        %v9433 = vpop.trf.xlu0
        %9434 = vxpose.xlu0.b32.start [1/16] %v9386, 128
        %9435 = vxpose.xlu0.b32.cont [2/16] %v9387, 128
        %9436 = vxpose.xlu0.b32.cont [3/16] %v9388, 128
        %9437 = vxpose.xlu0.b32.cont [4/16] %v9389, 128
        %9438 = vxpose.xlu0.b32.cont [5/16] %v9390, 128
        %9439 = vxpose.xlu0.b32.cont [6/16] %v9391, 128
        %9440 = vxpose.xlu0.b32.cont [7/16] %v9392, 128
        %9441 = vxpose.xlu0.b32.cont [8/16] %v9393, 128
        %9442 = vxpose.xlu0.b32.cont [9/16] %v9394, 128
        %9443 = vxpose.xlu0.b32.cont [10/16] %v9395, 128
        %9444 = vxpose.xlu0.b32.cont [11/16] %v9396, 128
        %9445 = vxpose.xlu0.b32.cont [12/16] %v9397, 128
        %9446 = vxpose.xlu0.b32.cont [13/16] %v9398, 128
        %9447 = vxpose.xlu0.b32.cont [14/16] %v9399, 128
        %9448 = vxpose.xlu0.b32.cont [15/16] %v9400, 128
        %9449 = vxpose.xlu0.b32.end [16/16] %v9401, 128
        %v9450 = vpop.trf.xlu0
        %v9451 = vpop.trf.xlu0
        %v9452 = vpop.trf.xlu0
        %v9453 = vpop.trf.xlu0
        %v9454 = vpop.trf.xlu0
        %v9455 = vpop.trf.xlu0
        %v9456 = vpop.trf.xlu0
        %v9457 = vpop.trf.xlu0
        %v9458 = vpop.trf.xlu0
        %v9459 = vpop.trf.xlu0
        %v9460 = vpop.trf.xlu0
        %v9461 = vpop.trf.xlu0
        %v9462 = vpop.trf.xlu0
        %v9463 = vpop.trf.xlu0
        %v9464 = vpop.trf.xlu0
        %v9465 = vpop.trf.xlu0
        %9466 = vst [vmem:[%s331] sm:$0xff] %v9418
        %9467 = vst [vmem:[%s331 + $0x8] sm:$0xff] %v9450
        %9468 = vst [vmem:[%s331 + $0x10] sm:$0xff] %v9419
        %9469 = vst [vmem:[%s331 + $0x18] sm:$0xff] %v9451
        %9470 = vst [vmem:[%s331 + $0x20] sm:$0xff] %v9420
        %9471 = vst [vmem:[%s331 + $0x28] sm:$0xff] %v9452
        %9472 = vst [vmem:[%s331 + $0x30] sm:$0xff] %v9421
        %9473 = vst [vmem:[%s331 + $0x38] sm:$0xff] %v9453
        %s9474 = sand.u32 %s185, 1
        %s9475 = scalar_lea.sflag [#allocation4], %s9474
        %s9476 = sand.u32 %s185, 1
        %s9477 = smul.addr %s9476, 64
        %s9478 = scalar_lea.vmem [#allocation8], %s9477
        // Predicated region
        $region61: #{tpu_custom_call.1} parent=47 // pred_check
          %p9479 = pneg %p195
        $region62: #{tpu_custom_call.1} parent=47 // pred_check_branch
          %9481 = sbr.rel (%p9479) target = $region64
        $region63: #{tpu_custom_call.1} parent=47 // pred_region
          %9483 = vsyncadd %s9475, 0
          %s9484 = smul.addr %s25, 8
          %s9485 = smul.addr %s9484, 8
          %s9486 = scalar_lea.hbm %s7, %s9485
          %s9487 = sshll.u32 %s9478, 4
          %s9488 = int_to_ptr.vmem [resolvable:$true] %s9487
          %s9489 = sshll.u32 %s9486, 4
          %s9490 = int_to_ptr.hbm [resolvable:$true] %s9489
          %9495 = dma.vmem_to_hbm [thread:$0]  %s9488, 1024, %s9490, %s9475, 256, 256, 16
        $region64: #{tpu_custom_call.1} parent=47 // pred_fallthru
          _
      $region48: #{tpu_custom_call.1} parent=5 // pred_fallthru
        _
      %p9496 = scmp.le.s32.totalorder 2, %s20
      // Predicated region
      $region65: #{tpu_custom_call.1} parent=5 // pred_check
        %p9497 = pneg %p9496
      $region66: #{tpu_custom_call.1} parent=5 // pred_check_branch
        %9499 = sbr.rel (%p9497) target = $region68
      $region67: #{tpu_custom_call.1} parent=5 // pred_region
        %s9500 = ssub.s32 %s20, 2
        // Predicated region
        $region69: #{tpu_custom_call.1} parent=67 // pred_check
          %p9501 = pneg %p201
        $region70: #{tpu_custom_call.1} parent=67 // pred_check_branch
          %9503 = sbr.rel (%p9501) target = $region72
        $region71: #{tpu_custom_call.1} parent=67 // pred_region
          %s9504 = sand.u32 %s186, 1
          %s9505 = scalar_lea.sflag [#allocation4], %s9504
          %s9506 = sand.u32 %s186, 1
          %s9507 = smul.addr %s9506, 64
          %s9508 = scalar_lea.vmem [#allocation8], %s9507
          %9510 = dma.done %s9505, 1024
        $region72: #{tpu_custom_call.1} parent=67 // pred_fallthru
          _
      $region68: #{tpu_custom_call.1} parent=5 // pred_fallthru
        _
    $region6: #{tpu_custom_call.1} parent=1 // loop_footer
      %s24 = sadd.s32 1, %s20
    $region7: #{tpu_custom_call.1} parent=1 // loop_footer_branch
      %19 = sbr.rel target = $region3
    $region8: #{tpu_custom_call.1} parent=1 // loop_exit
      _
    %9511 = vsyncpa [#allocation3], 1
    %s9512 = scalar_lea.sflag [#allocation3], 1
    %9513 = vsyncpa %s9512, 1
    %9514 = vsyncpa [#allocation6], 1
    %9515 = vsyncpa [#allocation4], 1
    %s9516 = scalar_lea.sflag [#allocation4], 1
    %9517 = vsyncpa %s9516, 1

</llo_original>
